<compile_context>
chip_gen: v7x
topology: tpu7x:2x2x1
jax: 0.10.0
libtpu: 0.0.40
codegen_flags: <defaults>
</compile_context>

<pallas_src>
import jax
import jax.numpy as jnp
from jax.experimental import pallas as pl
from jax.experimental.pallas import tpu as pltpu

LANE = 128      # TPU lane width; feature dims padded to a multiple of this.
SUBLANE = 8     # TPU sublane width; batch padded to a multiple of this.


def _round_up(n, m):
    return ((n + m - 1) // m) * m


def _cdiv(a, b):
    return -(-a // b)


def _autoencoder_kernel(x_ref,
                        w1_ref, b1_ref, w2_ref, b2_ref, w3_ref, b3_ref,
                        w4_ref, b4_ref, w5_ref, b5_ref, w6_ref, b6_ref,
                        o_ref):
    """One batch tile through all 6 fused (matmul -> bias -> ReLU) layers."""
    def linear_relu(h, w_ref, b_ref):
        y = jnp.dot(h, w_ref[...],
                    preferred_element_type=jnp.float32,
                    precision=jax.lax.Precision.HIGHEST)
        y = y + b_ref[...]            # (1, out_pad) broadcasts over the batch tile
        return jnp.maximum(y, 0.0)    # ReLU(inplace=True) semantics

    h = x_ref[...]                    # already f32; no redundant cast
    # encoder
    h = linear_relu(h, w1_ref, b1_ref)
    h = linear_relu(h, w2_ref, b2_ref)
    h = linear_relu(h, w3_ref, b3_ref)
    # decoder
    h = linear_relu(h, w4_ref, b4_ref)
    h = linear_relu(h, w5_ref, b5_ref)
    h = linear_relu(h, w6_ref, b6_ref)
    o_ref[...] = h.astype(o_ref.dtype)


def prepare_params(params):
    """One-time prep of PyTorch-layout params for the kernel.

    W (out, in) -> zero-padded transpose (in_pad, out_pad); b (out,) -> (1, out_pad).
    Zero padding keeps padded lanes exactly 0 through every Linear+ReLU.
    """
    prepared = []
    for w, b in params:
        w = jnp.asarray(w, jnp.float32)
        b = jnp.asarray(b, jnp.float32)
        d_out, d_in = w.shape
        in_p = _round_up(d_in, LANE)
        out_p = _round_up(d_out, LANE)
        w_p = jnp.zeros((in_p, out_p), jnp.float32).at[:d_in, :d_out].set(w.T)
        b_p = jnp.zeros((1, out_p), jnp.float32).at[0, :d_out].set(b)
        prepared.append((w_p, b_p))
    return prepared


def _choose_batch_tile(batch, tile_batch, min_steps=4):
    """Pick (tb, batch_pad): pad batch only to 8 sublanes where possible, give the
    grid >= min_steps steps when the batch is big enough (>=2 per v7x TC), and cap
    the tile at `tile_batch`."""
    tile_batch = max(SUBLANE, (tile_batch // SUBLANE) * SUBLANE)
    batch8 = _round_up(batch, SUBLANE)
    # Only force multiple steps when each step still gets a reasonably sized tile.
    want_steps = min_steps if batch8 >= min_steps * 64 else 1
    steps = max(_cdiv(batch8, tile_batch), want_steps)
    tb = min(_round_up(_cdiv(batch8, steps), SUBLANE), tile_batch)
    batch_pad = _round_up(batch8, tb)
    return tb, batch_pad


def autoencoder_forward(x, prepared_params, *, tile_batch=1024):
    """x: (batch, input_dim) f32. prepared_params: output of prepare_params()."""
    batch, input_dim = x.shape
    in_pad = prepared_params[0][0].shape[0]    # padded input width (128-multiple)
    out_pad = prepared_params[-1][0].shape[1]  # padded output width (128-multiple)

    tb, batch_pad = _choose_batch_tile(batch, tile_batch)
    grid = (batch_pad // tb,)

    # Fast path: skip the extra pad/slice HBM passes for already-aligned shapes.
    needs_pad = (batch_pad != batch) or (in_pad != input_dim)
    if needs_pad:
        x_p = jnp.zeros((batch_pad, in_pad), jnp.float32)
        x_p = x_p.at[:batch, :input_dim].set(x.astype(jnp.float32))
    else:
        x_p = jnp.asarray(x, jnp.float32)

    flat_args = []
    for w_p, b_p in prepared_params:
        flat_args.append(w_p)
        flat_args.append(b_p)

    # Cost estimate (matmul flops dominate; lets XLA overlap surrounding ops).
    flops = 0
    param_bytes = 0
    max_width = out_pad
    for w_p, b_p in prepared_params:
        din, dout = w_p.shape
        flops += 2 * batch_pad * din * dout + 2 * batch_pad * dout
        param_bytes += (w_p.size + b_p.size) * 4
        max_width = max(max_width, dout)
    bytes_accessed = 4 * batch_pad * (in_pad + out_pad) + param_bytes
    cost = pl.CostEstimate(flops=flops, transcendentals=0,
                           bytes_accessed=bytes_accessed)

    # Scoped-VMEM limit: resident params (x2 safety margin in case the weight
    # blocks end up double-buffered) + double-buffered x/o tiles + intermediate
    # headroom. Raises v5e's 16 MiB default; clamped to v7x's 64 MiB physical.
    needed = (2 * param_bytes
              + 2 * 4 * tb * (in_pad + out_pad)
              + 4 * 4 * tb * max_width)
    vmem_limit = int(min(64 << 20, max(needed, 32 << 20)))

    def build_in_specs(weight_pipeline_mode):
        specs = [pl.BlockSpec((tb, in_pad), lambda i: (i, 0))]
        for w_p, b_p in prepared_params:
            if weight_pipeline_mode is None:
                specs.append(pl.BlockSpec(w_p.shape, lambda i: (0, 0)))
                specs.append(pl.BlockSpec(b_p.shape, lambda i: (0, 0)))
            else:
                # Constant index maps -> blocks never change; single buffer halves
                # the weight VMEM footprint (matters at real feature widths).
                specs.append(pl.BlockSpec(w_p.shape, lambda i: (0, 0),
                                          pipeline_mode=weight_pipeline_mode))
                specs.append(pl.BlockSpec(b_p.shape, lambda i: (0, 0),
                                          pipeline_mode=weight_pipeline_mode))
        return specs

    def run(weight_pipeline_mode):
        return pl.pallas_call(
            _autoencoder_kernel,
            out_shape=jax.ShapeDtypeStruct((batch_pad, out_pad), jnp.float32),
            grid=grid,
            in_specs=build_in_specs(weight_pipeline_mode),
            out_specs=pl.BlockSpec((tb, out_pad), lambda i: (i, 0)),
            compiler_params=pltpu.CompilerParams(
                dimension_semantics=("parallel",),   # megacore sharding on v7x
                vmem_limit_bytes=vmem_limit),
            cost_estimate=cost,
        )(x_p, *flat_args)

    try:
        out_p = run(pl.Buffered(1))
    except Exception:
        # This jax build rejects buffer_count=1 for constant blocks; fall back to
        # the default double-buffering (only costs extra VMEM, not correctness).
        out_p = run(None)

    if needs_pad:
        return out_p[:batch, :input_dim]
    return out_p


def init_params(key, input_dim, hidden_fst, hidden_snd):
    """Deterministic synthetic init matching nn.Linear shapes: W (out, in), b (out,)."""
    dims = [(input_dim, hidden_fst), (hidden_fst, hidden_snd), (hidden_snd, 50),
            (50, hidden_snd), (hidden_snd, hidden_fst), (hidden_fst, input_dim)]
    params = []
    for (d_in, d_out) in dims:
        key, kw, kb = jax.random.split(key, 3)
        bound = 1.0 / (d_in ** 0.5)   # PyTorch default uniform(-1/sqrt(in), 1/sqrt(in))
        w = jax.random.uniform(kw, (d_out, d_in), jnp.float32, -bound, bound)
        b = jax.random.uniform(kb, (d_out,), jnp.float32, -bound, bound)
        params.append((w, b))
    return params


def _reference_forward(x, params):
    h = x
    for (w, b) in params:
        h = jnp.maximum(
            jnp.dot(h, w.T, precision=jax.lax.Precision.HIGHEST) + b, 0.0)
    return h


if __name__ == "__main__":
    key = jax.random.PRNGKey(0)
    kp, kp2, kx1, kx2, kx3 = jax.random.split(key, 5)

    # Small shapes consistent with the module.
    input_dim, hidden_fst, hidden_snd = 64, 32, 16
    params = init_params(kp, input_dim, hidden_fst, hidden_snd)
    prepared = prepare_params(params)   # one-time transpose + 128-lane padding

    # 1) Small batch: single grid step, unaligned feature dim (padded path).
    x = jax.random.normal(kx1, (8, input_dim), jnp.float32)
    out = jax.block_until_ready(autoencoder_forward(x, prepared))
    ref = _reference_forward(x, params)
    assert out.shape == (8, input_dim)
    assert jnp.allclose(out, ref, atol=1e-4, rtol=1e-4), "mismatch (small batch)"

    # 2) batch=400: low-waste tiling (tb=104, grid=4, padded to 416 rows, not 512).
    x_big = jax.random.normal(kx2, (400, input_dim), jnp.float32)
    out_big = jax.block_until_ready(autoencoder_forward(x_big, prepared))
    ref_big = _reference_forward(x_big, params)
    assert out_big.shape == (400, input_dim)
    assert jnp.allclose(out_big, ref_big, atol=1e-4, rtol=1e-4), "mismatch (tiled batch)"

    # 3) Lane/sublane-aligned shapes exercise the no-pad / no-slice fast path.
    input_dim2, hf2, hs2 = 128, 64, 64
    params2 = init_params(kp2, input_dim2, hf2, hs2)
    prepared2 = prepare_params(params2)
    x_al = jax.random.normal(kx3, (64, input_dim2), jnp.float32)
    out_al = jax.block_until_ready(autoencoder_forward(x_al, prepared2))
    ref_al = _reference_forward(x_al, params2)
    assert out_al.shape == (64, input_dim2)
    assert jnp.allclose(out_al, ref_al, atol=1e-4, rtol=1e-4), "mismatch (aligned fast path)"

    print("KERNEL_OK")
</pallas_src>

<mosaic_0001>
module attributes {stable_mosaic.version = 11 : i64} {
  func.func @_autoencoder_kernel(%arg0: i32, %arg1: memref<8x128xf32, #tpu.memory_space<vmem>>, %arg2: memref<128x128xf32, #tpu.memory_space<vmem>>, %arg3: memref<1x128xf32, #tpu.memory_space<vmem>>, %arg4: memref<128x128xf32, #tpu.memory_space<vmem>>, %arg5: memref<1x128xf32, #tpu.memory_space<vmem>>, %arg6: memref<128x128xf32, #tpu.memory_space<vmem>>, %arg7: memref<1x128xf32, #tpu.memory_space<vmem>>, %arg8: memref<128x128xf32, #tpu.memory_space<vmem>>, %arg9: memref<1x128xf32, #tpu.memory_space<vmem>>, %arg10: memref<128x128xf32, #tpu.memory_space<vmem>>, %arg11: memref<1x128xf32, #tpu.memory_space<vmem>>, %arg12: memref<128x128xf32, #tpu.memory_space<vmem>>, %arg13: memref<1x128xf32, #tpu.memory_space<vmem>>, %arg14: memref<8x128xf32, #tpu.memory_space<vmem>>) attributes {dimension_semantics = [#tpu.dimension_semantics<parallel>], iteration_bounds = array<i64: 1>, scalar_prefetch = 0 : i64, scratch_operands = 0 : i64, tpu.core_type = #tpu.core_type<tc>, window_params = [{transform_indices = @transform_0, window_bounds = array<i64: 8, 128>}, {pipeline_mode = #tpu.pipeline_mode<synchronous>, transform_indices = @transform_1, window_bounds = array<i64: 128, 128>}, {pipeline_mode = #tpu.pipeline_mode<synchronous>, transform_indices = @transform_2, window_bounds = array<i64: 1, 128>}, {pipeline_mode = #tpu.pipeline_mode<synchronous>, transform_indices = @transform_3, window_bounds = array<i64: 128, 128>}, {pipeline_mode = #tpu.pipeline_mode<synchronous>, transform_indices = @transform_4, window_bounds = array<i64: 1, 128>}, {pipeline_mode = #tpu.pipeline_mode<synchronous>, transform_indices = @transform_5, window_bounds = array<i64: 128, 128>}, {pipeline_mode = #tpu.pipeline_mode<synchronous>, transform_indices = @transform_6, window_bounds = array<i64: 1, 128>}, {pipeline_mode = #tpu.pipeline_mode<synchronous>, transform_indices = @transform_7, window_bounds = array<i64: 128, 128>}, {pipeline_mode = #tpu.pipeline_mode<synchronous>, transform_indices = @transform_8, window_bounds = array<i64: 1, 128>}, {pipeline_mode = #tpu.pipeline_mode<synchronous>, transform_indices = @transform_9, window_bounds = array<i64: 128, 128>}, {pipeline_mode = #tpu.pipeline_mode<synchronous>, transform_indices = @transform_10, window_bounds = array<i64: 1, 128>}, {pipeline_mode = #tpu.pipeline_mode<synchronous>, transform_indices = @transform_11, window_bounds = array<i64: 128, 128>}, {pipeline_mode = #tpu.pipeline_mode<synchronous>, transform_indices = @transform_12, window_bounds = array<i64: 1, 128>}, {transform_indices = @transform_13, window_bounds = array<i64: 8, 128>}]} {
    %c0 = arith.constant 0 : index
    %c0_0 = arith.constant 0 : index
    %0 = vector.load %arg1[%c0, %c0_0] : memref<8x128xf32, #tpu.memory_space<vmem>>, vector<8x128xf32>
    %c0_1 = arith.constant 0 : index
    %c0_2 = arith.constant 0 : index
    %1 = vector.load %arg2[%c0_1, %c0_2] : memref<128x128xf32, #tpu.memory_space<vmem>>, vector<128x128xf32>
    %cst = arith.constant dense<0.000000e+00> : vector<8x128xf32>
    %2 = tpu.matmul %0, %1, %cst {dimension_numbers = #tpu.dot_dimension_numbers<[1], [0], [0], [1], [0, 0, 1, 1], [], []>, precision = #tpu.contract_precision<fp32>} : vector<8x128xf32>, vector<128x128xf32>, vector<8x128xf32> -> vector<8x128xf32>
    %c0_3 = arith.constant 0 : index
    %c0_4 = arith.constant 0 : index
    %3 = vector.load %arg3[%c0_3, %c0_4] : memref<1x128xf32, #tpu.memory_space<vmem>>, vector<1x128xf32>
    %4 = vector.broadcast %3 : vector<1x128xf32> to vector<8x128xf32>
    %5 = arith.addf %2, %4 : vector<8x128xf32>
    %cst_5 = arith.constant 0.000000e+00 : f32
    %6 = vector.broadcast %cst_5 : f32 to vector<8x128xf32>
    %7 = arith.maximumf %5, %6 : vector<8x128xf32>
    %c0_6 = arith.constant 0 : index
    %c0_7 = arith.constant 0 : index
    %8 = vector.load %arg4[%c0_6, %c0_7] : memref<128x128xf32, #tpu.memory_space<vmem>>, vector<128x128xf32>
    %cst_8 = arith.constant dense<0.000000e+00> : vector<8x128xf32>
    %9 = tpu.matmul %7, %8, %cst_8 {dimension_numbers = #tpu.dot_dimension_numbers<[1], [0], [0], [1], [0, 0, 1, 1], [], []>, precision = #tpu.contract_precision<fp32>} : vector<8x128xf32>, vector<128x128xf32>, vector<8x128xf32> -> vector<8x128xf32>
    %c0_9 = arith.constant 0 : index
    %c0_10 = arith.constant 0 : index
    %10 = vector.load %arg5[%c0_9, %c0_10] : memref<1x128xf32, #tpu.memory_space<vmem>>, vector<1x128xf32>
    %11 = vector.broadcast %10 : vector<1x128xf32> to vector<8x128xf32>
    %12 = arith.addf %9, %11 : vector<8x128xf32>
    %cst_11 = arith.constant 0.000000e+00 : f32
    %13 = vector.broadcast %cst_11 : f32 to vector<8x128xf32>
    %14 = arith.maximumf %12, %13 : vector<8x128xf32>
    %c0_12 = arith.constant 0 : index
    %c0_13 = arith.constant 0 : index
    %15 = vector.load %arg6[%c0_12, %c0_13] : memref<128x128xf32, #tpu.memory_space<vmem>>, vector<128x128xf32>
    %cst_14 = arith.constant dense<0.000000e+00> : vector<8x128xf32>
    %16 = tpu.matmul %14, %15, %cst_14 {dimension_numbers = #tpu.dot_dimension_numbers<[1], [0], [0], [1], [0, 0, 1, 1], [], []>, precision = #tpu.contract_precision<fp32>} : vector<8x128xf32>, vector<128x128xf32>, vector<8x128xf32> -> vector<8x128xf32>
    %c0_15 = arith.constant 0 : index
    %c0_16 = arith.constant 0 : index
    %17 = vector.load %arg7[%c0_15, %c0_16] : memref<1x128xf32, #tpu.memory_space<vmem>>, vector<1x128xf32>
    %18 = vector.broadcast %17 : vector<1x128xf32> to vector<8x128xf32>
    %19 = arith.addf %16, %18 : vector<8x128xf32>
    %cst_17 = arith.constant 0.000000e+00 : f32
    %20 = vector.broadcast %cst_17 : f32 to vector<8x128xf32>
    %21 = arith.maximumf %19, %20 : vector<8x128xf32>
    %c0_18 = arith.constant 0 : index
    %c0_19 = arith.constant 0 : index
    %22 = vector.load %arg8[%c0_18, %c0_19] : memref<128x128xf32, #tpu.memory_space<vmem>>, vector<128x128xf32>
    %cst_20 = arith.constant dense<0.000000e+00> : vector<8x128xf32>
    %23 = tpu.matmul %21, %22, %cst_20 {dimension_numbers = #tpu.dot_dimension_numbers<[1], [0], [0], [1], [0, 0, 1, 1], [], []>, precision = #tpu.contract_precision<fp32>} : vector<8x128xf32>, vector<128x128xf32>, vector<8x128xf32> -> vector<8x128xf32>
    %c0_21 = arith.constant 0 : index
    %c0_22 = arith.constant 0 : index
    %24 = vector.load %arg9[%c0_21, %c0_22] : memref<1x128xf32, #tpu.memory_space<vmem>>, vector<1x128xf32>
    %25 = vector.broadcast %24 : vector<1x128xf32> to vector<8x128xf32>
    %26 = arith.addf %23, %25 : vector<8x128xf32>
    %cst_23 = arith.constant 0.000000e+00 : f32
    %27 = vector.broadcast %cst_23 : f32 to vector<8x128xf32>
    %28 = arith.maximumf %26, %27 : vector<8x128xf32>
    %c0_24 = arith.constant 0 : index
    %c0_25 = arith.constant 0 : index
    %29 = vector.load %arg10[%c0_24, %c0_25] : memref<128x128xf32, #tpu.memory_space<vmem>>, vector<128x128xf32>
    %cst_26 = arith.constant dense<0.000000e+00> : vector<8x128xf32>
    %30 = tpu.matmul %28, %29, %cst_26 {dimension_numbers = #tpu.dot_dimension_numbers<[1], [0], [0], [1], [0, 0, 1, 1], [], []>, precision = #tpu.contract_precision<fp32>} : vector<8x128xf32>, vector<128x128xf32>, vector<8x128xf32> -> vector<8x128xf32>
    %c0_27 = arith.constant 0 : index
    %c0_28 = arith.constant 0 : index
    %31 = vector.load %arg11[%c0_27, %c0_28] : memref<1x128xf32, #tpu.memory_space<vmem>>, vector<1x128xf32>
    %32 = vector.broadcast %31 : vector<1x128xf32> to vector<8x128xf32>
    %33 = arith.addf %30, %32 : vector<8x128xf32>
    %cst_29 = arith.constant 0.000000e+00 : f32
    %34 = vector.broadcast %cst_29 : f32 to vector<8x128xf32>
    %35 = arith.maximumf %33, %34 : vector<8x128xf32>
    %c0_30 = arith.constant 0 : index
    %c0_31 = arith.constant 0 : index
    %36 = vector.load %arg12[%c0_30, %c0_31] : memref<128x128xf32, #tpu.memory_space<vmem>>, vector<128x128xf32>
    %cst_32 = arith.constant dense<0.000000e+00> : vector<8x128xf32>
    %37 = tpu.matmul %35, %36, %cst_32 {dimension_numbers = #tpu.dot_dimension_numbers<[1], [0], [0], [1], [0, 0, 1, 1], [], []>, precision = #tpu.contract_precision<fp32>} : vector<8x128xf32>, vector<128x128xf32>, vector<8x128xf32> -> vector<8x128xf32>
    %c0_33 = arith.constant 0 : index
    %c0_34 = arith.constant 0 : index
    %38 = vector.load %arg13[%c0_33, %c0_34] : memref<1x128xf32, #tpu.memory_space<vmem>>, vector<1x128xf32>
    %39 = vector.broadcast %38 : vector<1x128xf32> to vector<8x128xf32>
    %40 = arith.addf %37, %39 : vector<8x128xf32>
    %cst_35 = arith.constant 0.000000e+00 : f32
    %41 = vector.broadcast %cst_35 : f32 to vector<8x128xf32>
    %42 = arith.maximumf %40, %41 : vector<8x128xf32>
    %c0_36 = arith.constant 0 : index
    %c0_37 = arith.constant 0 : index
    %43 = vector.load %arg14[%c0_36, %c0_37] : memref<8x128xf32, #tpu.memory_space<vmem>>, vector<8x128xf32>
    tpu.vector_store %arg14[%c0_36, %c0_37], %42 {strides = array<i32>} : memref<8x128xf32, #tpu.memory_space<vmem>>, vector<8x128xf32>,
    return
  }
  func.func @transform_0(%arg0: i32) -> (i32, i32) {
    %c0_i32 = arith.constant 0 : i32
    %c0_i32_0 = arith.constant 0 : i32
    return %arg0, %c0_i32 : i32, i32
  }
  func.func @transform_1(%arg0: i32) -> (i32, i32) {
    %c0_i32 = arith.constant 0 : i32
    %c0_i32_0 = arith.constant 0 : i32
    %c0_i32_1 = arith.constant 0 : i32
    return %c0_i32, %c0_i32_0 : i32, i32
  }
  func.func @transform_2(%arg0: i32) -> (i32, i32) {
    %c0_i32 = arith.constant 0 : i32
    %c0_i32_0 = arith.constant 0 : i32
    %c0_i32_1 = arith.constant 0 : i32
    return %c0_i32, %c0_i32_0 : i32, i32
  }
  func.func @transform_3(%arg0: i32) -> (i32, i32) {
    %c0_i32 = arith.constant 0 : i32
    %c0_i32_0 = arith.constant 0 : i32
    %c0_i32_1 = arith.constant 0 : i32
    return %c0_i32, %c0_i32_0 : i32, i32
  }
  func.func @transform_4(%arg0: i32) -> (i32, i32) {
    %c0_i32 = arith.constant 0 : i32
    %c0_i32_0 = arith.constant 0 : i32
    %c0_i32_1 = arith.constant 0 : i32
    return %c0_i32, %c0_i32_0 : i32, i32
  }
  func.func @transform_5(%arg0: i32) -> (i32, i32) {
    %c0_i32 = arith.constant 0 : i32
    %c0_i32_0 = arith.constant 0 : i32
    %c0_i32_1 = arith.constant 0 : i32
    return %c0_i32, %c0_i32_0 : i32, i32
  }
  func.func @transform_6(%arg0: i32) -> (i32, i32) {
    %c0_i32 = arith.constant 0 : i32
    %c0_i32_0 = arith.constant 0 : i32
    %c0_i32_1 = arith.constant 0 : i32
    return %c0_i32, %c0_i32_0 : i32, i32
  }
  func.func @transform_7(%arg0: i32) -> (i32, i32) {
    %c0_i32 = arith.constant 0 : i32
    %c0_i32_0 = arith.constant 0 : i32
    %c0_i32_1 = arith.constant 0 : i32
    return %c0_i32, %c0_i32_0 : i32, i32
  }
  func.func @transform_8(%arg0: i32) -> (i32, i32) {
    %c0_i32 = arith.constant 0 : i32
    %c0_i32_0 = arith.constant 0 : i32
    %c0_i32_1 = arith.constant 0 : i32
    return %c0_i32, %c0_i32_0 : i32, i32
  }
  func.func @transform_9(%arg0: i32) -> (i32, i32) {
    %c0_i32 = arith.constant 0 : i32
    %c0_i32_0 = arith.constant 0 : i32
    %c0_i32_1 = arith.constant 0 : i32
    return %c0_i32, %c0_i32_0 : i32, i32
  }
  func.func @transform_10(%arg0: i32) -> (i32, i32) {
    %c0_i32 = arith.constant 0 : i32
    %c0_i32_0 = arith.constant 0 : i32
    %c0_i32_1 = arith.constant 0 : i32
    return %c0_i32, %c0_i32_0 : i32, i32
  }
  func.func @transform_11(%arg0: i32) -> (i32, i32) {
    %c0_i32 = arith.constant 0 : i32
    %c0_i32_0 = arith.constant 0 : i32
    %c0_i32_1 = arith.constant 0 : i32
    return %c0_i32, %c0_i32_0 : i32, i32
  }
  func.func @transform_12(%arg0: i32) -> (i32, i32) {
    %c0_i32 = arith.constant 0 : i32
    %c0_i32_0 = arith.constant 0 : i32
    %c0_i32_1 = arith.constant 0 : i32
    return %c0_i32, %c0_i32_0 : i32, i32
  }
  func.func @transform_13(%arg0: i32) -> (i32, i32) {
    %c0_i32 = arith.constant 0 : i32
    %c0_i32_0 = arith.constant 0 : i32
    return %arg0, %c0_i32 : i32, i32
  }
}

module attributes {stable_mosaic.version = 11 : i64} {
  func.func @_autoencoder_kernel(%arg0: i32, %arg1: memref<8x128xf32, #tpu.memory_space<vmem>>, %arg2: memref<128x128xf32, #tpu.memory_space<vmem>>, %arg3: memref<1x128xf32, #tpu.memory_space<vmem>>, %arg4: memref<128x128xf32, #tpu.memory_space<vmem>>, %arg5: memref<1x128xf32, #tpu.memory_space<vmem>>, %arg6: memref<128x128xf32, #tpu.memory_space<vmem>>, %arg7: memref<1x128xf32, #tpu.memory_space<vmem>>, %arg8: memref<128x128xf32, #tpu.memory_space<vmem>>, %arg9: memref<1x128xf32, #tpu.memory_space<vmem>>, %arg10: memref<128x128xf32, #tpu.memory_space<vmem>>, %arg11: memref<1x128xf32, #tpu.memory_space<vmem>>, %arg12: memref<128x128xf32, #tpu.memory_space<vmem>>, %arg13: memref<1x128xf32, #tpu.memory_space<vmem>>, %arg14: memref<8x128xf32, #tpu.memory_space<vmem>>) attributes {dimension_semantics = [#tpu.dimension_semantics<parallel>], iteration_bounds = array<i64: 1>, scalar_prefetch = 0 : i64, scratch_operands = 0 : i64, tpu.core_type = #tpu.core_type<tc>, window_params = [{transform_indices = @transform_0, window_bounds = array<i64: 8, 128>}, {pipeline_mode = #tpu.pipeline_mode<synchronous>, transform_indices = @transform_1, window_bounds = array<i64: 128, 128>}, {pipeline_mode = #tpu.pipeline_mode<synchronous>, transform_indices = @transform_2, window_bounds = array<i64: 1, 128>}, {pipeline_mode = #tpu.pipeline_mode<synchronous>, transform_indices = @transform_3, window_bounds = array<i64: 128, 128>}, {pipeline_mode = #tpu.pipeline_mode<synchronous>, transform_indices = @transform_4, window_bounds = array<i64: 1, 128>}, {pipeline_mode = #tpu.pipeline_mode<synchronous>, transform_indices = @transform_5, window_bounds = array<i64: 128, 128>}, {pipeline_mode = #tpu.pipeline_mode<synchronous>, transform_indices = @transform_6, window_bounds = array<i64: 1, 128>}, {pipeline_mode = #tpu.pipeline_mode<synchronous>, transform_indices = @transform_7, window_bounds = array<i64: 128, 128>}, {pipeline_mode = #tpu.pipeline_mode<synchronous>, transform_indices = @transform_8, window_bounds = array<i64: 1, 128>}, {pipeline_mode = #tpu.pipeline_mode<synchronous>, transform_indices = @transform_9, window_bounds = array<i64: 128, 128>}, {pipeline_mode = #tpu.pipeline_mode<synchronous>, transform_indices = @transform_10, window_bounds = array<i64: 1, 128>}, {pipeline_mode = #tpu.pipeline_mode<synchronous>, transform_indices = @transform_11, window_bounds = array<i64: 128, 128>}, {pipeline_mode = #tpu.pipeline_mode<synchronous>, transform_indices = @transform_12, window_bounds = array<i64: 1, 128>}, {transform_indices = @transform_13, window_bounds = array<i64: 8, 128>}]} {
    %c0 = arith.constant 0 : index
    %c0_0 = arith.constant 0 : index
    %0 = vector.load %arg1[%c0, %c0_0] : memref<8x128xf32, #tpu.memory_space<vmem>>, vector<8x128xf32>
    %c0_1 = arith.constant 0 : index
    %c0_2 = arith.constant 0 : index
    %1 = vector.load %arg2[%c0_1, %c0_2] : memref<128x128xf32, #tpu.memory_space<vmem>>, vector<128x128xf32>
    %cst = arith.constant dense<0.000000e+00> : vector<8x128xf32>
    %2 = tpu.matmul %0, %1, %cst {dimension_numbers = #tpu.dot_dimension_numbers<[1], [0], [0], [1], [0, 0, 1, 1], [], []>, precision = #tpu.contract_precision<fp32>} : vector<8x128xf32>, vector<128x128xf32>, vector<8x128xf32> -> vector<8x128xf32>
    %c0_3 = arith.constant 0 : index
    %c0_4 = arith.constant 0 : index
    %3 = vector.load %arg3[%c0_3, %c0_4] : memref<1x128xf32, #tpu.memory_space<vmem>>, vector<1x128xf32>
    %4 = vector.broadcast %3 : vector<1x128xf32> to vector<8x128xf32>
    %5 = arith.addf %2, %4 : vector<8x128xf32>
    %cst_5 = arith.constant 0.000000e+00 : f32
    %6 = vector.broadcast %cst_5 : f32 to vector<8x128xf32>
    %7 = arith.maximumf %5, %6 : vector<8x128xf32>
    %c0_6 = arith.constant 0 : index
    %c0_7 = arith.constant 0 : index
    %8 = vector.load %arg4[%c0_6, %c0_7] : memref<128x128xf32, #tpu.memory_space<vmem>>, vector<128x128xf32>
    %cst_8 = arith.constant dense<0.000000e+00> : vector<8x128xf32>
    %9 = tpu.matmul %7, %8, %cst_8 {dimension_numbers = #tpu.dot_dimension_numbers<[1], [0], [0], [1], [0, 0, 1, 1], [], []>, precision = #tpu.contract_precision<fp32>} : vector<8x128xf32>, vector<128x128xf32>, vector<8x128xf32> -> vector<8x128xf32>
    %c0_9 = arith.constant 0 : index
    %c0_10 = arith.constant 0 : index
    %10 = vector.load %arg5[%c0_9, %c0_10] : memref<1x128xf32, #tpu.memory_space<vmem>>, vector<1x128xf32>
    %11 = vector.broadcast %10 : vector<1x128xf32> to vector<8x128xf32>
    %12 = arith.addf %9, %11 : vector<8x128xf32>
    %cst_11 = arith.constant 0.000000e+00 : f32
    %13 = vector.broadcast %cst_11 : f32 to vector<8x128xf32>
    %14 = arith.maximumf %12, %13 : vector<8x128xf32>
    %c0_12 = arith.constant 0 : index
    %c0_13 = arith.constant 0 : index
    %15 = vector.load %arg6[%c0_12, %c0_13] : memref<128x128xf32, #tpu.memory_space<vmem>>, vector<128x128xf32>
    %cst_14 = arith.constant dense<0.000000e+00> : vector<8x128xf32>
    %16 = tpu.matmul %14, %15, %cst_14 {dimension_numbers = #tpu.dot_dimension_numbers<[1], [0], [0], [1], [0, 0, 1, 1], [], []>, precision = #tpu.contract_precision<fp32>} : vector<8x128xf32>, vector<128x128xf32>, vector<8x128xf32> -> vector<8x128xf32>
    %c0_15 = arith.constant 0 : index
    %c0_16 = arith.constant 0 : index
    %17 = vector.load %arg7[%c0_15, %c0_16] : memref<1x128xf32, #tpu.memory_space<vmem>>, vector<1x128xf32>
    %18 = vector.broadcast %17 : vector<1x128xf32> to vector<8x128xf32>
    %19 = arith.addf %16, %18 : vector<8x128xf32>
    %cst_17 = arith.constant 0.000000e+00 : f32
    %20 = vector.broadcast %cst_17 : f32 to vector<8x128xf32>
    %21 = arith.maximumf %19, %20 : vector<8x128xf32>
    %c0_18 = arith.constant 0 : index
    %c0_19 = arith.constant 0 : index
    %22 = vector.load %arg8[%c0_18, %c0_19] : memref<128x128xf32, #tpu.memory_space<vmem>>, vector<128x128xf32>
    %cst_20 = arith.constant dense<0.000000e+00> : vector<8x128xf32>
    %23 = tpu.matmul %21, %22, %cst_20 {dimension_numbers = #tpu.dot_dimension_numbers<[1], [0], [0], [1], [0, 0, 1, 1], [], []>, precision = #tpu.contract_precision<fp32>} : vector<8x128xf32>, vector<128x128xf32>, vector<8x128xf32> -> vector<8x128xf32>
    %c0_21 = arith.constant 0 : index
    %c0_22 = arith.constant 0 : index
    %24 = vector.load %arg9[%c0_21, %c0_22] : memref<1x128xf32, #tpu.memory_space<vmem>>, vector<1x128xf32>
    %25 = vector.broadcast %24 : vector<1x128xf32> to vector<8x128xf32>
    %26 = arith.addf %23, %25 : vector<8x128xf32>
    %cst_23 = arith.constant 0.000000e+00 : f32
    %27 = vector.broadcast %cst_23 : f32 to vector<8x128xf32>
    %28 = arith.maximumf %26, %27 : vector<8x128xf32>
    %c0_24 = arith.constant 0 : index
    %c0_25 = arith.constant 0 : index
    %29 = vector.load %arg10[%c0_24, %c0_25] : memref<128x128xf32, #tpu.memory_space<vmem>>, vector<128x128xf32>
    %cst_26 = arith.constant dense<0.000000e+00> : vector<8x128xf32>
    %30 = tpu.matmul %28, %29, %cst_26 {dimension_numbers = #tpu.dot_dimension_numbers<[1], [0], [0], [1], [0, 0, 1, 1], [], []>, precision = #tpu.contract_precision<fp32>} : vector<8x128xf32>, vector<128x128xf32>, vector<8x128xf32> -> vector<8x128xf32>
    %c0_27 = arith.constant 0 : index
    %c0_28 = arith.constant 0 : index
    %31 = vector.load %arg11[%c0_27, %c0_28] : memref<1x128xf32, #tpu.memory_space<vmem>>, vector<1x128xf32>
    %32 = vector.broadcast %31 : vector<1x128xf32> to vector<8x128xf32>
    %33 = arith.addf %30, %32 : vector<8x128xf32>
    %cst_29 = arith.constant 0.000000e+00 : f32
    %34 = vector.broadcast %cst_29 : f32 to vector<8x128xf32>
    %35 = arith.maximumf %33, %34 : vector<8x128xf32>
    %c0_30 = arith.constant 0 : index
    %c0_31 = arith.constant 0 : index
    %36 = vector.load %arg12[%c0_30, %c0_31] : memref<128x128xf32, #tpu.memory_space<vmem>>, vector<128x128xf32>
    %cst_32 = arith.constant dense<0.000000e+00> : vector<8x128xf32>
    %37 = tpu.matmul %35, %36, %cst_32 {dimension_numbers = #tpu.dot_dimension_numbers<[1], [0], [0], [1], [0, 0, 1, 1], [], []>, precision = #tpu.contract_precision<fp32>} : vector<8x128xf32>, vector<128x128xf32>, vector<8x128xf32> -> vector<8x128xf32>
    %c0_33 = arith.constant 0 : index
    %c0_34 = arith.constant 0 : index
    %38 = vector.load %arg13[%c0_33, %c0_34] : memref<1x128xf32, #tpu.memory_space<vmem>>, vector<1x128xf32>
    %39 = vector.broadcast %38 : vector<1x128xf32> to vector<8x128xf32>
    %40 = arith.addf %37, %39 : vector<8x128xf32>
    %cst_35 = arith.constant 0.000000e+00 : f32
    %41 = vector.broadcast %cst_35 : f32 to vector<8x128xf32>
    %42 = arith.maximumf %40, %41 : vector<8x128xf32>
    %c0_36 = arith.constant 0 : index
    %c0_37 = arith.constant 0 : index
    %43 = vector.load %arg14[%c0_36, %c0_37] : memref<8x128xf32, #tpu.memory_space<vmem>>, vector<8x128xf32>
    tpu.vector_store %arg14[%c0_36, %c0_37], %42 {strides = array<i32>} : memref<8x128xf32, #tpu.memory_space<vmem>>, vector<8x128xf32>,
    return
  }
  func.func @transform_0(%arg0: i32) -> (i32, i32) {
    %c0_i32 = arith.constant 0 : i32
    %c0_i32_0 = arith.constant 0 : i32
    return %arg0, %c0_i32 : i32, i32
  }
  func.func @transform_1(%arg0: i32) -> (i32, i32) {
    %c0_i32 = arith.constant 0 : i32
    %c0_i32_0 = arith.constant 0 : i32
    %c0_i32_1 = arith.constant 0 : i32
    return %c0_i32, %c0_i32_0 : i32, i32
  }
  func.func @transform_2(%arg0: i32) -> (i32, i32) {
    %c0_i32 = arith.constant 0 : i32
    %c0_i32_0 = arith.constant 0 : i32
    %c0_i32_1 = arith.constant 0 : i32
    return %c0_i32, %c0_i32_0 : i32, i32
  }
  func.func @transform_3(%arg0: i32) -> (i32, i32) {
    %c0_i32 = arith.constant 0 : i32
    %c0_i32_0 = arith.constant 0 : i32
    %c0_i32_1 = arith.constant 0 : i32
    return %c0_i32, %c0_i32_0 : i32, i32
  }
  func.func @transform_4(%arg0: i32) -> (i32, i32) {
    %c0_i32 = arith.constant 0 : i32
    %c0_i32_0 = arith.constant 0 : i32
    %c0_i32_1 = arith.constant 0 : i32
    return %c0_i32, %c0_i32_0 : i32, i32
  }
  func.func @transform_5(%arg0: i32) -> (i32, i32) {
    %c0_i32 = arith.constant 0 : i32
    %c0_i32_0 = arith.constant 0 : i32
    %c0_i32_1 = arith.constant 0 : i32
    return %c0_i32, %c0_i32_0 : i32, i32
  }
  func.func @transform_6(%arg0: i32) -> (i32, i32) {
    %c0_i32 = arith.constant 0 : i32
    %c0_i32_0 = arith.constant 0 : i32
    %c0_i32_1 = arith.constant 0 : i32
    return %c0_i32, %c0_i32_0 : i32, i32
  }
  func.func @transform_7(%arg0: i32) -> (i32, i32) {
    %c0_i32 = arith.constant 0 : i32
    %c0_i32_0 = arith.constant 0 : i32
    %c0_i32_1 = arith.constant 0 : i32
    return %c0_i32, %c0_i32_0 : i32, i32
  }
  func.func @transform_8(%arg0: i32) -> (i32, i32) {
    %c0_i32 = arith.constant 0 : i32
    %c0_i32_0 = arith.constant 0 : i32
    %c0_i32_1 = arith.constant 0 : i32
    return %c0_i32, %c0_i32_0 : i32, i32
  }
  func.func @transform_9(%arg0: i32) -> (i32, i32) {
    %c0_i32 = arith.constant 0 : i32
    %c0_i32_0 = arith.constant 0 : i32
    %c0_i32_1 = arith.constant 0 : i32
    return %c0_i32, %c0_i32_0 : i32, i32
  }
  func.func @transform_10(%arg0: i32) -> (i32, i32) {
    %c0_i32 = arith.constant 0 : i32
    %c0_i32_0 = arith.constant 0 : i32
    %c0_i32_1 = arith.constant 0 : i32
    return %c0_i32, %c0_i32_0 : i32, i32
  }
  func.func @transform_11(%arg0: i32) -> (i32, i32) {
    %c0_i32 = arith.constant 0 : i32
    %c0_i32_0 = arith.constant 0 : i32
    %c0_i32_1 = arith.constant 0 : i32
    return %c0_i32, %c0_i32_0 : i32, i32
  }
  func.func @transform_12(%arg0: i32) -> (i32, i32) {
    %c0_i32 = arith.constant 0 : i32
    %c0_i32_0 = arith.constant 0 : i32
    %c0_i32_1 = arith.constant 0 : i32
    return %c0_i32, %c0_i32_0 : i32, i32
  }
  func.func @transform_13(%arg0: i32) -> (i32, i32) {
    %c0_i32 = arith.constant 0 : i32
    %c0_i32_0 = arith.constant 0 : i32
    return %arg0, %c0_i32 : i32, i32
  }
}

</mosaic_0001>

<llo_original>
// kernel: tpu_custom_call.1
$region0: #{tpu_custom_call.1}
  #allocation0 [shape = 'u32[]', space=smem, size = 0x4, offset = 0x4, fixed_abs, tag = 'smem constant byte address 0x4 - core index']
  #allocation1 [shape = 'u32[144,128]{1,0:T(1,128)}', space=vmem, size = 0x12000, scoped, tag = 'internal scratch']
  %s0 = inlined_call_operand.hbm [shape: f32[8,128], index: 0, kind: input, shape index: {}]
  %s1 = inlined_call_operand.hbm [shape: f32[128,128], index: 1, kind: input, shape index: {}]
  %s2 = inlined_call_operand.vmem [shape: f32[1,128], index: 2, kind: input, shape index: {}]
  %s3 = inlined_call_operand.hbm [shape: f32[128,128], index: 3, kind: input, shape index: {}]
  %s4 = inlined_call_operand.vmem [shape: f32[1,128], index: 4, kind: input, shape index: {}]
  %s5 = inlined_call_operand.hbm [shape: f32[128,128], index: 5, kind: input, shape index: {}]
  %s6 = inlined_call_operand.vmem [shape: f32[1,128], index: 6, kind: input, shape index: {}]
  %s7 = inlined_call_operand.hbm [shape: f32[128,128], index: 7, kind: input, shape index: {}]
  %s8 = inlined_call_operand.vmem [shape: f32[1,128], index: 8, kind: input, shape index: {}]
  %s9 = inlined_call_operand.hbm [shape: f32[128,128], index: 9, kind: input, shape index: {}]
  %s10 = inlined_call_operand.vmem [shape: f32[1,128], index: 10, kind: input, shape index: {}]
  %s11 = inlined_call_operand.hbm [shape: f32[128,128], index: 11, kind: input, shape index: {}]
  %s12 = inlined_call_operand.vmem [shape: f32[1,128], index: 12, kind: input, shape index: {}]
  %s13 = inlined_call_operand.hbm [shape: f32[8,128], index: 13, kind: output, shape index: {}]
  %s14 = sld [smem:[#allocation0]]
  $region90: #{tpu_custom_call.1} parent=0
    _
  %s16 = ssub.s32 1, %s14
  %s17 = scalar_select 0, %s16, %s14
  $region1: #{tpu_custom_call.1} parent=0
    #allocation2 [shape = 'u8[4096]{0}', space=vmem, size = 0x1000, scoped, tag = 'input window, operand 0, single buffered']
    #allocation3 [shape = 's32[1]{0}', space=sflag, size = 0x4, scoped, tag = 'scoped memory for tpu_custom_call.1']
    #allocation4 [shape = 's32[1]{0}', space=sflag, size = 0x4, scoped, tag = 'scoped memory for tpu_custom_call.1']
    #allocation5 [shape = 'u8[65536]{0}', space=vmem, size = 0x10000, scoped, tag = 'input window, operand 1, single buffered']
    #allocation6 [shape = 's32[1]{0}', space=sflag, size = 0x4, scoped, tag = 'scoped memory for tpu_custom_call.1']
    #allocation7 [shape = 'u8[65536]{0}', space=vmem, size = 0x10000, scoped, tag = 'input window, operand 3, single buffered']
    #allocation8 [shape = 'u8[65536]{0}', space=vmem, size = 0x10000, scoped, tag = 'input window, operand 5, single buffered']
    #allocation9 [shape = 's32[1]{0}', space=sflag, size = 0x4, scoped, tag = 'scoped memory for tpu_custom_call.1']
    #allocation10 [shape = 'u8[65536]{0}', space=vmem, size = 0x10000, scoped, tag = 'input window, operand 7, single buffered']
    #allocation11 [shape = 'u8[65536]{0}', space=vmem, size = 0x10000, scoped, tag = 'input window, operand 9, single buffered']
    #allocation12 [shape = 's32[1]{0}', space=sflag, size = 0x4, scoped, tag = 'scoped memory for tpu_custom_call.1']
    #allocation13 [shape = 'u8[65536]{0}', space=vmem, size = 0x10000, scoped, tag = 'input window, operand 11, single buffered']
    #allocation14 [shape = 'u8[4096]{0}', space=vmem, size = 0x1000, scoped, tag = 'output window, operand 0, single buffered']
    %18 = vsyncpa [#allocation3], 0
    %19 = vsyncpa [#allocation6], 0
    %20 = vsyncpa [#allocation9], 0
    %21 = vsyncpa [#allocation12], 0
    %22 = vsyncpa [#allocation4], 0
    // Predicated region
    $region2: #{tpu_custom_call.1} parent=1 // pred_check
      _
    $region3: #{tpu_custom_call.1} parent=1 // pred_check_branch
      %24 = sbr.rel (0) target = $region5
    $region4: #{tpu_custom_call.1} parent=1 // pred_region
      %s26 = ssub.s32 128, 128
      %27 = vsyncadd [#allocation3], %s26
      %s29 = sshll.u32 [#allocation2], 4
      %s30 = int_to_ptr.vmem [resolvable:$true] %s29
      %32 = dma.hbm_to_vmem [thread:$0]  %s0, 128, %s30, [#allocation3]
    $region5: #{tpu_custom_call.1} parent=1 // pred_fallthru
      _
    // Predicated region
    $region6: #{tpu_custom_call.1} parent=1 // pred_check
      _
    $region7: #{tpu_custom_call.1} parent=1 // pred_check_branch
      %34 = sbr.rel (0) target = $region9
    $region8: #{tpu_custom_call.1} parent=1 // pred_region
      %s36 = ssub.s32 2048, 2048
      %37 = vsyncadd [#allocation6], %s36
      %s38 = sshll.u32 [#allocation5], 4
      %s39 = int_to_ptr.vmem [resolvable:$true] %s38
      %44 = dma.hbm_to_vmem [thread:$0]  %s1, 2048, %s39, [#allocation6], 128, 128, 8
    $region9: #{tpu_custom_call.1} parent=1 // pred_fallthru
      _
    // Predicated region
    $region10: #{tpu_custom_call.1} parent=1 // pred_check
      _
    $region11: #{tpu_custom_call.1} parent=1 // pred_check_branch
      %46 = sbr.rel (0) target = $region13
    $region12: #{tpu_custom_call.1} parent=1 // pred_region
      _
    $region13: #{tpu_custom_call.1} parent=1 // pred_fallthru
      _
    // Predicated region
    $region14: #{tpu_custom_call.1} parent=1 // pred_check
      _
    $region15: #{tpu_custom_call.1} parent=1 // pred_check_branch
      %48 = sbr.rel (0) target = $region17
    $region16: #{tpu_custom_call.1} parent=1 // pred_region
      %s50 = ssub.s32 2048, 2048
      %51 = vsyncadd [#allocation6], %s50
      %s52 = sshll.u32 [#allocation7], 4
      %s53 = int_to_ptr.vmem [resolvable:$true] %s52
      %58 = dma.hbm_to_vmem [thread:$0]  %s3, 2048, %s53, [#allocation6], 128, 128, 8
    $region17: #{tpu_custom_call.1} parent=1 // pred_fallthru
      _
    // Predicated region
    $region18: #{tpu_custom_call.1} parent=1 // pred_check
      _
    $region19: #{tpu_custom_call.1} parent=1 // pred_check_branch
      %60 = sbr.rel (0) target = $region21
    $region20: #{tpu_custom_call.1} parent=1 // pred_region
      _
    $region21: #{tpu_custom_call.1} parent=1 // pred_fallthru
      _
    // Predicated region
    $region22: #{tpu_custom_call.1} parent=1 // pred_check
      _
    $region23: #{tpu_custom_call.1} parent=1 // pred_check_branch
      %62 = sbr.rel (0) target = $region25
    $region24: #{tpu_custom_call.1} parent=1 // pred_region
      %s64 = ssub.s32 2048, 2048
      %65 = vsyncadd [#allocation9], %s64
      %s66 = sshll.u32 [#allocation8], 4
      %s67 = int_to_ptr.vmem [resolvable:$true] %s66
      %72 = dma.hbm_to_vmem [thread:$0]  %s5, 2048, %s67, [#allocation9], 128, 128, 8
    $region25: #{tpu_custom_call.1} parent=1 // pred_fallthru
      _
    // Predicated region
    $region26: #{tpu_custom_call.1} parent=1 // pred_check
      _
    $region27: #{tpu_custom_call.1} parent=1 // pred_check_branch
      %74 = sbr.rel (0) target = $region29
    $region28: #{tpu_custom_call.1} parent=1 // pred_region
      _
    $region29: #{tpu_custom_call.1} parent=1 // pred_fallthru
      _
    // Predicated region
    $region30: #{tpu_custom_call.1} parent=1 // pred_check
      _
    $region31: #{tpu_custom_call.1} parent=1 // pred_check_branch
      %76 = sbr.rel (0) target = $region33
    $region32: #{tpu_custom_call.1} parent=1 // pred_region
      %s78 = ssub.s32 2048, 2048
      %79 = vsyncadd [#allocation9], %s78
      %s80 = sshll.u32 [#allocation10], 4
      %s81 = int_to_ptr.vmem [resolvable:$true] %s80
      %86 = dma.hbm_to_vmem [thread:$0]  %s7, 2048, %s81, [#allocation9], 128, 128, 8
    $region33: #{tpu_custom_call.1} parent=1 // pred_fallthru
      _
    // Predicated region
    $region34: #{tpu_custom_call.1} parent=1 // pred_check
      _
    $region35: #{tpu_custom_call.1} parent=1 // pred_check_branch
      %88 = sbr.rel (0) target = $region37
    $region36: #{tpu_custom_call.1} parent=1 // pred_region
      _
    $region37: #{tpu_custom_call.1} parent=1 // pred_fallthru
      _
    // Predicated region
    $region38: #{tpu_custom_call.1} parent=1 // pred_check
      _
    $region39: #{tpu_custom_call.1} parent=1 // pred_check_branch
      %90 = sbr.rel (0) target = $region41
    $region40: #{tpu_custom_call.1} parent=1 // pred_region
      %s92 = ssub.s32 2048, 2048
      %93 = vsyncadd [#allocation12], %s92
      %s94 = sshll.u32 [#allocation11], 4
      %s95 = int_to_ptr.vmem [resolvable:$true] %s94
      %100 = dma.hbm_to_vmem [thread:$0]  %s9, 2048, %s95, [#allocation12], 128, 128, 8
    $region41: #{tpu_custom_call.1} parent=1 // pred_fallthru
      _
    // Predicated region
    $region42: #{tpu_custom_call.1} parent=1 // pred_check
      _
    $region43: #{tpu_custom_call.1} parent=1 // pred_check_branch
      %102 = sbr.rel (0) target = $region45
    $region44: #{tpu_custom_call.1} parent=1 // pred_region
      _
    $region45: #{tpu_custom_call.1} parent=1 // pred_fallthru
      _
    // Predicated region
    $region46: #{tpu_custom_call.1} parent=1 // pred_check
      _
    $region47: #{tpu_custom_call.1} parent=1 // pred_check_branch
      %104 = sbr.rel (0) target = $region49
    $region48: #{tpu_custom_call.1} parent=1 // pred_region
      %s106 = ssub.s32 2048, 2048
      %107 = vsyncadd [#allocation12], %s106
      %s108 = sshll.u32 [#allocation13], 4
      %s109 = int_to_ptr.vmem [resolvable:$true] %s108
      %114 = dma.hbm_to_vmem [thread:$0]  %s11, 2048, %s109, [#allocation12], 128, 128, 8
    $region49: #{tpu_custom_call.1} parent=1 // pred_fallthru
      _
    // Predicated region
    $region50: #{tpu_custom_call.1} parent=1 // pred_check
      _
    $region51: #{tpu_custom_call.1} parent=1 // pred_check_branch
      %116 = sbr.rel (0) target = $region53
    $region52: #{tpu_custom_call.1} parent=1 // pred_region
      _
    $region53: #{tpu_custom_call.1} parent=1 // pred_fallthru
      _
    // Predicated region
    $region54: #{tpu_custom_call.1} parent=1 // pred_check
      _
    $region55: #{tpu_custom_call.1} parent=1 // pred_check_branch
      %118 = sbr.rel (0) target = $region57
    $region56: #{tpu_custom_call.1} parent=1 // pred_region
      %119 = dma.done [#allocation3], 128
    $region57: #{tpu_custom_call.1} parent=1 // pred_fallthru
      _
    // Predicated region
    $region58: #{tpu_custom_call.1} parent=1 // pred_check
      _
    $region59: #{tpu_custom_call.1} parent=1 // pred_check_branch
      %121 = sbr.rel (0) target = $region61
    $region60: #{tpu_custom_call.1} parent=1 // pred_region
      %122 = dma.done [#allocation6], 2048
    $region61: #{tpu_custom_call.1} parent=1 // pred_fallthru
      _
    // Predicated region
    $region62: #{tpu_custom_call.1} parent=1 // pred_check
      _
    $region63: #{tpu_custom_call.1} parent=1 // pred_check_branch
      %124 = sbr.rel (0) target = $region65
    $region64: #{tpu_custom_call.1} parent=1 // pred_region
      %125 = dma.done [#allocation6], 2048
    $region65: #{tpu_custom_call.1} parent=1 // pred_fallthru
      _
    // Predicated region
    $region66: #{tpu_custom_call.1} parent=1 // pred_check
      _
    $region67: #{tpu_custom_call.1} parent=1 // pred_check_branch
      %127 = sbr.rel (0) target = $region69
    $region68: #{tpu_custom_call.1} parent=1 // pred_region
      %128 = dma.done [#allocation9], 2048
    $region69: #{tpu_custom_call.1} parent=1 // pred_fallthru
      _
    // Predicated region
    $region70: #{tpu_custom_call.1} parent=1 // pred_check
      _
    $region71: #{tpu_custom_call.1} parent=1 // pred_check_branch
      %130 = sbr.rel (0) target = $region73
    $region72: #{tpu_custom_call.1} parent=1 // pred_region
      %131 = dma.done [#allocation9], 2048
    $region73: #{tpu_custom_call.1} parent=1 // pred_fallthru
      _
    // Predicated region
    $region74: #{tpu_custom_call.1} parent=1 // pred_check
      _
    $region75: #{tpu_custom_call.1} parent=1 // pred_check_branch
      %133 = sbr.rel (0) target = $region77
    $region76: #{tpu_custom_call.1} parent=1 // pred_region
      %134 = dma.done [#allocation12], 2048
    $region77: #{tpu_custom_call.1} parent=1 // pred_fallthru
      _
    // Predicated region
    $region78: #{tpu_custom_call.1} parent=1 // pred_check
      _
    $region79: #{tpu_custom_call.1} parent=1 // pred_check_branch
      %136 = sbr.rel (0) target = $region81
    $region80: #{tpu_custom_call.1} parent=1 // pred_region
      %137 = dma.done [#allocation12], 2048
    $region81: #{tpu_custom_call.1} parent=1 // pred_fallthru
      _
    %v138 = vld [vmem:[#allocation2] sm:$0xff]
    %v139 = vld [vmem:[#allocation5] sm:$0xff]
    %v140 = vld [vmem:[#allocation5 + $0x8] sm:$0xff]
    %v141 = vld [vmem:[#allocation5 + $0x10] sm:$0xff]
    %v142 = vld [vmem:[#allocation5 + $0x18] sm:$0xff]
    %v143 = vld [vmem:[#allocation5 + $0x20] sm:$0xff]
    %v144 = vld [vmem:[#allocation5 + $0x28] sm:$0xff]
    %v145 = vld [vmem:[#allocation5 + $0x30] sm:$0xff]
    %v146 = vld [vmem:[#allocation5 + $0x38] sm:$0xff]
    %v147 = vld [vmem:[#allocation5 + $0x40] sm:$0xff]
    %v148 = vld [vmem:[#allocation5 + $0x48] sm:$0xff]
    %v149 = vld [vmem:[#allocation5 + $0x50] sm:$0xff]
    %v150 = vld [vmem:[#allocation5 + $0x58] sm:$0xff]
    %v151 = vld [vmem:[#allocation5 + $0x60] sm:$0xff]
    %v152 = vld [vmem:[#allocation5 + $0x68] sm:$0xff]
    %v153 = vld [vmem:[#allocation5 + $0x70] sm:$0xff]
    %v154 = vld [vmem:[#allocation5 + $0x78] sm:$0xff]
    %v155 = vld [vmem:[%s2] sm:$0x1]
    %v157 = vlaneseq
    %v158 = vshrl.u32 %v157, 7
    %v159 = vsub.s32 0, %v158
    %v160 = vrot.slane %v155, %v159
    %162 = vmatprep.subr.mxu0 0.0
    %v163 = vand.u32 %v139, 4294901760
    %164 = vmatpush1.msra.mxu0 %v163
    %165 = vmatprep.subr.mxu0 0.0
    %v166 = vand.u32 %v140, 4294901760
    %167 = vmatpush1.msra.mxu0 %v166
    %168 = vmatprep.subr.mxu0 0.0
    %v169 = vand.u32 %v141, 4294901760
    %170 = vmatpush1.msra.mxu0 %v169
    %171 = vmatprep.subr.mxu0 0.0
    %v172 = vand.u32 %v142, 4294901760
    %173 = vmatpush1.msra.mxu0 %v172
    %174 = vmatprep.subr.mxu0 0.0
    %v175 = vand.u32 %v143, 4294901760
    %176 = vmatpush1.msra.mxu0 %v175
    %177 = vmatprep.subr.mxu0 0.0
    %v178 = vand.u32 %v144, 4294901760
    %179 = vmatpush1.msra.mxu0 %v178
    %180 = vmatprep.subr.mxu0 0.0
    %v181 = vand.u32 %v145, 4294901760
    %182 = vmatpush1.msra.mxu0 %v181
    %183 = vmatprep.subr.mxu0 0.0
    %v184 = vand.u32 %v146, 4294901760
    %185 = vmatpush1.msra.mxu0 %v184
    %186 = vmatprep.subr.mxu0 0.0
    %v187 = vand.u32 %v147, 4294901760
    %188 = vmatpush1.msra.mxu0 %v187
    %189 = vmatprep.subr.mxu0 0.0
    %v190 = vand.u32 %v148, 4294901760
    %191 = vmatpush1.msra.mxu0 %v190
    %192 = vmatprep.subr.mxu0 0.0
    %v193 = vand.u32 %v149, 4294901760
    %194 = vmatpush1.msra.mxu0 %v193
    %195 = vmatprep.subr.mxu0 0.0
    %v196 = vand.u32 %v150, 4294901760
    %197 = vmatpush1.msra.mxu0 %v196
    %198 = vmatprep.subr.mxu0 0.0
    %v199 = vand.u32 %v151, 4294901760
    %200 = vmatpush1.msra.mxu0 %v199
    %201 = vmatprep.subr.mxu0 0.0
    %v202 = vand.u32 %v152, 4294901760
    %203 = vmatpush1.msra.mxu0 %v202
    %204 = vmatprep.subr.mxu0 0.0
    %v205 = vand.u32 %v153, 4294901760
    %206 = vmatpush1.msra.mxu0 %v205
    %207 = vmatprep.subr.mxu0 0.0
    %v208 = vand.u32 %v154, 4294901760
    %209 = vmatpush1.msra.mxu0 %v208
    %210 = vmatprep.subr.mxu0 0.0
    %211 = vmatpush1.msra.mxu0 0.0
    %212 = vmatprep.subr.mxu0 0.0
    %213 = vmatpush1.msra.mxu0 0.0
    %214 = vmatprep.subr.mxu0 0.0
    %215 = vmatpush1.msra.mxu0 0.0
    %216 = vmatprep.subr.mxu0 0.0
    %217 = vmatpush1.msra.mxu0 0.0
    %218 = vmatprep.subr.mxu0 0.0
    %219 = vmatpush1.msra.mxu0 0.0
    %220 = vmatprep.subr.mxu0 0.0
    %221 = vmatpush1.msra.mxu0 0.0
    %222 = vmatprep.subr.mxu0 0.0
    %223 = vmatpush1.msra.mxu0 0.0
    %224 = vmatprep.subr.mxu0 0.0
    %225 = vmatpush1.msra.mxu0 0.0
    %226 = vmatprep.subr.mxu0 0.0
    %227 = vmatpush1.msra.mxu0 0.0
    %228 = vmatprep.subr.mxu0 0.0
    %229 = vmatpush1.msra.mxu0 0.0
    %230 = vmatprep.subr.mxu0 0.0
    %231 = vmatpush1.msra.mxu0 0.0
    %232 = vmatprep.subr.mxu0 0.0
    %233 = vmatpush1.msra.mxu0 0.0
    %234 = vmatprep.subr.mxu0 0.0
    %235 = vmatpush1.msra.mxu0 0.0
    %236 = vmatprep.subr.mxu0 0.0
    %237 = vmatpush1.msra.mxu0 0.0
    %238 = vmatprep.subr.mxu0 0.0
    %239 = vmatpush1.msra.mxu0 0.0
    %240 = vmatprep.subr.mxu0 0.0
    %241 = vmatpush1.msra.mxu0 0.0
    %242 = vmatprep.mubr.f32.mxu0 0.0
    %v243 = vand.u32 %v138, 4294901760
    %v244 = vsub.f32 %v138, %v243
    %v245 = vand.u32 %v244, 4294901760
    %v246 = vsub.f32 %v244, %v245
    %v247 = vand.u32 %v246, 4294901760
    %248 = vmatmul.mubr.f32.gmra.mrb[0].mxu0 %v247
    %v249 = vpop.f32.mrb[0].mxu0
    %v250 = vadd.f32 %v160, %v249
    %v251 = vpop.f32.mrb[0].mxu0
    %252 = vdwg.mxu0
    %253 = vmatprep.subr.mxu0 0.0
    %v254 = vand.u32 %v139, 4294901760
    %v255 = vsub.f32 %v139, %v254
    %v256 = vand.u32 %v255, 4294901760
    %v257 = vsub.f32 %v255, %v256
    %v258 = vand.u32 %v257, 4294901760
    %259 = vmatpush1.msra.mxu0 %v258
    %260 = vmatprep.subr.mxu0 0.0
    %v261 = vand.u32 %v140, 4294901760
    %v262 = vsub.f32 %v140, %v261
    %v263 = vand.u32 %v262, 4294901760
    %v264 = vsub.f32 %v262, %v263
    %v265 = vand.u32 %v264, 4294901760
    %266 = vmatpush1.msra.mxu0 %v265
    %267 = vmatprep.subr.mxu0 0.0
    %v268 = vand.u32 %v141, 4294901760
    %v269 = vsub.f32 %v141, %v268
    %v270 = vand.u32 %v269, 4294901760
    %v271 = vsub.f32 %v269, %v270
    %v272 = vand.u32 %v271, 4294901760
    %273 = vmatpush1.msra.mxu0 %v272
    %274 = vmatprep.subr.mxu0 0.0
    %v275 = vand.u32 %v142, 4294901760
    %v276 = vsub.f32 %v142, %v275
    %v277 = vand.u32 %v276, 4294901760
    %v278 = vsub.f32 %v276, %v277
    %v279 = vand.u32 %v278, 4294901760
    %280 = vmatpush1.msra.mxu0 %v279
    %281 = vmatprep.subr.mxu0 0.0
    %v282 = vand.u32 %v143, 4294901760
    %v283 = vsub.f32 %v143, %v282
    %v284 = vand.u32 %v283, 4294901760
    %v285 = vsub.f32 %v283, %v284
    %v286 = vand.u32 %v285, 4294901760
    %287 = vmatpush1.msra.mxu0 %v286
    %288 = vmatprep.subr.mxu0 0.0
    %v289 = vand.u32 %v144, 4294901760
    %v290 = vsub.f32 %v144, %v289
    %v291 = vand.u32 %v290, 4294901760
    %v292 = vsub.f32 %v290, %v291
    %v293 = vand.u32 %v292, 4294901760
    %294 = vmatpush1.msra.mxu0 %v293
    %295 = vmatprep.subr.mxu0 0.0
    %v296 = vand.u32 %v145, 4294901760
    %v297 = vsub.f32 %v145, %v296
    %v298 = vand.u32 %v297, 4294901760
    %v299 = vsub.f32 %v297, %v298
    %v300 = vand.u32 %v299, 4294901760
    %301 = vmatpush1.msra.mxu0 %v300
    %302 = vmatprep.subr.mxu0 0.0
    %v303 = vand.u32 %v146, 4294901760
    %v304 = vsub.f32 %v146, %v303
    %v305 = vand.u32 %v304, 4294901760
    %v306 = vsub.f32 %v304, %v305
    %v307 = vand.u32 %v306, 4294901760
    %308 = vmatpush1.msra.mxu0 %v307
    %309 = vmatprep.subr.mxu0 0.0
    %v310 = vand.u32 %v147, 4294901760
    %v311 = vsub.f32 %v147, %v310
    %v312 = vand.u32 %v311, 4294901760
    %v313 = vsub.f32 %v311, %v312
    %v314 = vand.u32 %v313, 4294901760
    %315 = vmatpush1.msra.mxu0 %v314
    %316 = vmatprep.subr.mxu0 0.0
    %v317 = vand.u32 %v148, 4294901760
    %v318 = vsub.f32 %v148, %v317
    %v319 = vand.u32 %v318, 4294901760
    %v320 = vsub.f32 %v318, %v319
    %v321 = vand.u32 %v320, 4294901760
    %322 = vmatpush1.msra.mxu0 %v321
    %323 = vmatprep.subr.mxu0 0.0
    %v324 = vand.u32 %v149, 4294901760
    %v325 = vsub.f32 %v149, %v324
    %v326 = vand.u32 %v325, 4294901760
    %v327 = vsub.f32 %v325, %v326
    %v328 = vand.u32 %v327, 4294901760
    %329 = vmatpush1.msra.mxu0 %v328
    %330 = vmatprep.subr.mxu0 0.0
    %v331 = vand.u32 %v150, 4294901760
    %v332 = vsub.f32 %v150, %v331
    %v333 = vand.u32 %v332, 4294901760
    %v334 = vsub.f32 %v332, %v333
    %v335 = vand.u32 %v334, 4294901760
    %336 = vmatpush1.msra.mxu0 %v335
    %337 = vmatprep.subr.mxu0 0.0
    %v338 = vand.u32 %v151, 4294901760
    %v339 = vsub.f32 %v151, %v338
    %v340 = vand.u32 %v339, 4294901760
    %v341 = vsub.f32 %v339, %v340
    %v342 = vand.u32 %v341, 4294901760
    %343 = vmatpush1.msra.mxu0 %v342
    %344 = vmatprep.subr.mxu0 0.0
    %v345 = vand.u32 %v152, 4294901760
    %v346 = vsub.f32 %v152, %v345
    %v347 = vand.u32 %v346, 4294901760
    %v348 = vsub.f32 %v346, %v347
    %v349 = vand.u32 %v348, 4294901760
    %350 = vmatpush1.msra.mxu0 %v349
    %351 = vmatprep.subr.mxu0 0.0
    %v352 = vand.u32 %v153, 4294901760
    %v353 = vsub.f32 %v153, %v352
    %v354 = vand.u32 %v353, 4294901760
    %v355 = vsub.f32 %v353, %v354
    %v356 = vand.u32 %v355, 4294901760
    %357 = vmatpush1.msra.mxu0 %v356
    %358 = vmatprep.subr.mxu0 0.0
    %v359 = vand.u32 %v154, 4294901760
    %v360 = vsub.f32 %v154, %v359
    %v361 = vand.u32 %v360, 4294901760
    %v362 = vsub.f32 %v360, %v361
    %v363 = vand.u32 %v362, 4294901760
    %364 = vmatpush1.msra.mxu0 %v363
    %365 = vmatprep.subr.mxu0 0.0
    %366 = vmatpush1.msra.mxu0 0.0
    %367 = vmatprep.subr.mxu0 0.0
    %368 = vmatpush1.msra.mxu0 0.0
    %369 = vmatprep.subr.mxu0 0.0
    %370 = vmatpush1.msra.mxu0 0.0
    %371 = vmatprep.subr.mxu0 0.0
    %372 = vmatpush1.msra.mxu0 0.0
    %373 = vmatprep.subr.mxu0 0.0
    %374 = vmatpush1.msra.mxu0 0.0
    %375 = vmatprep.subr.mxu0 0.0
    %376 = vmatpush1.msra.mxu0 0.0
    %377 = vmatprep.subr.mxu0 0.0
    %378 = vmatpush1.msra.mxu0 0.0
    %379 = vmatprep.subr.mxu0 0.0
    %380 = vmatpush1.msra.mxu0 0.0
    %381 = vmatprep.subr.mxu0 0.0
    %382 = vmatpush1.msra.mxu0 0.0
    %383 = vmatprep.subr.mxu0 0.0
    %384 = vmatpush1.msra.mxu0 0.0
    %385 = vmatprep.subr.mxu0 0.0
    %386 = vmatpush1.msra.mxu0 0.0
    %387 = vmatprep.subr.mxu0 0.0
    %388 = vmatpush1.msra.mxu0 0.0
    %389 = vmatprep.subr.mxu0 0.0
    %390 = vmatpush1.msra.mxu0 0.0
    %391 = vmatprep.subr.mxu0 0.0
    %392 = vmatpush1.msra.mxu0 0.0
    %393 = vmatprep.subr.mxu0 0.0
    %394 = vmatpush1.msra.mxu0 0.0
    %395 = vmatprep.subr.mxu0 0.0
    %396 = vmatpush1.msra.mxu0 0.0
    %397 = vmatprep.mubr.f32.mxu0 0.0
    %v398 = vand.u32 %v138, 4294901760
    %399 = vmatmul.mubr.f32.gmra.mrb[0].mxu0 %v398
    %v400 = vpop.f32.mrb[0].mxu0
    %v401 = vadd.f32 %v250, %v400
    %v402 = vpop.f32.mrb[0].mxu0
    %403 = vdwg.mxu0
    %404 = vmatprep.subr.mxu0 0.0
    %v405 = vand.u32 %v139, 4294901760
    %v406 = vsub.f32 %v139, %v405
    %407 = vmatpush1.msra.mxu0 %v406
    %408 = vmatprep.subr.mxu0 0.0
    %v409 = vand.u32 %v140, 4294901760
    %v410 = vsub.f32 %v140, %v409
    %411 = vmatpush1.msra.mxu0 %v410
    %412 = vmatprep.subr.mxu0 0.0
    %v413 = vand.u32 %v141, 4294901760
    %v414 = vsub.f32 %v141, %v413
    %415 = vmatpush1.msra.mxu0 %v414
    %416 = vmatprep.subr.mxu0 0.0
    %v417 = vand.u32 %v142, 4294901760
    %v418 = vsub.f32 %v142, %v417
    %419 = vmatpush1.msra.mxu0 %v418
    %420 = vmatprep.subr.mxu0 0.0
    %v421 = vand.u32 %v143, 4294901760
    %v422 = vsub.f32 %v143, %v421
    %423 = vmatpush1.msra.mxu0 %v422
    %424 = vmatprep.subr.mxu0 0.0
    %v425 = vand.u32 %v144, 4294901760
    %v426 = vsub.f32 %v144, %v425
    %427 = vmatpush1.msra.mxu0 %v426
    %428 = vmatprep.subr.mxu0 0.0
    %v429 = vand.u32 %v145, 4294901760
    %v430 = vsub.f32 %v145, %v429
    %431 = vmatpush1.msra.mxu0 %v430
    %432 = vmatprep.subr.mxu0 0.0
    %v433 = vand.u32 %v146, 4294901760
    %v434 = vsub.f32 %v146, %v433
    %435 = vmatpush1.msra.mxu0 %v434
    %436 = vmatprep.subr.mxu0 0.0
    %v437 = vand.u32 %v147, 4294901760
    %v438 = vsub.f32 %v147, %v437
    %439 = vmatpush1.msra.mxu0 %v438
    %440 = vmatprep.subr.mxu0 0.0
    %v441 = vand.u32 %v148, 4294901760
    %v442 = vsub.f32 %v148, %v441
    %443 = vmatpush1.msra.mxu0 %v442
    %444 = vmatprep.subr.mxu0 0.0
    %v445 = vand.u32 %v149, 4294901760
    %v446 = vsub.f32 %v149, %v445
    %447 = vmatpush1.msra.mxu0 %v446
    %448 = vmatprep.subr.mxu0 0.0
    %v449 = vand.u32 %v150, 4294901760
    %v450 = vsub.f32 %v150, %v449
    %451 = vmatpush1.msra.mxu0 %v450
    %452 = vmatprep.subr.mxu0 0.0
    %v453 = vand.u32 %v151, 4294901760
    %v454 = vsub.f32 %v151, %v453
    %455 = vmatpush1.msra.mxu0 %v454
    %456 = vmatprep.subr.mxu0 0.0
    %v457 = vand.u32 %v152, 4294901760
    %v458 = vsub.f32 %v152, %v457
    %459 = vmatpush1.msra.mxu0 %v458
    %460 = vmatprep.subr.mxu0 0.0
    %v461 = vand.u32 %v153, 4294901760
    %v462 = vsub.f32 %v153, %v461
    %463 = vmatpush1.msra.mxu0 %v462
    %464 = vmatprep.subr.mxu0 0.0
    %v465 = vand.u32 %v154, 4294901760
    %v466 = vsub.f32 %v154, %v465
    %467 = vmatpush1.msra.mxu0 %v466
    %468 = vmatprep.subr.mxu0 0.0
    %469 = vmatpush1.msra.mxu0 0.0
    %470 = vmatprep.subr.mxu0 0.0
    %471 = vmatpush1.msra.mxu0 0.0
    %472 = vmatprep.subr.mxu0 0.0
    %473 = vmatpush1.msra.mxu0 0.0
    %474 = vmatprep.subr.mxu0 0.0
    %475 = vmatpush1.msra.mxu0 0.0
    %476 = vmatprep.subr.mxu0 0.0
    %477 = vmatpush1.msra.mxu0 0.0
    %478 = vmatprep.subr.mxu0 0.0
    %479 = vmatpush1.msra.mxu0 0.0
    %480 = vmatprep.subr.mxu0 0.0
    %481 = vmatpush1.msra.mxu0 0.0
    %482 = vmatprep.subr.mxu0 0.0
    %483 = vmatpush1.msra.mxu0 0.0
    %484 = vmatprep.subr.mxu0 0.0
    %485 = vmatpush1.msra.mxu0 0.0
    %486 = vmatprep.subr.mxu0 0.0
    %487 = vmatpush1.msra.mxu0 0.0
    %488 = vmatprep.subr.mxu0 0.0
    %489 = vmatpush1.msra.mxu0 0.0
    %490 = vmatprep.subr.mxu0 0.0
    %491 = vmatpush1.msra.mxu0 0.0
    %492 = vmatprep.subr.mxu0 0.0
    %493 = vmatpush1.msra.mxu0 0.0
    %494 = vmatprep.subr.mxu0 0.0
    %495 = vmatpush1.msra.mxu0 0.0
    %496 = vmatprep.subr.mxu0 0.0
    %497 = vmatpush1.msra.mxu0 0.0
    %498 = vmatprep.subr.mxu0 0.0
    %499 = vmatpush1.msra.mxu0 0.0
    %500 = vmatprep.mubr.f32.mxu0 0.0
    %v501 = vand.u32 %v138, 4294901760
    %v502 = vsub.f32 %v138, %v501
    %503 = vmatmul.mubr.f32.gmra.mrb[0].mxu0 %v502
    %v504 = vpop.f32.mrb[0].mxu0
    %v505 = vadd.f32 %v401, %v504
    %v506 = vpop.f32.mrb[0].mxu0
    %507 = vdwg.mxu0
    %508 = vmatprep.subr.mxu0 0.0
    %v509 = vand.u32 %v139, 4294901760
    %510 = vmatpush1.msra.mxu0 %v509
    %511 = vmatprep.subr.mxu0 0.0
    %v512 = vand.u32 %v140, 4294901760
    %513 = vmatpush1.msra.mxu0 %v512
    %514 = vmatprep.subr.mxu0 0.0
    %v515 = vand.u32 %v141, 4294901760
    %516 = vmatpush1.msra.mxu0 %v515
    %517 = vmatprep.subr.mxu0 0.0
    %v518 = vand.u32 %v142, 4294901760
    %519 = vmatpush1.msra.mxu0 %v518
    %520 = vmatprep.subr.mxu0 0.0
    %v521 = vand.u32 %v143, 4294901760
    %522 = vmatpush1.msra.mxu0 %v521
    %523 = vmatprep.subr.mxu0 0.0
    %v524 = vand.u32 %v144, 4294901760
    %525 = vmatpush1.msra.mxu0 %v524
    %526 = vmatprep.subr.mxu0 0.0
    %v527 = vand.u32 %v145, 4294901760
    %528 = vmatpush1.msra.mxu0 %v527
    %529 = vmatprep.subr.mxu0 0.0
    %v530 = vand.u32 %v146, 4294901760
    %531 = vmatpush1.msra.mxu0 %v530
    %532 = vmatprep.subr.mxu0 0.0
    %v533 = vand.u32 %v147, 4294901760
    %534 = vmatpush1.msra.mxu0 %v533
    %535 = vmatprep.subr.mxu0 0.0
    %v536 = vand.u32 %v148, 4294901760
    %537 = vmatpush1.msra.mxu0 %v536
    %538 = vmatprep.subr.mxu0 0.0
    %v539 = vand.u32 %v149, 4294901760
    %540 = vmatpush1.msra.mxu0 %v539
    %541 = vmatprep.subr.mxu0 0.0
    %v542 = vand.u32 %v150, 4294901760
    %543 = vmatpush1.msra.mxu0 %v542
    %544 = vmatprep.subr.mxu0 0.0
    %v545 = vand.u32 %v151, 4294901760
    %546 = vmatpush1.msra.mxu0 %v545
    %547 = vmatprep.subr.mxu0 0.0
    %v548 = vand.u32 %v152, 4294901760
    %549 = vmatpush1.msra.mxu0 %v548
    %550 = vmatprep.subr.mxu0 0.0
    %v551 = vand.u32 %v153, 4294901760
    %552 = vmatpush1.msra.mxu0 %v551
    %553 = vmatprep.subr.mxu0 0.0
    %v554 = vand.u32 %v154, 4294901760
    %555 = vmatpush1.msra.mxu0 %v554
    %556 = vmatprep.subr.mxu0 0.0
    %557 = vmatpush1.msra.mxu0 0.0
    %558 = vmatprep.subr.mxu0 0.0
    %559 = vmatpush1.msra.mxu0 0.0
    %560 = vmatprep.subr.mxu0 0.0
    %561 = vmatpush1.msra.mxu0 0.0
    %562 = vmatprep.subr.mxu0 0.0
    %563 = vmatpush1.msra.mxu0 0.0
    %564 = vmatprep.subr.mxu0 0.0
    %565 = vmatpush1.msra.mxu0 0.0
    %566 = vmatprep.subr.mxu0 0.0
    %567 = vmatpush1.msra.mxu0 0.0
    %568 = vmatprep.subr.mxu0 0.0
    %569 = vmatpush1.msra.mxu0 0.0
    %570 = vmatprep.subr.mxu0 0.0
    %571 = vmatpush1.msra.mxu0 0.0
    %572 = vmatprep.subr.mxu0 0.0
    %573 = vmatpush1.msra.mxu0 0.0
    %574 = vmatprep.subr.mxu0 0.0
    %575 = vmatpush1.msra.mxu0 0.0
    %576 = vmatprep.subr.mxu0 0.0
    %577 = vmatpush1.msra.mxu0 0.0
    %578 = vmatprep.subr.mxu0 0.0
    %579 = vmatpush1.msra.mxu0 0.0
    %580 = vmatprep.subr.mxu0 0.0
    %581 = vmatpush1.msra.mxu0 0.0
    %582 = vmatprep.subr.mxu0 0.0
    %583 = vmatpush1.msra.mxu0 0.0
    %584 = vmatprep.subr.mxu0 0.0
    %585 = vmatpush1.msra.mxu0 0.0
    %586 = vmatprep.subr.mxu0 0.0
    %587 = vmatpush1.msra.mxu0 0.0
    %588 = vmatprep.mubr.f32.mxu0 0.0
    %v589 = vand.u32 %v138, 4294901760
    %v590 = vsub.f32 %v138, %v589
    %v591 = vand.u32 %v590, 4294901760
    %592 = vmatmul.mubr.f32.gmra.mrb[0].mxu0 %v591
    %v593 = vpop.f32.mrb[0].mxu0
    %v594 = vadd.f32 %v505, %v593
    %v595 = vpop.f32.mrb[0].mxu0
    %596 = vdwg.mxu0
    %597 = vmatprep.subr.mxu0 0.0
    %v598 = vand.u32 %v139, 4294901760
    %v599 = vsub.f32 %v139, %v598
    %v600 = vand.u32 %v599, 4294901760
    %601 = vmatpush1.msra.mxu0 %v600
    %602 = vmatprep.subr.mxu0 0.0
    %v603 = vand.u32 %v140, 4294901760
    %v604 = vsub.f32 %v140, %v603
    %v605 = vand.u32 %v604, 4294901760
    %606 = vmatpush1.msra.mxu0 %v605
    %607 = vmatprep.subr.mxu0 0.0
    %v608 = vand.u32 %v141, 4294901760
    %v609 = vsub.f32 %v141, %v608
    %v610 = vand.u32 %v609, 4294901760
    %611 = vmatpush1.msra.mxu0 %v610
    %612 = vmatprep.subr.mxu0 0.0
    %v613 = vand.u32 %v142, 4294901760
    %v614 = vsub.f32 %v142, %v613
    %v615 = vand.u32 %v614, 4294901760
    %616 = vmatpush1.msra.mxu0 %v615
    %617 = vmatprep.subr.mxu0 0.0
    %v618 = vand.u32 %v143, 4294901760
    %v619 = vsub.f32 %v143, %v618
    %v620 = vand.u32 %v619, 4294901760
    %621 = vmatpush1.msra.mxu0 %v620
    %622 = vmatprep.subr.mxu0 0.0
    %v623 = vand.u32 %v144, 4294901760
    %v624 = vsub.f32 %v144, %v623
    %v625 = vand.u32 %v624, 4294901760
    %626 = vmatpush1.msra.mxu0 %v625
    %627 = vmatprep.subr.mxu0 0.0
    %v628 = vand.u32 %v145, 4294901760
    %v629 = vsub.f32 %v145, %v628
    %v630 = vand.u32 %v629, 4294901760
    %631 = vmatpush1.msra.mxu0 %v630
    %632 = vmatprep.subr.mxu0 0.0
    %v633 = vand.u32 %v146, 4294901760
    %v634 = vsub.f32 %v146, %v633
    %v635 = vand.u32 %v634, 4294901760
    %636 = vmatpush1.msra.mxu0 %v635
    %637 = vmatprep.subr.mxu0 0.0
    %v638 = vand.u32 %v147, 4294901760
    %v639 = vsub.f32 %v147, %v638
    %v640 = vand.u32 %v639, 4294901760
    %641 = vmatpush1.msra.mxu0 %v640
    %642 = vmatprep.subr.mxu0 0.0
    %v643 = vand.u32 %v148, 4294901760
    %v644 = vsub.f32 %v148, %v643
    %v645 = vand.u32 %v644, 4294901760
    %646 = vmatpush1.msra.mxu0 %v645
    %647 = vmatprep.subr.mxu0 0.0
    %v648 = vand.u32 %v149, 4294901760
    %v649 = vsub.f32 %v149, %v648
    %v650 = vand.u32 %v649, 4294901760
    %651 = vmatpush1.msra.mxu0 %v650
    %652 = vmatprep.subr.mxu0 0.0
    %v653 = vand.u32 %v150, 4294901760
    %v654 = vsub.f32 %v150, %v653
    %v655 = vand.u32 %v654, 4294901760
    %656 = vmatpush1.msra.mxu0 %v655
    %657 = vmatprep.subr.mxu0 0.0
    %v658 = vand.u32 %v151, 4294901760
    %v659 = vsub.f32 %v151, %v658
    %v660 = vand.u32 %v659, 4294901760
    %661 = vmatpush1.msra.mxu0 %v660
    %662 = vmatprep.subr.mxu0 0.0
    %v663 = vand.u32 %v152, 4294901760
    %v664 = vsub.f32 %v152, %v663
    %v665 = vand.u32 %v664, 4294901760
    %666 = vmatpush1.msra.mxu0 %v665
    %667 = vmatprep.subr.mxu0 0.0
    %v668 = vand.u32 %v153, 4294901760
    %v669 = vsub.f32 %v153, %v668
    %v670 = vand.u32 %v669, 4294901760
    %671 = vmatpush1.msra.mxu0 %v670
    %672 = vmatprep.subr.mxu0 0.0
    %v673 = vand.u32 %v154, 4294901760
    %v674 = vsub.f32 %v154, %v673
    %v675 = vand.u32 %v674, 4294901760
    %676 = vmatpush1.msra.mxu0 %v675
    %677 = vmatprep.subr.mxu0 0.0
    %678 = vmatpush1.msra.mxu0 0.0
    %679 = vmatprep.subr.mxu0 0.0
    %680 = vmatpush1.msra.mxu0 0.0
    %681 = vmatprep.subr.mxu0 0.0
    %682 = vmatpush1.msra.mxu0 0.0
    %683 = vmatprep.subr.mxu0 0.0
    %684 = vmatpush1.msra.mxu0 0.0
    %685 = vmatprep.subr.mxu0 0.0
    %686 = vmatpush1.msra.mxu0 0.0
    %687 = vmatprep.subr.mxu0 0.0
    %688 = vmatpush1.msra.mxu0 0.0
    %689 = vmatprep.subr.mxu0 0.0
    %690 = vmatpush1.msra.mxu0 0.0
    %691 = vmatprep.subr.mxu0 0.0
    %692 = vmatpush1.msra.mxu0 0.0
    %693 = vmatprep.subr.mxu0 0.0
    %694 = vmatpush1.msra.mxu0 0.0
    %695 = vmatprep.subr.mxu0 0.0
    %696 = vmatpush1.msra.mxu0 0.0
    %697 = vmatprep.subr.mxu0 0.0
    %698 = vmatpush1.msra.mxu0 0.0
    %699 = vmatprep.subr.mxu0 0.0
    %700 = vmatpush1.msra.mxu0 0.0
    %701 = vmatprep.subr.mxu0 0.0
    %702 = vmatpush1.msra.mxu0 0.0
    %703 = vmatprep.subr.mxu0 0.0
    %704 = vmatpush1.msra.mxu0 0.0
    %705 = vmatprep.subr.mxu0 0.0
    %706 = vmatpush1.msra.mxu0 0.0
    %707 = vmatprep.subr.mxu0 0.0
    %708 = vmatpush1.msra.mxu0 0.0
    %709 = vmatprep.mubr.f32.mxu0 0.0
    %v710 = vand.u32 %v138, 4294901760
    %711 = vmatmul.mubr.f32.gmra.mrb[0].mxu0 %v710
    %v712 = vpop.f32.mrb[0].mxu0
    %v713 = vadd.f32 %v594, %v712
    %v714 = vpop.f32.mrb[0].mxu0
    %715 = vdwg.mxu0
    %716 = vmatprep.subr.mxu0 0.0
    %v717 = vand.u32 %v139, 4294901760
    %718 = vmatpush1.msra.mxu0 %v717
    %719 = vmatprep.subr.mxu0 0.0
    %v720 = vand.u32 %v140, 4294901760
    %721 = vmatpush1.msra.mxu0 %v720
    %722 = vmatprep.subr.mxu0 0.0
    %v723 = vand.u32 %v141, 4294901760
    %724 = vmatpush1.msra.mxu0 %v723
    %725 = vmatprep.subr.mxu0 0.0
    %v726 = vand.u32 %v142, 4294901760
    %727 = vmatpush1.msra.mxu0 %v726
    %728 = vmatprep.subr.mxu0 0.0
    %v729 = vand.u32 %v143, 4294901760
    %730 = vmatpush1.msra.mxu0 %v729
    %731 = vmatprep.subr.mxu0 0.0
    %v732 = vand.u32 %v144, 4294901760
    %733 = vmatpush1.msra.mxu0 %v732
    %734 = vmatprep.subr.mxu0 0.0
    %v735 = vand.u32 %v145, 4294901760
    %736 = vmatpush1.msra.mxu0 %v735
    %737 = vmatprep.subr.mxu0 0.0
    %v738 = vand.u32 %v146, 4294901760
    %739 = vmatpush1.msra.mxu0 %v738
    %740 = vmatprep.subr.mxu0 0.0
    %v741 = vand.u32 %v147, 4294901760
    %742 = vmatpush1.msra.mxu0 %v741
    %743 = vmatprep.subr.mxu0 0.0
    %v744 = vand.u32 %v148, 4294901760
    %745 = vmatpush1.msra.mxu0 %v744
    %746 = vmatprep.subr.mxu0 0.0
    %v747 = vand.u32 %v149, 4294901760
    %748 = vmatpush1.msra.mxu0 %v747
    %749 = vmatprep.subr.mxu0 0.0
    %v750 = vand.u32 %v150, 4294901760
    %751 = vmatpush1.msra.mxu0 %v750
    %752 = vmatprep.subr.mxu0 0.0
    %v753 = vand.u32 %v151, 4294901760
    %754 = vmatpush1.msra.mxu0 %v753
    %755 = vmatprep.subr.mxu0 0.0
    %v756 = vand.u32 %v152, 4294901760
    %757 = vmatpush1.msra.mxu0 %v756
    %758 = vmatprep.subr.mxu0 0.0
    %v759 = vand.u32 %v153, 4294901760
    %760 = vmatpush1.msra.mxu0 %v759
    %761 = vmatprep.subr.mxu0 0.0
    %v762 = vand.u32 %v154, 4294901760
    %763 = vmatpush1.msra.mxu0 %v762
    %764 = vmatprep.subr.mxu0 0.0
    %765 = vmatpush1.msra.mxu0 0.0
    %766 = vmatprep.subr.mxu0 0.0
    %767 = vmatpush1.msra.mxu0 0.0
    %768 = vmatprep.subr.mxu0 0.0
    %769 = vmatpush1.msra.mxu0 0.0
    %770 = vmatprep.subr.mxu0 0.0
    %771 = vmatpush1.msra.mxu0 0.0
    %772 = vmatprep.subr.mxu0 0.0
    %773 = vmatpush1.msra.mxu0 0.0
    %774 = vmatprep.subr.mxu0 0.0
    %775 = vmatpush1.msra.mxu0 0.0
    %776 = vmatprep.subr.mxu0 0.0
    %777 = vmatpush1.msra.mxu0 0.0
    %778 = vmatprep.subr.mxu0 0.0
    %779 = vmatpush1.msra.mxu0 0.0
    %780 = vmatprep.subr.mxu0 0.0
    %781 = vmatpush1.msra.mxu0 0.0
    %782 = vmatprep.subr.mxu0 0.0
    %783 = vmatpush1.msra.mxu0 0.0
    %784 = vmatprep.subr.mxu0 0.0
    %785 = vmatpush1.msra.mxu0 0.0
    %786 = vmatprep.subr.mxu0 0.0
    %787 = vmatpush1.msra.mxu0 0.0
    %788 = vmatprep.subr.mxu0 0.0
    %789 = vmatpush1.msra.mxu0 0.0
    %790 = vmatprep.subr.mxu0 0.0
    %791 = vmatpush1.msra.mxu0 0.0
    %792 = vmatprep.subr.mxu0 0.0
    %793 = vmatpush1.msra.mxu0 0.0
    %794 = vmatprep.subr.mxu0 0.0
    %795 = vmatpush1.msra.mxu0 0.0
    %796 = vmatprep.mubr.f32.mxu0 0.0
    %v797 = vand.u32 %v138, 4294901760
    %798 = vmatmul.mubr.f32.gmra.mrb[0].mxu0 %v797
    %v799 = vpop.f32.mrb[0].mxu0
    %v800 = vadd.f32 %v713, %v799
    %v801 = vpop.f32.mrb[0].mxu0
    %802 = vdwg.mxu0
    %v803 = vmax.f32 %v800, 0.0
    %v804 = vld [vmem:[#allocation7] sm:$0xff]
    %v805 = vld [vmem:[#allocation7 + $0x8] sm:$0xff]
    %v806 = vld [vmem:[#allocation7 + $0x10] sm:$0xff]
    %v807 = vld [vmem:[#allocation7 + $0x18] sm:$0xff]
    %v808 = vld [vmem:[#allocation7 + $0x20] sm:$0xff]
    %v809 = vld [vmem:[#allocation7 + $0x28] sm:$0xff]
    %v810 = vld [vmem:[#allocation7 + $0x30] sm:$0xff]
    %v811 = vld [vmem:[#allocation7 + $0x38] sm:$0xff]
    %v812 = vld [vmem:[#allocation7 + $0x40] sm:$0xff]
    %v813 = vld [vmem:[#allocation7 + $0x48] sm:$0xff]
    %v814 = vld [vmem:[#allocation7 + $0x50] sm:$0xff]
    %v815 = vld [vmem:[#allocation7 + $0x58] sm:$0xff]
    %v816 = vld [vmem:[#allocation7 + $0x60] sm:$0xff]
    %v817 = vld [vmem:[#allocation7 + $0x68] sm:$0xff]
    %v818 = vld [vmem:[#allocation7 + $0x70] sm:$0xff]
    %v819 = vld [vmem:[#allocation7 + $0x78] sm:$0xff]
    %v820 = vld [vmem:[%s4] sm:$0x1]
    %v822 = vlaneseq
    %v823 = vshrl.u32 %v822, 7
    %v824 = vsub.s32 0, %v823
    %v825 = vrot.slane %v820, %v824
    %827 = vmatprep.subr.mxu0 0.0
    %v828 = vand.u32 %v804, 4294901760
    %829 = vmatpush1.msra.mxu0 %v828
    %830 = vmatprep.subr.mxu0 0.0
    %v831 = vand.u32 %v805, 4294901760
    %832 = vmatpush1.msra.mxu0 %v831
    %833 = vmatprep.subr.mxu0 0.0
    %v834 = vand.u32 %v806, 4294901760
    %835 = vmatpush1.msra.mxu0 %v834
    %836 = vmatprep.subr.mxu0 0.0
    %v837 = vand.u32 %v807, 4294901760
    %838 = vmatpush1.msra.mxu0 %v837
    %839 = vmatprep.subr.mxu0 0.0
    %v840 = vand.u32 %v808, 4294901760
    %841 = vmatpush1.msra.mxu0 %v840
    %842 = vmatprep.subr.mxu0 0.0
    %v843 = vand.u32 %v809, 4294901760
    %844 = vmatpush1.msra.mxu0 %v843
    %845 = vmatprep.subr.mxu0 0.0
    %v846 = vand.u32 %v810, 4294901760
    %847 = vmatpush1.msra.mxu0 %v846
    %848 = vmatprep.subr.mxu0 0.0
    %v849 = vand.u32 %v811, 4294901760
    %850 = vmatpush1.msra.mxu0 %v849
    %851 = vmatprep.subr.mxu0 0.0
    %v852 = vand.u32 %v812, 4294901760
    %853 = vmatpush1.msra.mxu0 %v852
    %854 = vmatprep.subr.mxu0 0.0
    %v855 = vand.u32 %v813, 4294901760
    %856 = vmatpush1.msra.mxu0 %v855
    %857 = vmatprep.subr.mxu0 0.0
    %v858 = vand.u32 %v814, 4294901760
    %859 = vmatpush1.msra.mxu0 %v858
    %860 = vmatprep.subr.mxu0 0.0
    %v861 = vand.u32 %v815, 4294901760
    %862 = vmatpush1.msra.mxu0 %v861
    %863 = vmatprep.subr.mxu0 0.0
    %v864 = vand.u32 %v816, 4294901760
    %865 = vmatpush1.msra.mxu0 %v864
    %866 = vmatprep.subr.mxu0 0.0
    %v867 = vand.u32 %v817, 4294901760
    %868 = vmatpush1.msra.mxu0 %v867
    %869 = vmatprep.subr.mxu0 0.0
    %v870 = vand.u32 %v818, 4294901760
    %871 = vmatpush1.msra.mxu0 %v870
    %872 = vmatprep.subr.mxu0 0.0
    %v873 = vand.u32 %v819, 4294901760
    %874 = vmatpush1.msra.mxu0 %v873
    %875 = vmatprep.subr.mxu0 0.0
    %876 = vmatpush1.msra.mxu0 0.0
    %877 = vmatprep.subr.mxu0 0.0
    %878 = vmatpush1.msra.mxu0 0.0
    %879 = vmatprep.subr.mxu0 0.0
    %880 = vmatpush1.msra.mxu0 0.0
    %881 = vmatprep.subr.mxu0 0.0
    %882 = vmatpush1.msra.mxu0 0.0
    %883 = vmatprep.subr.mxu0 0.0
    %884 = vmatpush1.msra.mxu0 0.0
    %885 = vmatprep.subr.mxu0 0.0
    %886 = vmatpush1.msra.mxu0 0.0
    %887 = vmatprep.subr.mxu0 0.0
    %888 = vmatpush1.msra.mxu0 0.0
    %889 = vmatprep.subr.mxu0 0.0
    %890 = vmatpush1.msra.mxu0 0.0
    %891 = vmatprep.subr.mxu0 0.0
    %892 = vmatpush1.msra.mxu0 0.0
    %893 = vmatprep.subr.mxu0 0.0
    %894 = vmatpush1.msra.mxu0 0.0
    %895 = vmatprep.subr.mxu0 0.0
    %896 = vmatpush1.msra.mxu0 0.0
    %897 = vmatprep.subr.mxu0 0.0
    %898 = vmatpush1.msra.mxu0 0.0
    %899 = vmatprep.subr.mxu0 0.0
    %900 = vmatpush1.msra.mxu0 0.0
    %901 = vmatprep.subr.mxu0 0.0
    %902 = vmatpush1.msra.mxu0 0.0
    %903 = vmatprep.subr.mxu0 0.0
    %904 = vmatpush1.msra.mxu0 0.0
    %905 = vmatprep.subr.mxu0 0.0
    %906 = vmatpush1.msra.mxu0 0.0
    %907 = vmatprep.mubr.f32.mxu0 0.0
    %v908 = vand.u32 %v803, 4294901760
    %v909 = vsub.f32 %v803, %v908
    %v910 = vand.u32 %v909, 4294901760
    %v911 = vsub.f32 %v909, %v910
    %v912 = vand.u32 %v911, 4294901760
    %913 = vmatmul.mubr.f32.gmra.mrb[0].mxu0 %v912
    %v914 = vpop.f32.mrb[0].mxu0
    %v915 = vadd.f32 %v825, %v914
    %v916 = vpop.f32.mrb[0].mxu0
    %917 = vdwg.mxu0
    %918 = vmatprep.subr.mxu0 0.0
    %v919 = vand.u32 %v804, 4294901760
    %v920 = vsub.f32 %v804, %v919
    %v921 = vand.u32 %v920, 4294901760
    %v922 = vsub.f32 %v920, %v921
    %v923 = vand.u32 %v922, 4294901760
    %924 = vmatpush1.msra.mxu0 %v923
    %925 = vmatprep.subr.mxu0 0.0
    %v926 = vand.u32 %v805, 4294901760
    %v927 = vsub.f32 %v805, %v926
    %v928 = vand.u32 %v927, 4294901760
    %v929 = vsub.f32 %v927, %v928
    %v930 = vand.u32 %v929, 4294901760
    %931 = vmatpush1.msra.mxu0 %v930
    %932 = vmatprep.subr.mxu0 0.0
    %v933 = vand.u32 %v806, 4294901760
    %v934 = vsub.f32 %v806, %v933
    %v935 = vand.u32 %v934, 4294901760
    %v936 = vsub.f32 %v934, %v935
    %v937 = vand.u32 %v936, 4294901760
    %938 = vmatpush1.msra.mxu0 %v937
    %939 = vmatprep.subr.mxu0 0.0
    %v940 = vand.u32 %v807, 4294901760
    %v941 = vsub.f32 %v807, %v940
    %v942 = vand.u32 %v941, 4294901760
    %v943 = vsub.f32 %v941, %v942
    %v944 = vand.u32 %v943, 4294901760
    %945 = vmatpush1.msra.mxu0 %v944
    %946 = vmatprep.subr.mxu0 0.0
    %v947 = vand.u32 %v808, 4294901760
    %v948 = vsub.f32 %v808, %v947
    %v949 = vand.u32 %v948, 4294901760
    %v950 = vsub.f32 %v948, %v949
    %v951 = vand.u32 %v950, 4294901760
    %952 = vmatpush1.msra.mxu0 %v951
    %953 = vmatprep.subr.mxu0 0.0
    %v954 = vand.u32 %v809, 4294901760
    %v955 = vsub.f32 %v809, %v954
    %v956 = vand.u32 %v955, 4294901760
    %v957 = vsub.f32 %v955, %v956
    %v958 = vand.u32 %v957, 4294901760
    %959 = vmatpush1.msra.mxu0 %v958
    %960 = vmatprep.subr.mxu0 0.0
    %v961 = vand.u32 %v810, 4294901760
    %v962 = vsub.f32 %v810, %v961
    %v963 = vand.u32 %v962, 4294901760
    %v964 = vsub.f32 %v962, %v963
    %v965 = vand.u32 %v964, 4294901760
    %966 = vmatpush1.msra.mxu0 %v965
    %967 = vmatprep.subr.mxu0 0.0
    %v968 = vand.u32 %v811, 4294901760
    %v969 = vsub.f32 %v811, %v968
    %v970 = vand.u32 %v969, 4294901760
    %v971 = vsub.f32 %v969, %v970
    %v972 = vand.u32 %v971, 4294901760
    %973 = vmatpush1.msra.mxu0 %v972
    %974 = vmatprep.subr.mxu0 0.0
    %v975 = vand.u32 %v812, 4294901760
    %v976 = vsub.f32 %v812, %v975
    %v977 = vand.u32 %v976, 4294901760
    %v978 = vsub.f32 %v976, %v977
    %v979 = vand.u32 %v978, 4294901760
    %980 = vmatpush1.msra.mxu0 %v979
    %981 = vmatprep.subr.mxu0 0.0
    %v982 = vand.u32 %v813, 4294901760
    %v983 = vsub.f32 %v813, %v982
    %v984 = vand.u32 %v983, 4294901760
    %v985 = vsub.f32 %v983, %v984
    %v986 = vand.u32 %v985, 4294901760
    %987 = vmatpush1.msra.mxu0 %v986
    %988 = vmatprep.subr.mxu0 0.0
    %v989 = vand.u32 %v814, 4294901760
    %v990 = vsub.f32 %v814, %v989
    %v991 = vand.u32 %v990, 4294901760
    %v992 = vsub.f32 %v990, %v991
    %v993 = vand.u32 %v992, 4294901760
    %994 = vmatpush1.msra.mxu0 %v993
    %995 = vmatprep.subr.mxu0 0.0
    %v996 = vand.u32 %v815, 4294901760
    %v997 = vsub.f32 %v815, %v996
    %v998 = vand.u32 %v997, 4294901760
    %v999 = vsub.f32 %v997, %v998
    %v1000 = vand.u32 %v999, 4294901760
    %1001 = vmatpush1.msra.mxu0 %v1000
    %1002 = vmatprep.subr.mxu0 0.0
    %v1003 = vand.u32 %v816, 4294901760
    %v1004 = vsub.f32 %v816, %v1003
    %v1005 = vand.u32 %v1004, 4294901760
    %v1006 = vsub.f32 %v1004, %v1005
    %v1007 = vand.u32 %v1006, 4294901760
    %1008 = vmatpush1.msra.mxu0 %v1007
    %1009 = vmatprep.subr.mxu0 0.0
    %v1010 = vand.u32 %v817, 4294901760
    %v1011 = vsub.f32 %v817, %v1010
    %v1012 = vand.u32 %v1011, 4294901760
    %v1013 = vsub.f32 %v1011, %v1012
    %v1014 = vand.u32 %v1013, 4294901760
    %1015 = vmatpush1.msra.mxu0 %v1014
    %1016 = vmatprep.subr.mxu0 0.0
    %v1017 = vand.u32 %v818, 4294901760
    %v1018 = vsub.f32 %v818, %v1017
    %v1019 = vand.u32 %v1018, 4294901760
    %v1020 = vsub.f32 %v1018, %v1019
    %v1021 = vand.u32 %v1020, 4294901760
    %1022 = vmatpush1.msra.mxu0 %v1021
    %1023 = vmatprep.subr.mxu0 0.0
    %v1024 = vand.u32 %v819, 4294901760
    %v1025 = vsub.f32 %v819, %v1024
    %v1026 = vand.u32 %v1025, 4294901760
    %v1027 = vsub.f32 %v1025, %v1026
    %v1028 = vand.u32 %v1027, 4294901760
    %1029 = vmatpush1.msra.mxu0 %v1028
    %1030 = vmatprep.subr.mxu0 0.0
    %1031 = vmatpush1.msra.mxu0 0.0
    %1032 = vmatprep.subr.mxu0 0.0
    %1033 = vmatpush1.msra.mxu0 0.0
    %1034 = vmatprep.subr.mxu0 0.0
    %1035 = vmatpush1.msra.mxu0 0.0
    %1036 = vmatprep.subr.mxu0 0.0
    %1037 = vmatpush1.msra.mxu0 0.0
    %1038 = vmatprep.subr.mxu0 0.0
    %1039 = vmatpush1.msra.mxu0 0.0
    %1040 = vmatprep.subr.mxu0 0.0
    %1041 = vmatpush1.msra.mxu0 0.0
    %1042 = vmatprep.subr.mxu0 0.0
    %1043 = vmatpush1.msra.mxu0 0.0
    %1044 = vmatprep.subr.mxu0 0.0
    %1045 = vmatpush1.msra.mxu0 0.0
    %1046 = vmatprep.subr.mxu0 0.0
    %1047 = vmatpush1.msra.mxu0 0.0
    %1048 = vmatprep.subr.mxu0 0.0
    %1049 = vmatpush1.msra.mxu0 0.0
    %1050 = vmatprep.subr.mxu0 0.0
    %1051 = vmatpush1.msra.mxu0 0.0
    %1052 = vmatprep.subr.mxu0 0.0
    %1053 = vmatpush1.msra.mxu0 0.0
    %1054 = vmatprep.subr.mxu0 0.0
    %1055 = vmatpush1.msra.mxu0 0.0
    %1056 = vmatprep.subr.mxu0 0.0
    %1057 = vmatpush1.msra.mxu0 0.0
    %1058 = vmatprep.subr.mxu0 0.0
    %1059 = vmatpush1.msra.mxu0 0.0
    %1060 = vmatprep.subr.mxu0 0.0
    %1061 = vmatpush1.msra.mxu0 0.0
    %1062 = vmatprep.mubr.f32.mxu0 0.0
    %v1063 = vand.u32 %v803, 4294901760
    %1064 = vmatmul.mubr.f32.gmra.mrb[0].mxu0 %v1063
    %v1065 = vpop.f32.mrb[0].mxu0
    %v1066 = vadd.f32 %v915, %v1065
    %v1067 = vpop.f32.mrb[0].mxu0
    %1068 = vdwg.mxu0
    %1069 = vmatprep.subr.mxu0 0.0
    %v1070 = vand.u32 %v804, 4294901760
    %v1071 = vsub.f32 %v804, %v1070
    %1072 = vmatpush1.msra.mxu0 %v1071
    %1073 = vmatprep.subr.mxu0 0.0
    %v1074 = vand.u32 %v805, 4294901760
    %v1075 = vsub.f32 %v805, %v1074
    %1076 = vmatpush1.msra.mxu0 %v1075
    %1077 = vmatprep.subr.mxu0 0.0
    %v1078 = vand.u32 %v806, 4294901760
    %v1079 = vsub.f32 %v806, %v1078
    %1080 = vmatpush1.msra.mxu0 %v1079
    %1081 = vmatprep.subr.mxu0 0.0
    %v1082 = vand.u32 %v807, 4294901760
    %v1083 = vsub.f32 %v807, %v1082
    %1084 = vmatpush1.msra.mxu0 %v1083
    %1085 = vmatprep.subr.mxu0 0.0
    %v1086 = vand.u32 %v808, 4294901760
    %v1087 = vsub.f32 %v808, %v1086
    %1088 = vmatpush1.msra.mxu0 %v1087
    %1089 = vmatprep.subr.mxu0 0.0
    %v1090 = vand.u32 %v809, 4294901760
    %v1091 = vsub.f32 %v809, %v1090
    %1092 = vmatpush1.msra.mxu0 %v1091
    %1093 = vmatprep.subr.mxu0 0.0
    %v1094 = vand.u32 %v810, 4294901760
    %v1095 = vsub.f32 %v810, %v1094
    %1096 = vmatpush1.msra.mxu0 %v1095
    %1097 = vmatprep.subr.mxu0 0.0
    %v1098 = vand.u32 %v811, 4294901760
    %v1099 = vsub.f32 %v811, %v1098
    %1100 = vmatpush1.msra.mxu0 %v1099
    %1101 = vmatprep.subr.mxu0 0.0
    %v1102 = vand.u32 %v812, 4294901760
    %v1103 = vsub.f32 %v812, %v1102
    %1104 = vmatpush1.msra.mxu0 %v1103
    %1105 = vmatprep.subr.mxu0 0.0
    %v1106 = vand.u32 %v813, 4294901760
    %v1107 = vsub.f32 %v813, %v1106
    %1108 = vmatpush1.msra.mxu0 %v1107
    %1109 = vmatprep.subr.mxu0 0.0
    %v1110 = vand.u32 %v814, 4294901760
    %v1111 = vsub.f32 %v814, %v1110
    %1112 = vmatpush1.msra.mxu0 %v1111
    %1113 = vmatprep.subr.mxu0 0.0
    %v1114 = vand.u32 %v815, 4294901760
    %v1115 = vsub.f32 %v815, %v1114
    %1116 = vmatpush1.msra.mxu0 %v1115
    %1117 = vmatprep.subr.mxu0 0.0
    %v1118 = vand.u32 %v816, 4294901760
    %v1119 = vsub.f32 %v816, %v1118
    %1120 = vmatpush1.msra.mxu0 %v1119
    %1121 = vmatprep.subr.mxu0 0.0
    %v1122 = vand.u32 %v817, 4294901760
    %v1123 = vsub.f32 %v817, %v1122
    %1124 = vmatpush1.msra.mxu0 %v1123
    %1125 = vmatprep.subr.mxu0 0.0
    %v1126 = vand.u32 %v818, 4294901760
    %v1127 = vsub.f32 %v818, %v1126
    %1128 = vmatpush1.msra.mxu0 %v1127
    %1129 = vmatprep.subr.mxu0 0.0
    %v1130 = vand.u32 %v819, 4294901760
    %v1131 = vsub.f32 %v819, %v1130
    %1132 = vmatpush1.msra.mxu0 %v1131
    %1133 = vmatprep.subr.mxu0 0.0
    %1134 = vmatpush1.msra.mxu0 0.0
    %1135 = vmatprep.subr.mxu0 0.0
    %1136 = vmatpush1.msra.mxu0 0.0
    %1137 = vmatprep.subr.mxu0 0.0
    %1138 = vmatpush1.msra.mxu0 0.0
    %1139 = vmatprep.subr.mxu0 0.0
    %1140 = vmatpush1.msra.mxu0 0.0
    %1141 = vmatprep.subr.mxu0 0.0
    %1142 = vmatpush1.msra.mxu0 0.0
    %1143 = vmatprep.subr.mxu0 0.0
    %1144 = vmatpush1.msra.mxu0 0.0
    %1145 = vmatprep.subr.mxu0 0.0
    %1146 = vmatpush1.msra.mxu0 0.0
    %1147 = vmatprep.subr.mxu0 0.0
    %1148 = vmatpush1.msra.mxu0 0.0
    %1149 = vmatprep.subr.mxu0 0.0
    %1150 = vmatpush1.msra.mxu0 0.0
    %1151 = vmatprep.subr.mxu0 0.0
    %1152 = vmatpush1.msra.mxu0 0.0
    %1153 = vmatprep.subr.mxu0 0.0
    %1154 = vmatpush1.msra.mxu0 0.0
    %1155 = vmatprep.subr.mxu0 0.0
    %1156 = vmatpush1.msra.mxu0 0.0
    %1157 = vmatprep.subr.mxu0 0.0
    %1158 = vmatpush1.msra.mxu0 0.0
    %1159 = vmatprep.subr.mxu0 0.0
    %1160 = vmatpush1.msra.mxu0 0.0
    %1161 = vmatprep.subr.mxu0 0.0
    %1162 = vmatpush1.msra.mxu0 0.0
    %1163 = vmatprep.subr.mxu0 0.0
    %1164 = vmatpush1.msra.mxu0 0.0
    %1165 = vmatprep.mubr.f32.mxu0 0.0
    %v1166 = vand.u32 %v803, 4294901760
    %v1167 = vsub.f32 %v803, %v1166
    %1168 = vmatmul.mubr.f32.gmra.mrb[0].mxu0 %v1167
    %v1169 = vpop.f32.mrb[0].mxu0
    %v1170 = vadd.f32 %v1066, %v1169
    %v1171 = vpop.f32.mrb[0].mxu0
    %1172 = vdwg.mxu0
    %1173 = vmatprep.subr.mxu0 0.0
    %v1174 = vand.u32 %v804, 4294901760
    %1175 = vmatpush1.msra.mxu0 %v1174
    %1176 = vmatprep.subr.mxu0 0.0
    %v1177 = vand.u32 %v805, 4294901760
    %1178 = vmatpush1.msra.mxu0 %v1177
    %1179 = vmatprep.subr.mxu0 0.0
    %v1180 = vand.u32 %v806, 4294901760
    %1181 = vmatpush1.msra.mxu0 %v1180
    %1182 = vmatprep.subr.mxu0 0.0
    %v1183 = vand.u32 %v807, 4294901760
    %1184 = vmatpush1.msra.mxu0 %v1183
    %1185 = vmatprep.subr.mxu0 0.0
    %v1186 = vand.u32 %v808, 4294901760
    %1187 = vmatpush1.msra.mxu0 %v1186
    %1188 = vmatprep.subr.mxu0 0.0
    %v1189 = vand.u32 %v809, 4294901760
    %1190 = vmatpush1.msra.mxu0 %v1189
    %1191 = vmatprep.subr.mxu0 0.0
    %v1192 = vand.u32 %v810, 4294901760
    %1193 = vmatpush1.msra.mxu0 %v1192
    %1194 = vmatprep.subr.mxu0 0.0
    %v1195 = vand.u32 %v811, 4294901760
    %1196 = vmatpush1.msra.mxu0 %v1195
    %1197 = vmatprep.subr.mxu0 0.0
    %v1198 = vand.u32 %v812, 4294901760
    %1199 = vmatpush1.msra.mxu0 %v1198
    %1200 = vmatprep.subr.mxu0 0.0
    %v1201 = vand.u32 %v813, 4294901760
    %1202 = vmatpush1.msra.mxu0 %v1201
    %1203 = vmatprep.subr.mxu0 0.0
    %v1204 = vand.u32 %v814, 4294901760
    %1205 = vmatpush1.msra.mxu0 %v1204
    %1206 = vmatprep.subr.mxu0 0.0
    %v1207 = vand.u32 %v815, 4294901760
    %1208 = vmatpush1.msra.mxu0 %v1207
    %1209 = vmatprep.subr.mxu0 0.0
    %v1210 = vand.u32 %v816, 4294901760
    %1211 = vmatpush1.msra.mxu0 %v1210
    %1212 = vmatprep.subr.mxu0 0.0
    %v1213 = vand.u32 %v817, 4294901760
    %1214 = vmatpush1.msra.mxu0 %v1213
    %1215 = vmatprep.subr.mxu0 0.0
    %v1216 = vand.u32 %v818, 4294901760
    %1217 = vmatpush1.msra.mxu0 %v1216
    %1218 = vmatprep.subr.mxu0 0.0
    %v1219 = vand.u32 %v819, 4294901760
    %1220 = vmatpush1.msra.mxu0 %v1219
    %1221 = vmatprep.subr.mxu0 0.0
    %1222 = vmatpush1.msra.mxu0 0.0
    %1223 = vmatprep.subr.mxu0 0.0
    %1224 = vmatpush1.msra.mxu0 0.0
    %1225 = vmatprep.subr.mxu0 0.0
    %1226 = vmatpush1.msra.mxu0 0.0
    %1227 = vmatprep.subr.mxu0 0.0
    %1228 = vmatpush1.msra.mxu0 0.0
    %1229 = vmatprep.subr.mxu0 0.0
    %1230 = vmatpush1.msra.mxu0 0.0
    %1231 = vmatprep.subr.mxu0 0.0
    %1232 = vmatpush1.msra.mxu0 0.0
    %1233 = vmatprep.subr.mxu0 0.0
    %1234 = vmatpush1.msra.mxu0 0.0
    %1235 = vmatprep.subr.mxu0 0.0
    %1236 = vmatpush1.msra.mxu0 0.0
    %1237 = vmatprep.subr.mxu0 0.0
    %1238 = vmatpush1.msra.mxu0 0.0
    %1239 = vmatprep.subr.mxu0 0.0
    %1240 = vmatpush1.msra.mxu0 0.0
    %1241 = vmatprep.subr.mxu0 0.0
    %1242 = vmatpush1.msra.mxu0 0.0
    %1243 = vmatprep.subr.mxu0 0.0
    %1244 = vmatpush1.msra.mxu0 0.0
    %1245 = vmatprep.subr.mxu0 0.0
    %1246 = vmatpush1.msra.mxu0 0.0
    %1247 = vmatprep.subr.mxu0 0.0
    %1248 = vmatpush1.msra.mxu0 0.0
    %1249 = vmatprep.subr.mxu0 0.0
    %1250 = vmatpush1.msra.mxu0 0.0
    %1251 = vmatprep.subr.mxu0 0.0
    %1252 = vmatpush1.msra.mxu0 0.0
    %1253 = vmatprep.mubr.f32.mxu0 0.0
    %v1254 = vand.u32 %v803, 4294901760
    %v1255 = vsub.f32 %v803, %v1254
    %v1256 = vand.u32 %v1255, 4294901760
    %1257 = vmatmul.mubr.f32.gmra.mrb[0].mxu0 %v1256
    %v1258 = vpop.f32.mrb[0].mxu0
    %v1259 = vadd.f32 %v1170, %v1258
    %v1260 = vpop.f32.mrb[0].mxu0
    %1261 = vdwg.mxu0
    %1262 = vmatprep.subr.mxu0 0.0
    %v1263 = vand.u32 %v804, 4294901760
    %v1264 = vsub.f32 %v804, %v1263
    %v1265 = vand.u32 %v1264, 4294901760
    %1266 = vmatpush1.msra.mxu0 %v1265
    %1267 = vmatprep.subr.mxu0 0.0
    %v1268 = vand.u32 %v805, 4294901760
    %v1269 = vsub.f32 %v805, %v1268
    %v1270 = vand.u32 %v1269, 4294901760
    %1271 = vmatpush1.msra.mxu0 %v1270
    %1272 = vmatprep.subr.mxu0 0.0
    %v1273 = vand.u32 %v806, 4294901760
    %v1274 = vsub.f32 %v806, %v1273
    %v1275 = vand.u32 %v1274, 4294901760
    %1276 = vmatpush1.msra.mxu0 %v1275
    %1277 = vmatprep.subr.mxu0 0.0
    %v1278 = vand.u32 %v807, 4294901760
    %v1279 = vsub.f32 %v807, %v1278
    %v1280 = vand.u32 %v1279, 4294901760
    %1281 = vmatpush1.msra.mxu0 %v1280
    %1282 = vmatprep.subr.mxu0 0.0
    %v1283 = vand.u32 %v808, 4294901760
    %v1284 = vsub.f32 %v808, %v1283
    %v1285 = vand.u32 %v1284, 4294901760
    %1286 = vmatpush1.msra.mxu0 %v1285
    %1287 = vmatprep.subr.mxu0 0.0
    %v1288 = vand.u32 %v809, 4294901760
    %v1289 = vsub.f32 %v809, %v1288
    %v1290 = vand.u32 %v1289, 4294901760
    %1291 = vmatpush1.msra.mxu0 %v1290
    %1292 = vmatprep.subr.mxu0 0.0
    %v1293 = vand.u32 %v810, 4294901760
    %v1294 = vsub.f32 %v810, %v1293
    %v1295 = vand.u32 %v1294, 4294901760
    %1296 = vmatpush1.msra.mxu0 %v1295
    %1297 = vmatprep.subr.mxu0 0.0
    %v1298 = vand.u32 %v811, 4294901760
    %v1299 = vsub.f32 %v811, %v1298
    %v1300 = vand.u32 %v1299, 4294901760
    %1301 = vmatpush1.msra.mxu0 %v1300
    %1302 = vmatprep.subr.mxu0 0.0
    %v1303 = vand.u32 %v812, 4294901760
    %v1304 = vsub.f32 %v812, %v1303
    %v1305 = vand.u32 %v1304, 4294901760
    %1306 = vmatpush1.msra.mxu0 %v1305
    %1307 = vmatprep.subr.mxu0 0.0
    %v1308 = vand.u32 %v813, 4294901760
    %v1309 = vsub.f32 %v813, %v1308
    %v1310 = vand.u32 %v1309, 4294901760
    %1311 = vmatpush1.msra.mxu0 %v1310
    %1312 = vmatprep.subr.mxu0 0.0
    %v1313 = vand.u32 %v814, 4294901760
    %v1314 = vsub.f32 %v814, %v1313
    %v1315 = vand.u32 %v1314, 4294901760
    %1316 = vmatpush1.msra.mxu0 %v1315
    %1317 = vmatprep.subr.mxu0 0.0
    %v1318 = vand.u32 %v815, 4294901760
    %v1319 = vsub.f32 %v815, %v1318
    %v1320 = vand.u32 %v1319, 4294901760
    %1321 = vmatpush1.msra.mxu0 %v1320
    %1322 = vmatprep.subr.mxu0 0.0
    %v1323 = vand.u32 %v816, 4294901760
    %v1324 = vsub.f32 %v816, %v1323
    %v1325 = vand.u32 %v1324, 4294901760
    %1326 = vmatpush1.msra.mxu0 %v1325
    %1327 = vmatprep.subr.mxu0 0.0
    %v1328 = vand.u32 %v817, 4294901760
    %v1329 = vsub.f32 %v817, %v1328
    %v1330 = vand.u32 %v1329, 4294901760
    %1331 = vmatpush1.msra.mxu0 %v1330
    %1332 = vmatprep.subr.mxu0 0.0
    %v1333 = vand.u32 %v818, 4294901760
    %v1334 = vsub.f32 %v818, %v1333
    %v1335 = vand.u32 %v1334, 4294901760
    %1336 = vmatpush1.msra.mxu0 %v1335
    %1337 = vmatprep.subr.mxu0 0.0
    %v1338 = vand.u32 %v819, 4294901760
    %v1339 = vsub.f32 %v819, %v1338
    %v1340 = vand.u32 %v1339, 4294901760
    %1341 = vmatpush1.msra.mxu0 %v1340
    %1342 = vmatprep.subr.mxu0 0.0
    %1343 = vmatpush1.msra.mxu0 0.0
    %1344 = vmatprep.subr.mxu0 0.0
    %1345 = vmatpush1.msra.mxu0 0.0
    %1346 = vmatprep.subr.mxu0 0.0
    %1347 = vmatpush1.msra.mxu0 0.0
    %1348 = vmatprep.subr.mxu0 0.0
    %1349 = vmatpush1.msra.mxu0 0.0
    %1350 = vmatprep.subr.mxu0 0.0
    %1351 = vmatpush1.msra.mxu0 0.0
    %1352 = vmatprep.subr.mxu0 0.0
    %1353 = vmatpush1.msra.mxu0 0.0
    %1354 = vmatprep.subr.mxu0 0.0
    %1355 = vmatpush1.msra.mxu0 0.0
    %1356 = vmatprep.subr.mxu0 0.0
    %1357 = vmatpush1.msra.mxu0 0.0
    %1358 = vmatprep.subr.mxu0 0.0
    %1359 = vmatpush1.msra.mxu0 0.0
    %1360 = vmatprep.subr.mxu0 0.0
    %1361 = vmatpush1.msra.mxu0 0.0
    %1362 = vmatprep.subr.mxu0 0.0
    %1363 = vmatpush1.msra.mxu0 0.0
    %1364 = vmatprep.subr.mxu0 0.0
    %1365 = vmatpush1.msra.mxu0 0.0
    %1366 = vmatprep.subr.mxu0 0.0
    %1367 = vmatpush1.msra.mxu0 0.0
    %1368 = vmatprep.subr.mxu0 0.0
    %1369 = vmatpush1.msra.mxu0 0.0
    %1370 = vmatprep.subr.mxu0 0.0
    %1371 = vmatpush1.msra.mxu0 0.0
    %1372 = vmatprep.subr.mxu0 0.0
    %1373 = vmatpush1.msra.mxu0 0.0
    %1374 = vmatprep.mubr.f32.mxu0 0.0
    %v1375 = vand.u32 %v803, 4294901760
    %1376 = vmatmul.mubr.f32.gmra.mrb[0].mxu0 %v1375
    %v1377 = vpop.f32.mrb[0].mxu0
    %v1378 = vadd.f32 %v1259, %v1377
    %v1379 = vpop.f32.mrb[0].mxu0
    %1380 = vdwg.mxu0
    %1381 = vmatprep.subr.mxu0 0.0
    %v1382 = vand.u32 %v804, 4294901760
    %1383 = vmatpush1.msra.mxu0 %v1382
    %1384 = vmatprep.subr.mxu0 0.0
    %v1385 = vand.u32 %v805, 4294901760
    %1386 = vmatpush1.msra.mxu0 %v1385
    %1387 = vmatprep.subr.mxu0 0.0
    %v1388 = vand.u32 %v806, 4294901760
    %1389 = vmatpush1.msra.mxu0 %v1388
    %1390 = vmatprep.subr.mxu0 0.0
    %v1391 = vand.u32 %v807, 4294901760
    %1392 = vmatpush1.msra.mxu0 %v1391
    %1393 = vmatprep.subr.mxu0 0.0
    %v1394 = vand.u32 %v808, 4294901760
    %1395 = vmatpush1.msra.mxu0 %v1394
    %1396 = vmatprep.subr.mxu0 0.0
    %v1397 = vand.u32 %v809, 4294901760
    %1398 = vmatpush1.msra.mxu0 %v1397
    %1399 = vmatprep.subr.mxu0 0.0
    %v1400 = vand.u32 %v810, 4294901760
    %1401 = vmatpush1.msra.mxu0 %v1400
    %1402 = vmatprep.subr.mxu0 0.0
    %v1403 = vand.u32 %v811, 4294901760
    %1404 = vmatpush1.msra.mxu0 %v1403
    %1405 = vmatprep.subr.mxu0 0.0
    %v1406 = vand.u32 %v812, 4294901760
    %1407 = vmatpush1.msra.mxu0 %v1406
    %1408 = vmatprep.subr.mxu0 0.0
    %v1409 = vand.u32 %v813, 4294901760
    %1410 = vmatpush1.msra.mxu0 %v1409
    %1411 = vmatprep.subr.mxu0 0.0
    %v1412 = vand.u32 %v814, 4294901760
    %1413 = vmatpush1.msra.mxu0 %v1412
    %1414 = vmatprep.subr.mxu0 0.0
    %v1415 = vand.u32 %v815, 4294901760
    %1416 = vmatpush1.msra.mxu0 %v1415
    %1417 = vmatprep.subr.mxu0 0.0
    %v1418 = vand.u32 %v816, 4294901760
    %1419 = vmatpush1.msra.mxu0 %v1418
    %1420 = vmatprep.subr.mxu0 0.0
    %v1421 = vand.u32 %v817, 4294901760
    %1422 = vmatpush1.msra.mxu0 %v1421
    %1423 = vmatprep.subr.mxu0 0.0
    %v1424 = vand.u32 %v818, 4294901760
    %1425 = vmatpush1.msra.mxu0 %v1424
    %1426 = vmatprep.subr.mxu0 0.0
    %v1427 = vand.u32 %v819, 4294901760
    %1428 = vmatpush1.msra.mxu0 %v1427
    %1429 = vmatprep.subr.mxu0 0.0
    %1430 = vmatpush1.msra.mxu0 0.0
    %1431 = vmatprep.subr.mxu0 0.0
    %1432 = vmatpush1.msra.mxu0 0.0
    %1433 = vmatprep.subr.mxu0 0.0
    %1434 = vmatpush1.msra.mxu0 0.0
    %1435 = vmatprep.subr.mxu0 0.0
    %1436 = vmatpush1.msra.mxu0 0.0
    %1437 = vmatprep.subr.mxu0 0.0
    %1438 = vmatpush1.msra.mxu0 0.0
    %1439 = vmatprep.subr.mxu0 0.0
    %1440 = vmatpush1.msra.mxu0 0.0
    %1441 = vmatprep.subr.mxu0 0.0
    %1442 = vmatpush1.msra.mxu0 0.0
    %1443 = vmatprep.subr.mxu0 0.0
    %1444 = vmatpush1.msra.mxu0 0.0
    %1445 = vmatprep.subr.mxu0 0.0
    %1446 = vmatpush1.msra.mxu0 0.0
    %1447 = vmatprep.subr.mxu0 0.0
    %1448 = vmatpush1.msra.mxu0 0.0
    %1449 = vmatprep.subr.mxu0 0.0
    %1450 = vmatpush1.msra.mxu0 0.0
    %1451 = vmatprep.subr.mxu0 0.0
    %1452 = vmatpush1.msra.mxu0 0.0
    %1453 = vmatprep.subr.mxu0 0.0
    %1454 = vmatpush1.msra.mxu0 0.0
    %1455 = vmatprep.subr.mxu0 0.0
    %1456 = vmatpush1.msra.mxu0 0.0
    %1457 = vmatprep.subr.mxu0 0.0
    %1458 = vmatpush1.msra.mxu0 0.0
    %1459 = vmatprep.subr.mxu0 0.0
    %1460 = vmatpush1.msra.mxu0 0.0
    %1461 = vmatprep.mubr.f32.mxu0 0.0
    %v1462 = vand.u32 %v803, 4294901760
    %1463 = vmatmul.mubr.f32.gmra.mrb[0].mxu0 %v1462
    %v1464 = vpop.f32.mrb[0].mxu0
    %v1465 = vadd.f32 %v1378, %v1464
    %v1466 = vpop.f32.mrb[0].mxu0
    %1467 = vdwg.mxu0
    %v1468 = vmax.f32 %v1465, 0.0
    %v1469 = vld [vmem:[#allocation8] sm:$0xff]
    %v1470 = vld [vmem:[#allocation8 + $0x8] sm:$0xff]
    %v1471 = vld [vmem:[#allocation8 + $0x10] sm:$0xff]
    %v1472 = vld [vmem:[#allocation8 + $0x18] sm:$0xff]
    %v1473 = vld [vmem:[#allocation8 + $0x20] sm:$0xff]
    %v1474 = vld [vmem:[#allocation8 + $0x28] sm:$0xff]
    %v1475 = vld [vmem:[#allocation8 + $0x30] sm:$0xff]
    %v1476 = vld [vmem:[#allocation8 + $0x38] sm:$0xff]
    %v1477 = vld [vmem:[#allocation8 + $0x40] sm:$0xff]
    %v1478 = vld [vmem:[#allocation8 + $0x48] sm:$0xff]
    %v1479 = vld [vmem:[#allocation8 + $0x50] sm:$0xff]
    %v1480 = vld [vmem:[#allocation8 + $0x58] sm:$0xff]
    %v1481 = vld [vmem:[#allocation8 + $0x60] sm:$0xff]
    %v1482 = vld [vmem:[#allocation8 + $0x68] sm:$0xff]
    %v1483 = vld [vmem:[#allocation8 + $0x70] sm:$0xff]
    %v1484 = vld [vmem:[#allocation8 + $0x78] sm:$0xff]
    %v1485 = vld [vmem:[%s6] sm:$0x1]
    %v1487 = vlaneseq
    %v1488 = vshrl.u32 %v1487, 7
    %v1489 = vsub.s32 0, %v1488
    %v1490 = vrot.slane %v1485, %v1489
    %1492 = vmatprep.subr.mxu0 0.0
    %v1493 = vand.u32 %v1469, 4294901760
    %1494 = vmatpush1.msra.mxu0 %v1493
    %1495 = vmatprep.subr.mxu0 0.0
    %v1496 = vand.u32 %v1470, 4294901760
    %1497 = vmatpush1.msra.mxu0 %v1496
    %1498 = vmatprep.subr.mxu0 0.0
    %v1499 = vand.u32 %v1471, 4294901760
    %1500 = vmatpush1.msra.mxu0 %v1499
    %1501 = vmatprep.subr.mxu0 0.0
    %v1502 = vand.u32 %v1472, 4294901760
    %1503 = vmatpush1.msra.mxu0 %v1502
    %1504 = vmatprep.subr.mxu0 0.0
    %v1505 = vand.u32 %v1473, 4294901760
    %1506 = vmatpush1.msra.mxu0 %v1505
    %1507 = vmatprep.subr.mxu0 0.0
    %v1508 = vand.u32 %v1474, 4294901760
    %1509 = vmatpush1.msra.mxu0 %v1508
    %1510 = vmatprep.subr.mxu0 0.0
    %v1511 = vand.u32 %v1475, 4294901760
    %1512 = vmatpush1.msra.mxu0 %v1511
    %1513 = vmatprep.subr.mxu0 0.0
    %v1514 = vand.u32 %v1476, 4294901760
    %1515 = vmatpush1.msra.mxu0 %v1514
    %1516 = vmatprep.subr.mxu0 0.0
    %v1517 = vand.u32 %v1477, 4294901760
    %1518 = vmatpush1.msra.mxu0 %v1517
    %1519 = vmatprep.subr.mxu0 0.0
    %v1520 = vand.u32 %v1478, 4294901760
    %1521 = vmatpush1.msra.mxu0 %v1520
    %1522 = vmatprep.subr.mxu0 0.0
    %v1523 = vand.u32 %v1479, 4294901760
    %1524 = vmatpush1.msra.mxu0 %v1523
    %1525 = vmatprep.subr.mxu0 0.0
    %v1526 = vand.u32 %v1480, 4294901760
    %1527 = vmatpush1.msra.mxu0 %v1526
    %1528 = vmatprep.subr.mxu0 0.0
    %v1529 = vand.u32 %v1481, 4294901760
    %1530 = vmatpush1.msra.mxu0 %v1529
    %1531 = vmatprep.subr.mxu0 0.0
    %v1532 = vand.u32 %v1482, 4294901760
    %1533 = vmatpush1.msra.mxu0 %v1532
    %1534 = vmatprep.subr.mxu0 0.0
    %v1535 = vand.u32 %v1483, 4294901760
    %1536 = vmatpush1.msra.mxu0 %v1535
    %1537 = vmatprep.subr.mxu0 0.0
    %v1538 = vand.u32 %v1484, 4294901760
    %1539 = vmatpush1.msra.mxu0 %v1538
    %1540 = vmatprep.subr.mxu0 0.0
    %1541 = vmatpush1.msra.mxu0 0.0
    %1542 = vmatprep.subr.mxu0 0.0
    %1543 = vmatpush1.msra.mxu0 0.0
    %1544 = vmatprep.subr.mxu0 0.0
    %1545 = vmatpush1.msra.mxu0 0.0
    %1546 = vmatprep.subr.mxu0 0.0
    %1547 = vmatpush1.msra.mxu0 0.0
    %1548 = vmatprep.subr.mxu0 0.0
    %1549 = vmatpush1.msra.mxu0 0.0
    %1550 = vmatprep.subr.mxu0 0.0
    %1551 = vmatpush1.msra.mxu0 0.0
    %1552 = vmatprep.subr.mxu0 0.0
    %1553 = vmatpush1.msra.mxu0 0.0
    %1554 = vmatprep.subr.mxu0 0.0
    %1555 = vmatpush1.msra.mxu0 0.0
    %1556 = vmatprep.subr.mxu0 0.0
    %1557 = vmatpush1.msra.mxu0 0.0
    %1558 = vmatprep.subr.mxu0 0.0
    %1559 = vmatpush1.msra.mxu0 0.0
    %1560 = vmatprep.subr.mxu0 0.0
    %1561 = vmatpush1.msra.mxu0 0.0
    %1562 = vmatprep.subr.mxu0 0.0
    %1563 = vmatpush1.msra.mxu0 0.0
    %1564 = vmatprep.subr.mxu0 0.0
    %1565 = vmatpush1.msra.mxu0 0.0
    %1566 = vmatprep.subr.mxu0 0.0
    %1567 = vmatpush1.msra.mxu0 0.0
    %1568 = vmatprep.subr.mxu0 0.0
    %1569 = vmatpush1.msra.mxu0 0.0
    %1570 = vmatprep.subr.mxu0 0.0
    %1571 = vmatpush1.msra.mxu0 0.0
    %1572 = vmatprep.mubr.f32.mxu0 0.0
    %v1573 = vand.u32 %v1468, 4294901760
    %v1574 = vsub.f32 %v1468, %v1573
    %v1575 = vand.u32 %v1574, 4294901760
    %v1576 = vsub.f32 %v1574, %v1575
    %v1577 = vand.u32 %v1576, 4294901760
    %1578 = vmatmul.mubr.f32.gmra.mrb[0].mxu0 %v1577
    %v1579 = vpop.f32.mrb[0].mxu0
    %v1580 = vadd.f32 %v1490, %v1579
    %v1581 = vpop.f32.mrb[0].mxu0
    %1582 = vdwg.mxu0
    %1583 = vmatprep.subr.mxu0 0.0
    %v1584 = vand.u32 %v1469, 4294901760
    %v1585 = vsub.f32 %v1469, %v1584
    %v1586 = vand.u32 %v1585, 4294901760
    %v1587 = vsub.f32 %v1585, %v1586
    %v1588 = vand.u32 %v1587, 4294901760
    %1589 = vmatpush1.msra.mxu0 %v1588
    %1590 = vmatprep.subr.mxu0 0.0
    %v1591 = vand.u32 %v1470, 4294901760
    %v1592 = vsub.f32 %v1470, %v1591
    %v1593 = vand.u32 %v1592, 4294901760
    %v1594 = vsub.f32 %v1592, %v1593
    %v1595 = vand.u32 %v1594, 4294901760
    %1596 = vmatpush1.msra.mxu0 %v1595
    %1597 = vmatprep.subr.mxu0 0.0
    %v1598 = vand.u32 %v1471, 4294901760
    %v1599 = vsub.f32 %v1471, %v1598
    %v1600 = vand.u32 %v1599, 4294901760
    %v1601 = vsub.f32 %v1599, %v1600
    %v1602 = vand.u32 %v1601, 4294901760
    %1603 = vmatpush1.msra.mxu0 %v1602
    %1604 = vmatprep.subr.mxu0 0.0
    %v1605 = vand.u32 %v1472, 4294901760
    %v1606 = vsub.f32 %v1472, %v1605
    %v1607 = vand.u32 %v1606, 4294901760
    %v1608 = vsub.f32 %v1606, %v1607
    %v1609 = vand.u32 %v1608, 4294901760
    %1610 = vmatpush1.msra.mxu0 %v1609
    %1611 = vmatprep.subr.mxu0 0.0
    %v1612 = vand.u32 %v1473, 4294901760
    %v1613 = vsub.f32 %v1473, %v1612
    %v1614 = vand.u32 %v1613, 4294901760
    %v1615 = vsub.f32 %v1613, %v1614
    %v1616 = vand.u32 %v1615, 4294901760
    %1617 = vmatpush1.msra.mxu0 %v1616
    %1618 = vmatprep.subr.mxu0 0.0
    %v1619 = vand.u32 %v1474, 4294901760
    %v1620 = vsub.f32 %v1474, %v1619
    %v1621 = vand.u32 %v1620, 4294901760
    %v1622 = vsub.f32 %v1620, %v1621
    %v1623 = vand.u32 %v1622, 4294901760
    %1624 = vmatpush1.msra.mxu0 %v1623
    %1625 = vmatprep.subr.mxu0 0.0
    %v1626 = vand.u32 %v1475, 4294901760
    %v1627 = vsub.f32 %v1475, %v1626
    %v1628 = vand.u32 %v1627, 4294901760
    %v1629 = vsub.f32 %v1627, %v1628
    %v1630 = vand.u32 %v1629, 4294901760
    %1631 = vmatpush1.msra.mxu0 %v1630
    %1632 = vmatprep.subr.mxu0 0.0
    %v1633 = vand.u32 %v1476, 4294901760
    %v1634 = vsub.f32 %v1476, %v1633
    %v1635 = vand.u32 %v1634, 4294901760
    %v1636 = vsub.f32 %v1634, %v1635
    %v1637 = vand.u32 %v1636, 4294901760
    %1638 = vmatpush1.msra.mxu0 %v1637
    %1639 = vmatprep.subr.mxu0 0.0
    %v1640 = vand.u32 %v1477, 4294901760
    %v1641 = vsub.f32 %v1477, %v1640
    %v1642 = vand.u32 %v1641, 4294901760
    %v1643 = vsub.f32 %v1641, %v1642
    %v1644 = vand.u32 %v1643, 4294901760
    %1645 = vmatpush1.msra.mxu0 %v1644
    %1646 = vmatprep.subr.mxu0 0.0
    %v1647 = vand.u32 %v1478, 4294901760
    %v1648 = vsub.f32 %v1478, %v1647
    %v1649 = vand.u32 %v1648, 4294901760
    %v1650 = vsub.f32 %v1648, %v1649
    %v1651 = vand.u32 %v1650, 4294901760
    %1652 = vmatpush1.msra.mxu0 %v1651
    %1653 = vmatprep.subr.mxu0 0.0
    %v1654 = vand.u32 %v1479, 4294901760
    %v1655 = vsub.f32 %v1479, %v1654
    %v1656 = vand.u32 %v1655, 4294901760
    %v1657 = vsub.f32 %v1655, %v1656
    %v1658 = vand.u32 %v1657, 4294901760
    %1659 = vmatpush1.msra.mxu0 %v1658
    %1660 = vmatprep.subr.mxu0 0.0
    %v1661 = vand.u32 %v1480, 4294901760
    %v1662 = vsub.f32 %v1480, %v1661
    %v1663 = vand.u32 %v1662, 4294901760
    %v1664 = vsub.f32 %v1662, %v1663
    %v1665 = vand.u32 %v1664, 4294901760
    %1666 = vmatpush1.msra.mxu0 %v1665
    %1667 = vmatprep.subr.mxu0 0.0
    %v1668 = vand.u32 %v1481, 4294901760
    %v1669 = vsub.f32 %v1481, %v1668
    %v1670 = vand.u32 %v1669, 4294901760
    %v1671 = vsub.f32 %v1669, %v1670
    %v1672 = vand.u32 %v1671, 4294901760
    %1673 = vmatpush1.msra.mxu0 %v1672
    %1674 = vmatprep.subr.mxu0 0.0
    %v1675 = vand.u32 %v1482, 4294901760
    %v1676 = vsub.f32 %v1482, %v1675
    %v1677 = vand.u32 %v1676, 4294901760
    %v1678 = vsub.f32 %v1676, %v1677
    %v1679 = vand.u32 %v1678, 4294901760
    %1680 = vmatpush1.msra.mxu0 %v1679
    %1681 = vmatprep.subr.mxu0 0.0
    %v1682 = vand.u32 %v1483, 4294901760
    %v1683 = vsub.f32 %v1483, %v1682
    %v1684 = vand.u32 %v1683, 4294901760
    %v1685 = vsub.f32 %v1683, %v1684
    %v1686 = vand.u32 %v1685, 4294901760
    %1687 = vmatpush1.msra.mxu0 %v1686
    %1688 = vmatprep.subr.mxu0 0.0
    %v1689 = vand.u32 %v1484, 4294901760
    %v1690 = vsub.f32 %v1484, %v1689
    %v1691 = vand.u32 %v1690, 4294901760
    %v1692 = vsub.f32 %v1690, %v1691
    %v1693 = vand.u32 %v1692, 4294901760
    %1694 = vmatpush1.msra.mxu0 %v1693
    %1695 = vmatprep.subr.mxu0 0.0
    %1696 = vmatpush1.msra.mxu0 0.0
    %1697 = vmatprep.subr.mxu0 0.0
    %1698 = vmatpush1.msra.mxu0 0.0
    %1699 = vmatprep.subr.mxu0 0.0
    %1700 = vmatpush1.msra.mxu0 0.0
    %1701 = vmatprep.subr.mxu0 0.0
    %1702 = vmatpush1.msra.mxu0 0.0
    %1703 = vmatprep.subr.mxu0 0.0
    %1704 = vmatpush1.msra.mxu0 0.0
    %1705 = vmatprep.subr.mxu0 0.0
    %1706 = vmatpush1.msra.mxu0 0.0
    %1707 = vmatprep.subr.mxu0 0.0
    %1708 = vmatpush1.msra.mxu0 0.0
    %1709 = vmatprep.subr.mxu0 0.0
    %1710 = vmatpush1.msra.mxu0 0.0
    %1711 = vmatprep.subr.mxu0 0.0
    %1712 = vmatpush1.msra.mxu0 0.0
    %1713 = vmatprep.subr.mxu0 0.0
    %1714 = vmatpush1.msra.mxu0 0.0
    %1715 = vmatprep.subr.mxu0 0.0
    %1716 = vmatpush1.msra.mxu0 0.0
    %1717 = vmatprep.subr.mxu0 0.0
    %1718 = vmatpush1.msra.mxu0 0.0
    %1719 = vmatprep.subr.mxu0 0.0
    %1720 = vmatpush1.msra.mxu0 0.0
    %1721 = vmatprep.subr.mxu0 0.0
    %1722 = vmatpush1.msra.mxu0 0.0
    %1723 = vmatprep.subr.mxu0 0.0
    %1724 = vmatpush1.msra.mxu0 0.0
    %1725 = vmatprep.subr.mxu0 0.0
    %1726 = vmatpush1.msra.mxu0 0.0
    %1727 = vmatprep.mubr.f32.mxu0 0.0
    %v1728 = vand.u32 %v1468, 4294901760
    %1729 = vmatmul.mubr.f32.gmra.mrb[0].mxu0 %v1728
    %v1730 = vpop.f32.mrb[0].mxu0
    %v1731 = vadd.f32 %v1580, %v1730
    %v1732 = vpop.f32.mrb[0].mxu0
    %1733 = vdwg.mxu0
    %1734 = vmatprep.subr.mxu0 0.0
    %v1735 = vand.u32 %v1469, 4294901760
    %v1736 = vsub.f32 %v1469, %v1735
    %1737 = vmatpush1.msra.mxu0 %v1736
    %1738 = vmatprep.subr.mxu0 0.0
    %v1739 = vand.u32 %v1470, 4294901760
    %v1740 = vsub.f32 %v1470, %v1739
    %1741 = vmatpush1.msra.mxu0 %v1740
    %1742 = vmatprep.subr.mxu0 0.0
    %v1743 = vand.u32 %v1471, 4294901760
    %v1744 = vsub.f32 %v1471, %v1743
    %1745 = vmatpush1.msra.mxu0 %v1744
    %1746 = vmatprep.subr.mxu0 0.0
    %v1747 = vand.u32 %v1472, 4294901760
    %v1748 = vsub.f32 %v1472, %v1747
    %1749 = vmatpush1.msra.mxu0 %v1748
    %1750 = vmatprep.subr.mxu0 0.0
    %v1751 = vand.u32 %v1473, 4294901760
    %v1752 = vsub.f32 %v1473, %v1751
    %1753 = vmatpush1.msra.mxu0 %v1752
    %1754 = vmatprep.subr.mxu0 0.0
    %v1755 = vand.u32 %v1474, 4294901760
    %v1756 = vsub.f32 %v1474, %v1755
    %1757 = vmatpush1.msra.mxu0 %v1756
    %1758 = vmatprep.subr.mxu0 0.0
    %v1759 = vand.u32 %v1475, 4294901760
    %v1760 = vsub.f32 %v1475, %v1759
    %1761 = vmatpush1.msra.mxu0 %v1760
    %1762 = vmatprep.subr.mxu0 0.0
    %v1763 = vand.u32 %v1476, 4294901760
    %v1764 = vsub.f32 %v1476, %v1763
    %1765 = vmatpush1.msra.mxu0 %v1764
    %1766 = vmatprep.subr.mxu0 0.0
    %v1767 = vand.u32 %v1477, 4294901760
    %v1768 = vsub.f32 %v1477, %v1767
    %1769 = vmatpush1.msra.mxu0 %v1768
    %1770 = vmatprep.subr.mxu0 0.0
    %v1771 = vand.u32 %v1478, 4294901760
    %v1772 = vsub.f32 %v1478, %v1771
    %1773 = vmatpush1.msra.mxu0 %v1772
    %1774 = vmatprep.subr.mxu0 0.0
    %v1775 = vand.u32 %v1479, 4294901760
    %v1776 = vsub.f32 %v1479, %v1775
    %1777 = vmatpush1.msra.mxu0 %v1776
    %1778 = vmatprep.subr.mxu0 0.0
    %v1779 = vand.u32 %v1480, 4294901760
    %v1780 = vsub.f32 %v1480, %v1779
    %1781 = vmatpush1.msra.mxu0 %v1780
    %1782 = vmatprep.subr.mxu0 0.0
    %v1783 = vand.u32 %v1481, 4294901760
    %v1784 = vsub.f32 %v1481, %v1783
    %1785 = vmatpush1.msra.mxu0 %v1784
    %1786 = vmatprep.subr.mxu0 0.0
    %v1787 = vand.u32 %v1482, 4294901760
    %v1788 = vsub.f32 %v1482, %v1787
    %1789 = vmatpush1.msra.mxu0 %v1788
    %1790 = vmatprep.subr.mxu0 0.0
    %v1791 = vand.u32 %v1483, 4294901760
    %v1792 = vsub.f32 %v1483, %v1791
    %1793 = vmatpush1.msra.mxu0 %v1792
    %1794 = vmatprep.subr.mxu0 0.0
    %v1795 = vand.u32 %v1484, 4294901760
    %v1796 = vsub.f32 %v1484, %v1795
    %1797 = vmatpush1.msra.mxu0 %v1796
    %1798 = vmatprep.subr.mxu0 0.0
    %1799 = vmatpush1.msra.mxu0 0.0
    %1800 = vmatprep.subr.mxu0 0.0
    %1801 = vmatpush1.msra.mxu0 0.0
    %1802 = vmatprep.subr.mxu0 0.0
    %1803 = vmatpush1.msra.mxu0 0.0
    %1804 = vmatprep.subr.mxu0 0.0
    %1805 = vmatpush1.msra.mxu0 0.0
    %1806 = vmatprep.subr.mxu0 0.0
    %1807 = vmatpush1.msra.mxu0 0.0
    %1808 = vmatprep.subr.mxu0 0.0
    %1809 = vmatpush1.msra.mxu0 0.0
    %1810 = vmatprep.subr.mxu0 0.0
    %1811 = vmatpush1.msra.mxu0 0.0
    %1812 = vmatprep.subr.mxu0 0.0
    %1813 = vmatpush1.msra.mxu0 0.0
    %1814 = vmatprep.subr.mxu0 0.0
    %1815 = vmatpush1.msra.mxu0 0.0
    %1816 = vmatprep.subr.mxu0 0.0
    %1817 = vmatpush1.msra.mxu0 0.0
    %1818 = vmatprep.subr.mxu0 0.0
    %1819 = vmatpush1.msra.mxu0 0.0
    %1820 = vmatprep.subr.mxu0 0.0
    %1821 = vmatpush1.msra.mxu0 0.0
    %1822 = vmatprep.subr.mxu0 0.0
    %1823 = vmatpush1.msra.mxu0 0.0
    %1824 = vmatprep.subr.mxu0 0.0
    %1825 = vmatpush1.msra.mxu0 0.0
    %1826 = vmatprep.subr.mxu0 0.0
    %1827 = vmatpush1.msra.mxu0 0.0
    %1828 = vmatprep.subr.mxu0 0.0
    %1829 = vmatpush1.msra.mxu0 0.0
    %1830 = vmatprep.mubr.f32.mxu0 0.0
    %v1831 = vand.u32 %v1468, 4294901760
    %v1832 = vsub.f32 %v1468, %v1831
    %1833 = vmatmul.mubr.f32.gmra.mrb[0].mxu0 %v1832
    %v1834 = vpop.f32.mrb[0].mxu0
    %v1835 = vadd.f32 %v1731, %v1834
    %v1836 = vpop.f32.mrb[0].mxu0
    %1837 = vdwg.mxu0
    %1838 = vmatprep.subr.mxu0 0.0
    %v1839 = vand.u32 %v1469, 4294901760
    %1840 = vmatpush1.msra.mxu0 %v1839
    %1841 = vmatprep.subr.mxu0 0.0
    %v1842 = vand.u32 %v1470, 4294901760
    %1843 = vmatpush1.msra.mxu0 %v1842
    %1844 = vmatprep.subr.mxu0 0.0
    %v1845 = vand.u32 %v1471, 4294901760
    %1846 = vmatpush1.msra.mxu0 %v1845
    %1847 = vmatprep.subr.mxu0 0.0
    %v1848 = vand.u32 %v1472, 4294901760
    %1849 = vmatpush1.msra.mxu0 %v1848
    %1850 = vmatprep.subr.mxu0 0.0
    %v1851 = vand.u32 %v1473, 4294901760
    %1852 = vmatpush1.msra.mxu0 %v1851
    %1853 = vmatprep.subr.mxu0 0.0
    %v1854 = vand.u32 %v1474, 4294901760
    %1855 = vmatpush1.msra.mxu0 %v1854
    %1856 = vmatprep.subr.mxu0 0.0
    %v1857 = vand.u32 %v1475, 4294901760
    %1858 = vmatpush1.msra.mxu0 %v1857
    %1859 = vmatprep.subr.mxu0 0.0
    %v1860 = vand.u32 %v1476, 4294901760
    %1861 = vmatpush1.msra.mxu0 %v1860
    %1862 = vmatprep.subr.mxu0 0.0
    %v1863 = vand.u32 %v1477, 4294901760
    %1864 = vmatpush1.msra.mxu0 %v1863
    %1865 = vmatprep.subr.mxu0 0.0
    %v1866 = vand.u32 %v1478, 4294901760
    %1867 = vmatpush1.msra.mxu0 %v1866
    %1868 = vmatprep.subr.mxu0 0.0
    %v1869 = vand.u32 %v1479, 4294901760
    %1870 = vmatpush1.msra.mxu0 %v1869
    %1871 = vmatprep.subr.mxu0 0.0
    %v1872 = vand.u32 %v1480, 4294901760
    %1873 = vmatpush1.msra.mxu0 %v1872
    %1874 = vmatprep.subr.mxu0 0.0
    %v1875 = vand.u32 %v1481, 4294901760
    %1876 = vmatpush1.msra.mxu0 %v1875
    %1877 = vmatprep.subr.mxu0 0.0
    %v1878 = vand.u32 %v1482, 4294901760
    %1879 = vmatpush1.msra.mxu0 %v1878
    %1880 = vmatprep.subr.mxu0 0.0
    %v1881 = vand.u32 %v1483, 4294901760
    %1882 = vmatpush1.msra.mxu0 %v1881
    %1883 = vmatprep.subr.mxu0 0.0
    %v1884 = vand.u32 %v1484, 4294901760
    %1885 = vmatpush1.msra.mxu0 %v1884
    %1886 = vmatprep.subr.mxu0 0.0
    %1887 = vmatpush1.msra.mxu0 0.0
    %1888 = vmatprep.subr.mxu0 0.0
    %1889 = vmatpush1.msra.mxu0 0.0
    %1890 = vmatprep.subr.mxu0 0.0
    %1891 = vmatpush1.msra.mxu0 0.0
    %1892 = vmatprep.subr.mxu0 0.0
    %1893 = vmatpush1.msra.mxu0 0.0
    %1894 = vmatprep.subr.mxu0 0.0
    %1895 = vmatpush1.msra.mxu0 0.0
    %1896 = vmatprep.subr.mxu0 0.0
    %1897 = vmatpush1.msra.mxu0 0.0
    %1898 = vmatprep.subr.mxu0 0.0
    %1899 = vmatpush1.msra.mxu0 0.0
    %1900 = vmatprep.subr.mxu0 0.0
    %1901 = vmatpush1.msra.mxu0 0.0
    %1902 = vmatprep.subr.mxu0 0.0
    %1903 = vmatpush1.msra.mxu0 0.0
    %1904 = vmatprep.subr.mxu0 0.0
    %1905 = vmatpush1.msra.mxu0 0.0
    %1906 = vmatprep.subr.mxu0 0.0
    %1907 = vmatpush1.msra.mxu0 0.0
    %1908 = vmatprep.subr.mxu0 0.0
    %1909 = vmatpush1.msra.mxu0 0.0
    %1910 = vmatprep.subr.mxu0 0.0
    %1911 = vmatpush1.msra.mxu0 0.0
    %1912 = vmatprep.subr.mxu0 0.0
    %1913 = vmatpush1.msra.mxu0 0.0
    %1914 = vmatprep.subr.mxu0 0.0
    %1915 = vmatpush1.msra.mxu0 0.0
    %1916 = vmatprep.subr.mxu0 0.0
    %1917 = vmatpush1.msra.mxu0 0.0
    %1918 = vmatprep.mubr.f32.mxu0 0.0
    %v1919 = vand.u32 %v1468, 4294901760
    %v1920 = vsub.f32 %v1468, %v1919
    %v1921 = vand.u32 %v1920, 4294901760
    %1922 = vmatmul.mubr.f32.gmra.mrb[0].mxu0 %v1921
    %v1923 = vpop.f32.mrb[0].mxu0
    %v1924 = vadd.f32 %v1835, %v1923
    %v1925 = vpop.f32.mrb[0].mxu0
    %1926 = vdwg.mxu0
    %1927 = vmatprep.subr.mxu0 0.0
    %v1928 = vand.u32 %v1469, 4294901760
    %v1929 = vsub.f32 %v1469, %v1928
    %v1930 = vand.u32 %v1929, 4294901760
    %1931 = vmatpush1.msra.mxu0 %v1930
    %1932 = vmatprep.subr.mxu0 0.0
    %v1933 = vand.u32 %v1470, 4294901760
    %v1934 = vsub.f32 %v1470, %v1933
    %v1935 = vand.u32 %v1934, 4294901760
    %1936 = vmatpush1.msra.mxu0 %v1935
    %1937 = vmatprep.subr.mxu0 0.0
    %v1938 = vand.u32 %v1471, 4294901760
    %v1939 = vsub.f32 %v1471, %v1938
    %v1940 = vand.u32 %v1939, 4294901760
    %1941 = vmatpush1.msra.mxu0 %v1940
    %1942 = vmatprep.subr.mxu0 0.0
    %v1943 = vand.u32 %v1472, 4294901760
    %v1944 = vsub.f32 %v1472, %v1943
    %v1945 = vand.u32 %v1944, 4294901760
    %1946 = vmatpush1.msra.mxu0 %v1945
    %1947 = vmatprep.subr.mxu0 0.0
    %v1948 = vand.u32 %v1473, 4294901760
    %v1949 = vsub.f32 %v1473, %v1948
    %v1950 = vand.u32 %v1949, 4294901760
    %1951 = vmatpush1.msra.mxu0 %v1950
    %1952 = vmatprep.subr.mxu0 0.0
    %v1953 = vand.u32 %v1474, 4294901760
    %v1954 = vsub.f32 %v1474, %v1953
    %v1955 = vand.u32 %v1954, 4294901760
    %1956 = vmatpush1.msra.mxu0 %v1955
    %1957 = vmatprep.subr.mxu0 0.0
    %v1958 = vand.u32 %v1475, 4294901760
    %v1959 = vsub.f32 %v1475, %v1958
    %v1960 = vand.u32 %v1959, 4294901760
    %1961 = vmatpush1.msra.mxu0 %v1960
    %1962 = vmatprep.subr.mxu0 0.0
    %v1963 = vand.u32 %v1476, 4294901760
    %v1964 = vsub.f32 %v1476, %v1963
    %v1965 = vand.u32 %v1964, 4294901760
    %1966 = vmatpush1.msra.mxu0 %v1965
    %1967 = vmatprep.subr.mxu0 0.0
    %v1968 = vand.u32 %v1477, 4294901760
    %v1969 = vsub.f32 %v1477, %v1968
    %v1970 = vand.u32 %v1969, 4294901760
    %1971 = vmatpush1.msra.mxu0 %v1970
    %1972 = vmatprep.subr.mxu0 0.0
    %v1973 = vand.u32 %v1478, 4294901760
    %v1974 = vsub.f32 %v1478, %v1973
    %v1975 = vand.u32 %v1974, 4294901760
    %1976 = vmatpush1.msra.mxu0 %v1975
    %1977 = vmatprep.subr.mxu0 0.0
    %v1978 = vand.u32 %v1479, 4294901760
    %v1979 = vsub.f32 %v1479, %v1978
    %v1980 = vand.u32 %v1979, 4294901760
    %1981 = vmatpush1.msra.mxu0 %v1980
    %1982 = vmatprep.subr.mxu0 0.0
    %v1983 = vand.u32 %v1480, 4294901760
    %v1984 = vsub.f32 %v1480, %v1983
    %v1985 = vand.u32 %v1984, 4294901760
    %1986 = vmatpush1.msra.mxu0 %v1985
    %1987 = vmatprep.subr.mxu0 0.0
    %v1988 = vand.u32 %v1481, 4294901760
    %v1989 = vsub.f32 %v1481, %v1988
    %v1990 = vand.u32 %v1989, 4294901760
    %1991 = vmatpush1.msra.mxu0 %v1990
    %1992 = vmatprep.subr.mxu0 0.0
    %v1993 = vand.u32 %v1482, 4294901760
    %v1994 = vsub.f32 %v1482, %v1993
    %v1995 = vand.u32 %v1994, 4294901760
    %1996 = vmatpush1.msra.mxu0 %v1995
    %1997 = vmatprep.subr.mxu0 0.0
    %v1998 = vand.u32 %v1483, 4294901760
    %v1999 = vsub.f32 %v1483, %v1998
    %v2000 = vand.u32 %v1999, 4294901760
    %2001 = vmatpush1.msra.mxu0 %v2000
    %2002 = vmatprep.subr.mxu0 0.0
    %v2003 = vand.u32 %v1484, 4294901760
    %v2004 = vsub.f32 %v1484, %v2003
    %v2005 = vand.u32 %v2004, 4294901760
    %2006 = vmatpush1.msra.mxu0 %v2005
    %2007 = vmatprep.subr.mxu0 0.0
    %2008 = vmatpush1.msra.mxu0 0.0
    %2009 = vmatprep.subr.mxu0 0.0
    %2010 = vmatpush1.msra.mxu0 0.0
    %2011 = vmatprep.subr.mxu0 0.0
    %2012 = vmatpush1.msra.mxu0 0.0
    %2013 = vmatprep.subr.mxu0 0.0
    %2014 = vmatpush1.msra.mxu0 0.0
    %2015 = vmatprep.subr.mxu0 0.0
    %2016 = vmatpush1.msra.mxu0 0.0
    %2017 = vmatprep.subr.mxu0 0.0
    %2018 = vmatpush1.msra.mxu0 0.0
    %2019 = vmatprep.subr.mxu0 0.0
    %2020 = vmatpush1.msra.mxu0 0.0
    %2021 = vmatprep.subr.mxu0 0.0
    %2022 = vmatpush1.msra.mxu0 0.0
    %2023 = vmatprep.subr.mxu0 0.0
    %2024 = vmatpush1.msra.mxu0 0.0
    %2025 = vmatprep.subr.mxu0 0.0
    %2026 = vmatpush1.msra.mxu0 0.0
    %2027 = vmatprep.subr.mxu0 0.0
    %2028 = vmatpush1.msra.mxu0 0.0
    %2029 = vmatprep.subr.mxu0 0.0
    %2030 = vmatpush1.msra.mxu0 0.0
    %2031 = vmatprep.subr.mxu0 0.0
    %2032 = vmatpush1.msra.mxu0 0.0
    %2033 = vmatprep.subr.mxu0 0.0
    %2034 = vmatpush1.msra.mxu0 0.0
    %2035 = vmatprep.subr.mxu0 0.0
    %2036 = vmatpush1.msra.mxu0 0.0
    %2037 = vmatprep.subr.mxu0 0.0
    %2038 = vmatpush1.msra.mxu0 0.0
    %2039 = vmatprep.mubr.f32.mxu0 0.0
    %v2040 = vand.u32 %v1468, 4294901760
    %2041 = vmatmul.mubr.f32.gmra.mrb[0].mxu0 %v2040
    %v2042 = vpop.f32.mrb[0].mxu0
    %v2043 = vadd.f32 %v1924, %v2042
    %v2044 = vpop.f32.mrb[0].mxu0
    %2045 = vdwg.mxu0
    %2046 = vmatprep.subr.mxu0 0.0
    %v2047 = vand.u32 %v1469, 4294901760
    %2048 = vmatpush1.msra.mxu0 %v2047
    %2049 = vmatprep.subr.mxu0 0.0
    %v2050 = vand.u32 %v1470, 4294901760
    %2051 = vmatpush1.msra.mxu0 %v2050
    %2052 = vmatprep.subr.mxu0 0.0
    %v2053 = vand.u32 %v1471, 4294901760
    %2054 = vmatpush1.msra.mxu0 %v2053
    %2055 = vmatprep.subr.mxu0 0.0
    %v2056 = vand.u32 %v1472, 4294901760
    %2057 = vmatpush1.msra.mxu0 %v2056
    %2058 = vmatprep.subr.mxu0 0.0
    %v2059 = vand.u32 %v1473, 4294901760
    %2060 = vmatpush1.msra.mxu0 %v2059
    %2061 = vmatprep.subr.mxu0 0.0
    %v2062 = vand.u32 %v1474, 4294901760
    %2063 = vmatpush1.msra.mxu0 %v2062
    %2064 = vmatprep.subr.mxu0 0.0
    %v2065 = vand.u32 %v1475, 4294901760
    %2066 = vmatpush1.msra.mxu0 %v2065
    %2067 = vmatprep.subr.mxu0 0.0
    %v2068 = vand.u32 %v1476, 4294901760
    %2069 = vmatpush1.msra.mxu0 %v2068
    %2070 = vmatprep.subr.mxu0 0.0
    %v2071 = vand.u32 %v1477, 4294901760
    %2072 = vmatpush1.msra.mxu0 %v2071
    %2073 = vmatprep.subr.mxu0 0.0
    %v2074 = vand.u32 %v1478, 4294901760
    %2075 = vmatpush1.msra.mxu0 %v2074
    %2076 = vmatprep.subr.mxu0 0.0
    %v2077 = vand.u32 %v1479, 4294901760
    %2078 = vmatpush1.msra.mxu0 %v2077
    %2079 = vmatprep.subr.mxu0 0.0
    %v2080 = vand.u32 %v1480, 4294901760
    %2081 = vmatpush1.msra.mxu0 %v2080
    %2082 = vmatprep.subr.mxu0 0.0
    %v2083 = vand.u32 %v1481, 4294901760
    %2084 = vmatpush1.msra.mxu0 %v2083
    %2085 = vmatprep.subr.mxu0 0.0
    %v2086 = vand.u32 %v1482, 4294901760
    %2087 = vmatpush1.msra.mxu0 %v2086
    %2088 = vmatprep.subr.mxu0 0.0
    %v2089 = vand.u32 %v1483, 4294901760
    %2090 = vmatpush1.msra.mxu0 %v2089
    %2091 = vmatprep.subr.mxu0 0.0
    %v2092 = vand.u32 %v1484, 4294901760
    %2093 = vmatpush1.msra.mxu0 %v2092
    %2094 = vmatprep.subr.mxu0 0.0
    %2095 = vmatpush1.msra.mxu0 0.0
    %2096 = vmatprep.subr.mxu0 0.0
    %2097 = vmatpush1.msra.mxu0 0.0
    %2098 = vmatprep.subr.mxu0 0.0
    %2099 = vmatpush1.msra.mxu0 0.0
    %2100 = vmatprep.subr.mxu0 0.0
    %2101 = vmatpush1.msra.mxu0 0.0
    %2102 = vmatprep.subr.mxu0 0.0
    %2103 = vmatpush1.msra.mxu0 0.0
    %2104 = vmatprep.subr.mxu0 0.0
    %2105 = vmatpush1.msra.mxu0 0.0
    %2106 = vmatprep.subr.mxu0 0.0
    %2107 = vmatpush1.msra.mxu0 0.0
    %2108 = vmatprep.subr.mxu0 0.0
    %2109 = vmatpush1.msra.mxu0 0.0
    %2110 = vmatprep.subr.mxu0 0.0
    %2111 = vmatpush1.msra.mxu0 0.0
    %2112 = vmatprep.subr.mxu0 0.0
    %2113 = vmatpush1.msra.mxu0 0.0
    %2114 = vmatprep.subr.mxu0 0.0
    %2115 = vmatpush1.msra.mxu0 0.0
    %2116 = vmatprep.subr.mxu0 0.0
    %2117 = vmatpush1.msra.mxu0 0.0
    %2118 = vmatprep.subr.mxu0 0.0
    %2119 = vmatpush1.msra.mxu0 0.0
    %2120 = vmatprep.subr.mxu0 0.0
    %2121 = vmatpush1.msra.mxu0 0.0
    %2122 = vmatprep.subr.mxu0 0.0
    %2123 = vmatpush1.msra.mxu0 0.0
    %2124 = vmatprep.subr.mxu0 0.0
    %2125 = vmatpush1.msra.mxu0 0.0
    %2126 = vmatprep.mubr.f32.mxu0 0.0
    %v2127 = vand.u32 %v1468, 4294901760
    %2128 = vmatmul.mubr.f32.gmra.mrb[0].mxu0 %v2127
    %v2129 = vpop.f32.mrb[0].mxu0
    %v2130 = vadd.f32 %v2043, %v2129
    %v2131 = vpop.f32.mrb[0].mxu0
    %2132 = vdwg.mxu0
    %v2133 = vmax.f32 %v2130, 0.0
    %v2134 = vld [vmem:[#allocation10] sm:$0xff]
    %v2135 = vld [vmem:[#allocation10 + $0x8] sm:$0xff]
    %v2136 = vld [vmem:[#allocation10 + $0x10] sm:$0xff]
    %v2137 = vld [vmem:[#allocation10 + $0x18] sm:$0xff]
    %v2138 = vld [vmem:[#allocation10 + $0x20] sm:$0xff]
    %v2139 = vld [vmem:[#allocation10 + $0x28] sm:$0xff]
    %v2140 = vld [vmem:[#allocation10 + $0x30] sm:$0xff]
    %v2141 = vld [vmem:[#allocation10 + $0x38] sm:$0xff]
    %v2142 = vld [vmem:[#allocation10 + $0x40] sm:$0xff]
    %v2143 = vld [vmem:[#allocation10 + $0x48] sm:$0xff]
    %v2144 = vld [vmem:[#allocation10 + $0x50] sm:$0xff]
    %v2145 = vld [vmem:[#allocation10 + $0x58] sm:$0xff]
    %v2146 = vld [vmem:[#allocation10 + $0x60] sm:$0xff]
    %v2147 = vld [vmem:[#allocation10 + $0x68] sm:$0xff]
    %v2148 = vld [vmem:[#allocation10 + $0x70] sm:$0xff]
    %v2149 = vld [vmem:[#allocation10 + $0x78] sm:$0xff]
    %v2150 = vld [vmem:[%s8] sm:$0x1]
    %v2152 = vlaneseq
    %v2153 = vshrl.u32 %v2152, 7
    %v2154 = vsub.s32 0, %v2153
    %v2155 = vrot.slane %v2150, %v2154
    %2157 = vmatprep.subr.mxu0 0.0
    %v2158 = vand.u32 %v2134, 4294901760
    %2159 = vmatpush1.msra.mxu0 %v2158
    %2160 = vmatprep.subr.mxu0 0.0
    %v2161 = vand.u32 %v2135, 4294901760
    %2162 = vmatpush1.msra.mxu0 %v2161
    %2163 = vmatprep.subr.mxu0 0.0
    %v2164 = vand.u32 %v2136, 4294901760
    %2165 = vmatpush1.msra.mxu0 %v2164
    %2166 = vmatprep.subr.mxu0 0.0
    %v2167 = vand.u32 %v2137, 4294901760
    %2168 = vmatpush1.msra.mxu0 %v2167
    %2169 = vmatprep.subr.mxu0 0.0
    %v2170 = vand.u32 %v2138, 4294901760
    %2171 = vmatpush1.msra.mxu0 %v2170
    %2172 = vmatprep.subr.mxu0 0.0
    %v2173 = vand.u32 %v2139, 4294901760
    %2174 = vmatpush1.msra.mxu0 %v2173
    %2175 = vmatprep.subr.mxu0 0.0
    %v2176 = vand.u32 %v2140, 4294901760
    %2177 = vmatpush1.msra.mxu0 %v2176
    %2178 = vmatprep.subr.mxu0 0.0
    %v2179 = vand.u32 %v2141, 4294901760
    %2180 = vmatpush1.msra.mxu0 %v2179
    %2181 = vmatprep.subr.mxu0 0.0
    %v2182 = vand.u32 %v2142, 4294901760
    %2183 = vmatpush1.msra.mxu0 %v2182
    %2184 = vmatprep.subr.mxu0 0.0
    %v2185 = vand.u32 %v2143, 4294901760
    %2186 = vmatpush1.msra.mxu0 %v2185
    %2187 = vmatprep.subr.mxu0 0.0
    %v2188 = vand.u32 %v2144, 4294901760
    %2189 = vmatpush1.msra.mxu0 %v2188
    %2190 = vmatprep.subr.mxu0 0.0
    %v2191 = vand.u32 %v2145, 4294901760
    %2192 = vmatpush1.msra.mxu0 %v2191
    %2193 = vmatprep.subr.mxu0 0.0
    %v2194 = vand.u32 %v2146, 4294901760
    %2195 = vmatpush1.msra.mxu0 %v2194
    %2196 = vmatprep.subr.mxu0 0.0
    %v2197 = vand.u32 %v2147, 4294901760
    %2198 = vmatpush1.msra.mxu0 %v2197
    %2199 = vmatprep.subr.mxu0 0.0
    %v2200 = vand.u32 %v2148, 4294901760
    %2201 = vmatpush1.msra.mxu0 %v2200
    %2202 = vmatprep.subr.mxu0 0.0
    %v2203 = vand.u32 %v2149, 4294901760
    %2204 = vmatpush1.msra.mxu0 %v2203
    %2205 = vmatprep.subr.mxu0 0.0
    %2206 = vmatpush1.msra.mxu0 0.0
    %2207 = vmatprep.subr.mxu0 0.0
    %2208 = vmatpush1.msra.mxu0 0.0
    %2209 = vmatprep.subr.mxu0 0.0
    %2210 = vmatpush1.msra.mxu0 0.0
    %2211 = vmatprep.subr.mxu0 0.0
    %2212 = vmatpush1.msra.mxu0 0.0
    %2213 = vmatprep.subr.mxu0 0.0
    %2214 = vmatpush1.msra.mxu0 0.0
    %2215 = vmatprep.subr.mxu0 0.0
    %2216 = vmatpush1.msra.mxu0 0.0
    %2217 = vmatprep.subr.mxu0 0.0
    %2218 = vmatpush1.msra.mxu0 0.0
    %2219 = vmatprep.subr.mxu0 0.0
    %2220 = vmatpush1.msra.mxu0 0.0
    %2221 = vmatprep.subr.mxu0 0.0
    %2222 = vmatpush1.msra.mxu0 0.0
    %2223 = vmatprep.subr.mxu0 0.0
    %2224 = vmatpush1.msra.mxu0 0.0
    %2225 = vmatprep.subr.mxu0 0.0
    %2226 = vmatpush1.msra.mxu0 0.0
    %2227 = vmatprep.subr.mxu0 0.0
    %2228 = vmatpush1.msra.mxu0 0.0
    %2229 = vmatprep.subr.mxu0 0.0
    %2230 = vmatpush1.msra.mxu0 0.0
    %2231 = vmatprep.subr.mxu0 0.0
    %2232 = vmatpush1.msra.mxu0 0.0
    %2233 = vmatprep.subr.mxu0 0.0
    %2234 = vmatpush1.msra.mxu0 0.0
    %2235 = vmatprep.subr.mxu0 0.0
    %2236 = vmatpush1.msra.mxu0 0.0
    %2237 = vmatprep.mubr.f32.mxu0 0.0
    %v2238 = vand.u32 %v2133, 4294901760
    %v2239 = vsub.f32 %v2133, %v2238
    %v2240 = vand.u32 %v2239, 4294901760
    %v2241 = vsub.f32 %v2239, %v2240
    %v2242 = vand.u32 %v2241, 4294901760
    %2243 = vmatmul.mubr.f32.gmra.mrb[0].mxu0 %v2242
    %v2244 = vpop.f32.mrb[0].mxu0
    %v2245 = vadd.f32 %v2155, %v2244
    %v2246 = vpop.f32.mrb[0].mxu0
    %2247 = vdwg.mxu0
    %2248 = vmatprep.subr.mxu0 0.0
    %v2249 = vand.u32 %v2134, 4294901760
    %v2250 = vsub.f32 %v2134, %v2249
    %v2251 = vand.u32 %v2250, 4294901760
    %v2252 = vsub.f32 %v2250, %v2251
    %v2253 = vand.u32 %v2252, 4294901760
    %2254 = vmatpush1.msra.mxu0 %v2253
    %2255 = vmatprep.subr.mxu0 0.0
    %v2256 = vand.u32 %v2135, 4294901760
    %v2257 = vsub.f32 %v2135, %v2256
    %v2258 = vand.u32 %v2257, 4294901760
    %v2259 = vsub.f32 %v2257, %v2258
    %v2260 = vand.u32 %v2259, 4294901760
    %2261 = vmatpush1.msra.mxu0 %v2260
    %2262 = vmatprep.subr.mxu0 0.0
    %v2263 = vand.u32 %v2136, 4294901760
    %v2264 = vsub.f32 %v2136, %v2263
    %v2265 = vand.u32 %v2264, 4294901760
    %v2266 = vsub.f32 %v2264, %v2265
    %v2267 = vand.u32 %v2266, 4294901760
    %2268 = vmatpush1.msra.mxu0 %v2267
    %2269 = vmatprep.subr.mxu0 0.0
    %v2270 = vand.u32 %v2137, 4294901760
    %v2271 = vsub.f32 %v2137, %v2270
    %v2272 = vand.u32 %v2271, 4294901760
    %v2273 = vsub.f32 %v2271, %v2272
    %v2274 = vand.u32 %v2273, 4294901760
    %2275 = vmatpush1.msra.mxu0 %v2274
    %2276 = vmatprep.subr.mxu0 0.0
    %v2277 = vand.u32 %v2138, 4294901760
    %v2278 = vsub.f32 %v2138, %v2277
    %v2279 = vand.u32 %v2278, 4294901760
    %v2280 = vsub.f32 %v2278, %v2279
    %v2281 = vand.u32 %v2280, 4294901760
    %2282 = vmatpush1.msra.mxu0 %v2281
    %2283 = vmatprep.subr.mxu0 0.0
    %v2284 = vand.u32 %v2139, 4294901760
    %v2285 = vsub.f32 %v2139, %v2284
    %v2286 = vand.u32 %v2285, 4294901760
    %v2287 = vsub.f32 %v2285, %v2286
    %v2288 = vand.u32 %v2287, 4294901760
    %2289 = vmatpush1.msra.mxu0 %v2288
    %2290 = vmatprep.subr.mxu0 0.0
    %v2291 = vand.u32 %v2140, 4294901760
    %v2292 = vsub.f32 %v2140, %v2291
    %v2293 = vand.u32 %v2292, 4294901760
    %v2294 = vsub.f32 %v2292, %v2293
    %v2295 = vand.u32 %v2294, 4294901760
    %2296 = vmatpush1.msra.mxu0 %v2295
    %2297 = vmatprep.subr.mxu0 0.0
    %v2298 = vand.u32 %v2141, 4294901760
    %v2299 = vsub.f32 %v2141, %v2298
    %v2300 = vand.u32 %v2299, 4294901760
    %v2301 = vsub.f32 %v2299, %v2300
    %v2302 = vand.u32 %v2301, 4294901760
    %2303 = vmatpush1.msra.mxu0 %v2302
    %2304 = vmatprep.subr.mxu0 0.0
    %v2305 = vand.u32 %v2142, 4294901760
    %v2306 = vsub.f32 %v2142, %v2305
    %v2307 = vand.u32 %v2306, 4294901760
    %v2308 = vsub.f32 %v2306, %v2307
    %v2309 = vand.u32 %v2308, 4294901760
    %2310 = vmatpush1.msra.mxu0 %v2309
    %2311 = vmatprep.subr.mxu0 0.0
    %v2312 = vand.u32 %v2143, 4294901760
    %v2313 = vsub.f32 %v2143, %v2312
    %v2314 = vand.u32 %v2313, 4294901760
    %v2315 = vsub.f32 %v2313, %v2314
    %v2316 = vand.u32 %v2315, 4294901760
    %2317 = vmatpush1.msra.mxu0 %v2316
    %2318 = vmatprep.subr.mxu0 0.0
    %v2319 = vand.u32 %v2144, 4294901760
    %v2320 = vsub.f32 %v2144, %v2319
    %v2321 = vand.u32 %v2320, 4294901760
    %v2322 = vsub.f32 %v2320, %v2321
    %v2323 = vand.u32 %v2322, 4294901760
    %2324 = vmatpush1.msra.mxu0 %v2323
    %2325 = vmatprep.subr.mxu0 0.0
    %v2326 = vand.u32 %v2145, 4294901760
    %v2327 = vsub.f32 %v2145, %v2326
    %v2328 = vand.u32 %v2327, 4294901760
    %v2329 = vsub.f32 %v2327, %v2328
    %v2330 = vand.u32 %v2329, 4294901760
    %2331 = vmatpush1.msra.mxu0 %v2330
    %2332 = vmatprep.subr.mxu0 0.0
    %v2333 = vand.u32 %v2146, 4294901760
    %v2334 = vsub.f32 %v2146, %v2333
    %v2335 = vand.u32 %v2334, 4294901760
    %v2336 = vsub.f32 %v2334, %v2335
    %v2337 = vand.u32 %v2336, 4294901760
    %2338 = vmatpush1.msra.mxu0 %v2337
    %2339 = vmatprep.subr.mxu0 0.0
    %v2340 = vand.u32 %v2147, 4294901760
    %v2341 = vsub.f32 %v2147, %v2340
    %v2342 = vand.u32 %v2341, 4294901760
    %v2343 = vsub.f32 %v2341, %v2342
    %v2344 = vand.u32 %v2343, 4294901760
    %2345 = vmatpush1.msra.mxu0 %v2344
    %2346 = vmatprep.subr.mxu0 0.0
    %v2347 = vand.u32 %v2148, 4294901760
    %v2348 = vsub.f32 %v2148, %v2347
    %v2349 = vand.u32 %v2348, 4294901760
    %v2350 = vsub.f32 %v2348, %v2349
    %v2351 = vand.u32 %v2350, 4294901760
    %2352 = vmatpush1.msra.mxu0 %v2351
    %2353 = vmatprep.subr.mxu0 0.0
    %v2354 = vand.u32 %v2149, 4294901760
    %v2355 = vsub.f32 %v2149, %v2354
    %v2356 = vand.u32 %v2355, 4294901760
    %v2357 = vsub.f32 %v2355, %v2356
    %v2358 = vand.u32 %v2357, 4294901760
    %2359 = vmatpush1.msra.mxu0 %v2358
    %2360 = vmatprep.subr.mxu0 0.0
    %2361 = vmatpush1.msra.mxu0 0.0
    %2362 = vmatprep.subr.mxu0 0.0
    %2363 = vmatpush1.msra.mxu0 0.0
    %2364 = vmatprep.subr.mxu0 0.0
    %2365 = vmatpush1.msra.mxu0 0.0
    %2366 = vmatprep.subr.mxu0 0.0
    %2367 = vmatpush1.msra.mxu0 0.0
    %2368 = vmatprep.subr.mxu0 0.0
    %2369 = vmatpush1.msra.mxu0 0.0
    %2370 = vmatprep.subr.mxu0 0.0
    %2371 = vmatpush1.msra.mxu0 0.0
    %2372 = vmatprep.subr.mxu0 0.0
    %2373 = vmatpush1.msra.mxu0 0.0
    %2374 = vmatprep.subr.mxu0 0.0
    %2375 = vmatpush1.msra.mxu0 0.0
    %2376 = vmatprep.subr.mxu0 0.0
    %2377 = vmatpush1.msra.mxu0 0.0
    %2378 = vmatprep.subr.mxu0 0.0
    %2379 = vmatpush1.msra.mxu0 0.0
    %2380 = vmatprep.subr.mxu0 0.0
    %2381 = vmatpush1.msra.mxu0 0.0
    %2382 = vmatprep.subr.mxu0 0.0
    %2383 = vmatpush1.msra.mxu0 0.0
    %2384 = vmatprep.subr.mxu0 0.0
    %2385 = vmatpush1.msra.mxu0 0.0
    %2386 = vmatprep.subr.mxu0 0.0
    %2387 = vmatpush1.msra.mxu0 0.0
    %2388 = vmatprep.subr.mxu0 0.0
    %2389 = vmatpush1.msra.mxu0 0.0
    %2390 = vmatprep.subr.mxu0 0.0
    %2391 = vmatpush1.msra.mxu0 0.0
    %2392 = vmatprep.mubr.f32.mxu0 0.0
    %v2393 = vand.u32 %v2133, 4294901760
    %2394 = vmatmul.mubr.f32.gmra.mrb[0].mxu0 %v2393
    %v2395 = vpop.f32.mrb[0].mxu0
    %v2396 = vadd.f32 %v2245, %v2395
    %v2397 = vpop.f32.mrb[0].mxu0
    %2398 = vdwg.mxu0
    %2399 = vmatprep.subr.mxu0 0.0
    %v2400 = vand.u32 %v2134, 4294901760
    %v2401 = vsub.f32 %v2134, %v2400
    %2402 = vmatpush1.msra.mxu0 %v2401
    %2403 = vmatprep.subr.mxu0 0.0
    %v2404 = vand.u32 %v2135, 4294901760
    %v2405 = vsub.f32 %v2135, %v2404
    %2406 = vmatpush1.msra.mxu0 %v2405
    %2407 = vmatprep.subr.mxu0 0.0
    %v2408 = vand.u32 %v2136, 4294901760
    %v2409 = vsub.f32 %v2136, %v2408
    %2410 = vmatpush1.msra.mxu0 %v2409
    %2411 = vmatprep.subr.mxu0 0.0
    %v2412 = vand.u32 %v2137, 4294901760
    %v2413 = vsub.f32 %v2137, %v2412
    %2414 = vmatpush1.msra.mxu0 %v2413
    %2415 = vmatprep.subr.mxu0 0.0
    %v2416 = vand.u32 %v2138, 4294901760
    %v2417 = vsub.f32 %v2138, %v2416
    %2418 = vmatpush1.msra.mxu0 %v2417
    %2419 = vmatprep.subr.mxu0 0.0
    %v2420 = vand.u32 %v2139, 4294901760
    %v2421 = vsub.f32 %v2139, %v2420
    %2422 = vmatpush1.msra.mxu0 %v2421
    %2423 = vmatprep.subr.mxu0 0.0
    %v2424 = vand.u32 %v2140, 4294901760
    %v2425 = vsub.f32 %v2140, %v2424
    %2426 = vmatpush1.msra.mxu0 %v2425
    %2427 = vmatprep.subr.mxu0 0.0
    %v2428 = vand.u32 %v2141, 4294901760
    %v2429 = vsub.f32 %v2141, %v2428
    %2430 = vmatpush1.msra.mxu0 %v2429
    %2431 = vmatprep.subr.mxu0 0.0
    %v2432 = vand.u32 %v2142, 4294901760
    %v2433 = vsub.f32 %v2142, %v2432
    %2434 = vmatpush1.msra.mxu0 %v2433
    %2435 = vmatprep.subr.mxu0 0.0
    %v2436 = vand.u32 %v2143, 4294901760
    %v2437 = vsub.f32 %v2143, %v2436
    %2438 = vmatpush1.msra.mxu0 %v2437
    %2439 = vmatprep.subr.mxu0 0.0
    %v2440 = vand.u32 %v2144, 4294901760
    %v2441 = vsub.f32 %v2144, %v2440
    %2442 = vmatpush1.msra.mxu0 %v2441
    %2443 = vmatprep.subr.mxu0 0.0
    %v2444 = vand.u32 %v2145, 4294901760
    %v2445 = vsub.f32 %v2145, %v2444
    %2446 = vmatpush1.msra.mxu0 %v2445
    %2447 = vmatprep.subr.mxu0 0.0
    %v2448 = vand.u32 %v2146, 4294901760
    %v2449 = vsub.f32 %v2146, %v2448
    %2450 = vmatpush1.msra.mxu0 %v2449
    %2451 = vmatprep.subr.mxu0 0.0
    %v2452 = vand.u32 %v2147, 4294901760
    %v2453 = vsub.f32 %v2147, %v2452
    %2454 = vmatpush1.msra.mxu0 %v2453
    %2455 = vmatprep.subr.mxu0 0.0
    %v2456 = vand.u32 %v2148, 4294901760
    %v2457 = vsub.f32 %v2148, %v2456
    %2458 = vmatpush1.msra.mxu0 %v2457
    %2459 = vmatprep.subr.mxu0 0.0
    %v2460 = vand.u32 %v2149, 4294901760
    %v2461 = vsub.f32 %v2149, %v2460
    %2462 = vmatpush1.msra.mxu0 %v2461
    %2463 = vmatprep.subr.mxu0 0.0
    %2464 = vmatpush1.msra.mxu0 0.0
    %2465 = vmatprep.subr.mxu0 0.0
    %2466 = vmatpush1.msra.mxu0 0.0
    %2467 = vmatprep.subr.mxu0 0.0
    %2468 = vmatpush1.msra.mxu0 0.0
    %2469 = vmatprep.subr.mxu0 0.0
    %2470 = vmatpush1.msra.mxu0 0.0
    %2471 = vmatprep.subr.mxu0 0.0
    %2472 = vmatpush1.msra.mxu0 0.0
    %2473 = vmatprep.subr.mxu0 0.0
    %2474 = vmatpush1.msra.mxu0 0.0
    %2475 = vmatprep.subr.mxu0 0.0
    %2476 = vmatpush1.msra.mxu0 0.0
    %2477 = vmatprep.subr.mxu0 0.0
    %2478 = vmatpush1.msra.mxu0 0.0
    %2479 = vmatprep.subr.mxu0 0.0
    %2480 = vmatpush1.msra.mxu0 0.0
    %2481 = vmatprep.subr.mxu0 0.0
    %2482 = vmatpush1.msra.mxu0 0.0
    %2483 = vmatprep.subr.mxu0 0.0
    %2484 = vmatpush1.msra.mxu0 0.0
    %2485 = vmatprep.subr.mxu0 0.0
    %2486 = vmatpush1.msra.mxu0 0.0
    %2487 = vmatprep.subr.mxu0 0.0
    %2488 = vmatpush1.msra.mxu0 0.0
    %2489 = vmatprep.subr.mxu0 0.0
    %2490 = vmatpush1.msra.mxu0 0.0
    %2491 = vmatprep.subr.mxu0 0.0
    %2492 = vmatpush1.msra.mxu0 0.0
    %2493 = vmatprep.subr.mxu0 0.0
    %2494 = vmatpush1.msra.mxu0 0.0
    %2495 = vmatprep.mubr.f32.mxu0 0.0
    %v2496 = vand.u32 %v2133, 4294901760
    %v2497 = vsub.f32 %v2133, %v2496
    %2498 = vmatmul.mubr.f32.gmra.mrb[0].mxu0 %v2497
    %v2499 = vpop.f32.mrb[0].mxu0
    %v2500 = vadd.f32 %v2396, %v2499
    %v2501 = vpop.f32.mrb[0].mxu0
    %2502 = vdwg.mxu0
    %2503 = vmatprep.subr.mxu0 0.0
    %v2504 = vand.u32 %v2134, 4294901760
    %2505 = vmatpush1.msra.mxu0 %v2504
    %2506 = vmatprep.subr.mxu0 0.0
    %v2507 = vand.u32 %v2135, 4294901760
    %2508 = vmatpush1.msra.mxu0 %v2507
    %2509 = vmatprep.subr.mxu0 0.0
    %v2510 = vand.u32 %v2136, 4294901760
    %2511 = vmatpush1.msra.mxu0 %v2510
    %2512 = vmatprep.subr.mxu0 0.0
    %v2513 = vand.u32 %v2137, 4294901760
    %2514 = vmatpush1.msra.mxu0 %v2513
    %2515 = vmatprep.subr.mxu0 0.0
    %v2516 = vand.u32 %v2138, 4294901760
    %2517 = vmatpush1.msra.mxu0 %v2516
    %2518 = vmatprep.subr.mxu0 0.0
    %v2519 = vand.u32 %v2139, 4294901760
    %2520 = vmatpush1.msra.mxu0 %v2519
    %2521 = vmatprep.subr.mxu0 0.0
    %v2522 = vand.u32 %v2140, 4294901760
    %2523 = vmatpush1.msra.mxu0 %v2522
    %2524 = vmatprep.subr.mxu0 0.0
    %v2525 = vand.u32 %v2141, 4294901760
    %2526 = vmatpush1.msra.mxu0 %v2525
    %2527 = vmatprep.subr.mxu0 0.0
    %v2528 = vand.u32 %v2142, 4294901760
    %2529 = vmatpush1.msra.mxu0 %v2528
    %2530 = vmatprep.subr.mxu0 0.0
    %v2531 = vand.u32 %v2143, 4294901760
    %2532 = vmatpush1.msra.mxu0 %v2531
    %2533 = vmatprep.subr.mxu0 0.0
    %v2534 = vand.u32 %v2144, 4294901760
    %2535 = vmatpush1.msra.mxu0 %v2534
    %2536 = vmatprep.subr.mxu0 0.0
    %v2537 = vand.u32 %v2145, 4294901760
    %2538 = vmatpush1.msra.mxu0 %v2537
    %2539 = vmatprep.subr.mxu0 0.0
    %v2540 = vand.u32 %v2146, 4294901760
    %2541 = vmatpush1.msra.mxu0 %v2540
    %2542 = vmatprep.subr.mxu0 0.0
    %v2543 = vand.u32 %v2147, 4294901760
    %2544 = vmatpush1.msra.mxu0 %v2543
    %2545 = vmatprep.subr.mxu0 0.0
    %v2546 = vand.u32 %v2148, 4294901760
    %2547 = vmatpush1.msra.mxu0 %v2546
    %2548 = vmatprep.subr.mxu0 0.0
    %v2549 = vand.u32 %v2149, 4294901760
    %2550 = vmatpush1.msra.mxu0 %v2549
    %2551 = vmatprep.subr.mxu0 0.0
    %2552 = vmatpush1.msra.mxu0 0.0
    %2553 = vmatprep.subr.mxu0 0.0
    %2554 = vmatpush1.msra.mxu0 0.0
    %2555 = vmatprep.subr.mxu0 0.0
    %2556 = vmatpush1.msra.mxu0 0.0
    %2557 = vmatprep.subr.mxu0 0.0
    %2558 = vmatpush1.msra.mxu0 0.0
    %2559 = vmatprep.subr.mxu0 0.0
    %2560 = vmatpush1.msra.mxu0 0.0
    %2561 = vmatprep.subr.mxu0 0.0
    %2562 = vmatpush1.msra.mxu0 0.0
    %2563 = vmatprep.subr.mxu0 0.0
    %2564 = vmatpush1.msra.mxu0 0.0
    %2565 = vmatprep.subr.mxu0 0.0
    %2566 = vmatpush1.msra.mxu0 0.0
    %2567 = vmatprep.subr.mxu0 0.0
    %2568 = vmatpush1.msra.mxu0 0.0
    %2569 = vmatprep.subr.mxu0 0.0
    %2570 = vmatpush1.msra.mxu0 0.0
    %2571 = vmatprep.subr.mxu0 0.0
    %2572 = vmatpush1.msra.mxu0 0.0
    %2573 = vmatprep.subr.mxu0 0.0
    %2574 = vmatpush1.msra.mxu0 0.0
    %2575 = vmatprep.subr.mxu0 0.0
    %2576 = vmatpush1.msra.mxu0 0.0
    %2577 = vmatprep.subr.mxu0 0.0
    %2578 = vmatpush1.msra.mxu0 0.0
    %2579 = vmatprep.subr.mxu0 0.0
    %2580 = vmatpush1.msra.mxu0 0.0
    %2581 = vmatprep.subr.mxu0 0.0
    %2582 = vmatpush1.msra.mxu0 0.0
    %2583 = vmatprep.mubr.f32.mxu0 0.0
    %v2584 = vand.u32 %v2133, 4294901760
    %v2585 = vsub.f32 %v2133, %v2584
    %v2586 = vand.u32 %v2585, 4294901760
    %2587 = vmatmul.mubr.f32.gmra.mrb[0].mxu0 %v2586
    %v2588 = vpop.f32.mrb[0].mxu0
    %v2589 = vadd.f32 %v2500, %v2588
    %v2590 = vpop.f32.mrb[0].mxu0
    %2591 = vdwg.mxu0
    %2592 = vmatprep.subr.mxu0 0.0
    %v2593 = vand.u32 %v2134, 4294901760
    %v2594 = vsub.f32 %v2134, %v2593
    %v2595 = vand.u32 %v2594, 4294901760
    %2596 = vmatpush1.msra.mxu0 %v2595
    %2597 = vmatprep.subr.mxu0 0.0
    %v2598 = vand.u32 %v2135, 4294901760
    %v2599 = vsub.f32 %v2135, %v2598
    %v2600 = vand.u32 %v2599, 4294901760
    %2601 = vmatpush1.msra.mxu0 %v2600
    %2602 = vmatprep.subr.mxu0 0.0
    %v2603 = vand.u32 %v2136, 4294901760
    %v2604 = vsub.f32 %v2136, %v2603
    %v2605 = vand.u32 %v2604, 4294901760
    %2606 = vmatpush1.msra.mxu0 %v2605
    %2607 = vmatprep.subr.mxu0 0.0
    %v2608 = vand.u32 %v2137, 4294901760
    %v2609 = vsub.f32 %v2137, %v2608
    %v2610 = vand.u32 %v2609, 4294901760
    %2611 = vmatpush1.msra.mxu0 %v2610
    %2612 = vmatprep.subr.mxu0 0.0
    %v2613 = vand.u32 %v2138, 4294901760
    %v2614 = vsub.f32 %v2138, %v2613
    %v2615 = vand.u32 %v2614, 4294901760
    %2616 = vmatpush1.msra.mxu0 %v2615
    %2617 = vmatprep.subr.mxu0 0.0
    %v2618 = vand.u32 %v2139, 4294901760
    %v2619 = vsub.f32 %v2139, %v2618
    %v2620 = vand.u32 %v2619, 4294901760
    %2621 = vmatpush1.msra.mxu0 %v2620
    %2622 = vmatprep.subr.mxu0 0.0
    %v2623 = vand.u32 %v2140, 4294901760
    %v2624 = vsub.f32 %v2140, %v2623
    %v2625 = vand.u32 %v2624, 4294901760
    %2626 = vmatpush1.msra.mxu0 %v2625
    %2627 = vmatprep.subr.mxu0 0.0
    %v2628 = vand.u32 %v2141, 4294901760
    %v2629 = vsub.f32 %v2141, %v2628
    %v2630 = vand.u32 %v2629, 4294901760
    %2631 = vmatpush1.msra.mxu0 %v2630
    %2632 = vmatprep.subr.mxu0 0.0
    %v2633 = vand.u32 %v2142, 4294901760
    %v2634 = vsub.f32 %v2142, %v2633
    %v2635 = vand.u32 %v2634, 4294901760
    %2636 = vmatpush1.msra.mxu0 %v2635
    %2637 = vmatprep.subr.mxu0 0.0
    %v2638 = vand.u32 %v2143, 4294901760
    %v2639 = vsub.f32 %v2143, %v2638
    %v2640 = vand.u32 %v2639, 4294901760
    %2641 = vmatpush1.msra.mxu0 %v2640
    %2642 = vmatprep.subr.mxu0 0.0
    %v2643 = vand.u32 %v2144, 4294901760
    %v2644 = vsub.f32 %v2144, %v2643
    %v2645 = vand.u32 %v2644, 4294901760
    %2646 = vmatpush1.msra.mxu0 %v2645
    %2647 = vmatprep.subr.mxu0 0.0
    %v2648 = vand.u32 %v2145, 4294901760
    %v2649 = vsub.f32 %v2145, %v2648
    %v2650 = vand.u32 %v2649, 4294901760
    %2651 = vmatpush1.msra.mxu0 %v2650
    %2652 = vmatprep.subr.mxu0 0.0
    %v2653 = vand.u32 %v2146, 4294901760
    %v2654 = vsub.f32 %v2146, %v2653
    %v2655 = vand.u32 %v2654, 4294901760
    %2656 = vmatpush1.msra.mxu0 %v2655
    %2657 = vmatprep.subr.mxu0 0.0
    %v2658 = vand.u32 %v2147, 4294901760
    %v2659 = vsub.f32 %v2147, %v2658
    %v2660 = vand.u32 %v2659, 4294901760
    %2661 = vmatpush1.msra.mxu0 %v2660
    %2662 = vmatprep.subr.mxu0 0.0
    %v2663 = vand.u32 %v2148, 4294901760
    %v2664 = vsub.f32 %v2148, %v2663
    %v2665 = vand.u32 %v2664, 4294901760
    %2666 = vmatpush1.msra.mxu0 %v2665
    %2667 = vmatprep.subr.mxu0 0.0
    %v2668 = vand.u32 %v2149, 4294901760
    %v2669 = vsub.f32 %v2149, %v2668
    %v2670 = vand.u32 %v2669, 4294901760
    %2671 = vmatpush1.msra.mxu0 %v2670
    %2672 = vmatprep.subr.mxu0 0.0
    %2673 = vmatpush1.msra.mxu0 0.0
    %2674 = vmatprep.subr.mxu0 0.0
    %2675 = vmatpush1.msra.mxu0 0.0
    %2676 = vmatprep.subr.mxu0 0.0
    %2677 = vmatpush1.msra.mxu0 0.0
    %2678 = vmatprep.subr.mxu0 0.0
    %2679 = vmatpush1.msra.mxu0 0.0
    %2680 = vmatprep.subr.mxu0 0.0
    %2681 = vmatpush1.msra.mxu0 0.0
    %2682 = vmatprep.subr.mxu0 0.0
    %2683 = vmatpush1.msra.mxu0 0.0
    %2684 = vmatprep.subr.mxu0 0.0
    %2685 = vmatpush1.msra.mxu0 0.0
    %2686 = vmatprep.subr.mxu0 0.0
    %2687 = vmatpush1.msra.mxu0 0.0
    %2688 = vmatprep.subr.mxu0 0.0
    %2689 = vmatpush1.msra.mxu0 0.0
    %2690 = vmatprep.subr.mxu0 0.0
    %2691 = vmatpush1.msra.mxu0 0.0
    %2692 = vmatprep.subr.mxu0 0.0
    %2693 = vmatpush1.msra.mxu0 0.0
    %2694 = vmatprep.subr.mxu0 0.0
    %2695 = vmatpush1.msra.mxu0 0.0
    %2696 = vmatprep.subr.mxu0 0.0
    %2697 = vmatpush1.msra.mxu0 0.0
    %2698 = vmatprep.subr.mxu0 0.0
    %2699 = vmatpush1.msra.mxu0 0.0
    %2700 = vmatprep.subr.mxu0 0.0
    %2701 = vmatpush1.msra.mxu0 0.0
    %2702 = vmatprep.subr.mxu0 0.0
    %2703 = vmatpush1.msra.mxu0 0.0
    %2704 = vmatprep.mubr.f32.mxu0 0.0
    %v2705 = vand.u32 %v2133, 4294901760
    %2706 = vmatmul.mubr.f32.gmra.mrb[0].mxu0 %v2705
    %v2707 = vpop.f32.mrb[0].mxu0
    %v2708 = vadd.f32 %v2589, %v2707
    %v2709 = vpop.f32.mrb[0].mxu0
    %2710 = vdwg.mxu0
    %2711 = vmatprep.subr.mxu0 0.0
    %v2712 = vand.u32 %v2134, 4294901760
    %2713 = vmatpush1.msra.mxu0 %v2712
    %2714 = vmatprep.subr.mxu0 0.0
    %v2715 = vand.u32 %v2135, 4294901760
    %2716 = vmatpush1.msra.mxu0 %v2715
    %2717 = vmatprep.subr.mxu0 0.0
    %v2718 = vand.u32 %v2136, 4294901760
    %2719 = vmatpush1.msra.mxu0 %v2718
    %2720 = vmatprep.subr.mxu0 0.0
    %v2721 = vand.u32 %v2137, 4294901760
    %2722 = vmatpush1.msra.mxu0 %v2721
    %2723 = vmatprep.subr.mxu0 0.0
    %v2724 = vand.u32 %v2138, 4294901760
    %2725 = vmatpush1.msra.mxu0 %v2724
    %2726 = vmatprep.subr.mxu0 0.0
    %v2727 = vand.u32 %v2139, 4294901760
    %2728 = vmatpush1.msra.mxu0 %v2727
    %2729 = vmatprep.subr.mxu0 0.0
    %v2730 = vand.u32 %v2140, 4294901760
    %2731 = vmatpush1.msra.mxu0 %v2730
    %2732 = vmatprep.subr.mxu0 0.0
    %v2733 = vand.u32 %v2141, 4294901760
    %2734 = vmatpush1.msra.mxu0 %v2733
    %2735 = vmatprep.subr.mxu0 0.0
    %v2736 = vand.u32 %v2142, 4294901760
    %2737 = vmatpush1.msra.mxu0 %v2736
    %2738 = vmatprep.subr.mxu0 0.0
    %v2739 = vand.u32 %v2143, 4294901760
    %2740 = vmatpush1.msra.mxu0 %v2739
    %2741 = vmatprep.subr.mxu0 0.0
    %v2742 = vand.u32 %v2144, 4294901760
    %2743 = vmatpush1.msra.mxu0 %v2742
    %2744 = vmatprep.subr.mxu0 0.0
    %v2745 = vand.u32 %v2145, 4294901760
    %2746 = vmatpush1.msra.mxu0 %v2745
    %2747 = vmatprep.subr.mxu0 0.0
    %v2748 = vand.u32 %v2146, 4294901760
    %2749 = vmatpush1.msra.mxu0 %v2748
    %2750 = vmatprep.subr.mxu0 0.0
    %v2751 = vand.u32 %v2147, 4294901760
    %2752 = vmatpush1.msra.mxu0 %v2751
    %2753 = vmatprep.subr.mxu0 0.0
    %v2754 = vand.u32 %v2148, 4294901760
    %2755 = vmatpush1.msra.mxu0 %v2754
    %2756 = vmatprep.subr.mxu0 0.0
    %v2757 = vand.u32 %v2149, 4294901760
    %2758 = vmatpush1.msra.mxu0 %v2757
    %2759 = vmatprep.subr.mxu0 0.0
    %2760 = vmatpush1.msra.mxu0 0.0
    %2761 = vmatprep.subr.mxu0 0.0
    %2762 = vmatpush1.msra.mxu0 0.0
    %2763 = vmatprep.subr.mxu0 0.0
    %2764 = vmatpush1.msra.mxu0 0.0
    %2765 = vmatprep.subr.mxu0 0.0
    %2766 = vmatpush1.msra.mxu0 0.0
    %2767 = vmatprep.subr.mxu0 0.0
    %2768 = vmatpush1.msra.mxu0 0.0
    %2769 = vmatprep.subr.mxu0 0.0
    %2770 = vmatpush1.msra.mxu0 0.0
    %2771 = vmatprep.subr.mxu0 0.0
    %2772 = vmatpush1.msra.mxu0 0.0
    %2773 = vmatprep.subr.mxu0 0.0
    %2774 = vmatpush1.msra.mxu0 0.0
    %2775 = vmatprep.subr.mxu0 0.0
    %2776 = vmatpush1.msra.mxu0 0.0
    %2777 = vmatprep.subr.mxu0 0.0
    %2778 = vmatpush1.msra.mxu0 0.0
    %2779 = vmatprep.subr.mxu0 0.0
    %2780 = vmatpush1.msra.mxu0 0.0
    %2781 = vmatprep.subr.mxu0 0.0
    %2782 = vmatpush1.msra.mxu0 0.0
    %2783 = vmatprep.subr.mxu0 0.0
    %2784 = vmatpush1.msra.mxu0 0.0
    %2785 = vmatprep.subr.mxu0 0.0
    %2786 = vmatpush1.msra.mxu0 0.0
    %2787 = vmatprep.subr.mxu0 0.0
    %2788 = vmatpush1.msra.mxu0 0.0
    %2789 = vmatprep.subr.mxu0 0.0
    %2790 = vmatpush1.msra.mxu0 0.0
    %2791 = vmatprep.mubr.f32.mxu0 0.0
    %v2792 = vand.u32 %v2133, 4294901760
    %2793 = vmatmul.mubr.f32.gmra.mrb[0].mxu0 %v2792
    %v2794 = vpop.f32.mrb[0].mxu0
    %v2795 = vadd.f32 %v2708, %v2794
    %v2796 = vpop.f32.mrb[0].mxu0
    %2797 = vdwg.mxu0
    %v2798 = vmax.f32 %v2795, 0.0
    %v2799 = vld [vmem:[#allocation11] sm:$0xff]
    %v2800 = vld [vmem:[#allocation11 + $0x8] sm:$0xff]
    %v2801 = vld [vmem:[#allocation11 + $0x10] sm:$0xff]
    %v2802 = vld [vmem:[#allocation11 + $0x18] sm:$0xff]
    %v2803 = vld [vmem:[#allocation11 + $0x20] sm:$0xff]
    %v2804 = vld [vmem:[#allocation11 + $0x28] sm:$0xff]
    %v2805 = vld [vmem:[#allocation11 + $0x30] sm:$0xff]
    %v2806 = vld [vmem:[#allocation11 + $0x38] sm:$0xff]
    %v2807 = vld [vmem:[#allocation11 + $0x40] sm:$0xff]
    %v2808 = vld [vmem:[#allocation11 + $0x48] sm:$0xff]
    %v2809 = vld [vmem:[#allocation11 + $0x50] sm:$0xff]
    %v2810 = vld [vmem:[#allocation11 + $0x58] sm:$0xff]
    %v2811 = vld [vmem:[#allocation11 + $0x60] sm:$0xff]
    %v2812 = vld [vmem:[#allocation11 + $0x68] sm:$0xff]
    %v2813 = vld [vmem:[#allocation11 + $0x70] sm:$0xff]
    %v2814 = vld [vmem:[#allocation11 + $0x78] sm:$0xff]
    %v2815 = vld [vmem:[%s10] sm:$0x1]
    %v2817 = vlaneseq
    %v2818 = vshrl.u32 %v2817, 7
    %v2819 = vsub.s32 0, %v2818
    %v2820 = vrot.slane %v2815, %v2819
    %2822 = vmatprep.subr.mxu0 0.0
    %v2823 = vand.u32 %v2799, 4294901760
    %2824 = vmatpush1.msra.mxu0 %v2823
    %2825 = vmatprep.subr.mxu0 0.0
    %v2826 = vand.u32 %v2800, 4294901760
    %2827 = vmatpush1.msra.mxu0 %v2826
    %2828 = vmatprep.subr.mxu0 0.0
    %v2829 = vand.u32 %v2801, 4294901760
    %2830 = vmatpush1.msra.mxu0 %v2829
    %2831 = vmatprep.subr.mxu0 0.0
    %v2832 = vand.u32 %v2802, 4294901760
    %2833 = vmatpush1.msra.mxu0 %v2832
    %2834 = vmatprep.subr.mxu0 0.0
    %v2835 = vand.u32 %v2803, 4294901760
    %2836 = vmatpush1.msra.mxu0 %v2835
    %2837 = vmatprep.subr.mxu0 0.0
    %v2838 = vand.u32 %v2804, 4294901760
    %2839 = vmatpush1.msra.mxu0 %v2838
    %2840 = vmatprep.subr.mxu0 0.0
    %v2841 = vand.u32 %v2805, 4294901760
    %2842 = vmatpush1.msra.mxu0 %v2841
    %2843 = vmatprep.subr.mxu0 0.0
    %v2844 = vand.u32 %v2806, 4294901760
    %2845 = vmatpush1.msra.mxu0 %v2844
    %2846 = vmatprep.subr.mxu0 0.0
    %v2847 = vand.u32 %v2807, 4294901760
    %2848 = vmatpush1.msra.mxu0 %v2847
    %2849 = vmatprep.subr.mxu0 0.0
    %v2850 = vand.u32 %v2808, 4294901760
    %2851 = vmatpush1.msra.mxu0 %v2850
    %2852 = vmatprep.subr.mxu0 0.0
    %v2853 = vand.u32 %v2809, 4294901760
    %2854 = vmatpush1.msra.mxu0 %v2853
    %2855 = vmatprep.subr.mxu0 0.0
    %v2856 = vand.u32 %v2810, 4294901760
    %2857 = vmatpush1.msra.mxu0 %v2856
    %2858 = vmatprep.subr.mxu0 0.0
    %v2859 = vand.u32 %v2811, 4294901760
    %2860 = vmatpush1.msra.mxu0 %v2859
    %2861 = vmatprep.subr.mxu0 0.0
    %v2862 = vand.u32 %v2812, 4294901760
    %2863 = vmatpush1.msra.mxu0 %v2862
    %2864 = vmatprep.subr.mxu0 0.0
    %v2865 = vand.u32 %v2813, 4294901760
    %2866 = vmatpush1.msra.mxu0 %v2865
    %2867 = vmatprep.subr.mxu0 0.0
    %v2868 = vand.u32 %v2814, 4294901760
    %2869 = vmatpush1.msra.mxu0 %v2868
    %2870 = vmatprep.subr.mxu0 0.0
    %2871 = vmatpush1.msra.mxu0 0.0
    %2872 = vmatprep.subr.mxu0 0.0
    %2873 = vmatpush1.msra.mxu0 0.0
    %2874 = vmatprep.subr.mxu0 0.0
    %2875 = vmatpush1.msra.mxu0 0.0
    %2876 = vmatprep.subr.mxu0 0.0
    %2877 = vmatpush1.msra.mxu0 0.0
    %2878 = vmatprep.subr.mxu0 0.0
    %2879 = vmatpush1.msra.mxu0 0.0
    %2880 = vmatprep.subr.mxu0 0.0
    %2881 = vmatpush1.msra.mxu0 0.0
    %2882 = vmatprep.subr.mxu0 0.0
    %2883 = vmatpush1.msra.mxu0 0.0
    %2884 = vmatprep.subr.mxu0 0.0
    %2885 = vmatpush1.msra.mxu0 0.0
    %2886 = vmatprep.subr.mxu0 0.0
    %2887 = vmatpush1.msra.mxu0 0.0
    %2888 = vmatprep.subr.mxu0 0.0
    %2889 = vmatpush1.msra.mxu0 0.0
    %2890 = vmatprep.subr.mxu0 0.0
    %2891 = vmatpush1.msra.mxu0 0.0
    %2892 = vmatprep.subr.mxu0 0.0
    %2893 = vmatpush1.msra.mxu0 0.0
    %2894 = vmatprep.subr.mxu0 0.0
    %2895 = vmatpush1.msra.mxu0 0.0
    %2896 = vmatprep.subr.mxu0 0.0
    %2897 = vmatpush1.msra.mxu0 0.0
    %2898 = vmatprep.subr.mxu0 0.0
    %2899 = vmatpush1.msra.mxu0 0.0
    %2900 = vmatprep.subr.mxu0 0.0
    %2901 = vmatpush1.msra.mxu0 0.0
    %2902 = vmatprep.mubr.f32.mxu0 0.0
    %v2903 = vand.u32 %v2798, 4294901760
    %v2904 = vsub.f32 %v2798, %v2903
    %v2905 = vand.u32 %v2904, 4294901760
    %v2906 = vsub.f32 %v2904, %v2905
    %v2907 = vand.u32 %v2906, 4294901760
    %2908 = vmatmul.mubr.f32.gmra.mrb[0].mxu0 %v2907
    %v2909 = vpop.f32.mrb[0].mxu0
    %v2910 = vadd.f32 %v2820, %v2909
    %v2911 = vpop.f32.mrb[0].mxu0
    %2912 = vdwg.mxu0
    %2913 = vmatprep.subr.mxu0 0.0
    %v2914 = vand.u32 %v2799, 4294901760
    %v2915 = vsub.f32 %v2799, %v2914
    %v2916 = vand.u32 %v2915, 4294901760
    %v2917 = vsub.f32 %v2915, %v2916
    %v2918 = vand.u32 %v2917, 4294901760
    %2919 = vmatpush1.msra.mxu0 %v2918
    %2920 = vmatprep.subr.mxu0 0.0
    %v2921 = vand.u32 %v2800, 4294901760
    %v2922 = vsub.f32 %v2800, %v2921
    %v2923 = vand.u32 %v2922, 4294901760
    %v2924 = vsub.f32 %v2922, %v2923
    %v2925 = vand.u32 %v2924, 4294901760
    %2926 = vmatpush1.msra.mxu0 %v2925
    %2927 = vmatprep.subr.mxu0 0.0
    %v2928 = vand.u32 %v2801, 4294901760
    %v2929 = vsub.f32 %v2801, %v2928
    %v2930 = vand.u32 %v2929, 4294901760
    %v2931 = vsub.f32 %v2929, %v2930
    %v2932 = vand.u32 %v2931, 4294901760
    %2933 = vmatpush1.msra.mxu0 %v2932
    %2934 = vmatprep.subr.mxu0 0.0
    %v2935 = vand.u32 %v2802, 4294901760
    %v2936 = vsub.f32 %v2802, %v2935
    %v2937 = vand.u32 %v2936, 4294901760
    %v2938 = vsub.f32 %v2936, %v2937
    %v2939 = vand.u32 %v2938, 4294901760
    %2940 = vmatpush1.msra.mxu0 %v2939
    %2941 = vmatprep.subr.mxu0 0.0
    %v2942 = vand.u32 %v2803, 4294901760
    %v2943 = vsub.f32 %v2803, %v2942
    %v2944 = vand.u32 %v2943, 4294901760
    %v2945 = vsub.f32 %v2943, %v2944
    %v2946 = vand.u32 %v2945, 4294901760
    %2947 = vmatpush1.msra.mxu0 %v2946
    %2948 = vmatprep.subr.mxu0 0.0
    %v2949 = vand.u32 %v2804, 4294901760
    %v2950 = vsub.f32 %v2804, %v2949
    %v2951 = vand.u32 %v2950, 4294901760
    %v2952 = vsub.f32 %v2950, %v2951
    %v2953 = vand.u32 %v2952, 4294901760
    %2954 = vmatpush1.msra.mxu0 %v2953
    %2955 = vmatprep.subr.mxu0 0.0
    %v2956 = vand.u32 %v2805, 4294901760
    %v2957 = vsub.f32 %v2805, %v2956
    %v2958 = vand.u32 %v2957, 4294901760
    %v2959 = vsub.f32 %v2957, %v2958
    %v2960 = vand.u32 %v2959, 4294901760
    %2961 = vmatpush1.msra.mxu0 %v2960
    %2962 = vmatprep.subr.mxu0 0.0
    %v2963 = vand.u32 %v2806, 4294901760
    %v2964 = vsub.f32 %v2806, %v2963
    %v2965 = vand.u32 %v2964, 4294901760
    %v2966 = vsub.f32 %v2964, %v2965
    %v2967 = vand.u32 %v2966, 4294901760
    %2968 = vmatpush1.msra.mxu0 %v2967
    %2969 = vmatprep.subr.mxu0 0.0
    %v2970 = vand.u32 %v2807, 4294901760
    %v2971 = vsub.f32 %v2807, %v2970
    %v2972 = vand.u32 %v2971, 4294901760
    %v2973 = vsub.f32 %v2971, %v2972
    %v2974 = vand.u32 %v2973, 4294901760
    %2975 = vmatpush1.msra.mxu0 %v2974
    %2976 = vmatprep.subr.mxu0 0.0
    %v2977 = vand.u32 %v2808, 4294901760
    %v2978 = vsub.f32 %v2808, %v2977
    %v2979 = vand.u32 %v2978, 4294901760
    %v2980 = vsub.f32 %v2978, %v2979
    %v2981 = vand.u32 %v2980, 4294901760
    %2982 = vmatpush1.msra.mxu0 %v2981
    %2983 = vmatprep.subr.mxu0 0.0
    %v2984 = vand.u32 %v2809, 4294901760
    %v2985 = vsub.f32 %v2809, %v2984
    %v2986 = vand.u32 %v2985, 4294901760
    %v2987 = vsub.f32 %v2985, %v2986
    %v2988 = vand.u32 %v2987, 4294901760
    %2989 = vmatpush1.msra.mxu0 %v2988
    %2990 = vmatprep.subr.mxu0 0.0
    %v2991 = vand.u32 %v2810, 4294901760
    %v2992 = vsub.f32 %v2810, %v2991
    %v2993 = vand.u32 %v2992, 4294901760
    %v2994 = vsub.f32 %v2992, %v2993
    %v2995 = vand.u32 %v2994, 4294901760
    %2996 = vmatpush1.msra.mxu0 %v2995
    %2997 = vmatprep.subr.mxu0 0.0
    %v2998 = vand.u32 %v2811, 4294901760
    %v2999 = vsub.f32 %v2811, %v2998
    %v3000 = vand.u32 %v2999, 4294901760
    %v3001 = vsub.f32 %v2999, %v3000
    %v3002 = vand.u32 %v3001, 4294901760
    %3003 = vmatpush1.msra.mxu0 %v3002
    %3004 = vmatprep.subr.mxu0 0.0
    %v3005 = vand.u32 %v2812, 4294901760
    %v3006 = vsub.f32 %v2812, %v3005
    %v3007 = vand.u32 %v3006, 4294901760
    %v3008 = vsub.f32 %v3006, %v3007
    %v3009 = vand.u32 %v3008, 4294901760
    %3010 = vmatpush1.msra.mxu0 %v3009
    %3011 = vmatprep.subr.mxu0 0.0
    %v3012 = vand.u32 %v2813, 4294901760
    %v3013 = vsub.f32 %v2813, %v3012
    %v3014 = vand.u32 %v3013, 4294901760
    %v3015 = vsub.f32 %v3013, %v3014
    %v3016 = vand.u32 %v3015, 4294901760
    %3017 = vmatpush1.msra.mxu0 %v3016
    %3018 = vmatprep.subr.mxu0 0.0
    %v3019 = vand.u32 %v2814, 4294901760
    %v3020 = vsub.f32 %v2814, %v3019
    %v3021 = vand.u32 %v3020, 4294901760
    %v3022 = vsub.f32 %v3020, %v3021
    %v3023 = vand.u32 %v3022, 4294901760
    %3024 = vmatpush1.msra.mxu0 %v3023
    %3025 = vmatprep.subr.mxu0 0.0
    %3026 = vmatpush1.msra.mxu0 0.0
    %3027 = vmatprep.subr.mxu0 0.0
    %3028 = vmatpush1.msra.mxu0 0.0
    %3029 = vmatprep.subr.mxu0 0.0
    %3030 = vmatpush1.msra.mxu0 0.0
    %3031 = vmatprep.subr.mxu0 0.0
    %3032 = vmatpush1.msra.mxu0 0.0
    %3033 = vmatprep.subr.mxu0 0.0
    %3034 = vmatpush1.msra.mxu0 0.0
    %3035 = vmatprep.subr.mxu0 0.0
    %3036 = vmatpush1.msra.mxu0 0.0
    %3037 = vmatprep.subr.mxu0 0.0
    %3038 = vmatpush1.msra.mxu0 0.0
    %3039 = vmatprep.subr.mxu0 0.0
    %3040 = vmatpush1.msra.mxu0 0.0
    %3041 = vmatprep.subr.mxu0 0.0
    %3042 = vmatpush1.msra.mxu0 0.0
    %3043 = vmatprep.subr.mxu0 0.0
    %3044 = vmatpush1.msra.mxu0 0.0
    %3045 = vmatprep.subr.mxu0 0.0
    %3046 = vmatpush1.msra.mxu0 0.0
    %3047 = vmatprep.subr.mxu0 0.0
    %3048 = vmatpush1.msra.mxu0 0.0
    %3049 = vmatprep.subr.mxu0 0.0
    %3050 = vmatpush1.msra.mxu0 0.0
    %3051 = vmatprep.subr.mxu0 0.0
    %3052 = vmatpush1.msra.mxu0 0.0
    %3053 = vmatprep.subr.mxu0 0.0
    %3054 = vmatpush1.msra.mxu0 0.0
    %3055 = vmatprep.subr.mxu0 0.0
    %3056 = vmatpush1.msra.mxu0 0.0
    %3057 = vmatprep.mubr.f32.mxu0 0.0
    %v3058 = vand.u32 %v2798, 4294901760
    %3059 = vmatmul.mubr.f32.gmra.mrb[0].mxu0 %v3058
    %v3060 = vpop.f32.mrb[0].mxu0
    %v3061 = vadd.f32 %v2910, %v3060
    %v3062 = vpop.f32.mrb[0].mxu0
    %3063 = vdwg.mxu0
    %3064 = vmatprep.subr.mxu0 0.0
    %v3065 = vand.u32 %v2799, 4294901760
    %v3066 = vsub.f32 %v2799, %v3065
    %3067 = vmatpush1.msra.mxu0 %v3066
    %3068 = vmatprep.subr.mxu0 0.0
    %v3069 = vand.u32 %v2800, 4294901760
    %v3070 = vsub.f32 %v2800, %v3069
    %3071 = vmatpush1.msra.mxu0 %v3070
    %3072 = vmatprep.subr.mxu0 0.0
    %v3073 = vand.u32 %v2801, 4294901760
    %v3074 = vsub.f32 %v2801, %v3073
    %3075 = vmatpush1.msra.mxu0 %v3074
    %3076 = vmatprep.subr.mxu0 0.0
    %v3077 = vand.u32 %v2802, 4294901760
    %v3078 = vsub.f32 %v2802, %v3077
    %3079 = vmatpush1.msra.mxu0 %v3078
    %3080 = vmatprep.subr.mxu0 0.0
    %v3081 = vand.u32 %v2803, 4294901760
    %v3082 = vsub.f32 %v2803, %v3081
    %3083 = vmatpush1.msra.mxu0 %v3082
    %3084 = vmatprep.subr.mxu0 0.0
    %v3085 = vand.u32 %v2804, 4294901760
    %v3086 = vsub.f32 %v2804, %v3085
    %3087 = vmatpush1.msra.mxu0 %v3086
    %3088 = vmatprep.subr.mxu0 0.0
    %v3089 = vand.u32 %v2805, 4294901760
    %v3090 = vsub.f32 %v2805, %v3089
    %3091 = vmatpush1.msra.mxu0 %v3090
    %3092 = vmatprep.subr.mxu0 0.0
    %v3093 = vand.u32 %v2806, 4294901760
    %v3094 = vsub.f32 %v2806, %v3093
    %3095 = vmatpush1.msra.mxu0 %v3094
    %3096 = vmatprep.subr.mxu0 0.0
    %v3097 = vand.u32 %v2807, 4294901760
    %v3098 = vsub.f32 %v2807, %v3097
    %3099 = vmatpush1.msra.mxu0 %v3098
    %3100 = vmatprep.subr.mxu0 0.0
    %v3101 = vand.u32 %v2808, 4294901760
    %v3102 = vsub.f32 %v2808, %v3101
    %3103 = vmatpush1.msra.mxu0 %v3102
    %3104 = vmatprep.subr.mxu0 0.0
    %v3105 = vand.u32 %v2809, 4294901760
    %v3106 = vsub.f32 %v2809, %v3105
    %3107 = vmatpush1.msra.mxu0 %v3106
    %3108 = vmatprep.subr.mxu0 0.0
    %v3109 = vand.u32 %v2810, 4294901760
    %v3110 = vsub.f32 %v2810, %v3109
    %3111 = vmatpush1.msra.mxu0 %v3110
    %3112 = vmatprep.subr.mxu0 0.0
    %v3113 = vand.u32 %v2811, 4294901760
    %v3114 = vsub.f32 %v2811, %v3113
    %3115 = vmatpush1.msra.mxu0 %v3114
    %3116 = vmatprep.subr.mxu0 0.0
    %v3117 = vand.u32 %v2812, 4294901760
    %v3118 = vsub.f32 %v2812, %v3117
    %3119 = vmatpush1.msra.mxu0 %v3118
    %3120 = vmatprep.subr.mxu0 0.0
    %v3121 = vand.u32 %v2813, 4294901760
    %v3122 = vsub.f32 %v2813, %v3121
    %3123 = vmatpush1.msra.mxu0 %v3122
    %3124 = vmatprep.subr.mxu0 0.0
    %v3125 = vand.u32 %v2814, 4294901760
    %v3126 = vsub.f32 %v2814, %v3125
    %3127 = vmatpush1.msra.mxu0 %v3126
    %3128 = vmatprep.subr.mxu0 0.0
    %3129 = vmatpush1.msra.mxu0 0.0
    %3130 = vmatprep.subr.mxu0 0.0
    %3131 = vmatpush1.msra.mxu0 0.0
    %3132 = vmatprep.subr.mxu0 0.0
    %3133 = vmatpush1.msra.mxu0 0.0
    %3134 = vmatprep.subr.mxu0 0.0
    %3135 = vmatpush1.msra.mxu0 0.0
    %3136 = vmatprep.subr.mxu0 0.0
    %3137 = vmatpush1.msra.mxu0 0.0
    %3138 = vmatprep.subr.mxu0 0.0
    %3139 = vmatpush1.msra.mxu0 0.0
    %3140 = vmatprep.subr.mxu0 0.0
    %3141 = vmatpush1.msra.mxu0 0.0
    %3142 = vmatprep.subr.mxu0 0.0
    %3143 = vmatpush1.msra.mxu0 0.0
    %3144 = vmatprep.subr.mxu0 0.0
    %3145 = vmatpush1.msra.mxu0 0.0
    %3146 = vmatprep.subr.mxu0 0.0
    %3147 = vmatpush1.msra.mxu0 0.0
    %3148 = vmatprep.subr.mxu0 0.0
    %3149 = vmatpush1.msra.mxu0 0.0
    %3150 = vmatprep.subr.mxu0 0.0
    %3151 = vmatpush1.msra.mxu0 0.0
    %3152 = vmatprep.subr.mxu0 0.0
    %3153 = vmatpush1.msra.mxu0 0.0
    %3154 = vmatprep.subr.mxu0 0.0
    %3155 = vmatpush1.msra.mxu0 0.0
    %3156 = vmatprep.subr.mxu0 0.0
    %3157 = vmatpush1.msra.mxu0 0.0
    %3158 = vmatprep.subr.mxu0 0.0
    %3159 = vmatpush1.msra.mxu0 0.0
    %3160 = vmatprep.mubr.f32.mxu0 0.0
    %v3161 = vand.u32 %v2798, 4294901760
    %v3162 = vsub.f32 %v2798, %v3161
    %3163 = vmatmul.mubr.f32.gmra.mrb[0].mxu0 %v3162
    %v3164 = vpop.f32.mrb[0].mxu0
    %v3165 = vadd.f32 %v3061, %v3164
    %v3166 = vpop.f32.mrb[0].mxu0
    %3167 = vdwg.mxu0
    %3168 = vmatprep.subr.mxu0 0.0
    %v3169 = vand.u32 %v2799, 4294901760
    %3170 = vmatpush1.msra.mxu0 %v3169
    %3171 = vmatprep.subr.mxu0 0.0
    %v3172 = vand.u32 %v2800, 4294901760
    %3173 = vmatpush1.msra.mxu0 %v3172
    %3174 = vmatprep.subr.mxu0 0.0
    %v3175 = vand.u32 %v2801, 4294901760
    %3176 = vmatpush1.msra.mxu0 %v3175
    %3177 = vmatprep.subr.mxu0 0.0
    %v3178 = vand.u32 %v2802, 4294901760
    %3179 = vmatpush1.msra.mxu0 %v3178
    %3180 = vmatprep.subr.mxu0 0.0
    %v3181 = vand.u32 %v2803, 4294901760
    %3182 = vmatpush1.msra.mxu0 %v3181
    %3183 = vmatprep.subr.mxu0 0.0
    %v3184 = vand.u32 %v2804, 4294901760
    %3185 = vmatpush1.msra.mxu0 %v3184
    %3186 = vmatprep.subr.mxu0 0.0
    %v3187 = vand.u32 %v2805, 4294901760
    %3188 = vmatpush1.msra.mxu0 %v3187
    %3189 = vmatprep.subr.mxu0 0.0
    %v3190 = vand.u32 %v2806, 4294901760
    %3191 = vmatpush1.msra.mxu0 %v3190
    %3192 = vmatprep.subr.mxu0 0.0
    %v3193 = vand.u32 %v2807, 4294901760
    %3194 = vmatpush1.msra.mxu0 %v3193
    %3195 = vmatprep.subr.mxu0 0.0
    %v3196 = vand.u32 %v2808, 4294901760
    %3197 = vmatpush1.msra.mxu0 %v3196
    %3198 = vmatprep.subr.mxu0 0.0
    %v3199 = vand.u32 %v2809, 4294901760
    %3200 = vmatpush1.msra.mxu0 %v3199
    %3201 = vmatprep.subr.mxu0 0.0
    %v3202 = vand.u32 %v2810, 4294901760
    %3203 = vmatpush1.msra.mxu0 %v3202
    %3204 = vmatprep.subr.mxu0 0.0
    %v3205 = vand.u32 %v2811, 4294901760
    %3206 = vmatpush1.msra.mxu0 %v3205
    %3207 = vmatprep.subr.mxu0 0.0
    %v3208 = vand.u32 %v2812, 4294901760
    %3209 = vmatpush1.msra.mxu0 %v3208
    %3210 = vmatprep.subr.mxu0 0.0
    %v3211 = vand.u32 %v2813, 4294901760
    %3212 = vmatpush1.msra.mxu0 %v3211
    %3213 = vmatprep.subr.mxu0 0.0
    %v3214 = vand.u32 %v2814, 4294901760
    %3215 = vmatpush1.msra.mxu0 %v3214
    %3216 = vmatprep.subr.mxu0 0.0
    %3217 = vmatpush1.msra.mxu0 0.0
    %3218 = vmatprep.subr.mxu0 0.0
    %3219 = vmatpush1.msra.mxu0 0.0
    %3220 = vmatprep.subr.mxu0 0.0
    %3221 = vmatpush1.msra.mxu0 0.0
    %3222 = vmatprep.subr.mxu0 0.0
    %3223 = vmatpush1.msra.mxu0 0.0
    %3224 = vmatprep.subr.mxu0 0.0
    %3225 = vmatpush1.msra.mxu0 0.0
    %3226 = vmatprep.subr.mxu0 0.0
    %3227 = vmatpush1.msra.mxu0 0.0
    %3228 = vmatprep.subr.mxu0 0.0
    %3229 = vmatpush1.msra.mxu0 0.0
    %3230 = vmatprep.subr.mxu0 0.0
    %3231 = vmatpush1.msra.mxu0 0.0
    %3232 = vmatprep.subr.mxu0 0.0
    %3233 = vmatpush1.msra.mxu0 0.0
    %3234 = vmatprep.subr.mxu0 0.0
    %3235 = vmatpush1.msra.mxu0 0.0
    %3236 = vmatprep.subr.mxu0 0.0
    %3237 = vmatpush1.msra.mxu0 0.0
    %3238 = vmatprep.subr.mxu0 0.0
    %3239 = vmatpush1.msra.mxu0 0.0
    %3240 = vmatprep.subr.mxu0 0.0
    %3241 = vmatpush1.msra.mxu0 0.0
    %3242 = vmatprep.subr.mxu0 0.0
    %3243 = vmatpush1.msra.mxu0 0.0
    %3244 = vmatprep.subr.mxu0 0.0
    %3245 = vmatpush1.msra.mxu0 0.0
    %3246 = vmatprep.subr.mxu0 0.0
    %3247 = vmatpush1.msra.mxu0 0.0
    %3248 = vmatprep.mubr.f32.mxu0 0.0
    %v3249 = vand.u32 %v2798, 4294901760
    %v3250 = vsub.f32 %v2798, %v3249
    %v3251 = vand.u32 %v3250, 4294901760
    %3252 = vmatmul.mubr.f32.gmra.mrb[0].mxu0 %v3251
    %v3253 = vpop.f32.mrb[0].mxu0
    %v3254 = vadd.f32 %v3165, %v3253
    %v3255 = vpop.f32.mrb[0].mxu0
    %3256 = vdwg.mxu0
    %3257 = vmatprep.subr.mxu0 0.0
    %v3258 = vand.u32 %v2799, 4294901760
    %v3259 = vsub.f32 %v2799, %v3258
    %v3260 = vand.u32 %v3259, 4294901760
    %3261 = vmatpush1.msra.mxu0 %v3260
    %3262 = vmatprep.subr.mxu0 0.0
    %v3263 = vand.u32 %v2800, 4294901760
    %v3264 = vsub.f32 %v2800, %v3263
    %v3265 = vand.u32 %v3264, 4294901760
    %3266 = vmatpush1.msra.mxu0 %v3265
    %3267 = vmatprep.subr.mxu0 0.0
    %v3268 = vand.u32 %v2801, 4294901760
    %v3269 = vsub.f32 %v2801, %v3268
    %v3270 = vand.u32 %v3269, 4294901760
    %3271 = vmatpush1.msra.mxu0 %v3270
    %3272 = vmatprep.subr.mxu0 0.0
    %v3273 = vand.u32 %v2802, 4294901760
    %v3274 = vsub.f32 %v2802, %v3273
    %v3275 = vand.u32 %v3274, 4294901760
    %3276 = vmatpush1.msra.mxu0 %v3275
    %3277 = vmatprep.subr.mxu0 0.0
    %v3278 = vand.u32 %v2803, 4294901760
    %v3279 = vsub.f32 %v2803, %v3278
    %v3280 = vand.u32 %v3279, 4294901760
    %3281 = vmatpush1.msra.mxu0 %v3280
    %3282 = vmatprep.subr.mxu0 0.0
    %v3283 = vand.u32 %v2804, 4294901760
    %v3284 = vsub.f32 %v2804, %v3283
    %v3285 = vand.u32 %v3284, 4294901760
    %3286 = vmatpush1.msra.mxu0 %v3285
    %3287 = vmatprep.subr.mxu0 0.0
    %v3288 = vand.u32 %v2805, 4294901760
    %v3289 = vsub.f32 %v2805, %v3288
    %v3290 = vand.u32 %v3289, 4294901760
    %3291 = vmatpush1.msra.mxu0 %v3290
    %3292 = vmatprep.subr.mxu0 0.0
    %v3293 = vand.u32 %v2806, 4294901760
    %v3294 = vsub.f32 %v2806, %v3293
    %v3295 = vand.u32 %v3294, 4294901760
    %3296 = vmatpush1.msra.mxu0 %v3295
    %3297 = vmatprep.subr.mxu0 0.0
    %v3298 = vand.u32 %v2807, 4294901760
    %v3299 = vsub.f32 %v2807, %v3298
    %v3300 = vand.u32 %v3299, 4294901760
    %3301 = vmatpush1.msra.mxu0 %v3300
    %3302 = vmatprep.subr.mxu0 0.0
    %v3303 = vand.u32 %v2808, 4294901760
    %v3304 = vsub.f32 %v2808, %v3303
    %v3305 = vand.u32 %v3304, 4294901760
    %3306 = vmatpush1.msra.mxu0 %v3305
    %3307 = vmatprep.subr.mxu0 0.0
    %v3308 = vand.u32 %v2809, 4294901760
    %v3309 = vsub.f32 %v2809, %v3308
    %v3310 = vand.u32 %v3309, 4294901760
    %3311 = vmatpush1.msra.mxu0 %v3310
    %3312 = vmatprep.subr.mxu0 0.0
    %v3313 = vand.u32 %v2810, 4294901760
    %v3314 = vsub.f32 %v2810, %v3313
    %v3315 = vand.u32 %v3314, 4294901760
    %3316 = vmatpush1.msra.mxu0 %v3315
    %3317 = vmatprep.subr.mxu0 0.0
    %v3318 = vand.u32 %v2811, 4294901760
    %v3319 = vsub.f32 %v2811, %v3318
    %v3320 = vand.u32 %v3319, 4294901760
    %3321 = vmatpush1.msra.mxu0 %v3320
    %3322 = vmatprep.subr.mxu0 0.0
    %v3323 = vand.u32 %v2812, 4294901760
    %v3324 = vsub.f32 %v2812, %v3323
    %v3325 = vand.u32 %v3324, 4294901760
    %3326 = vmatpush1.msra.mxu0 %v3325
    %3327 = vmatprep.subr.mxu0 0.0
    %v3328 = vand.u32 %v2813, 4294901760
    %v3329 = vsub.f32 %v2813, %v3328
    %v3330 = vand.u32 %v3329, 4294901760
    %3331 = vmatpush1.msra.mxu0 %v3330
    %3332 = vmatprep.subr.mxu0 0.0
    %v3333 = vand.u32 %v2814, 4294901760
    %v3334 = vsub.f32 %v2814, %v3333
    %v3335 = vand.u32 %v3334, 4294901760
    %3336 = vmatpush1.msra.mxu0 %v3335
    %3337 = vmatprep.subr.mxu0 0.0
    %3338 = vmatpush1.msra.mxu0 0.0
    %3339 = vmatprep.subr.mxu0 0.0
    %3340 = vmatpush1.msra.mxu0 0.0
    %3341 = vmatprep.subr.mxu0 0.0
    %3342 = vmatpush1.msra.mxu0 0.0
    %3343 = vmatprep.subr.mxu0 0.0
    %3344 = vmatpush1.msra.mxu0 0.0
    %3345 = vmatprep.subr.mxu0 0.0
    %3346 = vmatpush1.msra.mxu0 0.0
    %3347 = vmatprep.subr.mxu0 0.0
    %3348 = vmatpush1.msra.mxu0 0.0
    %3349 = vmatprep.subr.mxu0 0.0
    %3350 = vmatpush1.msra.mxu0 0.0
    %3351 = vmatprep.subr.mxu0 0.0
    %3352 = vmatpush1.msra.mxu0 0.0
    %3353 = vmatprep.subr.mxu0 0.0
    %3354 = vmatpush1.msra.mxu0 0.0
    %3355 = vmatprep.subr.mxu0 0.0
    %3356 = vmatpush1.msra.mxu0 0.0
    %3357 = vmatprep.subr.mxu0 0.0
    %3358 = vmatpush1.msra.mxu0 0.0
    %3359 = vmatprep.subr.mxu0 0.0
    %3360 = vmatpush1.msra.mxu0 0.0
    %3361 = vmatprep.subr.mxu0 0.0
    %3362 = vmatpush1.msra.mxu0 0.0
    %3363 = vmatprep.subr.mxu0 0.0
    %3364 = vmatpush1.msra.mxu0 0.0
    %3365 = vmatprep.subr.mxu0 0.0
    %3366 = vmatpush1.msra.mxu0 0.0
    %3367 = vmatprep.subr.mxu0 0.0
    %3368 = vmatpush1.msra.mxu0 0.0
    %3369 = vmatprep.mubr.f32.mxu0 0.0
    %v3370 = vand.u32 %v2798, 4294901760
    %3371 = vmatmul.mubr.f32.gmra.mrb[0].mxu0 %v3370
    %v3372 = vpop.f32.mrb[0].mxu0
    %v3373 = vadd.f32 %v3254, %v3372
    %v3374 = vpop.f32.mrb[0].mxu0
    %3375 = vdwg.mxu0
    %3376 = vmatprep.subr.mxu0 0.0
    %v3377 = vand.u32 %v2799, 4294901760
    %3378 = vmatpush1.msra.mxu0 %v3377
    %3379 = vmatprep.subr.mxu0 0.0
    %v3380 = vand.u32 %v2800, 4294901760
    %3381 = vmatpush1.msra.mxu0 %v3380
    %3382 = vmatprep.subr.mxu0 0.0
    %v3383 = vand.u32 %v2801, 4294901760
    %3384 = vmatpush1.msra.mxu0 %v3383
    %3385 = vmatprep.subr.mxu0 0.0
    %v3386 = vand.u32 %v2802, 4294901760
    %3387 = vmatpush1.msra.mxu0 %v3386
    %3388 = vmatprep.subr.mxu0 0.0
    %v3389 = vand.u32 %v2803, 4294901760
    %3390 = vmatpush1.msra.mxu0 %v3389
    %3391 = vmatprep.subr.mxu0 0.0
    %v3392 = vand.u32 %v2804, 4294901760
    %3393 = vmatpush1.msra.mxu0 %v3392
    %3394 = vmatprep.subr.mxu0 0.0
    %v3395 = vand.u32 %v2805, 4294901760
    %3396 = vmatpush1.msra.mxu0 %v3395
    %3397 = vmatprep.subr.mxu0 0.0
    %v3398 = vand.u32 %v2806, 4294901760
    %3399 = vmatpush1.msra.mxu0 %v3398
    %3400 = vmatprep.subr.mxu0 0.0
    %v3401 = vand.u32 %v2807, 4294901760
    %3402 = vmatpush1.msra.mxu0 %v3401
    %3403 = vmatprep.subr.mxu0 0.0
    %v3404 = vand.u32 %v2808, 4294901760
    %3405 = vmatpush1.msra.mxu0 %v3404
    %3406 = vmatprep.subr.mxu0 0.0
    %v3407 = vand.u32 %v2809, 4294901760
    %3408 = vmatpush1.msra.mxu0 %v3407
    %3409 = vmatprep.subr.mxu0 0.0
    %v3410 = vand.u32 %v2810, 4294901760
    %3411 = vmatpush1.msra.mxu0 %v3410
    %3412 = vmatprep.subr.mxu0 0.0
    %v3413 = vand.u32 %v2811, 4294901760
    %3414 = vmatpush1.msra.mxu0 %v3413
    %3415 = vmatprep.subr.mxu0 0.0
    %v3416 = vand.u32 %v2812, 4294901760
    %3417 = vmatpush1.msra.mxu0 %v3416
    %3418 = vmatprep.subr.mxu0 0.0
    %v3419 = vand.u32 %v2813, 4294901760
    %3420 = vmatpush1.msra.mxu0 %v3419
    %3421 = vmatprep.subr.mxu0 0.0
    %v3422 = vand.u32 %v2814, 4294901760
    %3423 = vmatpush1.msra.mxu0 %v3422
    %3424 = vmatprep.subr.mxu0 0.0
    %3425 = vmatpush1.msra.mxu0 0.0
    %3426 = vmatprep.subr.mxu0 0.0
    %3427 = vmatpush1.msra.mxu0 0.0
    %3428 = vmatprep.subr.mxu0 0.0
    %3429 = vmatpush1.msra.mxu0 0.0
    %3430 = vmatprep.subr.mxu0 0.0
    %3431 = vmatpush1.msra.mxu0 0.0
    %3432 = vmatprep.subr.mxu0 0.0
    %3433 = vmatpush1.msra.mxu0 0.0
    %3434 = vmatprep.subr.mxu0 0.0
    %3435 = vmatpush1.msra.mxu0 0.0
    %3436 = vmatprep.subr.mxu0 0.0
    %3437 = vmatpush1.msra.mxu0 0.0
    %3438 = vmatprep.subr.mxu0 0.0
    %3439 = vmatpush1.msra.mxu0 0.0
    %3440 = vmatprep.subr.mxu0 0.0
    %3441 = vmatpush1.msra.mxu0 0.0
    %3442 = vmatprep.subr.mxu0 0.0
    %3443 = vmatpush1.msra.mxu0 0.0
    %3444 = vmatprep.subr.mxu0 0.0
    %3445 = vmatpush1.msra.mxu0 0.0
    %3446 = vmatprep.subr.mxu0 0.0
    %3447 = vmatpush1.msra.mxu0 0.0
    %3448 = vmatprep.subr.mxu0 0.0
    %3449 = vmatpush1.msra.mxu0 0.0
    %3450 = vmatprep.subr.mxu0 0.0
    %3451 = vmatpush1.msra.mxu0 0.0
    %3452 = vmatprep.subr.mxu0 0.0
    %3453 = vmatpush1.msra.mxu0 0.0
    %3454 = vmatprep.subr.mxu0 0.0
    %3455 = vmatpush1.msra.mxu0 0.0
    %3456 = vmatprep.mubr.f32.mxu0 0.0
    %v3457 = vand.u32 %v2798, 4294901760
    %3458 = vmatmul.mubr.f32.gmra.mrb[0].mxu0 %v3457
    %v3459 = vpop.f32.mrb[0].mxu0
    %v3460 = vadd.f32 %v3373, %v3459
    %v3461 = vpop.f32.mrb[0].mxu0
    %3462 = vdwg.mxu0
    %v3463 = vmax.f32 %v3460, 0.0
    %v3464 = vld [vmem:[#allocation13] sm:$0xff]
    %v3465 = vld [vmem:[#allocation13 + $0x8] sm:$0xff]
    %v3466 = vld [vmem:[#allocation13 + $0x10] sm:$0xff]
    %v3467 = vld [vmem:[#allocation13 + $0x18] sm:$0xff]
    %v3468 = vld [vmem:[#allocation13 + $0x20] sm:$0xff]
    %v3469 = vld [vmem:[#allocation13 + $0x28] sm:$0xff]
    %v3470 = vld [vmem:[#allocation13 + $0x30] sm:$0xff]
    %v3471 = vld [vmem:[#allocation13 + $0x38] sm:$0xff]
    %v3472 = vld [vmem:[#allocation13 + $0x40] sm:$0xff]
    %v3473 = vld [vmem:[#allocation13 + $0x48] sm:$0xff]
    %v3474 = vld [vmem:[#allocation13 + $0x50] sm:$0xff]
    %v3475 = vld [vmem:[#allocation13 + $0x58] sm:$0xff]
    %v3476 = vld [vmem:[#allocation13 + $0x60] sm:$0xff]
    %v3477 = vld [vmem:[#allocation13 + $0x68] sm:$0xff]
    %v3478 = vld [vmem:[#allocation13 + $0x70] sm:$0xff]
    %v3479 = vld [vmem:[#allocation13 + $0x78] sm:$0xff]
    %v3480 = vld [vmem:[%s12] sm:$0x1]
    %v3482 = vlaneseq
    %v3483 = vshrl.u32 %v3482, 7
    %v3484 = vsub.s32 0, %v3483
    %v3485 = vrot.slane %v3480, %v3484
    %3487 = vmatprep.subr.mxu0 0.0
    %v3488 = vand.u32 %v3464, 4294901760
    %3489 = vmatpush1.msra.mxu0 %v3488
    %3490 = vmatprep.subr.mxu0 0.0
    %v3491 = vand.u32 %v3465, 4294901760
    %3492 = vmatpush1.msra.mxu0 %v3491
    %3493 = vmatprep.subr.mxu0 0.0
    %v3494 = vand.u32 %v3466, 4294901760
    %3495 = vmatpush1.msra.mxu0 %v3494
    %3496 = vmatprep.subr.mxu0 0.0
    %v3497 = vand.u32 %v3467, 4294901760
    %3498 = vmatpush1.msra.mxu0 %v3497
    %3499 = vmatprep.subr.mxu0 0.0
    %v3500 = vand.u32 %v3468, 4294901760
    %3501 = vmatpush1.msra.mxu0 %v3500
    %3502 = vmatprep.subr.mxu0 0.0
    %v3503 = vand.u32 %v3469, 4294901760
    %3504 = vmatpush1.msra.mxu0 %v3503
    %3505 = vmatprep.subr.mxu0 0.0
    %v3506 = vand.u32 %v3470, 4294901760
    %3507 = vmatpush1.msra.mxu0 %v3506
    %3508 = vmatprep.subr.mxu0 0.0
    %v3509 = vand.u32 %v3471, 4294901760
    %3510 = vmatpush1.msra.mxu0 %v3509
    %3511 = vmatprep.subr.mxu0 0.0
    %v3512 = vand.u32 %v3472, 4294901760
    %3513 = vmatpush1.msra.mxu0 %v3512
    %3514 = vmatprep.subr.mxu0 0.0
    %v3515 = vand.u32 %v3473, 4294901760
    %3516 = vmatpush1.msra.mxu0 %v3515
    %3517 = vmatprep.subr.mxu0 0.0
    %v3518 = vand.u32 %v3474, 4294901760
    %3519 = vmatpush1.msra.mxu0 %v3518
    %3520 = vmatprep.subr.mxu0 0.0
    %v3521 = vand.u32 %v3475, 4294901760
    %3522 = vmatpush1.msra.mxu0 %v3521
    %3523 = vmatprep.subr.mxu0 0.0
    %v3524 = vand.u32 %v3476, 4294901760
    %3525 = vmatpush1.msra.mxu0 %v3524
    %3526 = vmatprep.subr.mxu0 0.0
    %v3527 = vand.u32 %v3477, 4294901760
    %3528 = vmatpush1.msra.mxu0 %v3527
    %3529 = vmatprep.subr.mxu0 0.0
    %v3530 = vand.u32 %v3478, 4294901760
    %3531 = vmatpush1.msra.mxu0 %v3530
    %3532 = vmatprep.subr.mxu0 0.0
    %v3533 = vand.u32 %v3479, 4294901760
    %3534 = vmatpush1.msra.mxu0 %v3533
    %3535 = vmatprep.subr.mxu0 0.0
    %3536 = vmatpush1.msra.mxu0 0.0
    %3537 = vmatprep.subr.mxu0 0.0
    %3538 = vmatpush1.msra.mxu0 0.0
    %3539 = vmatprep.subr.mxu0 0.0
    %3540 = vmatpush1.msra.mxu0 0.0
    %3541 = vmatprep.subr.mxu0 0.0
    %3542 = vmatpush1.msra.mxu0 0.0
    %3543 = vmatprep.subr.mxu0 0.0
    %3544 = vmatpush1.msra.mxu0 0.0
    %3545 = vmatprep.subr.mxu0 0.0
    %3546 = vmatpush1.msra.mxu0 0.0
    %3547 = vmatprep.subr.mxu0 0.0
    %3548 = vmatpush1.msra.mxu0 0.0
    %3549 = vmatprep.subr.mxu0 0.0
    %3550 = vmatpush1.msra.mxu0 0.0
    %3551 = vmatprep.subr.mxu0 0.0
    %3552 = vmatpush1.msra.mxu0 0.0
    %3553 = vmatprep.subr.mxu0 0.0
    %3554 = vmatpush1.msra.mxu0 0.0
    %3555 = vmatprep.subr.mxu0 0.0
    %3556 = vmatpush1.msra.mxu0 0.0
    %3557 = vmatprep.subr.mxu0 0.0
    %3558 = vmatpush1.msra.mxu0 0.0
    %3559 = vmatprep.subr.mxu0 0.0
    %3560 = vmatpush1.msra.mxu0 0.0
    %3561 = vmatprep.subr.mxu0 0.0
    %3562 = vmatpush1.msra.mxu0 0.0
    %3563 = vmatprep.subr.mxu0 0.0
    %3564 = vmatpush1.msra.mxu0 0.0
    %3565 = vmatprep.subr.mxu0 0.0
    %3566 = vmatpush1.msra.mxu0 0.0
    %3567 = vmatprep.mubr.f32.mxu0 0.0
    %v3568 = vand.u32 %v3463, 4294901760
    %v3569 = vsub.f32 %v3463, %v3568
    %v3570 = vand.u32 %v3569, 4294901760
    %v3571 = vsub.f32 %v3569, %v3570
    %v3572 = vand.u32 %v3571, 4294901760
    %3573 = vmatmul.mubr.f32.gmra.mrb[0].mxu0 %v3572
    %v3574 = vpop.f32.mrb[0].mxu0
    %v3575 = vadd.f32 %v3485, %v3574
    %v3576 = vpop.f32.mrb[0].mxu0
    %3577 = vdwg.mxu0
    %3578 = vmatprep.subr.mxu0 0.0
    %v3579 = vand.u32 %v3464, 4294901760
    %v3580 = vsub.f32 %v3464, %v3579
    %v3581 = vand.u32 %v3580, 4294901760
    %v3582 = vsub.f32 %v3580, %v3581
    %v3583 = vand.u32 %v3582, 4294901760
    %3584 = vmatpush1.msra.mxu0 %v3583
    %3585 = vmatprep.subr.mxu0 0.0
    %v3586 = vand.u32 %v3465, 4294901760
    %v3587 = vsub.f32 %v3465, %v3586
    %v3588 = vand.u32 %v3587, 4294901760
    %v3589 = vsub.f32 %v3587, %v3588
    %v3590 = vand.u32 %v3589, 4294901760
    %3591 = vmatpush1.msra.mxu0 %v3590
    %3592 = vmatprep.subr.mxu0 0.0
    %v3593 = vand.u32 %v3466, 4294901760
    %v3594 = vsub.f32 %v3466, %v3593
    %v3595 = vand.u32 %v3594, 4294901760
    %v3596 = vsub.f32 %v3594, %v3595
    %v3597 = vand.u32 %v3596, 4294901760
    %3598 = vmatpush1.msra.mxu0 %v3597
    %3599 = vmatprep.subr.mxu0 0.0
    %v3600 = vand.u32 %v3467, 4294901760
    %v3601 = vsub.f32 %v3467, %v3600
    %v3602 = vand.u32 %v3601, 4294901760
    %v3603 = vsub.f32 %v3601, %v3602
    %v3604 = vand.u32 %v3603, 4294901760
    %3605 = vmatpush1.msra.mxu0 %v3604
    %3606 = vmatprep.subr.mxu0 0.0
    %v3607 = vand.u32 %v3468, 4294901760
    %v3608 = vsub.f32 %v3468, %v3607
    %v3609 = vand.u32 %v3608, 4294901760
    %v3610 = vsub.f32 %v3608, %v3609
    %v3611 = vand.u32 %v3610, 4294901760
    %3612 = vmatpush1.msra.mxu0 %v3611
    %3613 = vmatprep.subr.mxu0 0.0
    %v3614 = vand.u32 %v3469, 4294901760
    %v3615 = vsub.f32 %v3469, %v3614
    %v3616 = vand.u32 %v3615, 4294901760
    %v3617 = vsub.f32 %v3615, %v3616
    %v3618 = vand.u32 %v3617, 4294901760
    %3619 = vmatpush1.msra.mxu0 %v3618
    %3620 = vmatprep.subr.mxu0 0.0
    %v3621 = vand.u32 %v3470, 4294901760
    %v3622 = vsub.f32 %v3470, %v3621
    %v3623 = vand.u32 %v3622, 4294901760
    %v3624 = vsub.f32 %v3622, %v3623
    %v3625 = vand.u32 %v3624, 4294901760
    %3626 = vmatpush1.msra.mxu0 %v3625
    %3627 = vmatprep.subr.mxu0 0.0
    %v3628 = vand.u32 %v3471, 4294901760
    %v3629 = vsub.f32 %v3471, %v3628
    %v3630 = vand.u32 %v3629, 4294901760
    %v3631 = vsub.f32 %v3629, %v3630
    %v3632 = vand.u32 %v3631, 4294901760
    %3633 = vmatpush1.msra.mxu0 %v3632
    %3634 = vmatprep.subr.mxu0 0.0
    %v3635 = vand.u32 %v3472, 4294901760
    %v3636 = vsub.f32 %v3472, %v3635
    %v3637 = vand.u32 %v3636, 4294901760
    %v3638 = vsub.f32 %v3636, %v3637
    %v3639 = vand.u32 %v3638, 4294901760
    %3640 = vmatpush1.msra.mxu0 %v3639
    %3641 = vmatprep.subr.mxu0 0.0
    %v3642 = vand.u32 %v3473, 4294901760
    %v3643 = vsub.f32 %v3473, %v3642
    %v3644 = vand.u32 %v3643, 4294901760
    %v3645 = vsub.f32 %v3643, %v3644
    %v3646 = vand.u32 %v3645, 4294901760
    %3647 = vmatpush1.msra.mxu0 %v3646
    %3648 = vmatprep.subr.mxu0 0.0
    %v3649 = vand.u32 %v3474, 4294901760
    %v3650 = vsub.f32 %v3474, %v3649
    %v3651 = vand.u32 %v3650, 4294901760
    %v3652 = vsub.f32 %v3650, %v3651
    %v3653 = vand.u32 %v3652, 4294901760
    %3654 = vmatpush1.msra.mxu0 %v3653
    %3655 = vmatprep.subr.mxu0 0.0
    %v3656 = vand.u32 %v3475, 4294901760
    %v3657 = vsub.f32 %v3475, %v3656
    %v3658 = vand.u32 %v3657, 4294901760
    %v3659 = vsub.f32 %v3657, %v3658
    %v3660 = vand.u32 %v3659, 4294901760
    %3661 = vmatpush1.msra.mxu0 %v3660
    %3662 = vmatprep.subr.mxu0 0.0
    %v3663 = vand.u32 %v3476, 4294901760
    %v3664 = vsub.f32 %v3476, %v3663
    %v3665 = vand.u32 %v3664, 4294901760
    %v3666 = vsub.f32 %v3664, %v3665
    %v3667 = vand.u32 %v3666, 4294901760
    %3668 = vmatpush1.msra.mxu0 %v3667
    %3669 = vmatprep.subr.mxu0 0.0
    %v3670 = vand.u32 %v3477, 4294901760
    %v3671 = vsub.f32 %v3477, %v3670
    %v3672 = vand.u32 %v3671, 4294901760
    %v3673 = vsub.f32 %v3671, %v3672
    %v3674 = vand.u32 %v3673, 4294901760
    %3675 = vmatpush1.msra.mxu0 %v3674
    %3676 = vmatprep.subr.mxu0 0.0
    %v3677 = vand.u32 %v3478, 4294901760
    %v3678 = vsub.f32 %v3478, %v3677
    %v3679 = vand.u32 %v3678, 4294901760
    %v3680 = vsub.f32 %v3678, %v3679
    %v3681 = vand.u32 %v3680, 4294901760
    %3682 = vmatpush1.msra.mxu0 %v3681
    %3683 = vmatprep.subr.mxu0 0.0
    %v3684 = vand.u32 %v3479, 4294901760
    %v3685 = vsub.f32 %v3479, %v3684
    %v3686 = vand.u32 %v3685, 4294901760
    %v3687 = vsub.f32 %v3685, %v3686
    %v3688 = vand.u32 %v3687, 4294901760
    %3689 = vmatpush1.msra.mxu0 %v3688
    %3690 = vmatprep.subr.mxu0 0.0
    %3691 = vmatpush1.msra.mxu0 0.0
    %3692 = vmatprep.subr.mxu0 0.0
    %3693 = vmatpush1.msra.mxu0 0.0
    %3694 = vmatprep.subr.mxu0 0.0
    %3695 = vmatpush1.msra.mxu0 0.0
    %3696 = vmatprep.subr.mxu0 0.0
    %3697 = vmatpush1.msra.mxu0 0.0
    %3698 = vmatprep.subr.mxu0 0.0
    %3699 = vmatpush1.msra.mxu0 0.0
    %3700 = vmatprep.subr.mxu0 0.0
    %3701 = vmatpush1.msra.mxu0 0.0
    %3702 = vmatprep.subr.mxu0 0.0
    %3703 = vmatpush1.msra.mxu0 0.0
    %3704 = vmatprep.subr.mxu0 0.0
    %3705 = vmatpush1.msra.mxu0 0.0
    %3706 = vmatprep.subr.mxu0 0.0
    %3707 = vmatpush1.msra.mxu0 0.0
    %3708 = vmatprep.subr.mxu0 0.0
    %3709 = vmatpush1.msra.mxu0 0.0
    %3710 = vmatprep.subr.mxu0 0.0
    %3711 = vmatpush1.msra.mxu0 0.0
    %3712 = vmatprep.subr.mxu0 0.0
    %3713 = vmatpush1.msra.mxu0 0.0
    %3714 = vmatprep.subr.mxu0 0.0
    %3715 = vmatpush1.msra.mxu0 0.0
    %3716 = vmatprep.subr.mxu0 0.0
    %3717 = vmatpush1.msra.mxu0 0.0
    %3718 = vmatprep.subr.mxu0 0.0
    %3719 = vmatpush1.msra.mxu0 0.0
    %3720 = vmatprep.subr.mxu0 0.0
    %3721 = vmatpush1.msra.mxu0 0.0
    %3722 = vmatprep.mubr.f32.mxu0 0.0
    %v3723 = vand.u32 %v3463, 4294901760
    %3724 = vmatmul.mubr.f32.gmra.mrb[0].mxu0 %v3723
    %v3725 = vpop.f32.mrb[0].mxu0
    %v3726 = vadd.f32 %v3575, %v3725
    %v3727 = vpop.f32.mrb[0].mxu0
    %3728 = vdwg.mxu0
    %3729 = vmatprep.subr.mxu0 0.0
    %v3730 = vand.u32 %v3464, 4294901760
    %v3731 = vsub.f32 %v3464, %v3730
    %3732 = vmatpush1.msra.mxu0 %v3731
    %3733 = vmatprep.subr.mxu0 0.0
    %v3734 = vand.u32 %v3465, 4294901760
    %v3735 = vsub.f32 %v3465, %v3734
    %3736 = vmatpush1.msra.mxu0 %v3735
    %3737 = vmatprep.subr.mxu0 0.0
    %v3738 = vand.u32 %v3466, 4294901760
    %v3739 = vsub.f32 %v3466, %v3738
    %3740 = vmatpush1.msra.mxu0 %v3739
    %3741 = vmatprep.subr.mxu0 0.0
    %v3742 = vand.u32 %v3467, 4294901760
    %v3743 = vsub.f32 %v3467, %v3742
    %3744 = vmatpush1.msra.mxu0 %v3743
    %3745 = vmatprep.subr.mxu0 0.0
    %v3746 = vand.u32 %v3468, 4294901760
    %v3747 = vsub.f32 %v3468, %v3746
    %3748 = vmatpush1.msra.mxu0 %v3747
    %3749 = vmatprep.subr.mxu0 0.0
    %v3750 = vand.u32 %v3469, 4294901760
    %v3751 = vsub.f32 %v3469, %v3750
    %3752 = vmatpush1.msra.mxu0 %v3751
    %3753 = vmatprep.subr.mxu0 0.0
    %v3754 = vand.u32 %v3470, 4294901760
    %v3755 = vsub.f32 %v3470, %v3754
    %3756 = vmatpush1.msra.mxu0 %v3755
    %3757 = vmatprep.subr.mxu0 0.0
    %v3758 = vand.u32 %v3471, 4294901760
    %v3759 = vsub.f32 %v3471, %v3758
    %3760 = vmatpush1.msra.mxu0 %v3759
    %3761 = vmatprep.subr.mxu0 0.0
    %v3762 = vand.u32 %v3472, 4294901760
    %v3763 = vsub.f32 %v3472, %v3762
    %3764 = vmatpush1.msra.mxu0 %v3763
    %3765 = vmatprep.subr.mxu0 0.0
    %v3766 = vand.u32 %v3473, 4294901760
    %v3767 = vsub.f32 %v3473, %v3766
    %3768 = vmatpush1.msra.mxu0 %v3767
    %3769 = vmatprep.subr.mxu0 0.0
    %v3770 = vand.u32 %v3474, 4294901760
    %v3771 = vsub.f32 %v3474, %v3770
    %3772 = vmatpush1.msra.mxu0 %v3771
    %3773 = vmatprep.subr.mxu0 0.0
    %v3774 = vand.u32 %v3475, 4294901760
    %v3775 = vsub.f32 %v3475, %v3774
    %3776 = vmatpush1.msra.mxu0 %v3775
    %3777 = vmatprep.subr.mxu0 0.0
    %v3778 = vand.u32 %v3476, 4294901760
    %v3779 = vsub.f32 %v3476, %v3778
    %3780 = vmatpush1.msra.mxu0 %v3779
    %3781 = vmatprep.subr.mxu0 0.0
    %v3782 = vand.u32 %v3477, 4294901760
    %v3783 = vsub.f32 %v3477, %v3782
    %3784 = vmatpush1.msra.mxu0 %v3783
    %3785 = vmatprep.subr.mxu0 0.0
    %v3786 = vand.u32 %v3478, 4294901760
    %v3787 = vsub.f32 %v3478, %v3786
    %3788 = vmatpush1.msra.mxu0 %v3787
    %3789 = vmatprep.subr.mxu0 0.0
    %v3790 = vand.u32 %v3479, 4294901760
    %v3791 = vsub.f32 %v3479, %v3790
    %3792 = vmatpush1.msra.mxu0 %v3791
    %3793 = vmatprep.subr.mxu0 0.0
    %3794 = vmatpush1.msra.mxu0 0.0
    %3795 = vmatprep.subr.mxu0 0.0
    %3796 = vmatpush1.msra.mxu0 0.0
    %3797 = vmatprep.subr.mxu0 0.0
    %3798 = vmatpush1.msra.mxu0 0.0
    %3799 = vmatprep.subr.mxu0 0.0
    %3800 = vmatpush1.msra.mxu0 0.0
    %3801 = vmatprep.subr.mxu0 0.0
    %3802 = vmatpush1.msra.mxu0 0.0
    %3803 = vmatprep.subr.mxu0 0.0
    %3804 = vmatpush1.msra.mxu0 0.0
    %3805 = vmatprep.subr.mxu0 0.0
    %3806 = vmatpush1.msra.mxu0 0.0
    %3807 = vmatprep.subr.mxu0 0.0
    %3808 = vmatpush1.msra.mxu0 0.0
    %3809 = vmatprep.subr.mxu0 0.0
    %3810 = vmatpush1.msra.mxu0 0.0
    %3811 = vmatprep.subr.mxu0 0.0
    %3812 = vmatpush1.msra.mxu0 0.0
    %3813 = vmatprep.subr.mxu0 0.0
    %3814 = vmatpush1.msra.mxu0 0.0
    %3815 = vmatprep.subr.mxu0 0.0
    %3816 = vmatpush1.msra.mxu0 0.0
    %3817 = vmatprep.subr.mxu0 0.0
    %3818 = vmatpush1.msra.mxu0 0.0
    %3819 = vmatprep.subr.mxu0 0.0
    %3820 = vmatpush1.msra.mxu0 0.0
    %3821 = vmatprep.subr.mxu0 0.0
    %3822 = vmatpush1.msra.mxu0 0.0
    %3823 = vmatprep.subr.mxu0 0.0
    %3824 = vmatpush1.msra.mxu0 0.0
    %3825 = vmatprep.mubr.f32.mxu0 0.0
    %v3826 = vand.u32 %v3463, 4294901760
    %v3827 = vsub.f32 %v3463, %v3826
    %3828 = vmatmul.mubr.f32.gmra.mrb[0].mxu0 %v3827
    %v3829 = vpop.f32.mrb[0].mxu0
    %v3830 = vadd.f32 %v3726, %v3829
    %v3831 = vpop.f32.mrb[0].mxu0
    %3832 = vdwg.mxu0
    %3833 = vmatprep.subr.mxu0 0.0
    %v3834 = vand.u32 %v3464, 4294901760
    %3835 = vmatpush1.msra.mxu0 %v3834
    %3836 = vmatprep.subr.mxu0 0.0
    %v3837 = vand.u32 %v3465, 4294901760
    %3838 = vmatpush1.msra.mxu0 %v3837
    %3839 = vmatprep.subr.mxu0 0.0
    %v3840 = vand.u32 %v3466, 4294901760
    %3841 = vmatpush1.msra.mxu0 %v3840
    %3842 = vmatprep.subr.mxu0 0.0
    %v3843 = vand.u32 %v3467, 4294901760
    %3844 = vmatpush1.msra.mxu0 %v3843
    %3845 = vmatprep.subr.mxu0 0.0
    %v3846 = vand.u32 %v3468, 4294901760
    %3847 = vmatpush1.msra.mxu0 %v3846
    %3848 = vmatprep.subr.mxu0 0.0
    %v3849 = vand.u32 %v3469, 4294901760
    %3850 = vmatpush1.msra.mxu0 %v3849
    %3851 = vmatprep.subr.mxu0 0.0
    %v3852 = vand.u32 %v3470, 4294901760
    %3853 = vmatpush1.msra.mxu0 %v3852
    %3854 = vmatprep.subr.mxu0 0.0
    %v3855 = vand.u32 %v3471, 4294901760
    %3856 = vmatpush1.msra.mxu0 %v3855
    %3857 = vmatprep.subr.mxu0 0.0
    %v3858 = vand.u32 %v3472, 4294901760
    %3859 = vmatpush1.msra.mxu0 %v3858
    %3860 = vmatprep.subr.mxu0 0.0
    %v3861 = vand.u32 %v3473, 4294901760
    %3862 = vmatpush1.msra.mxu0 %v3861
    %3863 = vmatprep.subr.mxu0 0.0
    %v3864 = vand.u32 %v3474, 4294901760
    %3865 = vmatpush1.msra.mxu0 %v3864
    %3866 = vmatprep.subr.mxu0 0.0
    %v3867 = vand.u32 %v3475, 4294901760
    %3868 = vmatpush1.msra.mxu0 %v3867
    %3869 = vmatprep.subr.mxu0 0.0
    %v3870 = vand.u32 %v3476, 4294901760
    %3871 = vmatpush1.msra.mxu0 %v3870
    %3872 = vmatprep.subr.mxu0 0.0
    %v3873 = vand.u32 %v3477, 4294901760
    %3874 = vmatpush1.msra.mxu0 %v3873
    %3875 = vmatprep.subr.mxu0 0.0
    %v3876 = vand.u32 %v3478, 4294901760
    %3877 = vmatpush1.msra.mxu0 %v3876
    %3878 = vmatprep.subr.mxu0 0.0
    %v3879 = vand.u32 %v3479, 4294901760
    %3880 = vmatpush1.msra.mxu0 %v3879
    %3881 = vmatprep.subr.mxu0 0.0
    %3882 = vmatpush1.msra.mxu0 0.0
    %3883 = vmatprep.subr.mxu0 0.0
    %3884 = vmatpush1.msra.mxu0 0.0
    %3885 = vmatprep.subr.mxu0 0.0
    %3886 = vmatpush1.msra.mxu0 0.0
    %3887 = vmatprep.subr.mxu0 0.0
    %3888 = vmatpush1.msra.mxu0 0.0
    %3889 = vmatprep.subr.mxu0 0.0
    %3890 = vmatpush1.msra.mxu0 0.0
    %3891 = vmatprep.subr.mxu0 0.0
    %3892 = vmatpush1.msra.mxu0 0.0
    %3893 = vmatprep.subr.mxu0 0.0
    %3894 = vmatpush1.msra.mxu0 0.0
    %3895 = vmatprep.subr.mxu0 0.0
    %3896 = vmatpush1.msra.mxu0 0.0
    %3897 = vmatprep.subr.mxu0 0.0
    %3898 = vmatpush1.msra.mxu0 0.0
    %3899 = vmatprep.subr.mxu0 0.0
    %3900 = vmatpush1.msra.mxu0 0.0
    %3901 = vmatprep.subr.mxu0 0.0
    %3902 = vmatpush1.msra.mxu0 0.0
    %3903 = vmatprep.subr.mxu0 0.0
    %3904 = vmatpush1.msra.mxu0 0.0
    %3905 = vmatprep.subr.mxu0 0.0
    %3906 = vmatpush1.msra.mxu0 0.0
    %3907 = vmatprep.subr.mxu0 0.0
    %3908 = vmatpush1.msra.mxu0 0.0
    %3909 = vmatprep.subr.mxu0 0.0
    %3910 = vmatpush1.msra.mxu0 0.0
    %3911 = vmatprep.subr.mxu0 0.0
    %3912 = vmatpush1.msra.mxu0 0.0
    %3913 = vmatprep.mubr.f32.mxu0 0.0
    %v3914 = vand.u32 %v3463, 4294901760
    %v3915 = vsub.f32 %v3463, %v3914
    %v3916 = vand.u32 %v3915, 4294901760
    %3917 = vmatmul.mubr.f32.gmra.mrb[0].mxu0 %v3916
    %v3918 = vpop.f32.mrb[0].mxu0
    %v3919 = vadd.f32 %v3830, %v3918
    %v3920 = vpop.f32.mrb[0].mxu0
    %3921 = vdwg.mxu0
    %3922 = vmatprep.subr.mxu0 0.0
    %v3923 = vand.u32 %v3464, 4294901760
    %v3924 = vsub.f32 %v3464, %v3923
    %v3925 = vand.u32 %v3924, 4294901760
    %3926 = vmatpush1.msra.mxu0 %v3925
    %3927 = vmatprep.subr.mxu0 0.0
    %v3928 = vand.u32 %v3465, 4294901760
    %v3929 = vsub.f32 %v3465, %v3928
    %v3930 = vand.u32 %v3929, 4294901760
    %3931 = vmatpush1.msra.mxu0 %v3930
    %3932 = vmatprep.subr.mxu0 0.0
    %v3933 = vand.u32 %v3466, 4294901760
    %v3934 = vsub.f32 %v3466, %v3933
    %v3935 = vand.u32 %v3934, 4294901760
    %3936 = vmatpush1.msra.mxu0 %v3935
    %3937 = vmatprep.subr.mxu0 0.0
    %v3938 = vand.u32 %v3467, 4294901760
    %v3939 = vsub.f32 %v3467, %v3938
    %v3940 = vand.u32 %v3939, 4294901760
    %3941 = vmatpush1.msra.mxu0 %v3940
    %3942 = vmatprep.subr.mxu0 0.0
    %v3943 = vand.u32 %v3468, 4294901760
    %v3944 = vsub.f32 %v3468, %v3943
    %v3945 = vand.u32 %v3944, 4294901760
    %3946 = vmatpush1.msra.mxu0 %v3945
    %3947 = vmatprep.subr.mxu0 0.0
    %v3948 = vand.u32 %v3469, 4294901760
    %v3949 = vsub.f32 %v3469, %v3948
    %v3950 = vand.u32 %v3949, 4294901760
    %3951 = vmatpush1.msra.mxu0 %v3950
    %3952 = vmatprep.subr.mxu0 0.0
    %v3953 = vand.u32 %v3470, 4294901760
    %v3954 = vsub.f32 %v3470, %v3953
    %v3955 = vand.u32 %v3954, 4294901760
    %3956 = vmatpush1.msra.mxu0 %v3955
    %3957 = vmatprep.subr.mxu0 0.0
    %v3958 = vand.u32 %v3471, 4294901760
    %v3959 = vsub.f32 %v3471, %v3958
    %v3960 = vand.u32 %v3959, 4294901760
    %3961 = vmatpush1.msra.mxu0 %v3960
    %3962 = vmatprep.subr.mxu0 0.0
    %v3963 = vand.u32 %v3472, 4294901760
    %v3964 = vsub.f32 %v3472, %v3963
    %v3965 = vand.u32 %v3964, 4294901760
    %3966 = vmatpush1.msra.mxu0 %v3965
    %3967 = vmatprep.subr.mxu0 0.0
    %v3968 = vand.u32 %v3473, 4294901760
    %v3969 = vsub.f32 %v3473, %v3968
    %v3970 = vand.u32 %v3969, 4294901760
    %3971 = vmatpush1.msra.mxu0 %v3970
    %3972 = vmatprep.subr.mxu0 0.0
    %v3973 = vand.u32 %v3474, 4294901760
    %v3974 = vsub.f32 %v3474, %v3973
    %v3975 = vand.u32 %v3974, 4294901760
    %3976 = vmatpush1.msra.mxu0 %v3975
    %3977 = vmatprep.subr.mxu0 0.0
    %v3978 = vand.u32 %v3475, 4294901760
    %v3979 = vsub.f32 %v3475, %v3978
    %v3980 = vand.u32 %v3979, 4294901760
    %3981 = vmatpush1.msra.mxu0 %v3980
    %3982 = vmatprep.subr.mxu0 0.0
    %v3983 = vand.u32 %v3476, 4294901760
    %v3984 = vsub.f32 %v3476, %v3983
    %v3985 = vand.u32 %v3984, 4294901760
    %3986 = vmatpush1.msra.mxu0 %v3985
    %3987 = vmatprep.subr.mxu0 0.0
    %v3988 = vand.u32 %v3477, 4294901760
    %v3989 = vsub.f32 %v3477, %v3988
    %v3990 = vand.u32 %v3989, 4294901760
    %3991 = vmatpush1.msra.mxu0 %v3990
    %3992 = vmatprep.subr.mxu0 0.0
    %v3993 = vand.u32 %v3478, 4294901760
    %v3994 = vsub.f32 %v3478, %v3993
    %v3995 = vand.u32 %v3994, 4294901760
    %3996 = vmatpush1.msra.mxu0 %v3995
    %3997 = vmatprep.subr.mxu0 0.0
    %v3998 = vand.u32 %v3479, 4294901760
    %v3999 = vsub.f32 %v3479, %v3998
    %v4000 = vand.u32 %v3999, 4294901760
    %4001 = vmatpush1.msra.mxu0 %v4000
    %4002 = vmatprep.subr.mxu0 0.0
    %4003 = vmatpush1.msra.mxu0 0.0
    %4004 = vmatprep.subr.mxu0 0.0
    %4005 = vmatpush1.msra.mxu0 0.0
    %4006 = vmatprep.subr.mxu0 0.0
    %4007 = vmatpush1.msra.mxu0 0.0
    %4008 = vmatprep.subr.mxu0 0.0
    %4009 = vmatpush1.msra.mxu0 0.0
    %4010 = vmatprep.subr.mxu0 0.0
    %4011 = vmatpush1.msra.mxu0 0.0
    %4012 = vmatprep.subr.mxu0 0.0
    %4013 = vmatpush1.msra.mxu0 0.0
    %4014 = vmatprep.subr.mxu0 0.0
    %4015 = vmatpush1.msra.mxu0 0.0
    %4016 = vmatprep.subr.mxu0 0.0
    %4017 = vmatpush1.msra.mxu0 0.0
    %4018 = vmatprep.subr.mxu0 0.0
    %4019 = vmatpush1.msra.mxu0 0.0
    %4020 = vmatprep.subr.mxu0 0.0
    %4021 = vmatpush1.msra.mxu0 0.0
    %4022 = vmatprep.subr.mxu0 0.0
    %4023 = vmatpush1.msra.mxu0 0.0
    %4024 = vmatprep.subr.mxu0 0.0
    %4025 = vmatpush1.msra.mxu0 0.0
    %4026 = vmatprep.subr.mxu0 0.0
    %4027 = vmatpush1.msra.mxu0 0.0
    %4028 = vmatprep.subr.mxu0 0.0
    %4029 = vmatpush1.msra.mxu0 0.0
    %4030 = vmatprep.subr.mxu0 0.0
    %4031 = vmatpush1.msra.mxu0 0.0
    %4032 = vmatprep.subr.mxu0 0.0
    %4033 = vmatpush1.msra.mxu0 0.0
    %4034 = vmatprep.mubr.f32.mxu0 0.0
    %v4035 = vand.u32 %v3463, 4294901760
    %4036 = vmatmul.mubr.f32.gmra.mrb[0].mxu0 %v4035
    %v4037 = vpop.f32.mrb[0].mxu0
    %v4038 = vadd.f32 %v3919, %v4037
    %v4039 = vpop.f32.mrb[0].mxu0
    %4040 = vdwg.mxu0
    %4041 = vmatprep.subr.mxu0 0.0
    %v4042 = vand.u32 %v3464, 4294901760
    %4043 = vmatpush1.msra.mxu0 %v4042
    %4044 = vmatprep.subr.mxu0 0.0
    %v4045 = vand.u32 %v3465, 4294901760
    %4046 = vmatpush1.msra.mxu0 %v4045
    %4047 = vmatprep.subr.mxu0 0.0
    %v4048 = vand.u32 %v3466, 4294901760
    %4049 = vmatpush1.msra.mxu0 %v4048
    %4050 = vmatprep.subr.mxu0 0.0
    %v4051 = vand.u32 %v3467, 4294901760
    %4052 = vmatpush1.msra.mxu0 %v4051
    %4053 = vmatprep.subr.mxu0 0.0
    %v4054 = vand.u32 %v3468, 4294901760
    %4055 = vmatpush1.msra.mxu0 %v4054
    %4056 = vmatprep.subr.mxu0 0.0
    %v4057 = vand.u32 %v3469, 4294901760
    %4058 = vmatpush1.msra.mxu0 %v4057
    %4059 = vmatprep.subr.mxu0 0.0
    %v4060 = vand.u32 %v3470, 4294901760
    %4061 = vmatpush1.msra.mxu0 %v4060
    %4062 = vmatprep.subr.mxu0 0.0
    %v4063 = vand.u32 %v3471, 4294901760
    %4064 = vmatpush1.msra.mxu0 %v4063
    %4065 = vmatprep.subr.mxu0 0.0
    %v4066 = vand.u32 %v3472, 4294901760
    %4067 = vmatpush1.msra.mxu0 %v4066
    %4068 = vmatprep.subr.mxu0 0.0
    %v4069 = vand.u32 %v3473, 4294901760
    %4070 = vmatpush1.msra.mxu0 %v4069
    %4071 = vmatprep.subr.mxu0 0.0
    %v4072 = vand.u32 %v3474, 4294901760
    %4073 = vmatpush1.msra.mxu0 %v4072
    %4074 = vmatprep.subr.mxu0 0.0
    %v4075 = vand.u32 %v3475, 4294901760
    %4076 = vmatpush1.msra.mxu0 %v4075
    %4077 = vmatprep.subr.mxu0 0.0
    %v4078 = vand.u32 %v3476, 4294901760
    %4079 = vmatpush1.msra.mxu0 %v4078
    %4080 = vmatprep.subr.mxu0 0.0
    %v4081 = vand.u32 %v3477, 4294901760
    %4082 = vmatpush1.msra.mxu0 %v4081
    %4083 = vmatprep.subr.mxu0 0.0
    %v4084 = vand.u32 %v3478, 4294901760
    %4085 = vmatpush1.msra.mxu0 %v4084
    %4086 = vmatprep.subr.mxu0 0.0
    %v4087 = vand.u32 %v3479, 4294901760
    %4088 = vmatpush1.msra.mxu0 %v4087
    %4089 = vmatprep.subr.mxu0 0.0
    %4090 = vmatpush1.msra.mxu0 0.0
    %4091 = vmatprep.subr.mxu0 0.0
    %4092 = vmatpush1.msra.mxu0 0.0
    %4093 = vmatprep.subr.mxu0 0.0
    %4094 = vmatpush1.msra.mxu0 0.0
    %4095 = vmatprep.subr.mxu0 0.0
    %4096 = vmatpush1.msra.mxu0 0.0
    %4097 = vmatprep.subr.mxu0 0.0
    %4098 = vmatpush1.msra.mxu0 0.0
    %4099 = vmatprep.subr.mxu0 0.0
    %4100 = vmatpush1.msra.mxu0 0.0
    %4101 = vmatprep.subr.mxu0 0.0
    %4102 = vmatpush1.msra.mxu0 0.0
    %4103 = vmatprep.subr.mxu0 0.0
    %4104 = vmatpush1.msra.mxu0 0.0
    %4105 = vmatprep.subr.mxu0 0.0
    %4106 = vmatpush1.msra.mxu0 0.0
    %4107 = vmatprep.subr.mxu0 0.0
    %4108 = vmatpush1.msra.mxu0 0.0
    %4109 = vmatprep.subr.mxu0 0.0
    %4110 = vmatpush1.msra.mxu0 0.0
    %4111 = vmatprep.subr.mxu0 0.0
    %4112 = vmatpush1.msra.mxu0 0.0
    %4113 = vmatprep.subr.mxu0 0.0
    %4114 = vmatpush1.msra.mxu0 0.0
    %4115 = vmatprep.subr.mxu0 0.0
    %4116 = vmatpush1.msra.mxu0 0.0
    %4117 = vmatprep.subr.mxu0 0.0
    %4118 = vmatpush1.msra.mxu0 0.0
    %4119 = vmatprep.subr.mxu0 0.0
    %4120 = vmatpush1.msra.mxu0 0.0
    %4121 = vmatprep.mubr.f32.mxu0 0.0
    %v4122 = vand.u32 %v3463, 4294901760
    %4123 = vmatmul.mubr.f32.gmra.mrb[0].mxu0 %v4122
    %v4124 = vpop.f32.mrb[0].mxu0
    %v4125 = vadd.f32 %v4038, %v4124
    %v4126 = vpop.f32.mrb[0].mxu0
    %4127 = vdwg.mxu0
    %v4128 = vmax.f32 %v4125, 0.0
    %4129 = vst [vmem:[#allocation14] sm:$0xff] %v4128
    // Predicated region
    $region82: #{tpu_custom_call.1} parent=1 // pred_check
      _
    $region83: #{tpu_custom_call.1} parent=1 // pred_check_branch
      %4131 = sbr.rel (0) target = $region85
    $region84: #{tpu_custom_call.1} parent=1 // pred_region
      %s4133 = ssub.s32 128, 128
      %4134 = vsyncadd [#allocation4], %s4133
      %s4136 = sshll.u32 [#allocation14], 4
      %s4137 = int_to_ptr.vmem [resolvable:$true] %s4136
      %4139 = dma.vmem_to_hbm [thread:$0]  %s4137, 128, %s13, [#allocation4]
    $region85: #{tpu_custom_call.1} parent=1 // pred_fallthru
      _
    // Predicated region
    $region86: #{tpu_custom_call.1} parent=1 // pred_check
      _
    $region87: #{tpu_custom_call.1} parent=1 // pred_check_branch
      %4141 = sbr.rel (0) target = $region89
    $region88: #{tpu_custom_call.1} parent=1 // pred_region
      %4142 = dma.done [#allocation4], 128
    $region89: #{tpu_custom_call.1} parent=1 // pred_fallthru
      _
    %4143 = vsyncpa [#allocation3], 1
    %4144 = vsyncpa [#allocation6], 1
    %4145 = vsyncpa [#allocation9], 1
    %4146 = vsyncpa [#allocation12], 1
    %4147 = vsyncpa [#allocation4], 1

// kernel: tpu_custom_call.1
$region0: #{tpu_custom_call.1}
  #allocation0 [shape = 'u32[]', space=smem, size = 0x4, offset = 0x4, fixed_abs, tag = 'smem constant byte address 0x4 - core index']
  #allocation1 [shape = 'u32[144,128]{1,0:T(1,128)}', space=vmem, size = 0x12000, scoped, tag = 'internal scratch']
  %s0 = inlined_call_operand.hbm [shape: f32[8,128], index: 0, kind: input, shape index: {}]
  %s1 = inlined_call_operand.hbm [shape: f32[128,128], index: 1, kind: input, shape index: {}]
  %s2 = inlined_call_operand.vmem [shape: f32[1,128], index: 2, kind: input, shape index: {}]
  %s3 = inlined_call_operand.hbm [shape: f32[128,128], index: 3, kind: input, shape index: {}]
  %s4 = inlined_call_operand.vmem [shape: f32[1,128], index: 4, kind: input, shape index: {}]
  %s5 = inlined_call_operand.hbm [shape: f32[128,128], index: 5, kind: input, shape index: {}]
  %s6 = inlined_call_operand.vmem [shape: f32[1,128], index: 6, kind: input, shape index: {}]
  %s7 = inlined_call_operand.hbm [shape: f32[128,128], index: 7, kind: input, shape index: {}]
  %s8 = inlined_call_operand.vmem [shape: f32[1,128], index: 8, kind: input, shape index: {}]
  %s9 = inlined_call_operand.hbm [shape: f32[128,128], index: 9, kind: input, shape index: {}]
  %s10 = inlined_call_operand.vmem [shape: f32[1,128], index: 10, kind: input, shape index: {}]
  %s11 = inlined_call_operand.hbm [shape: f32[128,128], index: 11, kind: input, shape index: {}]
  %s12 = inlined_call_operand.vmem [shape: f32[1,128], index: 12, kind: input, shape index: {}]
  %s13 = inlined_call_operand.hbm [shape: f32[8,128], index: 13, kind: output, shape index: {}]
  %s14 = sld [smem:[#allocation0]]
  $region90: #{tpu_custom_call.1} parent=0
    _
  %s16 = ssub.s32 1, %s14
  %s17 = scalar_select 0, %s16, %s14
  $region1: #{tpu_custom_call.1} parent=0
    #allocation2 [shape = 'u8[4096]{0}', space=vmem, size = 0x1000, scoped, tag = 'input window, operand 0, single buffered']
    #allocation3 [shape = 's32[1]{0}', space=sflag, size = 0x4, scoped, tag = 'scoped memory for tpu_custom_call.1']
    #allocation4 [shape = 's32[1]{0}', space=sflag, size = 0x4, scoped, tag = 'scoped memory for tpu_custom_call.1']
    #allocation5 [shape = 'u8[65536]{0}', space=vmem, size = 0x10000, scoped, tag = 'input window, operand 1, single buffered']
    #allocation6 [shape = 's32[1]{0}', space=sflag, size = 0x4, scoped, tag = 'scoped memory for tpu_custom_call.1']
    #allocation7 [shape = 'u8[65536]{0}', space=vmem, size = 0x10000, scoped, tag = 'input window, operand 3, single buffered']
    #allocation8 [shape = 'u8[65536]{0}', space=vmem, size = 0x10000, scoped, tag = 'input window, operand 5, single buffered']
    #allocation9 [shape = 's32[1]{0}', space=sflag, size = 0x4, scoped, tag = 'scoped memory for tpu_custom_call.1']
    #allocation10 [shape = 'u8[65536]{0}', space=vmem, size = 0x10000, scoped, tag = 'input window, operand 7, single buffered']
    #allocation11 [shape = 'u8[65536]{0}', space=vmem, size = 0x10000, scoped, tag = 'input window, operand 9, single buffered']
    #allocation12 [shape = 's32[1]{0}', space=sflag, size = 0x4, scoped, tag = 'scoped memory for tpu_custom_call.1']
    #allocation13 [shape = 'u8[65536]{0}', space=vmem, size = 0x10000, scoped, tag = 'input window, operand 11, single buffered']
    #allocation14 [shape = 'u8[4096]{0}', space=vmem, size = 0x1000, scoped, tag = 'output window, operand 0, single buffered']
    %18 = vsyncpa [#allocation3], 0
    %19 = vsyncpa [#allocation6], 0
    %20 = vsyncpa [#allocation9], 0
    %21 = vsyncpa [#allocation12], 0
    %22 = vsyncpa [#allocation4], 0
    // Predicated region
    $region2: #{tpu_custom_call.1} parent=1 // pred_check
      _
    $region3: #{tpu_custom_call.1} parent=1 // pred_check_branch
      %24 = sbr.rel (0) target = $region5
    $region4: #{tpu_custom_call.1} parent=1 // pred_region
      %s26 = ssub.s32 128, 128
      %27 = vsyncadd [#allocation3], %s26
      %s29 = sshll.u32 [#allocation2], 4
      %s30 = int_to_ptr.vmem [resolvable:$true] %s29
      %32 = dma.hbm_to_vmem [thread:$0]  %s0, 128, %s30, [#allocation3]
    $region5: #{tpu_custom_call.1} parent=1 // pred_fallthru
      _
    // Predicated region
    $region6: #{tpu_custom_call.1} parent=1 // pred_check
      _
    $region7: #{tpu_custom_call.1} parent=1 // pred_check_branch
      %34 = sbr.rel (0) target = $region9
    $region8: #{tpu_custom_call.1} parent=1 // pred_region
      %s36 = ssub.s32 2048, 2048
      %37 = vsyncadd [#allocation6], %s36
      %s38 = sshll.u32 [#allocation5], 4
      %s39 = int_to_ptr.vmem [resolvable:$true] %s38
      %44 = dma.hbm_to_vmem [thread:$0]  %s1, 2048, %s39, [#allocation6], 128, 128, 8
    $region9: #{tpu_custom_call.1} parent=1 // pred_fallthru
      _
    // Predicated region
    $region10: #{tpu_custom_call.1} parent=1 // pred_check
      _
    $region11: #{tpu_custom_call.1} parent=1 // pred_check_branch
      %46 = sbr.rel (0) target = $region13
    $region12: #{tpu_custom_call.1} parent=1 // pred_region
      _
    $region13: #{tpu_custom_call.1} parent=1 // pred_fallthru
      _
    // Predicated region
    $region14: #{tpu_custom_call.1} parent=1 // pred_check
      _
    $region15: #{tpu_custom_call.1} parent=1 // pred_check_branch
      %48 = sbr.rel (0) target = $region17
    $region16: #{tpu_custom_call.1} parent=1 // pred_region
      %s50 = ssub.s32 2048, 2048
      %51 = vsyncadd [#allocation6], %s50
      %s52 = sshll.u32 [#allocation7], 4
      %s53 = int_to_ptr.vmem [resolvable:$true] %s52
      %58 = dma.hbm_to_vmem [thread:$0]  %s3, 2048, %s53, [#allocation6], 128, 128, 8
    $region17: #{tpu_custom_call.1} parent=1 // pred_fallthru
      _
    // Predicated region
    $region18: #{tpu_custom_call.1} parent=1 // pred_check
      _
    $region19: #{tpu_custom_call.1} parent=1 // pred_check_branch
      %60 = sbr.rel (0) target = $region21
    $region20: #{tpu_custom_call.1} parent=1 // pred_region
      _
    $region21: #{tpu_custom_call.1} parent=1 // pred_fallthru
      _
    // Predicated region
    $region22: #{tpu_custom_call.1} parent=1 // pred_check
      _
    $region23: #{tpu_custom_call.1} parent=1 // pred_check_branch
      %62 = sbr.rel (0) target = $region25
    $region24: #{tpu_custom_call.1} parent=1 // pred_region
      %s64 = ssub.s32 2048, 2048
      %65 = vsyncadd [#allocation9], %s64
      %s66 = sshll.u32 [#allocation8], 4
      %s67 = int_to_ptr.vmem [resolvable:$true] %s66
      %72 = dma.hbm_to_vmem [thread:$0]  %s5, 2048, %s67, [#allocation9], 128, 128, 8
    $region25: #{tpu_custom_call.1} parent=1 // pred_fallthru
      _
    // Predicated region
    $region26: #{tpu_custom_call.1} parent=1 // pred_check
      _
    $region27: #{tpu_custom_call.1} parent=1 // pred_check_branch
      %74 = sbr.rel (0) target = $region29
    $region28: #{tpu_custom_call.1} parent=1 // pred_region
      _
    $region29: #{tpu_custom_call.1} parent=1 // pred_fallthru
      _
    // Predicated region
    $region30: #{tpu_custom_call.1} parent=1 // pred_check
      _
    $region31: #{tpu_custom_call.1} parent=1 // pred_check_branch
      %76 = sbr.rel (0) target = $region33
    $region32: #{tpu_custom_call.1} parent=1 // pred_region
      %s78 = ssub.s32 2048, 2048
      %79 = vsyncadd [#allocation9], %s78
      %s80 = sshll.u32 [#allocation10], 4
      %s81 = int_to_ptr.vmem [resolvable:$true] %s80
      %86 = dma.hbm_to_vmem [thread:$0]  %s7, 2048, %s81, [#allocation9], 128, 128, 8
    $region33: #{tpu_custom_call.1} parent=1 // pred_fallthru
      _
    // Predicated region
    $region34: #{tpu_custom_call.1} parent=1 // pred_check
      _
    $region35: #{tpu_custom_call.1} parent=1 // pred_check_branch
      %88 = sbr.rel (0) target = $region37
    $region36: #{tpu_custom_call.1} parent=1 // pred_region
      _
    $region37: #{tpu_custom_call.1} parent=1 // pred_fallthru
      _
    // Predicated region
    $region38: #{tpu_custom_call.1} parent=1 // pred_check
      _
    $region39: #{tpu_custom_call.1} parent=1 // pred_check_branch
      %90 = sbr.rel (0) target = $region41
    $region40: #{tpu_custom_call.1} parent=1 // pred_region
      %s92 = ssub.s32 2048, 2048
      %93 = vsyncadd [#allocation12], %s92
      %s94 = sshll.u32 [#allocation11], 4
      %s95 = int_to_ptr.vmem [resolvable:$true] %s94
      %100 = dma.hbm_to_vmem [thread:$0]  %s9, 2048, %s95, [#allocation12], 128, 128, 8
    $region41: #{tpu_custom_call.1} parent=1 // pred_fallthru
      _
    // Predicated region
    $region42: #{tpu_custom_call.1} parent=1 // pred_check
      _
    $region43: #{tpu_custom_call.1} parent=1 // pred_check_branch
      %102 = sbr.rel (0) target = $region45
    $region44: #{tpu_custom_call.1} parent=1 // pred_region
      _
    $region45: #{tpu_custom_call.1} parent=1 // pred_fallthru
      _
    // Predicated region
    $region46: #{tpu_custom_call.1} parent=1 // pred_check
      _
    $region47: #{tpu_custom_call.1} parent=1 // pred_check_branch
      %104 = sbr.rel (0) target = $region49
    $region48: #{tpu_custom_call.1} parent=1 // pred_region
      %s106 = ssub.s32 2048, 2048
      %107 = vsyncadd [#allocation12], %s106
      %s108 = sshll.u32 [#allocation13], 4
      %s109 = int_to_ptr.vmem [resolvable:$true] %s108
      %114 = dma.hbm_to_vmem [thread:$0]  %s11, 2048, %s109, [#allocation12], 128, 128, 8
    $region49: #{tpu_custom_call.1} parent=1 // pred_fallthru
      _
    // Predicated region
    $region50: #{tpu_custom_call.1} parent=1 // pred_check
      _
    $region51: #{tpu_custom_call.1} parent=1 // pred_check_branch
      %116 = sbr.rel (0) target = $region53
    $region52: #{tpu_custom_call.1} parent=1 // pred_region
      _
    $region53: #{tpu_custom_call.1} parent=1 // pred_fallthru
      _
    // Predicated region
    $region54: #{tpu_custom_call.1} parent=1 // pred_check
      _
    $region55: #{tpu_custom_call.1} parent=1 // pred_check_branch
      %118 = sbr.rel (0) target = $region57
    $region56: #{tpu_custom_call.1} parent=1 // pred_region
      %119 = dma.done [#allocation3], 128
    $region57: #{tpu_custom_call.1} parent=1 // pred_fallthru
      _
    // Predicated region
    $region58: #{tpu_custom_call.1} parent=1 // pred_check
      _
    $region59: #{tpu_custom_call.1} parent=1 // pred_check_branch
      %121 = sbr.rel (0) target = $region61
    $region60: #{tpu_custom_call.1} parent=1 // pred_region
      %122 = dma.done [#allocation6], 2048
    $region61: #{tpu_custom_call.1} parent=1 // pred_fallthru
      _
    // Predicated region
    $region62: #{tpu_custom_call.1} parent=1 // pred_check
      _
    $region63: #{tpu_custom_call.1} parent=1 // pred_check_branch
      %124 = sbr.rel (0) target = $region65
    $region64: #{tpu_custom_call.1} parent=1 // pred_region
      %125 = dma.done [#allocation6], 2048
    $region65: #{tpu_custom_call.1} parent=1 // pred_fallthru
      _
    // Predicated region
    $region66: #{tpu_custom_call.1} parent=1 // pred_check
      _
    $region67: #{tpu_custom_call.1} parent=1 // pred_check_branch
      %127 = sbr.rel (0) target = $region69
    $region68: #{tpu_custom_call.1} parent=1 // pred_region
      %128 = dma.done [#allocation9], 2048
    $region69: #{tpu_custom_call.1} parent=1 // pred_fallthru
      _
    // Predicated region
    $region70: #{tpu_custom_call.1} parent=1 // pred_check
      _
    $region71: #{tpu_custom_call.1} parent=1 // pred_check_branch
      %130 = sbr.rel (0) target = $region73
    $region72: #{tpu_custom_call.1} parent=1 // pred_region
      %131 = dma.done [#allocation9], 2048
    $region73: #{tpu_custom_call.1} parent=1 // pred_fallthru
      _
    // Predicated region
    $region74: #{tpu_custom_call.1} parent=1 // pred_check
      _
    $region75: #{tpu_custom_call.1} parent=1 // pred_check_branch
      %133 = sbr.rel (0) target = $region77
    $region76: #{tpu_custom_call.1} parent=1 // pred_region
      %134 = dma.done [#allocation12], 2048
    $region77: #{tpu_custom_call.1} parent=1 // pred_fallthru
      _
    // Predicated region
    $region78: #{tpu_custom_call.1} parent=1 // pred_check
      _
    $region79: #{tpu_custom_call.1} parent=1 // pred_check_branch
      %136 = sbr.rel (0) target = $region81
    $region80: #{tpu_custom_call.1} parent=1 // pred_region
      %137 = dma.done [#allocation12], 2048
    $region81: #{tpu_custom_call.1} parent=1 // pred_fallthru
      _
    %v138 = vld [vmem:[#allocation2] sm:$0xff]
    %v139 = vld [vmem:[#allocation5] sm:$0xff]
    %v140 = vld [vmem:[#allocation5 + $0x8] sm:$0xff]
    %v141 = vld [vmem:[#allocation5 + $0x10] sm:$0xff]
    %v142 = vld [vmem:[#allocation5 + $0x18] sm:$0xff]
    %v143 = vld [vmem:[#allocation5 + $0x20] sm:$0xff]
    %v144 = vld [vmem:[#allocation5 + $0x28] sm:$0xff]
    %v145 = vld [vmem:[#allocation5 + $0x30] sm:$0xff]
    %v146 = vld [vmem:[#allocation5 + $0x38] sm:$0xff]
    %v147 = vld [vmem:[#allocation5 + $0x40] sm:$0xff]
    %v148 = vld [vmem:[#allocation5 + $0x48] sm:$0xff]
    %v149 = vld [vmem:[#allocation5 + $0x50] sm:$0xff]
    %v150 = vld [vmem:[#allocation5 + $0x58] sm:$0xff]
    %v151 = vld [vmem:[#allocation5 + $0x60] sm:$0xff]
    %v152 = vld [vmem:[#allocation5 + $0x68] sm:$0xff]
    %v153 = vld [vmem:[#allocation5 + $0x70] sm:$0xff]
    %v154 = vld [vmem:[#allocation5 + $0x78] sm:$0xff]
    %v155 = vld [vmem:[%s2] sm:$0x1]
    %v157 = vlaneseq
    %v158 = vshrl.u32 %v157, 7
    %v159 = vsub.s32 0, %v158
    %v160 = vrot.slane %v155, %v159
    %162 = vmatprep.subr.mxu0 0.0
    %v163 = vand.u32 %v139, 4294901760
    %164 = vmatpush1.msra.mxu0 %v163
    %165 = vmatprep.subr.mxu0 0.0
    %v166 = vand.u32 %v140, 4294901760
    %167 = vmatpush1.msra.mxu0 %v166
    %168 = vmatprep.subr.mxu0 0.0
    %v169 = vand.u32 %v141, 4294901760
    %170 = vmatpush1.msra.mxu0 %v169
    %171 = vmatprep.subr.mxu0 0.0
    %v172 = vand.u32 %v142, 4294901760
    %173 = vmatpush1.msra.mxu0 %v172
    %174 = vmatprep.subr.mxu0 0.0
    %v175 = vand.u32 %v143, 4294901760
    %176 = vmatpush1.msra.mxu0 %v175
    %177 = vmatprep.subr.mxu0 0.0
    %v178 = vand.u32 %v144, 4294901760
    %179 = vmatpush1.msra.mxu0 %v178
    %180 = vmatprep.subr.mxu0 0.0
    %v181 = vand.u32 %v145, 4294901760
    %182 = vmatpush1.msra.mxu0 %v181
    %183 = vmatprep.subr.mxu0 0.0
    %v184 = vand.u32 %v146, 4294901760
    %185 = vmatpush1.msra.mxu0 %v184
    %186 = vmatprep.subr.mxu0 0.0
    %v187 = vand.u32 %v147, 4294901760
    %188 = vmatpush1.msra.mxu0 %v187
    %189 = vmatprep.subr.mxu0 0.0
    %v190 = vand.u32 %v148, 4294901760
    %191 = vmatpush1.msra.mxu0 %v190
    %192 = vmatprep.subr.mxu0 0.0
    %v193 = vand.u32 %v149, 4294901760
    %194 = vmatpush1.msra.mxu0 %v193
    %195 = vmatprep.subr.mxu0 0.0
    %v196 = vand.u32 %v150, 4294901760
    %197 = vmatpush1.msra.mxu0 %v196
    %198 = vmatprep.subr.mxu0 0.0
    %v199 = vand.u32 %v151, 4294901760
    %200 = vmatpush1.msra.mxu0 %v199
    %201 = vmatprep.subr.mxu0 0.0
    %v202 = vand.u32 %v152, 4294901760
    %203 = vmatpush1.msra.mxu0 %v202
    %204 = vmatprep.subr.mxu0 0.0
    %v205 = vand.u32 %v153, 4294901760
    %206 = vmatpush1.msra.mxu0 %v205
    %207 = vmatprep.subr.mxu0 0.0
    %v208 = vand.u32 %v154, 4294901760
    %209 = vmatpush1.msra.mxu0 %v208
    %210 = vmatprep.subr.mxu0 0.0
    %211 = vmatpush1.msra.mxu0 0.0
    %212 = vmatprep.subr.mxu0 0.0
    %213 = vmatpush1.msra.mxu0 0.0
    %214 = vmatprep.subr.mxu0 0.0
    %215 = vmatpush1.msra.mxu0 0.0
    %216 = vmatprep.subr.mxu0 0.0
    %217 = vmatpush1.msra.mxu0 0.0
    %218 = vmatprep.subr.mxu0 0.0
    %219 = vmatpush1.msra.mxu0 0.0
    %220 = vmatprep.subr.mxu0 0.0
    %221 = vmatpush1.msra.mxu0 0.0
    %222 = vmatprep.subr.mxu0 0.0
    %223 = vmatpush1.msra.mxu0 0.0
    %224 = vmatprep.subr.mxu0 0.0
    %225 = vmatpush1.msra.mxu0 0.0
    %226 = vmatprep.subr.mxu0 0.0
    %227 = vmatpush1.msra.mxu0 0.0
    %228 = vmatprep.subr.mxu0 0.0
    %229 = vmatpush1.msra.mxu0 0.0
    %230 = vmatprep.subr.mxu0 0.0
    %231 = vmatpush1.msra.mxu0 0.0
    %232 = vmatprep.subr.mxu0 0.0
    %233 = vmatpush1.msra.mxu0 0.0
    %234 = vmatprep.subr.mxu0 0.0
    %235 = vmatpush1.msra.mxu0 0.0
    %236 = vmatprep.subr.mxu0 0.0
    %237 = vmatpush1.msra.mxu0 0.0
    %238 = vmatprep.subr.mxu0 0.0
    %239 = vmatpush1.msra.mxu0 0.0
    %240 = vmatprep.subr.mxu0 0.0
    %241 = vmatpush1.msra.mxu0 0.0
    %242 = vmatprep.mubr.f32.mxu0 0.0
    %v243 = vand.u32 %v138, 4294901760
    %v244 = vsub.f32 %v138, %v243
    %v245 = vand.u32 %v244, 4294901760
    %v246 = vsub.f32 %v244, %v245
    %v247 = vand.u32 %v246, 4294901760
    %248 = vmatmul.mubr.f32.gmra.mrb[0].mxu0 %v247
    %v249 = vpop.f32.mrb[0].mxu0
    %v250 = vadd.f32 %v160, %v249
    %v251 = vpop.f32.mrb[0].mxu0
    %252 = vdwg.mxu0
    %253 = vmatprep.subr.mxu0 0.0
    %v254 = vand.u32 %v139, 4294901760
    %v255 = vsub.f32 %v139, %v254
    %v256 = vand.u32 %v255, 4294901760
    %v257 = vsub.f32 %v255, %v256
    %v258 = vand.u32 %v257, 4294901760
    %259 = vmatpush1.msra.mxu0 %v258
    %260 = vmatprep.subr.mxu0 0.0
    %v261 = vand.u32 %v140, 4294901760
    %v262 = vsub.f32 %v140, %v261
    %v263 = vand.u32 %v262, 4294901760
    %v264 = vsub.f32 %v262, %v263
    %v265 = vand.u32 %v264, 4294901760
    %266 = vmatpush1.msra.mxu0 %v265
    %267 = vmatprep.subr.mxu0 0.0
    %v268 = vand.u32 %v141, 4294901760
    %v269 = vsub.f32 %v141, %v268
    %v270 = vand.u32 %v269, 4294901760
    %v271 = vsub.f32 %v269, %v270
    %v272 = vand.u32 %v271, 4294901760
    %273 = vmatpush1.msra.mxu0 %v272
    %274 = vmatprep.subr.mxu0 0.0
    %v275 = vand.u32 %v142, 4294901760
    %v276 = vsub.f32 %v142, %v275
    %v277 = vand.u32 %v276, 4294901760
    %v278 = vsub.f32 %v276, %v277
    %v279 = vand.u32 %v278, 4294901760
    %280 = vmatpush1.msra.mxu0 %v279
    %281 = vmatprep.subr.mxu0 0.0
    %v282 = vand.u32 %v143, 4294901760
    %v283 = vsub.f32 %v143, %v282
    %v284 = vand.u32 %v283, 4294901760
    %v285 = vsub.f32 %v283, %v284
    %v286 = vand.u32 %v285, 4294901760
    %287 = vmatpush1.msra.mxu0 %v286
    %288 = vmatprep.subr.mxu0 0.0
    %v289 = vand.u32 %v144, 4294901760
    %v290 = vsub.f32 %v144, %v289
    %v291 = vand.u32 %v290, 4294901760
    %v292 = vsub.f32 %v290, %v291
    %v293 = vand.u32 %v292, 4294901760
    %294 = vmatpush1.msra.mxu0 %v293
    %295 = vmatprep.subr.mxu0 0.0
    %v296 = vand.u32 %v145, 4294901760
    %v297 = vsub.f32 %v145, %v296
    %v298 = vand.u32 %v297, 4294901760
    %v299 = vsub.f32 %v297, %v298
    %v300 = vand.u32 %v299, 4294901760
    %301 = vmatpush1.msra.mxu0 %v300
    %302 = vmatprep.subr.mxu0 0.0
    %v303 = vand.u32 %v146, 4294901760
    %v304 = vsub.f32 %v146, %v303
    %v305 = vand.u32 %v304, 4294901760
    %v306 = vsub.f32 %v304, %v305
    %v307 = vand.u32 %v306, 4294901760
    %308 = vmatpush1.msra.mxu0 %v307
    %309 = vmatprep.subr.mxu0 0.0
    %v310 = vand.u32 %v147, 4294901760
    %v311 = vsub.f32 %v147, %v310
    %v312 = vand.u32 %v311, 4294901760
    %v313 = vsub.f32 %v311, %v312
    %v314 = vand.u32 %v313, 4294901760
    %315 = vmatpush1.msra.mxu0 %v314
    %316 = vmatprep.subr.mxu0 0.0
    %v317 = vand.u32 %v148, 4294901760
    %v318 = vsub.f32 %v148, %v317
    %v319 = vand.u32 %v318, 4294901760
    %v320 = vsub.f32 %v318, %v319
    %v321 = vand.u32 %v320, 4294901760
    %322 = vmatpush1.msra.mxu0 %v321
    %323 = vmatprep.subr.mxu0 0.0
    %v324 = vand.u32 %v149, 4294901760
    %v325 = vsub.f32 %v149, %v324
    %v326 = vand.u32 %v325, 4294901760
    %v327 = vsub.f32 %v325, %v326
    %v328 = vand.u32 %v327, 4294901760
    %329 = vmatpush1.msra.mxu0 %v328
    %330 = vmatprep.subr.mxu0 0.0
    %v331 = vand.u32 %v150, 4294901760
    %v332 = vsub.f32 %v150, %v331
    %v333 = vand.u32 %v332, 4294901760
    %v334 = vsub.f32 %v332, %v333
    %v335 = vand.u32 %v334, 4294901760
    %336 = vmatpush1.msra.mxu0 %v335
    %337 = vmatprep.subr.mxu0 0.0
    %v338 = vand.u32 %v151, 4294901760
    %v339 = vsub.f32 %v151, %v338
    %v340 = vand.u32 %v339, 4294901760
    %v341 = vsub.f32 %v339, %v340
    %v342 = vand.u32 %v341, 4294901760
    %343 = vmatpush1.msra.mxu0 %v342
    %344 = vmatprep.subr.mxu0 0.0
    %v345 = vand.u32 %v152, 4294901760
    %v346 = vsub.f32 %v152, %v345
    %v347 = vand.u32 %v346, 4294901760
    %v348 = vsub.f32 %v346, %v347
    %v349 = vand.u32 %v348, 4294901760
    %350 = vmatpush1.msra.mxu0 %v349
    %351 = vmatprep.subr.mxu0 0.0
    %v352 = vand.u32 %v153, 4294901760
    %v353 = vsub.f32 %v153, %v352
    %v354 = vand.u32 %v353, 4294901760
    %v355 = vsub.f32 %v353, %v354
    %v356 = vand.u32 %v355, 4294901760
    %357 = vmatpush1.msra.mxu0 %v356
    %358 = vmatprep.subr.mxu0 0.0
    %v359 = vand.u32 %v154, 4294901760
    %v360 = vsub.f32 %v154, %v359
    %v361 = vand.u32 %v360, 4294901760
    %v362 = vsub.f32 %v360, %v361
    %v363 = vand.u32 %v362, 4294901760
    %364 = vmatpush1.msra.mxu0 %v363
    %365 = vmatprep.subr.mxu0 0.0
    %366 = vmatpush1.msra.mxu0 0.0
    %367 = vmatprep.subr.mxu0 0.0
    %368 = vmatpush1.msra.mxu0 0.0
    %369 = vmatprep.subr.mxu0 0.0
    %370 = vmatpush1.msra.mxu0 0.0
    %371 = vmatprep.subr.mxu0 0.0
    %372 = vmatpush1.msra.mxu0 0.0
    %373 = vmatprep.subr.mxu0 0.0
    %374 = vmatpush1.msra.mxu0 0.0
    %375 = vmatprep.subr.mxu0 0.0
    %376 = vmatpush1.msra.mxu0 0.0
    %377 = vmatprep.subr.mxu0 0.0
    %378 = vmatpush1.msra.mxu0 0.0
    %379 = vmatprep.subr.mxu0 0.0
    %380 = vmatpush1.msra.mxu0 0.0
    %381 = vmatprep.subr.mxu0 0.0
    %382 = vmatpush1.msra.mxu0 0.0
    %383 = vmatprep.subr.mxu0 0.0
    %384 = vmatpush1.msra.mxu0 0.0
    %385 = vmatprep.subr.mxu0 0.0
    %386 = vmatpush1.msra.mxu0 0.0
    %387 = vmatprep.subr.mxu0 0.0
    %388 = vmatpush1.msra.mxu0 0.0
    %389 = vmatprep.subr.mxu0 0.0
    %390 = vmatpush1.msra.mxu0 0.0
    %391 = vmatprep.subr.mxu0 0.0
    %392 = vmatpush1.msra.mxu0 0.0
    %393 = vmatprep.subr.mxu0 0.0
    %394 = vmatpush1.msra.mxu0 0.0
    %395 = vmatprep.subr.mxu0 0.0
    %396 = vmatpush1.msra.mxu0 0.0
    %397 = vmatprep.mubr.f32.mxu0 0.0
    %v398 = vand.u32 %v138, 4294901760
    %399 = vmatmul.mubr.f32.gmra.mrb[0].mxu0 %v398
    %v400 = vpop.f32.mrb[0].mxu0
    %v401 = vadd.f32 %v250, %v400
    %v402 = vpop.f32.mrb[0].mxu0
    %403 = vdwg.mxu0
    %404 = vmatprep.subr.mxu0 0.0
    %v405 = vand.u32 %v139, 4294901760
    %v406 = vsub.f32 %v139, %v405
    %407 = vmatpush1.msra.mxu0 %v406
    %408 = vmatprep.subr.mxu0 0.0
    %v409 = vand.u32 %v140, 4294901760
    %v410 = vsub.f32 %v140, %v409
    %411 = vmatpush1.msra.mxu0 %v410
    %412 = vmatprep.subr.mxu0 0.0
    %v413 = vand.u32 %v141, 4294901760
    %v414 = vsub.f32 %v141, %v413
    %415 = vmatpush1.msra.mxu0 %v414
    %416 = vmatprep.subr.mxu0 0.0
    %v417 = vand.u32 %v142, 4294901760
    %v418 = vsub.f32 %v142, %v417
    %419 = vmatpush1.msra.mxu0 %v418
    %420 = vmatprep.subr.mxu0 0.0
    %v421 = vand.u32 %v143, 4294901760
    %v422 = vsub.f32 %v143, %v421
    %423 = vmatpush1.msra.mxu0 %v422
    %424 = vmatprep.subr.mxu0 0.0
    %v425 = vand.u32 %v144, 4294901760
    %v426 = vsub.f32 %v144, %v425
    %427 = vmatpush1.msra.mxu0 %v426
    %428 = vmatprep.subr.mxu0 0.0
    %v429 = vand.u32 %v145, 4294901760
    %v430 = vsub.f32 %v145, %v429
    %431 = vmatpush1.msra.mxu0 %v430
    %432 = vmatprep.subr.mxu0 0.0
    %v433 = vand.u32 %v146, 4294901760
    %v434 = vsub.f32 %v146, %v433
    %435 = vmatpush1.msra.mxu0 %v434
    %436 = vmatprep.subr.mxu0 0.0
    %v437 = vand.u32 %v147, 4294901760
    %v438 = vsub.f32 %v147, %v437
    %439 = vmatpush1.msra.mxu0 %v438
    %440 = vmatprep.subr.mxu0 0.0
    %v441 = vand.u32 %v148, 4294901760
    %v442 = vsub.f32 %v148, %v441
    %443 = vmatpush1.msra.mxu0 %v442
    %444 = vmatprep.subr.mxu0 0.0
    %v445 = vand.u32 %v149, 4294901760
    %v446 = vsub.f32 %v149, %v445
    %447 = vmatpush1.msra.mxu0 %v446
    %448 = vmatprep.subr.mxu0 0.0
    %v449 = vand.u32 %v150, 4294901760
    %v450 = vsub.f32 %v150, %v449
    %451 = vmatpush1.msra.mxu0 %v450
    %452 = vmatprep.subr.mxu0 0.0
    %v453 = vand.u32 %v151, 4294901760
    %v454 = vsub.f32 %v151, %v453
    %455 = vmatpush1.msra.mxu0 %v454
    %456 = vmatprep.subr.mxu0 0.0
    %v457 = vand.u32 %v152, 4294901760
    %v458 = vsub.f32 %v152, %v457
    %459 = vmatpush1.msra.mxu0 %v458
    %460 = vmatprep.subr.mxu0 0.0
    %v461 = vand.u32 %v153, 4294901760
    %v462 = vsub.f32 %v153, %v461
    %463 = vmatpush1.msra.mxu0 %v462
    %464 = vmatprep.subr.mxu0 0.0
    %v465 = vand.u32 %v154, 4294901760
    %v466 = vsub.f32 %v154, %v465
    %467 = vmatpush1.msra.mxu0 %v466
    %468 = vmatprep.subr.mxu0 0.0
    %469 = vmatpush1.msra.mxu0 0.0
    %470 = vmatprep.subr.mxu0 0.0
    %471 = vmatpush1.msra.mxu0 0.0
    %472 = vmatprep.subr.mxu0 0.0
    %473 = vmatpush1.msra.mxu0 0.0
    %474 = vmatprep.subr.mxu0 0.0
    %475 = vmatpush1.msra.mxu0 0.0
    %476 = vmatprep.subr.mxu0 0.0
    %477 = vmatpush1.msra.mxu0 0.0
    %478 = vmatprep.subr.mxu0 0.0
    %479 = vmatpush1.msra.mxu0 0.0
    %480 = vmatprep.subr.mxu0 0.0
    %481 = vmatpush1.msra.mxu0 0.0
    %482 = vmatprep.subr.mxu0 0.0
    %483 = vmatpush1.msra.mxu0 0.0
    %484 = vmatprep.subr.mxu0 0.0
    %485 = vmatpush1.msra.mxu0 0.0
    %486 = vmatprep.subr.mxu0 0.0
    %487 = vmatpush1.msra.mxu0 0.0
    %488 = vmatprep.subr.mxu0 0.0
    %489 = vmatpush1.msra.mxu0 0.0
    %490 = vmatprep.subr.mxu0 0.0
    %491 = vmatpush1.msra.mxu0 0.0
    %492 = vmatprep.subr.mxu0 0.0
    %493 = vmatpush1.msra.mxu0 0.0
    %494 = vmatprep.subr.mxu0 0.0
    %495 = vmatpush1.msra.mxu0 0.0
    %496 = vmatprep.subr.mxu0 0.0
    %497 = vmatpush1.msra.mxu0 0.0
    %498 = vmatprep.subr.mxu0 0.0
    %499 = vmatpush1.msra.mxu0 0.0
    %500 = vmatprep.mubr.f32.mxu0 0.0
    %v501 = vand.u32 %v138, 4294901760
    %v502 = vsub.f32 %v138, %v501
    %503 = vmatmul.mubr.f32.gmra.mrb[0].mxu0 %v502
    %v504 = vpop.f32.mrb[0].mxu0
    %v505 = vadd.f32 %v401, %v504
    %v506 = vpop.f32.mrb[0].mxu0
    %507 = vdwg.mxu0
    %508 = vmatprep.subr.mxu0 0.0
    %v509 = vand.u32 %v139, 4294901760
    %510 = vmatpush1.msra.mxu0 %v509
    %511 = vmatprep.subr.mxu0 0.0
    %v512 = vand.u32 %v140, 4294901760
    %513 = vmatpush1.msra.mxu0 %v512
    %514 = vmatprep.subr.mxu0 0.0
    %v515 = vand.u32 %v141, 4294901760
    %516 = vmatpush1.msra.mxu0 %v515
    %517 = vmatprep.subr.mxu0 0.0
    %v518 = vand.u32 %v142, 4294901760
    %519 = vmatpush1.msra.mxu0 %v518
    %520 = vmatprep.subr.mxu0 0.0
    %v521 = vand.u32 %v143, 4294901760
    %522 = vmatpush1.msra.mxu0 %v521
    %523 = vmatprep.subr.mxu0 0.0
    %v524 = vand.u32 %v144, 4294901760
    %525 = vmatpush1.msra.mxu0 %v524
    %526 = vmatprep.subr.mxu0 0.0
    %v527 = vand.u32 %v145, 4294901760
    %528 = vmatpush1.msra.mxu0 %v527
    %529 = vmatprep.subr.mxu0 0.0
    %v530 = vand.u32 %v146, 4294901760
    %531 = vmatpush1.msra.mxu0 %v530
    %532 = vmatprep.subr.mxu0 0.0
    %v533 = vand.u32 %v147, 4294901760
    %534 = vmatpush1.msra.mxu0 %v533
    %535 = vmatprep.subr.mxu0 0.0
    %v536 = vand.u32 %v148, 4294901760
    %537 = vmatpush1.msra.mxu0 %v536
    %538 = vmatprep.subr.mxu0 0.0
    %v539 = vand.u32 %v149, 4294901760
    %540 = vmatpush1.msra.mxu0 %v539
    %541 = vmatprep.subr.mxu0 0.0
    %v542 = vand.u32 %v150, 4294901760
    %543 = vmatpush1.msra.mxu0 %v542
    %544 = vmatprep.subr.mxu0 0.0
    %v545 = vand.u32 %v151, 4294901760
    %546 = vmatpush1.msra.mxu0 %v545
    %547 = vmatprep.subr.mxu0 0.0
    %v548 = vand.u32 %v152, 4294901760
    %549 = vmatpush1.msra.mxu0 %v548
    %550 = vmatprep.subr.mxu0 0.0
    %v551 = vand.u32 %v153, 4294901760
    %552 = vmatpush1.msra.mxu0 %v551
    %553 = vmatprep.subr.mxu0 0.0
    %v554 = vand.u32 %v154, 4294901760
    %555 = vmatpush1.msra.mxu0 %v554
    %556 = vmatprep.subr.mxu0 0.0
    %557 = vmatpush1.msra.mxu0 0.0
    %558 = vmatprep.subr.mxu0 0.0
    %559 = vmatpush1.msra.mxu0 0.0
    %560 = vmatprep.subr.mxu0 0.0
    %561 = vmatpush1.msra.mxu0 0.0
    %562 = vmatprep.subr.mxu0 0.0
    %563 = vmatpush1.msra.mxu0 0.0
    %564 = vmatprep.subr.mxu0 0.0
    %565 = vmatpush1.msra.mxu0 0.0
    %566 = vmatprep.subr.mxu0 0.0
    %567 = vmatpush1.msra.mxu0 0.0
    %568 = vmatprep.subr.mxu0 0.0
    %569 = vmatpush1.msra.mxu0 0.0
    %570 = vmatprep.subr.mxu0 0.0
    %571 = vmatpush1.msra.mxu0 0.0
    %572 = vmatprep.subr.mxu0 0.0
    %573 = vmatpush1.msra.mxu0 0.0
    %574 = vmatprep.subr.mxu0 0.0
    %575 = vmatpush1.msra.mxu0 0.0
    %576 = vmatprep.subr.mxu0 0.0
    %577 = vmatpush1.msra.mxu0 0.0
    %578 = vmatprep.subr.mxu0 0.0
    %579 = vmatpush1.msra.mxu0 0.0
    %580 = vmatprep.subr.mxu0 0.0
    %581 = vmatpush1.msra.mxu0 0.0
    %582 = vmatprep.subr.mxu0 0.0
    %583 = vmatpush1.msra.mxu0 0.0
    %584 = vmatprep.subr.mxu0 0.0
    %585 = vmatpush1.msra.mxu0 0.0
    %586 = vmatprep.subr.mxu0 0.0
    %587 = vmatpush1.msra.mxu0 0.0
    %588 = vmatprep.mubr.f32.mxu0 0.0
    %v589 = vand.u32 %v138, 4294901760
    %v590 = vsub.f32 %v138, %v589
    %v591 = vand.u32 %v590, 4294901760
    %592 = vmatmul.mubr.f32.gmra.mrb[0].mxu0 %v591
    %v593 = vpop.f32.mrb[0].mxu0
    %v594 = vadd.f32 %v505, %v593
    %v595 = vpop.f32.mrb[0].mxu0
    %596 = vdwg.mxu0
    %597 = vmatprep.subr.mxu0 0.0
    %v598 = vand.u32 %v139, 4294901760
    %v599 = vsub.f32 %v139, %v598
    %v600 = vand.u32 %v599, 4294901760
    %601 = vmatpush1.msra.mxu0 %v600
    %602 = vmatprep.subr.mxu0 0.0
    %v603 = vand.u32 %v140, 4294901760
    %v604 = vsub.f32 %v140, %v603
    %v605 = vand.u32 %v604, 4294901760
    %606 = vmatpush1.msra.mxu0 %v605
    %607 = vmatprep.subr.mxu0 0.0
    %v608 = vand.u32 %v141, 4294901760
    %v609 = vsub.f32 %v141, %v608
    %v610 = vand.u32 %v609, 4294901760
    %611 = vmatpush1.msra.mxu0 %v610
    %612 = vmatprep.subr.mxu0 0.0
    %v613 = vand.u32 %v142, 4294901760
    %v614 = vsub.f32 %v142, %v613
    %v615 = vand.u32 %v614, 4294901760
    %616 = vmatpush1.msra.mxu0 %v615
    %617 = vmatprep.subr.mxu0 0.0
    %v618 = vand.u32 %v143, 4294901760
    %v619 = vsub.f32 %v143, %v618
    %v620 = vand.u32 %v619, 4294901760
    %621 = vmatpush1.msra.mxu0 %v620
    %622 = vmatprep.subr.mxu0 0.0
    %v623 = vand.u32 %v144, 4294901760
    %v624 = vsub.f32 %v144, %v623
    %v625 = vand.u32 %v624, 4294901760
    %626 = vmatpush1.msra.mxu0 %v625
    %627 = vmatprep.subr.mxu0 0.0
    %v628 = vand.u32 %v145, 4294901760
    %v629 = vsub.f32 %v145, %v628
    %v630 = vand.u32 %v629, 4294901760
    %631 = vmatpush1.msra.mxu0 %v630
    %632 = vmatprep.subr.mxu0 0.0
    %v633 = vand.u32 %v146, 4294901760
    %v634 = vsub.f32 %v146, %v633
    %v635 = vand.u32 %v634, 4294901760
    %636 = vmatpush1.msra.mxu0 %v635
    %637 = vmatprep.subr.mxu0 0.0
    %v638 = vand.u32 %v147, 4294901760
    %v639 = vsub.f32 %v147, %v638
    %v640 = vand.u32 %v639, 4294901760
    %641 = vmatpush1.msra.mxu0 %v640
    %642 = vmatprep.subr.mxu0 0.0
    %v643 = vand.u32 %v148, 4294901760
    %v644 = vsub.f32 %v148, %v643
    %v645 = vand.u32 %v644, 4294901760
    %646 = vmatpush1.msra.mxu0 %v645
    %647 = vmatprep.subr.mxu0 0.0
    %v648 = vand.u32 %v149, 4294901760
    %v649 = vsub.f32 %v149, %v648
    %v650 = vand.u32 %v649, 4294901760
    %651 = vmatpush1.msra.mxu0 %v650
    %652 = vmatprep.subr.mxu0 0.0
    %v653 = vand.u32 %v150, 4294901760
    %v654 = vsub.f32 %v150, %v653
    %v655 = vand.u32 %v654, 4294901760
    %656 = vmatpush1.msra.mxu0 %v655
    %657 = vmatprep.subr.mxu0 0.0
    %v658 = vand.u32 %v151, 4294901760
    %v659 = vsub.f32 %v151, %v658
    %v660 = vand.u32 %v659, 4294901760
    %661 = vmatpush1.msra.mxu0 %v660
    %662 = vmatprep.subr.mxu0 0.0
    %v663 = vand.u32 %v152, 4294901760
    %v664 = vsub.f32 %v152, %v663
    %v665 = vand.u32 %v664, 4294901760
    %666 = vmatpush1.msra.mxu0 %v665
    %667 = vmatprep.subr.mxu0 0.0
    %v668 = vand.u32 %v153, 4294901760
    %v669 = vsub.f32 %v153, %v668
    %v670 = vand.u32 %v669, 4294901760
    %671 = vmatpush1.msra.mxu0 %v670
    %672 = vmatprep.subr.mxu0 0.0
    %v673 = vand.u32 %v154, 4294901760
    %v674 = vsub.f32 %v154, %v673
    %v675 = vand.u32 %v674, 4294901760
    %676 = vmatpush1.msra.mxu0 %v675
    %677 = vmatprep.subr.mxu0 0.0
    %678 = vmatpush1.msra.mxu0 0.0
    %679 = vmatprep.subr.mxu0 0.0
    %680 = vmatpush1.msra.mxu0 0.0
    %681 = vmatprep.subr.mxu0 0.0
    %682 = vmatpush1.msra.mxu0 0.0
    %683 = vmatprep.subr.mxu0 0.0
    %684 = vmatpush1.msra.mxu0 0.0
    %685 = vmatprep.subr.mxu0 0.0
    %686 = vmatpush1.msra.mxu0 0.0
    %687 = vmatprep.subr.mxu0 0.0
    %688 = vmatpush1.msra.mxu0 0.0
    %689 = vmatprep.subr.mxu0 0.0
    %690 = vmatpush1.msra.mxu0 0.0
    %691 = vmatprep.subr.mxu0 0.0
    %692 = vmatpush1.msra.mxu0 0.0
    %693 = vmatprep.subr.mxu0 0.0
    %694 = vmatpush1.msra.mxu0 0.0
    %695 = vmatprep.subr.mxu0 0.0
    %696 = vmatpush1.msra.mxu0 0.0
    %697 = vmatprep.subr.mxu0 0.0
    %698 = vmatpush1.msra.mxu0 0.0
    %699 = vmatprep.subr.mxu0 0.0
    %700 = vmatpush1.msra.mxu0 0.0
    %701 = vmatprep.subr.mxu0 0.0
    %702 = vmatpush1.msra.mxu0 0.0
    %703 = vmatprep.subr.mxu0 0.0
    %704 = vmatpush1.msra.mxu0 0.0
    %705 = vmatprep.subr.mxu0 0.0
    %706 = vmatpush1.msra.mxu0 0.0
    %707 = vmatprep.subr.mxu0 0.0
    %708 = vmatpush1.msra.mxu0 0.0
    %709 = vmatprep.mubr.f32.mxu0 0.0
    %v710 = vand.u32 %v138, 4294901760
    %711 = vmatmul.mubr.f32.gmra.mrb[0].mxu0 %v710
    %v712 = vpop.f32.mrb[0].mxu0
    %v713 = vadd.f32 %v594, %v712
    %v714 = vpop.f32.mrb[0].mxu0
    %715 = vdwg.mxu0
    %716 = vmatprep.subr.mxu0 0.0
    %v717 = vand.u32 %v139, 4294901760
    %718 = vmatpush1.msra.mxu0 %v717
    %719 = vmatprep.subr.mxu0 0.0
    %v720 = vand.u32 %v140, 4294901760
    %721 = vmatpush1.msra.mxu0 %v720
    %722 = vmatprep.subr.mxu0 0.0
    %v723 = vand.u32 %v141, 4294901760
    %724 = vmatpush1.msra.mxu0 %v723
    %725 = vmatprep.subr.mxu0 0.0
    %v726 = vand.u32 %v142, 4294901760
    %727 = vmatpush1.msra.mxu0 %v726
    %728 = vmatprep.subr.mxu0 0.0
    %v729 = vand.u32 %v143, 4294901760
    %730 = vmatpush1.msra.mxu0 %v729
    %731 = vmatprep.subr.mxu0 0.0
    %v732 = vand.u32 %v144, 4294901760
    %733 = vmatpush1.msra.mxu0 %v732
    %734 = vmatprep.subr.mxu0 0.0
    %v735 = vand.u32 %v145, 4294901760
    %736 = vmatpush1.msra.mxu0 %v735
    %737 = vmatprep.subr.mxu0 0.0
    %v738 = vand.u32 %v146, 4294901760
    %739 = vmatpush1.msra.mxu0 %v738
    %740 = vmatprep.subr.mxu0 0.0
    %v741 = vand.u32 %v147, 4294901760
    %742 = vmatpush1.msra.mxu0 %v741
    %743 = vmatprep.subr.mxu0 0.0
    %v744 = vand.u32 %v148, 4294901760
    %745 = vmatpush1.msra.mxu0 %v744
    %746 = vmatprep.subr.mxu0 0.0
    %v747 = vand.u32 %v149, 4294901760
    %748 = vmatpush1.msra.mxu0 %v747
    %749 = vmatprep.subr.mxu0 0.0
    %v750 = vand.u32 %v150, 4294901760
    %751 = vmatpush1.msra.mxu0 %v750
    %752 = vmatprep.subr.mxu0 0.0
    %v753 = vand.u32 %v151, 4294901760
    %754 = vmatpush1.msra.mxu0 %v753
    %755 = vmatprep.subr.mxu0 0.0
    %v756 = vand.u32 %v152, 4294901760
    %757 = vmatpush1.msra.mxu0 %v756
    %758 = vmatprep.subr.mxu0 0.0
    %v759 = vand.u32 %v153, 4294901760
    %760 = vmatpush1.msra.mxu0 %v759
    %761 = vmatprep.subr.mxu0 0.0
    %v762 = vand.u32 %v154, 4294901760
    %763 = vmatpush1.msra.mxu0 %v762
    %764 = vmatprep.subr.mxu0 0.0
    %765 = vmatpush1.msra.mxu0 0.0
    %766 = vmatprep.subr.mxu0 0.0
    %767 = vmatpush1.msra.mxu0 0.0
    %768 = vmatprep.subr.mxu0 0.0
    %769 = vmatpush1.msra.mxu0 0.0
    %770 = vmatprep.subr.mxu0 0.0
    %771 = vmatpush1.msra.mxu0 0.0
    %772 = vmatprep.subr.mxu0 0.0
    %773 = vmatpush1.msra.mxu0 0.0
    %774 = vmatprep.subr.mxu0 0.0
    %775 = vmatpush1.msra.mxu0 0.0
    %776 = vmatprep.subr.mxu0 0.0
    %777 = vmatpush1.msra.mxu0 0.0
    %778 = vmatprep.subr.mxu0 0.0
    %779 = vmatpush1.msra.mxu0 0.0
    %780 = vmatprep.subr.mxu0 0.0
    %781 = vmatpush1.msra.mxu0 0.0
    %782 = vmatprep.subr.mxu0 0.0
    %783 = vmatpush1.msra.mxu0 0.0
    %784 = vmatprep.subr.mxu0 0.0
    %785 = vmatpush1.msra.mxu0 0.0
    %786 = vmatprep.subr.mxu0 0.0
    %787 = vmatpush1.msra.mxu0 0.0
    %788 = vmatprep.subr.mxu0 0.0
    %789 = vmatpush1.msra.mxu0 0.0
    %790 = vmatprep.subr.mxu0 0.0
    %791 = vmatpush1.msra.mxu0 0.0
    %792 = vmatprep.subr.mxu0 0.0
    %793 = vmatpush1.msra.mxu0 0.0
    %794 = vmatprep.subr.mxu0 0.0
    %795 = vmatpush1.msra.mxu0 0.0
    %796 = vmatprep.mubr.f32.mxu0 0.0
    %v797 = vand.u32 %v138, 4294901760
    %798 = vmatmul.mubr.f32.gmra.mrb[0].mxu0 %v797
    %v799 = vpop.f32.mrb[0].mxu0
    %v800 = vadd.f32 %v713, %v799
    %v801 = vpop.f32.mrb[0].mxu0
    %802 = vdwg.mxu0
    %v803 = vmax.f32 %v800, 0.0
    %v804 = vld [vmem:[#allocation7] sm:$0xff]
    %v805 = vld [vmem:[#allocation7 + $0x8] sm:$0xff]
    %v806 = vld [vmem:[#allocation7 + $0x10] sm:$0xff]
    %v807 = vld [vmem:[#allocation7 + $0x18] sm:$0xff]
    %v808 = vld [vmem:[#allocation7 + $0x20] sm:$0xff]
    %v809 = vld [vmem:[#allocation7 + $0x28] sm:$0xff]
    %v810 = vld [vmem:[#allocation7 + $0x30] sm:$0xff]
    %v811 = vld [vmem:[#allocation7 + $0x38] sm:$0xff]
    %v812 = vld [vmem:[#allocation7 + $0x40] sm:$0xff]
    %v813 = vld [vmem:[#allocation7 + $0x48] sm:$0xff]
    %v814 = vld [vmem:[#allocation7 + $0x50] sm:$0xff]
    %v815 = vld [vmem:[#allocation7 + $0x58] sm:$0xff]
    %v816 = vld [vmem:[#allocation7 + $0x60] sm:$0xff]
    %v817 = vld [vmem:[#allocation7 + $0x68] sm:$0xff]
    %v818 = vld [vmem:[#allocation7 + $0x70] sm:$0xff]
    %v819 = vld [vmem:[#allocation7 + $0x78] sm:$0xff]
    %v820 = vld [vmem:[%s4] sm:$0x1]
    %v822 = vlaneseq
    %v823 = vshrl.u32 %v822, 7
    %v824 = vsub.s32 0, %v823
    %v825 = vrot.slane %v820, %v824
    %827 = vmatprep.subr.mxu0 0.0
    %v828 = vand.u32 %v804, 4294901760
    %829 = vmatpush1.msra.mxu0 %v828
    %830 = vmatprep.subr.mxu0 0.0
    %v831 = vand.u32 %v805, 4294901760
    %832 = vmatpush1.msra.mxu0 %v831
    %833 = vmatprep.subr.mxu0 0.0
    %v834 = vand.u32 %v806, 4294901760
    %835 = vmatpush1.msra.mxu0 %v834
    %836 = vmatprep.subr.mxu0 0.0
    %v837 = vand.u32 %v807, 4294901760
    %838 = vmatpush1.msra.mxu0 %v837
    %839 = vmatprep.subr.mxu0 0.0
    %v840 = vand.u32 %v808, 4294901760
    %841 = vmatpush1.msra.mxu0 %v840
    %842 = vmatprep.subr.mxu0 0.0
    %v843 = vand.u32 %v809, 4294901760
    %844 = vmatpush1.msra.mxu0 %v843
    %845 = vmatprep.subr.mxu0 0.0
    %v846 = vand.u32 %v810, 4294901760
    %847 = vmatpush1.msra.mxu0 %v846
    %848 = vmatprep.subr.mxu0 0.0
    %v849 = vand.u32 %v811, 4294901760
    %850 = vmatpush1.msra.mxu0 %v849
    %851 = vmatprep.subr.mxu0 0.0
    %v852 = vand.u32 %v812, 4294901760
    %853 = vmatpush1.msra.mxu0 %v852
    %854 = vmatprep.subr.mxu0 0.0
    %v855 = vand.u32 %v813, 4294901760
    %856 = vmatpush1.msra.mxu0 %v855
    %857 = vmatprep.subr.mxu0 0.0
    %v858 = vand.u32 %v814, 4294901760
    %859 = vmatpush1.msra.mxu0 %v858
    %860 = vmatprep.subr.mxu0 0.0
    %v861 = vand.u32 %v815, 4294901760
    %862 = vmatpush1.msra.mxu0 %v861
    %863 = vmatprep.subr.mxu0 0.0
    %v864 = vand.u32 %v816, 4294901760
    %865 = vmatpush1.msra.mxu0 %v864
    %866 = vmatprep.subr.mxu0 0.0
    %v867 = vand.u32 %v817, 4294901760
    %868 = vmatpush1.msra.mxu0 %v867
    %869 = vmatprep.subr.mxu0 0.0
    %v870 = vand.u32 %v818, 4294901760
    %871 = vmatpush1.msra.mxu0 %v870
    %872 = vmatprep.subr.mxu0 0.0
    %v873 = vand.u32 %v819, 4294901760
    %874 = vmatpush1.msra.mxu0 %v873
    %875 = vmatprep.subr.mxu0 0.0
    %876 = vmatpush1.msra.mxu0 0.0
    %877 = vmatprep.subr.mxu0 0.0
    %878 = vmatpush1.msra.mxu0 0.0
    %879 = vmatprep.subr.mxu0 0.0
    %880 = vmatpush1.msra.mxu0 0.0
    %881 = vmatprep.subr.mxu0 0.0
    %882 = vmatpush1.msra.mxu0 0.0
    %883 = vmatprep.subr.mxu0 0.0
    %884 = vmatpush1.msra.mxu0 0.0
    %885 = vmatprep.subr.mxu0 0.0
    %886 = vmatpush1.msra.mxu0 0.0
    %887 = vmatprep.subr.mxu0 0.0
    %888 = vmatpush1.msra.mxu0 0.0
    %889 = vmatprep.subr.mxu0 0.0
    %890 = vmatpush1.msra.mxu0 0.0
    %891 = vmatprep.subr.mxu0 0.0
    %892 = vmatpush1.msra.mxu0 0.0
    %893 = vmatprep.subr.mxu0 0.0
    %894 = vmatpush1.msra.mxu0 0.0
    %895 = vmatprep.subr.mxu0 0.0
    %896 = vmatpush1.msra.mxu0 0.0
    %897 = vmatprep.subr.mxu0 0.0
    %898 = vmatpush1.msra.mxu0 0.0
    %899 = vmatprep.subr.mxu0 0.0
    %900 = vmatpush1.msra.mxu0 0.0
    %901 = vmatprep.subr.mxu0 0.0
    %902 = vmatpush1.msra.mxu0 0.0
    %903 = vmatprep.subr.mxu0 0.0
    %904 = vmatpush1.msra.mxu0 0.0
    %905 = vmatprep.subr.mxu0 0.0
    %906 = vmatpush1.msra.mxu0 0.0
    %907 = vmatprep.mubr.f32.mxu0 0.0
    %v908 = vand.u32 %v803, 4294901760
    %v909 = vsub.f32 %v803, %v908
    %v910 = vand.u32 %v909, 4294901760
    %v911 = vsub.f32 %v909, %v910
    %v912 = vand.u32 %v911, 4294901760
    %913 = vmatmul.mubr.f32.gmra.mrb[0].mxu0 %v912
    %v914 = vpop.f32.mrb[0].mxu0
    %v915 = vadd.f32 %v825, %v914
    %v916 = vpop.f32.mrb[0].mxu0
    %917 = vdwg.mxu0
    %918 = vmatprep.subr.mxu0 0.0
    %v919 = vand.u32 %v804, 4294901760
    %v920 = vsub.f32 %v804, %v919
    %v921 = vand.u32 %v920, 4294901760
    %v922 = vsub.f32 %v920, %v921
    %v923 = vand.u32 %v922, 4294901760
    %924 = vmatpush1.msra.mxu0 %v923
    %925 = vmatprep.subr.mxu0 0.0
    %v926 = vand.u32 %v805, 4294901760
    %v927 = vsub.f32 %v805, %v926
    %v928 = vand.u32 %v927, 4294901760
    %v929 = vsub.f32 %v927, %v928
    %v930 = vand.u32 %v929, 4294901760
    %931 = vmatpush1.msra.mxu0 %v930
    %932 = vmatprep.subr.mxu0 0.0
    %v933 = vand.u32 %v806, 4294901760
    %v934 = vsub.f32 %v806, %v933
    %v935 = vand.u32 %v934, 4294901760
    %v936 = vsub.f32 %v934, %v935
    %v937 = vand.u32 %v936, 4294901760
    %938 = vmatpush1.msra.mxu0 %v937
    %939 = vmatprep.subr.mxu0 0.0
    %v940 = vand.u32 %v807, 4294901760
    %v941 = vsub.f32 %v807, %v940
    %v942 = vand.u32 %v941, 4294901760
    %v943 = vsub.f32 %v941, %v942
    %v944 = vand.u32 %v943, 4294901760
    %945 = vmatpush1.msra.mxu0 %v944
    %946 = vmatprep.subr.mxu0 0.0
    %v947 = vand.u32 %v808, 4294901760
    %v948 = vsub.f32 %v808, %v947
    %v949 = vand.u32 %v948, 4294901760
    %v950 = vsub.f32 %v948, %v949
    %v951 = vand.u32 %v950, 4294901760
    %952 = vmatpush1.msra.mxu0 %v951
    %953 = vmatprep.subr.mxu0 0.0
    %v954 = vand.u32 %v809, 4294901760
    %v955 = vsub.f32 %v809, %v954
    %v956 = vand.u32 %v955, 4294901760
    %v957 = vsub.f32 %v955, %v956
    %v958 = vand.u32 %v957, 4294901760
    %959 = vmatpush1.msra.mxu0 %v958
    %960 = vmatprep.subr.mxu0 0.0
    %v961 = vand.u32 %v810, 4294901760
    %v962 = vsub.f32 %v810, %v961
    %v963 = vand.u32 %v962, 4294901760
    %v964 = vsub.f32 %v962, %v963
    %v965 = vand.u32 %v964, 4294901760
    %966 = vmatpush1.msra.mxu0 %v965
    %967 = vmatprep.subr.mxu0 0.0
    %v968 = vand.u32 %v811, 4294901760
    %v969 = vsub.f32 %v811, %v968
    %v970 = vand.u32 %v969, 4294901760
    %v971 = vsub.f32 %v969, %v970
    %v972 = vand.u32 %v971, 4294901760
    %973 = vmatpush1.msra.mxu0 %v972
    %974 = vmatprep.subr.mxu0 0.0
    %v975 = vand.u32 %v812, 4294901760
    %v976 = vsub.f32 %v812, %v975
    %v977 = vand.u32 %v976, 4294901760
    %v978 = vsub.f32 %v976, %v977
    %v979 = vand.u32 %v978, 4294901760
    %980 = vmatpush1.msra.mxu0 %v979
    %981 = vmatprep.subr.mxu0 0.0
    %v982 = vand.u32 %v813, 4294901760
    %v983 = vsub.f32 %v813, %v982
    %v984 = vand.u32 %v983, 4294901760
    %v985 = vsub.f32 %v983, %v984
    %v986 = vand.u32 %v985, 4294901760
    %987 = vmatpush1.msra.mxu0 %v986
    %988 = vmatprep.subr.mxu0 0.0
    %v989 = vand.u32 %v814, 4294901760
    %v990 = vsub.f32 %v814, %v989
    %v991 = vand.u32 %v990, 4294901760
    %v992 = vsub.f32 %v990, %v991
    %v993 = vand.u32 %v992, 4294901760
    %994 = vmatpush1.msra.mxu0 %v993
    %995 = vmatprep.subr.mxu0 0.0
    %v996 = vand.u32 %v815, 4294901760
    %v997 = vsub.f32 %v815, %v996
    %v998 = vand.u32 %v997, 4294901760
    %v999 = vsub.f32 %v997, %v998
    %v1000 = vand.u32 %v999, 4294901760
    %1001 = vmatpush1.msra.mxu0 %v1000
    %1002 = vmatprep.subr.mxu0 0.0
    %v1003 = vand.u32 %v816, 4294901760
    %v1004 = vsub.f32 %v816, %v1003
    %v1005 = vand.u32 %v1004, 4294901760
    %v1006 = vsub.f32 %v1004, %v1005
    %v1007 = vand.u32 %v1006, 4294901760
    %1008 = vmatpush1.msra.mxu0 %v1007
    %1009 = vmatprep.subr.mxu0 0.0
    %v1010 = vand.u32 %v817, 4294901760
    %v1011 = vsub.f32 %v817, %v1010
    %v1012 = vand.u32 %v1011, 4294901760
    %v1013 = vsub.f32 %v1011, %v1012
    %v1014 = vand.u32 %v1013, 4294901760
    %1015 = vmatpush1.msra.mxu0 %v1014
    %1016 = vmatprep.subr.mxu0 0.0
    %v1017 = vand.u32 %v818, 4294901760
    %v1018 = vsub.f32 %v818, %v1017
    %v1019 = vand.u32 %v1018, 4294901760
    %v1020 = vsub.f32 %v1018, %v1019
    %v1021 = vand.u32 %v1020, 4294901760
    %1022 = vmatpush1.msra.mxu0 %v1021
    %1023 = vmatprep.subr.mxu0 0.0
    %v1024 = vand.u32 %v819, 4294901760
    %v1025 = vsub.f32 %v819, %v1024
    %v1026 = vand.u32 %v1025, 4294901760
    %v1027 = vsub.f32 %v1025, %v1026
    %v1028 = vand.u32 %v1027, 4294901760
    %1029 = vmatpush1.msra.mxu0 %v1028
    %1030 = vmatprep.subr.mxu0 0.0
    %1031 = vmatpush1.msra.mxu0 0.0
    %1032 = vmatprep.subr.mxu0 0.0
    %1033 = vmatpush1.msra.mxu0 0.0
    %1034 = vmatprep.subr.mxu0 0.0
    %1035 = vmatpush1.msra.mxu0 0.0
    %1036 = vmatprep.subr.mxu0 0.0
    %1037 = vmatpush1.msra.mxu0 0.0
    %1038 = vmatprep.subr.mxu0 0.0
    %1039 = vmatpush1.msra.mxu0 0.0
    %1040 = vmatprep.subr.mxu0 0.0
    %1041 = vmatpush1.msra.mxu0 0.0
    %1042 = vmatprep.subr.mxu0 0.0
    %1043 = vmatpush1.msra.mxu0 0.0
    %1044 = vmatprep.subr.mxu0 0.0
    %1045 = vmatpush1.msra.mxu0 0.0
    %1046 = vmatprep.subr.mxu0 0.0
    %1047 = vmatpush1.msra.mxu0 0.0
    %1048 = vmatprep.subr.mxu0 0.0
    %1049 = vmatpush1.msra.mxu0 0.0
    %1050 = vmatprep.subr.mxu0 0.0
    %1051 = vmatpush1.msra.mxu0 0.0
    %1052 = vmatprep.subr.mxu0 0.0
    %1053 = vmatpush1.msra.mxu0 0.0
    %1054 = vmatprep.subr.mxu0 0.0
    %1055 = vmatpush1.msra.mxu0 0.0
    %1056 = vmatprep.subr.mxu0 0.0
    %1057 = vmatpush1.msra.mxu0 0.0
    %1058 = vmatprep.subr.mxu0 0.0
    %1059 = vmatpush1.msra.mxu0 0.0
    %1060 = vmatprep.subr.mxu0 0.0
    %1061 = vmatpush1.msra.mxu0 0.0
    %1062 = vmatprep.mubr.f32.mxu0 0.0
    %v1063 = vand.u32 %v803, 4294901760
    %1064 = vmatmul.mubr.f32.gmra.mrb[0].mxu0 %v1063
    %v1065 = vpop.f32.mrb[0].mxu0
    %v1066 = vadd.f32 %v915, %v1065
    %v1067 = vpop.f32.mrb[0].mxu0
    %1068 = vdwg.mxu0
    %1069 = vmatprep.subr.mxu0 0.0
    %v1070 = vand.u32 %v804, 4294901760
    %v1071 = vsub.f32 %v804, %v1070
    %1072 = vmatpush1.msra.mxu0 %v1071
    %1073 = vmatprep.subr.mxu0 0.0
    %v1074 = vand.u32 %v805, 4294901760
    %v1075 = vsub.f32 %v805, %v1074
    %1076 = vmatpush1.msra.mxu0 %v1075
    %1077 = vmatprep.subr.mxu0 0.0
    %v1078 = vand.u32 %v806, 4294901760
    %v1079 = vsub.f32 %v806, %v1078
    %1080 = vmatpush1.msra.mxu0 %v1079
    %1081 = vmatprep.subr.mxu0 0.0
    %v1082 = vand.u32 %v807, 4294901760
    %v1083 = vsub.f32 %v807, %v1082
    %1084 = vmatpush1.msra.mxu0 %v1083
    %1085 = vmatprep.subr.mxu0 0.0
    %v1086 = vand.u32 %v808, 4294901760
    %v1087 = vsub.f32 %v808, %v1086
    %1088 = vmatpush1.msra.mxu0 %v1087
    %1089 = vmatprep.subr.mxu0 0.0
    %v1090 = vand.u32 %v809, 4294901760
    %v1091 = vsub.f32 %v809, %v1090
    %1092 = vmatpush1.msra.mxu0 %v1091
    %1093 = vmatprep.subr.mxu0 0.0
    %v1094 = vand.u32 %v810, 4294901760
    %v1095 = vsub.f32 %v810, %v1094
    %1096 = vmatpush1.msra.mxu0 %v1095
    %1097 = vmatprep.subr.mxu0 0.0
    %v1098 = vand.u32 %v811, 4294901760
    %v1099 = vsub.f32 %v811, %v1098
    %1100 = vmatpush1.msra.mxu0 %v1099
    %1101 = vmatprep.subr.mxu0 0.0
    %v1102 = vand.u32 %v812, 4294901760
    %v1103 = vsub.f32 %v812, %v1102
    %1104 = vmatpush1.msra.mxu0 %v1103
    %1105 = vmatprep.subr.mxu0 0.0
    %v1106 = vand.u32 %v813, 4294901760
    %v1107 = vsub.f32 %v813, %v1106
    %1108 = vmatpush1.msra.mxu0 %v1107
    %1109 = vmatprep.subr.mxu0 0.0
    %v1110 = vand.u32 %v814, 4294901760
    %v1111 = vsub.f32 %v814, %v1110
    %1112 = vmatpush1.msra.mxu0 %v1111
    %1113 = vmatprep.subr.mxu0 0.0
    %v1114 = vand.u32 %v815, 4294901760
    %v1115 = vsub.f32 %v815, %v1114
    %1116 = vmatpush1.msra.mxu0 %v1115
    %1117 = vmatprep.subr.mxu0 0.0
    %v1118 = vand.u32 %v816, 4294901760
    %v1119 = vsub.f32 %v816, %v1118
    %1120 = vmatpush1.msra.mxu0 %v1119
    %1121 = vmatprep.subr.mxu0 0.0
    %v1122 = vand.u32 %v817, 4294901760
    %v1123 = vsub.f32 %v817, %v1122
    %1124 = vmatpush1.msra.mxu0 %v1123
    %1125 = vmatprep.subr.mxu0 0.0
    %v1126 = vand.u32 %v818, 4294901760
    %v1127 = vsub.f32 %v818, %v1126
    %1128 = vmatpush1.msra.mxu0 %v1127
    %1129 = vmatprep.subr.mxu0 0.0
    %v1130 = vand.u32 %v819, 4294901760
    %v1131 = vsub.f32 %v819, %v1130
    %1132 = vmatpush1.msra.mxu0 %v1131
    %1133 = vmatprep.subr.mxu0 0.0
    %1134 = vmatpush1.msra.mxu0 0.0
    %1135 = vmatprep.subr.mxu0 0.0
    %1136 = vmatpush1.msra.mxu0 0.0
    %1137 = vmatprep.subr.mxu0 0.0
    %1138 = vmatpush1.msra.mxu0 0.0
    %1139 = vmatprep.subr.mxu0 0.0
    %1140 = vmatpush1.msra.mxu0 0.0
    %1141 = vmatprep.subr.mxu0 0.0
    %1142 = vmatpush1.msra.mxu0 0.0
    %1143 = vmatprep.subr.mxu0 0.0
    %1144 = vmatpush1.msra.mxu0 0.0
    %1145 = vmatprep.subr.mxu0 0.0
    %1146 = vmatpush1.msra.mxu0 0.0
    %1147 = vmatprep.subr.mxu0 0.0
    %1148 = vmatpush1.msra.mxu0 0.0
    %1149 = vmatprep.subr.mxu0 0.0
    %1150 = vmatpush1.msra.mxu0 0.0
    %1151 = vmatprep.subr.mxu0 0.0
    %1152 = vmatpush1.msra.mxu0 0.0
    %1153 = vmatprep.subr.mxu0 0.0
    %1154 = vmatpush1.msra.mxu0 0.0
    %1155 = vmatprep.subr.mxu0 0.0
    %1156 = vmatpush1.msra.mxu0 0.0
    %1157 = vmatprep.subr.mxu0 0.0
    %1158 = vmatpush1.msra.mxu0 0.0
    %1159 = vmatprep.subr.mxu0 0.0
    %1160 = vmatpush1.msra.mxu0 0.0
    %1161 = vmatprep.subr.mxu0 0.0
    %1162 = vmatpush1.msra.mxu0 0.0
    %1163 = vmatprep.subr.mxu0 0.0
    %1164 = vmatpush1.msra.mxu0 0.0
    %1165 = vmatprep.mubr.f32.mxu0 0.0
    %v1166 = vand.u32 %v803, 4294901760
    %v1167 = vsub.f32 %v803, %v1166
    %1168 = vmatmul.mubr.f32.gmra.mrb[0].mxu0 %v1167
    %v1169 = vpop.f32.mrb[0].mxu0
    %v1170 = vadd.f32 %v1066, %v1169
    %v1171 = vpop.f32.mrb[0].mxu0
    %1172 = vdwg.mxu0
    %1173 = vmatprep.subr.mxu0 0.0
    %v1174 = vand.u32 %v804, 4294901760
    %1175 = vmatpush1.msra.mxu0 %v1174
    %1176 = vmatprep.subr.mxu0 0.0
    %v1177 = vand.u32 %v805, 4294901760
    %1178 = vmatpush1.msra.mxu0 %v1177
    %1179 = vmatprep.subr.mxu0 0.0
    %v1180 = vand.u32 %v806, 4294901760
    %1181 = vmatpush1.msra.mxu0 %v1180
    %1182 = vmatprep.subr.mxu0 0.0
    %v1183 = vand.u32 %v807, 4294901760
    %1184 = vmatpush1.msra.mxu0 %v1183
    %1185 = vmatprep.subr.mxu0 0.0
    %v1186 = vand.u32 %v808, 4294901760
    %1187 = vmatpush1.msra.mxu0 %v1186
    %1188 = vmatprep.subr.mxu0 0.0
    %v1189 = vand.u32 %v809, 4294901760
    %1190 = vmatpush1.msra.mxu0 %v1189
    %1191 = vmatprep.subr.mxu0 0.0
    %v1192 = vand.u32 %v810, 4294901760
    %1193 = vmatpush1.msra.mxu0 %v1192
    %1194 = vmatprep.subr.mxu0 0.0
    %v1195 = vand.u32 %v811, 4294901760
    %1196 = vmatpush1.msra.mxu0 %v1195
    %1197 = vmatprep.subr.mxu0 0.0
    %v1198 = vand.u32 %v812, 4294901760
    %1199 = vmatpush1.msra.mxu0 %v1198
    %1200 = vmatprep.subr.mxu0 0.0
    %v1201 = vand.u32 %v813, 4294901760
    %1202 = vmatpush1.msra.mxu0 %v1201
    %1203 = vmatprep.subr.mxu0 0.0
    %v1204 = vand.u32 %v814, 4294901760
    %1205 = vmatpush1.msra.mxu0 %v1204
    %1206 = vmatprep.subr.mxu0 0.0
    %v1207 = vand.u32 %v815, 4294901760
    %1208 = vmatpush1.msra.mxu0 %v1207
    %1209 = vmatprep.subr.mxu0 0.0
    %v1210 = vand.u32 %v816, 4294901760
    %1211 = vmatpush1.msra.mxu0 %v1210
    %1212 = vmatprep.subr.mxu0 0.0
    %v1213 = vand.u32 %v817, 4294901760
    %1214 = vmatpush1.msra.mxu0 %v1213
    %1215 = vmatprep.subr.mxu0 0.0
    %v1216 = vand.u32 %v818, 4294901760
    %1217 = vmatpush1.msra.mxu0 %v1216
    %1218 = vmatprep.subr.mxu0 0.0
    %v1219 = vand.u32 %v819, 4294901760
    %1220 = vmatpush1.msra.mxu0 %v1219
    %1221 = vmatprep.subr.mxu0 0.0
    %1222 = vmatpush1.msra.mxu0 0.0
    %1223 = vmatprep.subr.mxu0 0.0
    %1224 = vmatpush1.msra.mxu0 0.0
    %1225 = vmatprep.subr.mxu0 0.0
    %1226 = vmatpush1.msra.mxu0 0.0
    %1227 = vmatprep.subr.mxu0 0.0
    %1228 = vmatpush1.msra.mxu0 0.0
    %1229 = vmatprep.subr.mxu0 0.0
    %1230 = vmatpush1.msra.mxu0 0.0
    %1231 = vmatprep.subr.mxu0 0.0
    %1232 = vmatpush1.msra.mxu0 0.0
    %1233 = vmatprep.subr.mxu0 0.0
    %1234 = vmatpush1.msra.mxu0 0.0
    %1235 = vmatprep.subr.mxu0 0.0
    %1236 = vmatpush1.msra.mxu0 0.0
    %1237 = vmatprep.subr.mxu0 0.0
    %1238 = vmatpush1.msra.mxu0 0.0
    %1239 = vmatprep.subr.mxu0 0.0
    %1240 = vmatpush1.msra.mxu0 0.0
    %1241 = vmatprep.subr.mxu0 0.0
    %1242 = vmatpush1.msra.mxu0 0.0
    %1243 = vmatprep.subr.mxu0 0.0
    %1244 = vmatpush1.msra.mxu0 0.0
    %1245 = vmatprep.subr.mxu0 0.0
    %1246 = vmatpush1.msra.mxu0 0.0
    %1247 = vmatprep.subr.mxu0 0.0
    %1248 = vmatpush1.msra.mxu0 0.0
    %1249 = vmatprep.subr.mxu0 0.0
    %1250 = vmatpush1.msra.mxu0 0.0
    %1251 = vmatprep.subr.mxu0 0.0
    %1252 = vmatpush1.msra.mxu0 0.0
    %1253 = vmatprep.mubr.f32.mxu0 0.0
    %v1254 = vand.u32 %v803, 4294901760
    %v1255 = vsub.f32 %v803, %v1254
    %v1256 = vand.u32 %v1255, 4294901760
    %1257 = vmatmul.mubr.f32.gmra.mrb[0].mxu0 %v1256
    %v1258 = vpop.f32.mrb[0].mxu0
    %v1259 = vadd.f32 %v1170, %v1258
    %v1260 = vpop.f32.mrb[0].mxu0
    %1261 = vdwg.mxu0
    %1262 = vmatprep.subr.mxu0 0.0
    %v1263 = vand.u32 %v804, 4294901760
    %v1264 = vsub.f32 %v804, %v1263
    %v1265 = vand.u32 %v1264, 4294901760
    %1266 = vmatpush1.msra.mxu0 %v1265
    %1267 = vmatprep.subr.mxu0 0.0
    %v1268 = vand.u32 %v805, 4294901760
    %v1269 = vsub.f32 %v805, %v1268
    %v1270 = vand.u32 %v1269, 4294901760
    %1271 = vmatpush1.msra.mxu0 %v1270
    %1272 = vmatprep.subr.mxu0 0.0
    %v1273 = vand.u32 %v806, 4294901760
    %v1274 = vsub.f32 %v806, %v1273
    %v1275 = vand.u32 %v1274, 4294901760
    %1276 = vmatpush1.msra.mxu0 %v1275
    %1277 = vmatprep.subr.mxu0 0.0
    %v1278 = vand.u32 %v807, 4294901760
    %v1279 = vsub.f32 %v807, %v1278
    %v1280 = vand.u32 %v1279, 4294901760
    %1281 = vmatpush1.msra.mxu0 %v1280
    %1282 = vmatprep.subr.mxu0 0.0
    %v1283 = vand.u32 %v808, 4294901760
    %v1284 = vsub.f32 %v808, %v1283
    %v1285 = vand.u32 %v1284, 4294901760
    %1286 = vmatpush1.msra.mxu0 %v1285
    %1287 = vmatprep.subr.mxu0 0.0
    %v1288 = vand.u32 %v809, 4294901760
    %v1289 = vsub.f32 %v809, %v1288
    %v1290 = vand.u32 %v1289, 4294901760
    %1291 = vmatpush1.msra.mxu0 %v1290
    %1292 = vmatprep.subr.mxu0 0.0
    %v1293 = vand.u32 %v810, 4294901760
    %v1294 = vsub.f32 %v810, %v1293
    %v1295 = vand.u32 %v1294, 4294901760
    %1296 = vmatpush1.msra.mxu0 %v1295
    %1297 = vmatprep.subr.mxu0 0.0
    %v1298 = vand.u32 %v811, 4294901760
    %v1299 = vsub.f32 %v811, %v1298
    %v1300 = vand.u32 %v1299, 4294901760
    %1301 = vmatpush1.msra.mxu0 %v1300
    %1302 = vmatprep.subr.mxu0 0.0
    %v1303 = vand.u32 %v812, 4294901760
    %v1304 = vsub.f32 %v812, %v1303
    %v1305 = vand.u32 %v1304, 4294901760
    %1306 = vmatpush1.msra.mxu0 %v1305
    %1307 = vmatprep.subr.mxu0 0.0
    %v1308 = vand.u32 %v813, 4294901760
    %v1309 = vsub.f32 %v813, %v1308
    %v1310 = vand.u32 %v1309, 4294901760
    %1311 = vmatpush1.msra.mxu0 %v1310
    %1312 = vmatprep.subr.mxu0 0.0
    %v1313 = vand.u32 %v814, 4294901760
    %v1314 = vsub.f32 %v814, %v1313
    %v1315 = vand.u32 %v1314, 4294901760
    %1316 = vmatpush1.msra.mxu0 %v1315
    %1317 = vmatprep.subr.mxu0 0.0
    %v1318 = vand.u32 %v815, 4294901760
    %v1319 = vsub.f32 %v815, %v1318
    %v1320 = vand.u32 %v1319, 4294901760
    %1321 = vmatpush1.msra.mxu0 %v1320
    %1322 = vmatprep.subr.mxu0 0.0
    %v1323 = vand.u32 %v816, 4294901760
    %v1324 = vsub.f32 %v816, %v1323
    %v1325 = vand.u32 %v1324, 4294901760
    %1326 = vmatpush1.msra.mxu0 %v1325
    %1327 = vmatprep.subr.mxu0 0.0
    %v1328 = vand.u32 %v817, 4294901760
    %v1329 = vsub.f32 %v817, %v1328
    %v1330 = vand.u32 %v1329, 4294901760
    %1331 = vmatpush1.msra.mxu0 %v1330
    %1332 = vmatprep.subr.mxu0 0.0
    %v1333 = vand.u32 %v818, 4294901760
    %v1334 = vsub.f32 %v818, %v1333
    %v1335 = vand.u32 %v1334, 4294901760
    %1336 = vmatpush1.msra.mxu0 %v1335
    %1337 = vmatprep.subr.mxu0 0.0
    %v1338 = vand.u32 %v819, 4294901760
    %v1339 = vsub.f32 %v819, %v1338
    %v1340 = vand.u32 %v1339, 4294901760
    %1341 = vmatpush1.msra.mxu0 %v1340
    %1342 = vmatprep.subr.mxu0 0.0
    %1343 = vmatpush1.msra.mxu0 0.0
    %1344 = vmatprep.subr.mxu0 0.0
    %1345 = vmatpush1.msra.mxu0 0.0
    %1346 = vmatprep.subr.mxu0 0.0
    %1347 = vmatpush1.msra.mxu0 0.0
    %1348 = vmatprep.subr.mxu0 0.0
    %1349 = vmatpush1.msra.mxu0 0.0
    %1350 = vmatprep.subr.mxu0 0.0
    %1351 = vmatpush1.msra.mxu0 0.0
    %1352 = vmatprep.subr.mxu0 0.0
    %1353 = vmatpush1.msra.mxu0 0.0
    %1354 = vmatprep.subr.mxu0 0.0
    %1355 = vmatpush1.msra.mxu0 0.0
    %1356 = vmatprep.subr.mxu0 0.0
    %1357 = vmatpush1.msra.mxu0 0.0
    %1358 = vmatprep.subr.mxu0 0.0
    %1359 = vmatpush1.msra.mxu0 0.0
    %1360 = vmatprep.subr.mxu0 0.0
    %1361 = vmatpush1.msra.mxu0 0.0
    %1362 = vmatprep.subr.mxu0 0.0
    %1363 = vmatpush1.msra.mxu0 0.0
    %1364 = vmatprep.subr.mxu0 0.0
    %1365 = vmatpush1.msra.mxu0 0.0
    %1366 = vmatprep.subr.mxu0 0.0
    %1367 = vmatpush1.msra.mxu0 0.0
    %1368 = vmatprep.subr.mxu0 0.0
    %1369 = vmatpush1.msra.mxu0 0.0
    %1370 = vmatprep.subr.mxu0 0.0
    %1371 = vmatpush1.msra.mxu0 0.0
    %1372 = vmatprep.subr.mxu0 0.0
    %1373 = vmatpush1.msra.mxu0 0.0
    %1374 = vmatprep.mubr.f32.mxu0 0.0
    %v1375 = vand.u32 %v803, 4294901760
    %1376 = vmatmul.mubr.f32.gmra.mrb[0].mxu0 %v1375
    %v1377 = vpop.f32.mrb[0].mxu0
    %v1378 = vadd.f32 %v1259, %v1377
    %v1379 = vpop.f32.mrb[0].mxu0
    %1380 = vdwg.mxu0
    %1381 = vmatprep.subr.mxu0 0.0
    %v1382 = vand.u32 %v804, 4294901760
    %1383 = vmatpush1.msra.mxu0 %v1382
    %1384 = vmatprep.subr.mxu0 0.0
    %v1385 = vand.u32 %v805, 4294901760
    %1386 = vmatpush1.msra.mxu0 %v1385
    %1387 = vmatprep.subr.mxu0 0.0
    %v1388 = vand.u32 %v806, 4294901760
    %1389 = vmatpush1.msra.mxu0 %v1388
    %1390 = vmatprep.subr.mxu0 0.0
    %v1391 = vand.u32 %v807, 4294901760
    %1392 = vmatpush1.msra.mxu0 %v1391
    %1393 = vmatprep.subr.mxu0 0.0
    %v1394 = vand.u32 %v808, 4294901760
    %1395 = vmatpush1.msra.mxu0 %v1394
    %1396 = vmatprep.subr.mxu0 0.0
    %v1397 = vand.u32 %v809, 4294901760
    %1398 = vmatpush1.msra.mxu0 %v1397
    %1399 = vmatprep.subr.mxu0 0.0
    %v1400 = vand.u32 %v810, 4294901760
    %1401 = vmatpush1.msra.mxu0 %v1400
    %1402 = vmatprep.subr.mxu0 0.0
    %v1403 = vand.u32 %v811, 4294901760
    %1404 = vmatpush1.msra.mxu0 %v1403
    %1405 = vmatprep.subr.mxu0 0.0
    %v1406 = vand.u32 %v812, 4294901760
    %1407 = vmatpush1.msra.mxu0 %v1406
    %1408 = vmatprep.subr.mxu0 0.0
    %v1409 = vand.u32 %v813, 4294901760
    %1410 = vmatpush1.msra.mxu0 %v1409
    %1411 = vmatprep.subr.mxu0 0.0
    %v1412 = vand.u32 %v814, 4294901760
    %1413 = vmatpush1.msra.mxu0 %v1412
    %1414 = vmatprep.subr.mxu0 0.0
    %v1415 = vand.u32 %v815, 4294901760
    %1416 = vmatpush1.msra.mxu0 %v1415
    %1417 = vmatprep.subr.mxu0 0.0
    %v1418 = vand.u32 %v816, 4294901760
    %1419 = vmatpush1.msra.mxu0 %v1418
    %1420 = vmatprep.subr.mxu0 0.0
    %v1421 = vand.u32 %v817, 4294901760
    %1422 = vmatpush1.msra.mxu0 %v1421
    %1423 = vmatprep.subr.mxu0 0.0
    %v1424 = vand.u32 %v818, 4294901760
    %1425 = vmatpush1.msra.mxu0 %v1424
    %1426 = vmatprep.subr.mxu0 0.0
    %v1427 = vand.u32 %v819, 4294901760
    %1428 = vmatpush1.msra.mxu0 %v1427
    %1429 = vmatprep.subr.mxu0 0.0
    %1430 = vmatpush1.msra.mxu0 0.0
    %1431 = vmatprep.subr.mxu0 0.0
    %1432 = vmatpush1.msra.mxu0 0.0
    %1433 = vmatprep.subr.mxu0 0.0
    %1434 = vmatpush1.msra.mxu0 0.0
    %1435 = vmatprep.subr.mxu0 0.0
    %1436 = vmatpush1.msra.mxu0 0.0
    %1437 = vmatprep.subr.mxu0 0.0
    %1438 = vmatpush1.msra.mxu0 0.0
    %1439 = vmatprep.subr.mxu0 0.0
    %1440 = vmatpush1.msra.mxu0 0.0
    %1441 = vmatprep.subr.mxu0 0.0
    %1442 = vmatpush1.msra.mxu0 0.0
    %1443 = vmatprep.subr.mxu0 0.0
    %1444 = vmatpush1.msra.mxu0 0.0
    %1445 = vmatprep.subr.mxu0 0.0
    %1446 = vmatpush1.msra.mxu0 0.0
    %1447 = vmatprep.subr.mxu0 0.0
    %1448 = vmatpush1.msra.mxu0 0.0
    %1449 = vmatprep.subr.mxu0 0.0
    %1450 = vmatpush1.msra.mxu0 0.0
    %1451 = vmatprep.subr.mxu0 0.0
    %1452 = vmatpush1.msra.mxu0 0.0
    %1453 = vmatprep.subr.mxu0 0.0
    %1454 = vmatpush1.msra.mxu0 0.0
    %1455 = vmatprep.subr.mxu0 0.0
    %1456 = vmatpush1.msra.mxu0 0.0
    %1457 = vmatprep.subr.mxu0 0.0
    %1458 = vmatpush1.msra.mxu0 0.0
    %1459 = vmatprep.subr.mxu0 0.0
    %1460 = vmatpush1.msra.mxu0 0.0
    %1461 = vmatprep.mubr.f32.mxu0 0.0
    %v1462 = vand.u32 %v803, 4294901760
    %1463 = vmatmul.mubr.f32.gmra.mrb[0].mxu0 %v1462
    %v1464 = vpop.f32.mrb[0].mxu0
    %v1465 = vadd.f32 %v1378, %v1464
    %v1466 = vpop.f32.mrb[0].mxu0
    %1467 = vdwg.mxu0
    %v1468 = vmax.f32 %v1465, 0.0
    %v1469 = vld [vmem:[#allocation8] sm:$0xff]
    %v1470 = vld [vmem:[#allocation8 + $0x8] sm:$0xff]
    %v1471 = vld [vmem:[#allocation8 + $0x10] sm:$0xff]
    %v1472 = vld [vmem:[#allocation8 + $0x18] sm:$0xff]
    %v1473 = vld [vmem:[#allocation8 + $0x20] sm:$0xff]
    %v1474 = vld [vmem:[#allocation8 + $0x28] sm:$0xff]
    %v1475 = vld [vmem:[#allocation8 + $0x30] sm:$0xff]
    %v1476 = vld [vmem:[#allocation8 + $0x38] sm:$0xff]
    %v1477 = vld [vmem:[#allocation8 + $0x40] sm:$0xff]
    %v1478 = vld [vmem:[#allocation8 + $0x48] sm:$0xff]
    %v1479 = vld [vmem:[#allocation8 + $0x50] sm:$0xff]
    %v1480 = vld [vmem:[#allocation8 + $0x58] sm:$0xff]
    %v1481 = vld [vmem:[#allocation8 + $0x60] sm:$0xff]
    %v1482 = vld [vmem:[#allocation8 + $0x68] sm:$0xff]
    %v1483 = vld [vmem:[#allocation8 + $0x70] sm:$0xff]
    %v1484 = vld [vmem:[#allocation8 + $0x78] sm:$0xff]
    %v1485 = vld [vmem:[%s6] sm:$0x1]
    %v1487 = vlaneseq
    %v1488 = vshrl.u32 %v1487, 7
    %v1489 = vsub.s32 0, %v1488
    %v1490 = vrot.slane %v1485, %v1489
    %1492 = vmatprep.subr.mxu0 0.0
    %v1493 = vand.u32 %v1469, 4294901760
    %1494 = vmatpush1.msra.mxu0 %v1493
    %1495 = vmatprep.subr.mxu0 0.0
    %v1496 = vand.u32 %v1470, 4294901760
    %1497 = vmatpush1.msra.mxu0 %v1496
    %1498 = vmatprep.subr.mxu0 0.0
    %v1499 = vand.u32 %v1471, 4294901760
    %1500 = vmatpush1.msra.mxu0 %v1499
    %1501 = vmatprep.subr.mxu0 0.0
    %v1502 = vand.u32 %v1472, 4294901760
    %1503 = vmatpush1.msra.mxu0 %v1502
    %1504 = vmatprep.subr.mxu0 0.0
    %v1505 = vand.u32 %v1473, 4294901760
    %1506 = vmatpush1.msra.mxu0 %v1505
    %1507 = vmatprep.subr.mxu0 0.0
    %v1508 = vand.u32 %v1474, 4294901760
    %1509 = vmatpush1.msra.mxu0 %v1508
    %1510 = vmatprep.subr.mxu0 0.0
    %v1511 = vand.u32 %v1475, 4294901760
    %1512 = vmatpush1.msra.mxu0 %v1511
    %1513 = vmatprep.subr.mxu0 0.0
    %v1514 = vand.u32 %v1476, 4294901760
    %1515 = vmatpush1.msra.mxu0 %v1514
    %1516 = vmatprep.subr.mxu0 0.0
    %v1517 = vand.u32 %v1477, 4294901760
    %1518 = vmatpush1.msra.mxu0 %v1517
    %1519 = vmatprep.subr.mxu0 0.0
    %v1520 = vand.u32 %v1478, 4294901760
    %1521 = vmatpush1.msra.mxu0 %v1520
    %1522 = vmatprep.subr.mxu0 0.0
    %v1523 = vand.u32 %v1479, 4294901760
    %1524 = vmatpush1.msra.mxu0 %v1523
    %1525 = vmatprep.subr.mxu0 0.0
    %v1526 = vand.u32 %v1480, 4294901760
    %1527 = vmatpush1.msra.mxu0 %v1526
    %1528 = vmatprep.subr.mxu0 0.0
    %v1529 = vand.u32 %v1481, 4294901760
    %1530 = vmatpush1.msra.mxu0 %v1529
    %1531 = vmatprep.subr.mxu0 0.0
    %v1532 = vand.u32 %v1482, 4294901760
    %1533 = vmatpush1.msra.mxu0 %v1532
    %1534 = vmatprep.subr.mxu0 0.0
    %v1535 = vand.u32 %v1483, 4294901760
    %1536 = vmatpush1.msra.mxu0 %v1535
    %1537 = vmatprep.subr.mxu0 0.0
    %v1538 = vand.u32 %v1484, 4294901760
    %1539 = vmatpush1.msra.mxu0 %v1538
    %1540 = vmatprep.subr.mxu0 0.0
    %1541 = vmatpush1.msra.mxu0 0.0
    %1542 = vmatprep.subr.mxu0 0.0
    %1543 = vmatpush1.msra.mxu0 0.0
    %1544 = vmatprep.subr.mxu0 0.0
    %1545 = vmatpush1.msra.mxu0 0.0
    %1546 = vmatprep.subr.mxu0 0.0
    %1547 = vmatpush1.msra.mxu0 0.0
    %1548 = vmatprep.subr.mxu0 0.0
    %1549 = vmatpush1.msra.mxu0 0.0
    %1550 = vmatprep.subr.mxu0 0.0
    %1551 = vmatpush1.msra.mxu0 0.0
    %1552 = vmatprep.subr.mxu0 0.0
    %1553 = vmatpush1.msra.mxu0 0.0
    %1554 = vmatprep.subr.mxu0 0.0
    %1555 = vmatpush1.msra.mxu0 0.0
    %1556 = vmatprep.subr.mxu0 0.0
    %1557 = vmatpush1.msra.mxu0 0.0
    %1558 = vmatprep.subr.mxu0 0.0
    %1559 = vmatpush1.msra.mxu0 0.0
    %1560 = vmatprep.subr.mxu0 0.0
    %1561 = vmatpush1.msra.mxu0 0.0
    %1562 = vmatprep.subr.mxu0 0.0
    %1563 = vmatpush1.msra.mxu0 0.0
    %1564 = vmatprep.subr.mxu0 0.0
    %1565 = vmatpush1.msra.mxu0 0.0
    %1566 = vmatprep.subr.mxu0 0.0
    %1567 = vmatpush1.msra.mxu0 0.0
    %1568 = vmatprep.subr.mxu0 0.0
    %1569 = vmatpush1.msra.mxu0 0.0
    %1570 = vmatprep.subr.mxu0 0.0
    %1571 = vmatpush1.msra.mxu0 0.0
    %1572 = vmatprep.mubr.f32.mxu0 0.0
    %v1573 = vand.u32 %v1468, 4294901760
    %v1574 = vsub.f32 %v1468, %v1573
    %v1575 = vand.u32 %v1574, 4294901760
    %v1576 = vsub.f32 %v1574, %v1575
    %v1577 = vand.u32 %v1576, 4294901760
    %1578 = vmatmul.mubr.f32.gmra.mrb[0].mxu0 %v1577
    %v1579 = vpop.f32.mrb[0].mxu0
    %v1580 = vadd.f32 %v1490, %v1579
    %v1581 = vpop.f32.mrb[0].mxu0
    %1582 = vdwg.mxu0
    %1583 = vmatprep.subr.mxu0 0.0
    %v1584 = vand.u32 %v1469, 4294901760
    %v1585 = vsub.f32 %v1469, %v1584
    %v1586 = vand.u32 %v1585, 4294901760
    %v1587 = vsub.f32 %v1585, %v1586
    %v1588 = vand.u32 %v1587, 4294901760
    %1589 = vmatpush1.msra.mxu0 %v1588
    %1590 = vmatprep.subr.mxu0 0.0
    %v1591 = vand.u32 %v1470, 4294901760
    %v1592 = vsub.f32 %v1470, %v1591
    %v1593 = vand.u32 %v1592, 4294901760
    %v1594 = vsub.f32 %v1592, %v1593
    %v1595 = vand.u32 %v1594, 4294901760
    %1596 = vmatpush1.msra.mxu0 %v1595
    %1597 = vmatprep.subr.mxu0 0.0
    %v1598 = vand.u32 %v1471, 4294901760
    %v1599 = vsub.f32 %v1471, %v1598
    %v1600 = vand.u32 %v1599, 4294901760
    %v1601 = vsub.f32 %v1599, %v1600
    %v1602 = vand.u32 %v1601, 4294901760
    %1603 = vmatpush1.msra.mxu0 %v1602
    %1604 = vmatprep.subr.mxu0 0.0
    %v1605 = vand.u32 %v1472, 4294901760
    %v1606 = vsub.f32 %v1472, %v1605
    %v1607 = vand.u32 %v1606, 4294901760
    %v1608 = vsub.f32 %v1606, %v1607
    %v1609 = vand.u32 %v1608, 4294901760
    %1610 = vmatpush1.msra.mxu0 %v1609
    %1611 = vmatprep.subr.mxu0 0.0
    %v1612 = vand.u32 %v1473, 4294901760
    %v1613 = vsub.f32 %v1473, %v1612
    %v1614 = vand.u32 %v1613, 4294901760
    %v1615 = vsub.f32 %v1613, %v1614
    %v1616 = vand.u32 %v1615, 4294901760
    %1617 = vmatpush1.msra.mxu0 %v1616
    %1618 = vmatprep.subr.mxu0 0.0
    %v1619 = vand.u32 %v1474, 4294901760
    %v1620 = vsub.f32 %v1474, %v1619
    %v1621 = vand.u32 %v1620, 4294901760
    %v1622 = vsub.f32 %v1620, %v1621
    %v1623 = vand.u32 %v1622, 4294901760
    %1624 = vmatpush1.msra.mxu0 %v1623
    %1625 = vmatprep.subr.mxu0 0.0
    %v1626 = vand.u32 %v1475, 4294901760
    %v1627 = vsub.f32 %v1475, %v1626
    %v1628 = vand.u32 %v1627, 4294901760
    %v1629 = vsub.f32 %v1627, %v1628
    %v1630 = vand.u32 %v1629, 4294901760
    %1631 = vmatpush1.msra.mxu0 %v1630
    %1632 = vmatprep.subr.mxu0 0.0
    %v1633 = vand.u32 %v1476, 4294901760
    %v1634 = vsub.f32 %v1476, %v1633
    %v1635 = vand.u32 %v1634, 4294901760
    %v1636 = vsub.f32 %v1634, %v1635
    %v1637 = vand.u32 %v1636, 4294901760
    %1638 = vmatpush1.msra.mxu0 %v1637
    %1639 = vmatprep.subr.mxu0 0.0
    %v1640 = vand.u32 %v1477, 4294901760
    %v1641 = vsub.f32 %v1477, %v1640
    %v1642 = vand.u32 %v1641, 4294901760
    %v1643 = vsub.f32 %v1641, %v1642
    %v1644 = vand.u32 %v1643, 4294901760
    %1645 = vmatpush1.msra.mxu0 %v1644
    %1646 = vmatprep.subr.mxu0 0.0
    %v1647 = vand.u32 %v1478, 4294901760
    %v1648 = vsub.f32 %v1478, %v1647
    %v1649 = vand.u32 %v1648, 4294901760
    %v1650 = vsub.f32 %v1648, %v1649
    %v1651 = vand.u32 %v1650, 4294901760
    %1652 = vmatpush1.msra.mxu0 %v1651
    %1653 = vmatprep.subr.mxu0 0.0
    %v1654 = vand.u32 %v1479, 4294901760
    %v1655 = vsub.f32 %v1479, %v1654
    %v1656 = vand.u32 %v1655, 4294901760
    %v1657 = vsub.f32 %v1655, %v1656
    %v1658 = vand.u32 %v1657, 4294901760
    %1659 = vmatpush1.msra.mxu0 %v1658
    %1660 = vmatprep.subr.mxu0 0.0
    %v1661 = vand.u32 %v1480, 4294901760
    %v1662 = vsub.f32 %v1480, %v1661
    %v1663 = vand.u32 %v1662, 4294901760
    %v1664 = vsub.f32 %v1662, %v1663
    %v1665 = vand.u32 %v1664, 4294901760
    %1666 = vmatpush1.msra.mxu0 %v1665
    %1667 = vmatprep.subr.mxu0 0.0
    %v1668 = vand.u32 %v1481, 4294901760
    %v1669 = vsub.f32 %v1481, %v1668
    %v1670 = vand.u32 %v1669, 4294901760
    %v1671 = vsub.f32 %v1669, %v1670
    %v1672 = vand.u32 %v1671, 4294901760
    %1673 = vmatpush1.msra.mxu0 %v1672
    %1674 = vmatprep.subr.mxu0 0.0
    %v1675 = vand.u32 %v1482, 4294901760
    %v1676 = vsub.f32 %v1482, %v1675
    %v1677 = vand.u32 %v1676, 4294901760
    %v1678 = vsub.f32 %v1676, %v1677
    %v1679 = vand.u32 %v1678, 4294901760
    %1680 = vmatpush1.msra.mxu0 %v1679
    %1681 = vmatprep.subr.mxu0 0.0
    %v1682 = vand.u32 %v1483, 4294901760
    %v1683 = vsub.f32 %v1483, %v1682
    %v1684 = vand.u32 %v1683, 4294901760
    %v1685 = vsub.f32 %v1683, %v1684
    %v1686 = vand.u32 %v1685, 4294901760
    %1687 = vmatpush1.msra.mxu0 %v1686
    %1688 = vmatprep.subr.mxu0 0.0
    %v1689 = vand.u32 %v1484, 4294901760
    %v1690 = vsub.f32 %v1484, %v1689
    %v1691 = vand.u32 %v1690, 4294901760
    %v1692 = vsub.f32 %v1690, %v1691
    %v1693 = vand.u32 %v1692, 4294901760
    %1694 = vmatpush1.msra.mxu0 %v1693
    %1695 = vmatprep.subr.mxu0 0.0
    %1696 = vmatpush1.msra.mxu0 0.0
    %1697 = vmatprep.subr.mxu0 0.0
    %1698 = vmatpush1.msra.mxu0 0.0
    %1699 = vmatprep.subr.mxu0 0.0
    %1700 = vmatpush1.msra.mxu0 0.0
    %1701 = vmatprep.subr.mxu0 0.0
    %1702 = vmatpush1.msra.mxu0 0.0
    %1703 = vmatprep.subr.mxu0 0.0
    %1704 = vmatpush1.msra.mxu0 0.0
    %1705 = vmatprep.subr.mxu0 0.0
    %1706 = vmatpush1.msra.mxu0 0.0
    %1707 = vmatprep.subr.mxu0 0.0
    %1708 = vmatpush1.msra.mxu0 0.0
    %1709 = vmatprep.subr.mxu0 0.0
    %1710 = vmatpush1.msra.mxu0 0.0
    %1711 = vmatprep.subr.mxu0 0.0
    %1712 = vmatpush1.msra.mxu0 0.0
    %1713 = vmatprep.subr.mxu0 0.0
    %1714 = vmatpush1.msra.mxu0 0.0
    %1715 = vmatprep.subr.mxu0 0.0
    %1716 = vmatpush1.msra.mxu0 0.0
    %1717 = vmatprep.subr.mxu0 0.0
    %1718 = vmatpush1.msra.mxu0 0.0
    %1719 = vmatprep.subr.mxu0 0.0
    %1720 = vmatpush1.msra.mxu0 0.0
    %1721 = vmatprep.subr.mxu0 0.0
    %1722 = vmatpush1.msra.mxu0 0.0
    %1723 = vmatprep.subr.mxu0 0.0
    %1724 = vmatpush1.msra.mxu0 0.0
    %1725 = vmatprep.subr.mxu0 0.0
    %1726 = vmatpush1.msra.mxu0 0.0
    %1727 = vmatprep.mubr.f32.mxu0 0.0
    %v1728 = vand.u32 %v1468, 4294901760
    %1729 = vmatmul.mubr.f32.gmra.mrb[0].mxu0 %v1728
    %v1730 = vpop.f32.mrb[0].mxu0
    %v1731 = vadd.f32 %v1580, %v1730
    %v1732 = vpop.f32.mrb[0].mxu0
    %1733 = vdwg.mxu0
    %1734 = vmatprep.subr.mxu0 0.0
    %v1735 = vand.u32 %v1469, 4294901760
    %v1736 = vsub.f32 %v1469, %v1735
    %1737 = vmatpush1.msra.mxu0 %v1736
    %1738 = vmatprep.subr.mxu0 0.0
    %v1739 = vand.u32 %v1470, 4294901760
    %v1740 = vsub.f32 %v1470, %v1739
    %1741 = vmatpush1.msra.mxu0 %v1740
    %1742 = vmatprep.subr.mxu0 0.0
    %v1743 = vand.u32 %v1471, 4294901760
    %v1744 = vsub.f32 %v1471, %v1743
    %1745 = vmatpush1.msra.mxu0 %v1744
    %1746 = vmatprep.subr.mxu0 0.0
    %v1747 = vand.u32 %v1472, 4294901760
    %v1748 = vsub.f32 %v1472, %v1747
    %1749 = vmatpush1.msra.mxu0 %v1748
    %1750 = vmatprep.subr.mxu0 0.0
    %v1751 = vand.u32 %v1473, 4294901760
    %v1752 = vsub.f32 %v1473, %v1751
    %1753 = vmatpush1.msra.mxu0 %v1752
    %1754 = vmatprep.subr.mxu0 0.0
    %v1755 = vand.u32 %v1474, 4294901760
    %v1756 = vsub.f32 %v1474, %v1755
    %1757 = vmatpush1.msra.mxu0 %v1756
    %1758 = vmatprep.subr.mxu0 0.0
    %v1759 = vand.u32 %v1475, 4294901760
    %v1760 = vsub.f32 %v1475, %v1759
    %1761 = vmatpush1.msra.mxu0 %v1760
    %1762 = vmatprep.subr.mxu0 0.0
    %v1763 = vand.u32 %v1476, 4294901760
    %v1764 = vsub.f32 %v1476, %v1763
    %1765 = vmatpush1.msra.mxu0 %v1764
    %1766 = vmatprep.subr.mxu0 0.0
    %v1767 = vand.u32 %v1477, 4294901760
    %v1768 = vsub.f32 %v1477, %v1767
    %1769 = vmatpush1.msra.mxu0 %v1768
    %1770 = vmatprep.subr.mxu0 0.0
    %v1771 = vand.u32 %v1478, 4294901760
    %v1772 = vsub.f32 %v1478, %v1771
    %1773 = vmatpush1.msra.mxu0 %v1772
    %1774 = vmatprep.subr.mxu0 0.0
    %v1775 = vand.u32 %v1479, 4294901760
    %v1776 = vsub.f32 %v1479, %v1775
    %1777 = vmatpush1.msra.mxu0 %v1776
    %1778 = vmatprep.subr.mxu0 0.0
    %v1779 = vand.u32 %v1480, 4294901760
    %v1780 = vsub.f32 %v1480, %v1779
    %1781 = vmatpush1.msra.mxu0 %v1780
    %1782 = vmatprep.subr.mxu0 0.0
    %v1783 = vand.u32 %v1481, 4294901760
    %v1784 = vsub.f32 %v1481, %v1783
    %1785 = vmatpush1.msra.mxu0 %v1784
    %1786 = vmatprep.subr.mxu0 0.0
    %v1787 = vand.u32 %v1482, 4294901760
    %v1788 = vsub.f32 %v1482, %v1787
    %1789 = vmatpush1.msra.mxu0 %v1788
    %1790 = vmatprep.subr.mxu0 0.0
    %v1791 = vand.u32 %v1483, 4294901760
    %v1792 = vsub.f32 %v1483, %v1791
    %1793 = vmatpush1.msra.mxu0 %v1792
    %1794 = vmatprep.subr.mxu0 0.0
    %v1795 = vand.u32 %v1484, 4294901760
    %v1796 = vsub.f32 %v1484, %v1795
    %1797 = vmatpush1.msra.mxu0 %v1796
    %1798 = vmatprep.subr.mxu0 0.0
    %1799 = vmatpush1.msra.mxu0 0.0
    %1800 = vmatprep.subr.mxu0 0.0
    %1801 = vmatpush1.msra.mxu0 0.0
    %1802 = vmatprep.subr.mxu0 0.0
    %1803 = vmatpush1.msra.mxu0 0.0
    %1804 = vmatprep.subr.mxu0 0.0
    %1805 = vmatpush1.msra.mxu0 0.0
    %1806 = vmatprep.subr.mxu0 0.0
    %1807 = vmatpush1.msra.mxu0 0.0
    %1808 = vmatprep.subr.mxu0 0.0
    %1809 = vmatpush1.msra.mxu0 0.0
    %1810 = vmatprep.subr.mxu0 0.0
    %1811 = vmatpush1.msra.mxu0 0.0
    %1812 = vmatprep.subr.mxu0 0.0
    %1813 = vmatpush1.msra.mxu0 0.0
    %1814 = vmatprep.subr.mxu0 0.0
    %1815 = vmatpush1.msra.mxu0 0.0
    %1816 = vmatprep.subr.mxu0 0.0
    %1817 = vmatpush1.msra.mxu0 0.0
    %1818 = vmatprep.subr.mxu0 0.0
    %1819 = vmatpush1.msra.mxu0 0.0
    %1820 = vmatprep.subr.mxu0 0.0
    %1821 = vmatpush1.msra.mxu0 0.0
    %1822 = vmatprep.subr.mxu0 0.0
    %1823 = vmatpush1.msra.mxu0 0.0
    %1824 = vmatprep.subr.mxu0 0.0
    %1825 = vmatpush1.msra.mxu0 0.0
    %1826 = vmatprep.subr.mxu0 0.0
    %1827 = vmatpush1.msra.mxu0 0.0
    %1828 = vmatprep.subr.mxu0 0.0
    %1829 = vmatpush1.msra.mxu0 0.0
    %1830 = vmatprep.mubr.f32.mxu0 0.0
    %v1831 = vand.u32 %v1468, 4294901760
    %v1832 = vsub.f32 %v1468, %v1831
    %1833 = vmatmul.mubr.f32.gmra.mrb[0].mxu0 %v1832
    %v1834 = vpop.f32.mrb[0].mxu0
    %v1835 = vadd.f32 %v1731, %v1834
    %v1836 = vpop.f32.mrb[0].mxu0
    %1837 = vdwg.mxu0
    %1838 = vmatprep.subr.mxu0 0.0
    %v1839 = vand.u32 %v1469, 4294901760
    %1840 = vmatpush1.msra.mxu0 %v1839
    %1841 = vmatprep.subr.mxu0 0.0
    %v1842 = vand.u32 %v1470, 4294901760
    %1843 = vmatpush1.msra.mxu0 %v1842
    %1844 = vmatprep.subr.mxu0 0.0
    %v1845 = vand.u32 %v1471, 4294901760
    %1846 = vmatpush1.msra.mxu0 %v1845
    %1847 = vmatprep.subr.mxu0 0.0
    %v1848 = vand.u32 %v1472, 4294901760
    %1849 = vmatpush1.msra.mxu0 %v1848
    %1850 = vmatprep.subr.mxu0 0.0
    %v1851 = vand.u32 %v1473, 4294901760
    %1852 = vmatpush1.msra.mxu0 %v1851
    %1853 = vmatprep.subr.mxu0 0.0
    %v1854 = vand.u32 %v1474, 4294901760
    %1855 = vmatpush1.msra.mxu0 %v1854
    %1856 = vmatprep.subr.mxu0 0.0
    %v1857 = vand.u32 %v1475, 4294901760
    %1858 = vmatpush1.msra.mxu0 %v1857
    %1859 = vmatprep.subr.mxu0 0.0
    %v1860 = vand.u32 %v1476, 4294901760
    %1861 = vmatpush1.msra.mxu0 %v1860
    %1862 = vmatprep.subr.mxu0 0.0
    %v1863 = vand.u32 %v1477, 4294901760
    %1864 = vmatpush1.msra.mxu0 %v1863
    %1865 = vmatprep.subr.mxu0 0.0
    %v1866 = vand.u32 %v1478, 4294901760
    %1867 = vmatpush1.msra.mxu0 %v1866
    %1868 = vmatprep.subr.mxu0 0.0
    %v1869 = vand.u32 %v1479, 4294901760
    %1870 = vmatpush1.msra.mxu0 %v1869
    %1871 = vmatprep.subr.mxu0 0.0
    %v1872 = vand.u32 %v1480, 4294901760
    %1873 = vmatpush1.msra.mxu0 %v1872
    %1874 = vmatprep.subr.mxu0 0.0
    %v1875 = vand.u32 %v1481, 4294901760
    %1876 = vmatpush1.msra.mxu0 %v1875
    %1877 = vmatprep.subr.mxu0 0.0
    %v1878 = vand.u32 %v1482, 4294901760
    %1879 = vmatpush1.msra.mxu0 %v1878
    %1880 = vmatprep.subr.mxu0 0.0
    %v1881 = vand.u32 %v1483, 4294901760
    %1882 = vmatpush1.msra.mxu0 %v1881
    %1883 = vmatprep.subr.mxu0 0.0
    %v1884 = vand.u32 %v1484, 4294901760
    %1885 = vmatpush1.msra.mxu0 %v1884
    %1886 = vmatprep.subr.mxu0 0.0
    %1887 = vmatpush1.msra.mxu0 0.0
    %1888 = vmatprep.subr.mxu0 0.0
    %1889 = vmatpush1.msra.mxu0 0.0
    %1890 = vmatprep.subr.mxu0 0.0
    %1891 = vmatpush1.msra.mxu0 0.0
    %1892 = vmatprep.subr.mxu0 0.0
    %1893 = vmatpush1.msra.mxu0 0.0
    %1894 = vmatprep.subr.mxu0 0.0
    %1895 = vmatpush1.msra.mxu0 0.0
    %1896 = vmatprep.subr.mxu0 0.0
    %1897 = vmatpush1.msra.mxu0 0.0
    %1898 = vmatprep.subr.mxu0 0.0
    %1899 = vmatpush1.msra.mxu0 0.0
    %1900 = vmatprep.subr.mxu0 0.0
    %1901 = vmatpush1.msra.mxu0 0.0
    %1902 = vmatprep.subr.mxu0 0.0
    %1903 = vmatpush1.msra.mxu0 0.0
    %1904 = vmatprep.subr.mxu0 0.0
    %1905 = vmatpush1.msra.mxu0 0.0
    %1906 = vmatprep.subr.mxu0 0.0
    %1907 = vmatpush1.msra.mxu0 0.0
    %1908 = vmatprep.subr.mxu0 0.0
    %1909 = vmatpush1.msra.mxu0 0.0
    %1910 = vmatprep.subr.mxu0 0.0
    %1911 = vmatpush1.msra.mxu0 0.0
    %1912 = vmatprep.subr.mxu0 0.0
    %1913 = vmatpush1.msra.mxu0 0.0
    %1914 = vmatprep.subr.mxu0 0.0
    %1915 = vmatpush1.msra.mxu0 0.0
    %1916 = vmatprep.subr.mxu0 0.0
    %1917 = vmatpush1.msra.mxu0 0.0
    %1918 = vmatprep.mubr.f32.mxu0 0.0
    %v1919 = vand.u32 %v1468, 4294901760
    %v1920 = vsub.f32 %v1468, %v1919
    %v1921 = vand.u32 %v1920, 4294901760
    %1922 = vmatmul.mubr.f32.gmra.mrb[0].mxu0 %v1921
    %v1923 = vpop.f32.mrb[0].mxu0
    %v1924 = vadd.f32 %v1835, %v1923
    %v1925 = vpop.f32.mrb[0].mxu0
    %1926 = vdwg.mxu0
    %1927 = vmatprep.subr.mxu0 0.0
    %v1928 = vand.u32 %v1469, 4294901760
    %v1929 = vsub.f32 %v1469, %v1928
    %v1930 = vand.u32 %v1929, 4294901760
    %1931 = vmatpush1.msra.mxu0 %v1930
    %1932 = vmatprep.subr.mxu0 0.0
    %v1933 = vand.u32 %v1470, 4294901760
    %v1934 = vsub.f32 %v1470, %v1933
    %v1935 = vand.u32 %v1934, 4294901760
    %1936 = vmatpush1.msra.mxu0 %v1935
    %1937 = vmatprep.subr.mxu0 0.0
    %v1938 = vand.u32 %v1471, 4294901760
    %v1939 = vsub.f32 %v1471, %v1938
    %v1940 = vand.u32 %v1939, 4294901760
    %1941 = vmatpush1.msra.mxu0 %v1940
    %1942 = vmatprep.subr.mxu0 0.0
    %v1943 = vand.u32 %v1472, 4294901760
    %v1944 = vsub.f32 %v1472, %v1943
    %v1945 = vand.u32 %v1944, 4294901760
    %1946 = vmatpush1.msra.mxu0 %v1945
    %1947 = vmatprep.subr.mxu0 0.0
    %v1948 = vand.u32 %v1473, 4294901760
    %v1949 = vsub.f32 %v1473, %v1948
    %v1950 = vand.u32 %v1949, 4294901760
    %1951 = vmatpush1.msra.mxu0 %v1950
    %1952 = vmatprep.subr.mxu0 0.0
    %v1953 = vand.u32 %v1474, 4294901760
    %v1954 = vsub.f32 %v1474, %v1953
    %v1955 = vand.u32 %v1954, 4294901760
    %1956 = vmatpush1.msra.mxu0 %v1955
    %1957 = vmatprep.subr.mxu0 0.0
    %v1958 = vand.u32 %v1475, 4294901760
    %v1959 = vsub.f32 %v1475, %v1958
    %v1960 = vand.u32 %v1959, 4294901760
    %1961 = vmatpush1.msra.mxu0 %v1960
    %1962 = vmatprep.subr.mxu0 0.0
    %v1963 = vand.u32 %v1476, 4294901760
    %v1964 = vsub.f32 %v1476, %v1963
    %v1965 = vand.u32 %v1964, 4294901760
    %1966 = vmatpush1.msra.mxu0 %v1965
    %1967 = vmatprep.subr.mxu0 0.0
    %v1968 = vand.u32 %v1477, 4294901760
    %v1969 = vsub.f32 %v1477, %v1968
    %v1970 = vand.u32 %v1969, 4294901760
    %1971 = vmatpush1.msra.mxu0 %v1970
    %1972 = vmatprep.subr.mxu0 0.0
    %v1973 = vand.u32 %v1478, 4294901760
    %v1974 = vsub.f32 %v1478, %v1973
    %v1975 = vand.u32 %v1974, 4294901760
    %1976 = vmatpush1.msra.mxu0 %v1975
    %1977 = vmatprep.subr.mxu0 0.0
    %v1978 = vand.u32 %v1479, 4294901760
    %v1979 = vsub.f32 %v1479, %v1978
    %v1980 = vand.u32 %v1979, 4294901760
    %1981 = vmatpush1.msra.mxu0 %v1980
    %1982 = vmatprep.subr.mxu0 0.0
    %v1983 = vand.u32 %v1480, 4294901760
    %v1984 = vsub.f32 %v1480, %v1983
    %v1985 = vand.u32 %v1984, 4294901760
    %1986 = vmatpush1.msra.mxu0 %v1985
    %1987 = vmatprep.subr.mxu0 0.0
    %v1988 = vand.u32 %v1481, 4294901760
    %v1989 = vsub.f32 %v1481, %v1988
    %v1990 = vand.u32 %v1989, 4294901760
    %1991 = vmatpush1.msra.mxu0 %v1990
    %1992 = vmatprep.subr.mxu0 0.0
    %v1993 = vand.u32 %v1482, 4294901760
    %v1994 = vsub.f32 %v1482, %v1993
    %v1995 = vand.u32 %v1994, 4294901760
    %1996 = vmatpush1.msra.mxu0 %v1995
    %1997 = vmatprep.subr.mxu0 0.0
    %v1998 = vand.u32 %v1483, 4294901760
    %v1999 = vsub.f32 %v1483, %v1998
    %v2000 = vand.u32 %v1999, 4294901760
    %2001 = vmatpush1.msra.mxu0 %v2000
    %2002 = vmatprep.subr.mxu0 0.0
    %v2003 = vand.u32 %v1484, 4294901760
    %v2004 = vsub.f32 %v1484, %v2003
    %v2005 = vand.u32 %v2004, 4294901760
    %2006 = vmatpush1.msra.mxu0 %v2005
    %2007 = vmatprep.subr.mxu0 0.0
    %2008 = vmatpush1.msra.mxu0 0.0
    %2009 = vmatprep.subr.mxu0 0.0
    %2010 = vmatpush1.msra.mxu0 0.0
    %2011 = vmatprep.subr.mxu0 0.0
    %2012 = vmatpush1.msra.mxu0 0.0
    %2013 = vmatprep.subr.mxu0 0.0
    %2014 = vmatpush1.msra.mxu0 0.0
    %2015 = vmatprep.subr.mxu0 0.0
    %2016 = vmatpush1.msra.mxu0 0.0
    %2017 = vmatprep.subr.mxu0 0.0
    %2018 = vmatpush1.msra.mxu0 0.0
    %2019 = vmatprep.subr.mxu0 0.0
    %2020 = vmatpush1.msra.mxu0 0.0
    %2021 = vmatprep.subr.mxu0 0.0
    %2022 = vmatpush1.msra.mxu0 0.0
    %2023 = vmatprep.subr.mxu0 0.0
    %2024 = vmatpush1.msra.mxu0 0.0
    %2025 = vmatprep.subr.mxu0 0.0
    %2026 = vmatpush1.msra.mxu0 0.0
    %2027 = vmatprep.subr.mxu0 0.0
    %2028 = vmatpush1.msra.mxu0 0.0
    %2029 = vmatprep.subr.mxu0 0.0
    %2030 = vmatpush1.msra.mxu0 0.0
    %2031 = vmatprep.subr.mxu0 0.0
    %2032 = vmatpush1.msra.mxu0 0.0
    %2033 = vmatprep.subr.mxu0 0.0
    %2034 = vmatpush1.msra.mxu0 0.0
    %2035 = vmatprep.subr.mxu0 0.0
    %2036 = vmatpush1.msra.mxu0 0.0
    %2037 = vmatprep.subr.mxu0 0.0
    %2038 = vmatpush1.msra.mxu0 0.0
    %2039 = vmatprep.mubr.f32.mxu0 0.0
    %v2040 = vand.u32 %v1468, 4294901760
    %2041 = vmatmul.mubr.f32.gmra.mrb[0].mxu0 %v2040
    %v2042 = vpop.f32.mrb[0].mxu0
    %v2043 = vadd.f32 %v1924, %v2042
    %v2044 = vpop.f32.mrb[0].mxu0
    %2045 = vdwg.mxu0
    %2046 = vmatprep.subr.mxu0 0.0
    %v2047 = vand.u32 %v1469, 4294901760
    %2048 = vmatpush1.msra.mxu0 %v2047
    %2049 = vmatprep.subr.mxu0 0.0
    %v2050 = vand.u32 %v1470, 4294901760
    %2051 = vmatpush1.msra.mxu0 %v2050
    %2052 = vmatprep.subr.mxu0 0.0
    %v2053 = vand.u32 %v1471, 4294901760
    %2054 = vmatpush1.msra.mxu0 %v2053
    %2055 = vmatprep.subr.mxu0 0.0
    %v2056 = vand.u32 %v1472, 4294901760
    %2057 = vmatpush1.msra.mxu0 %v2056
    %2058 = vmatprep.subr.mxu0 0.0
    %v2059 = vand.u32 %v1473, 4294901760
    %2060 = vmatpush1.msra.mxu0 %v2059
    %2061 = vmatprep.subr.mxu0 0.0
    %v2062 = vand.u32 %v1474, 4294901760
    %2063 = vmatpush1.msra.mxu0 %v2062
    %2064 = vmatprep.subr.mxu0 0.0
    %v2065 = vand.u32 %v1475, 4294901760
    %2066 = vmatpush1.msra.mxu0 %v2065
    %2067 = vmatprep.subr.mxu0 0.0
    %v2068 = vand.u32 %v1476, 4294901760
    %2069 = vmatpush1.msra.mxu0 %v2068
    %2070 = vmatprep.subr.mxu0 0.0
    %v2071 = vand.u32 %v1477, 4294901760
    %2072 = vmatpush1.msra.mxu0 %v2071
    %2073 = vmatprep.subr.mxu0 0.0
    %v2074 = vand.u32 %v1478, 4294901760
    %2075 = vmatpush1.msra.mxu0 %v2074
    %2076 = vmatprep.subr.mxu0 0.0
    %v2077 = vand.u32 %v1479, 4294901760
    %2078 = vmatpush1.msra.mxu0 %v2077
    %2079 = vmatprep.subr.mxu0 0.0
    %v2080 = vand.u32 %v1480, 4294901760
    %2081 = vmatpush1.msra.mxu0 %v2080
    %2082 = vmatprep.subr.mxu0 0.0
    %v2083 = vand.u32 %v1481, 4294901760
    %2084 = vmatpush1.msra.mxu0 %v2083
    %2085 = vmatprep.subr.mxu0 0.0
    %v2086 = vand.u32 %v1482, 4294901760
    %2087 = vmatpush1.msra.mxu0 %v2086
    %2088 = vmatprep.subr.mxu0 0.0
    %v2089 = vand.u32 %v1483, 4294901760
    %2090 = vmatpush1.msra.mxu0 %v2089
    %2091 = vmatprep.subr.mxu0 0.0
    %v2092 = vand.u32 %v1484, 4294901760
    %2093 = vmatpush1.msra.mxu0 %v2092
    %2094 = vmatprep.subr.mxu0 0.0
    %2095 = vmatpush1.msra.mxu0 0.0
    %2096 = vmatprep.subr.mxu0 0.0
    %2097 = vmatpush1.msra.mxu0 0.0
    %2098 = vmatprep.subr.mxu0 0.0
    %2099 = vmatpush1.msra.mxu0 0.0
    %2100 = vmatprep.subr.mxu0 0.0
    %2101 = vmatpush1.msra.mxu0 0.0
    %2102 = vmatprep.subr.mxu0 0.0
    %2103 = vmatpush1.msra.mxu0 0.0
    %2104 = vmatprep.subr.mxu0 0.0
    %2105 = vmatpush1.msra.mxu0 0.0
    %2106 = vmatprep.subr.mxu0 0.0
    %2107 = vmatpush1.msra.mxu0 0.0
    %2108 = vmatprep.subr.mxu0 0.0
    %2109 = vmatpush1.msra.mxu0 0.0
    %2110 = vmatprep.subr.mxu0 0.0
    %2111 = vmatpush1.msra.mxu0 0.0
    %2112 = vmatprep.subr.mxu0 0.0
    %2113 = vmatpush1.msra.mxu0 0.0
    %2114 = vmatprep.subr.mxu0 0.0
    %2115 = vmatpush1.msra.mxu0 0.0
    %2116 = vmatprep.subr.mxu0 0.0
    %2117 = vmatpush1.msra.mxu0 0.0
    %2118 = vmatprep.subr.mxu0 0.0
    %2119 = vmatpush1.msra.mxu0 0.0
    %2120 = vmatprep.subr.mxu0 0.0
    %2121 = vmatpush1.msra.mxu0 0.0
    %2122 = vmatprep.subr.mxu0 0.0
    %2123 = vmatpush1.msra.mxu0 0.0
    %2124 = vmatprep.subr.mxu0 0.0
    %2125 = vmatpush1.msra.mxu0 0.0
    %2126 = vmatprep.mubr.f32.mxu0 0.0
    %v2127 = vand.u32 %v1468, 4294901760
    %2128 = vmatmul.mubr.f32.gmra.mrb[0].mxu0 %v2127
    %v2129 = vpop.f32.mrb[0].mxu0
    %v2130 = vadd.f32 %v2043, %v2129
    %v2131 = vpop.f32.mrb[0].mxu0
    %2132 = vdwg.mxu0
    %v2133 = vmax.f32 %v2130, 0.0
    %v2134 = vld [vmem:[#allocation10] sm:$0xff]
    %v2135 = vld [vmem:[#allocation10 + $0x8] sm:$0xff]
    %v2136 = vld [vmem:[#allocation10 + $0x10] sm:$0xff]
    %v2137 = vld [vmem:[#allocation10 + $0x18] sm:$0xff]
    %v2138 = vld [vmem:[#allocation10 + $0x20] sm:$0xff]
    %v2139 = vld [vmem:[#allocation10 + $0x28] sm:$0xff]
    %v2140 = vld [vmem:[#allocation10 + $0x30] sm:$0xff]
    %v2141 = vld [vmem:[#allocation10 + $0x38] sm:$0xff]
    %v2142 = vld [vmem:[#allocation10 + $0x40] sm:$0xff]
    %v2143 = vld [vmem:[#allocation10 + $0x48] sm:$0xff]
    %v2144 = vld [vmem:[#allocation10 + $0x50] sm:$0xff]
    %v2145 = vld [vmem:[#allocation10 + $0x58] sm:$0xff]
    %v2146 = vld [vmem:[#allocation10 + $0x60] sm:$0xff]
    %v2147 = vld [vmem:[#allocation10 + $0x68] sm:$0xff]
    %v2148 = vld [vmem:[#allocation10 + $0x70] sm:$0xff]
    %v2149 = vld [vmem:[#allocation10 + $0x78] sm:$0xff]
    %v2150 = vld [vmem:[%s8] sm:$0x1]
    %v2152 = vlaneseq
    %v2153 = vshrl.u32 %v2152, 7
    %v2154 = vsub.s32 0, %v2153
    %v2155 = vrot.slane %v2150, %v2154
    %2157 = vmatprep.subr.mxu0 0.0
    %v2158 = vand.u32 %v2134, 4294901760
    %2159 = vmatpush1.msra.mxu0 %v2158
    %2160 = vmatprep.subr.mxu0 0.0
    %v2161 = vand.u32 %v2135, 4294901760
    %2162 = vmatpush1.msra.mxu0 %v2161
    %2163 = vmatprep.subr.mxu0 0.0
    %v2164 = vand.u32 %v2136, 4294901760
    %2165 = vmatpush1.msra.mxu0 %v2164
    %2166 = vmatprep.subr.mxu0 0.0
    %v2167 = vand.u32 %v2137, 4294901760
    %2168 = vmatpush1.msra.mxu0 %v2167
    %2169 = vmatprep.subr.mxu0 0.0
    %v2170 = vand.u32 %v2138, 4294901760
    %2171 = vmatpush1.msra.mxu0 %v2170
    %2172 = vmatprep.subr.mxu0 0.0
    %v2173 = vand.u32 %v2139, 4294901760
    %2174 = vmatpush1.msra.mxu0 %v2173
    %2175 = vmatprep.subr.mxu0 0.0
    %v2176 = vand.u32 %v2140, 4294901760
    %2177 = vmatpush1.msra.mxu0 %v2176
    %2178 = vmatprep.subr.mxu0 0.0
    %v2179 = vand.u32 %v2141, 4294901760
    %2180 = vmatpush1.msra.mxu0 %v2179
    %2181 = vmatprep.subr.mxu0 0.0
    %v2182 = vand.u32 %v2142, 4294901760
    %2183 = vmatpush1.msra.mxu0 %v2182
    %2184 = vmatprep.subr.mxu0 0.0
    %v2185 = vand.u32 %v2143, 4294901760
    %2186 = vmatpush1.msra.mxu0 %v2185
    %2187 = vmatprep.subr.mxu0 0.0
    %v2188 = vand.u32 %v2144, 4294901760
    %2189 = vmatpush1.msra.mxu0 %v2188
    %2190 = vmatprep.subr.mxu0 0.0
    %v2191 = vand.u32 %v2145, 4294901760
    %2192 = vmatpush1.msra.mxu0 %v2191
    %2193 = vmatprep.subr.mxu0 0.0
    %v2194 = vand.u32 %v2146, 4294901760
    %2195 = vmatpush1.msra.mxu0 %v2194
    %2196 = vmatprep.subr.mxu0 0.0
    %v2197 = vand.u32 %v2147, 4294901760
    %2198 = vmatpush1.msra.mxu0 %v2197
    %2199 = vmatprep.subr.mxu0 0.0
    %v2200 = vand.u32 %v2148, 4294901760
    %2201 = vmatpush1.msra.mxu0 %v2200
    %2202 = vmatprep.subr.mxu0 0.0
    %v2203 = vand.u32 %v2149, 4294901760
    %2204 = vmatpush1.msra.mxu0 %v2203
    %2205 = vmatprep.subr.mxu0 0.0
    %2206 = vmatpush1.msra.mxu0 0.0
    %2207 = vmatprep.subr.mxu0 0.0
    %2208 = vmatpush1.msra.mxu0 0.0
    %2209 = vmatprep.subr.mxu0 0.0
    %2210 = vmatpush1.msra.mxu0 0.0
    %2211 = vmatprep.subr.mxu0 0.0
    %2212 = vmatpush1.msra.mxu0 0.0
    %2213 = vmatprep.subr.mxu0 0.0
    %2214 = vmatpush1.msra.mxu0 0.0
    %2215 = vmatprep.subr.mxu0 0.0
    %2216 = vmatpush1.msra.mxu0 0.0
    %2217 = vmatprep.subr.mxu0 0.0
    %2218 = vmatpush1.msra.mxu0 0.0
    %2219 = vmatprep.subr.mxu0 0.0
    %2220 = vmatpush1.msra.mxu0 0.0
    %2221 = vmatprep.subr.mxu0 0.0
    %2222 = vmatpush1.msra.mxu0 0.0
    %2223 = vmatprep.subr.mxu0 0.0
    %2224 = vmatpush1.msra.mxu0 0.0
    %2225 = vmatprep.subr.mxu0 0.0
    %2226 = vmatpush1.msra.mxu0 0.0
    %2227 = vmatprep.subr.mxu0 0.0
    %2228 = vmatpush1.msra.mxu0 0.0
    %2229 = vmatprep.subr.mxu0 0.0
    %2230 = vmatpush1.msra.mxu0 0.0
    %2231 = vmatprep.subr.mxu0 0.0
    %2232 = vmatpush1.msra.mxu0 0.0
    %2233 = vmatprep.subr.mxu0 0.0
    %2234 = vmatpush1.msra.mxu0 0.0
    %2235 = vmatprep.subr.mxu0 0.0
    %2236 = vmatpush1.msra.mxu0 0.0
    %2237 = vmatprep.mubr.f32.mxu0 0.0
    %v2238 = vand.u32 %v2133, 4294901760
    %v2239 = vsub.f32 %v2133, %v2238
    %v2240 = vand.u32 %v2239, 4294901760
    %v2241 = vsub.f32 %v2239, %v2240
    %v2242 = vand.u32 %v2241, 4294901760
    %2243 = vmatmul.mubr.f32.gmra.mrb[0].mxu0 %v2242
    %v2244 = vpop.f32.mrb[0].mxu0
    %v2245 = vadd.f32 %v2155, %v2244
    %v2246 = vpop.f32.mrb[0].mxu0
    %2247 = vdwg.mxu0
    %2248 = vmatprep.subr.mxu0 0.0
    %v2249 = vand.u32 %v2134, 4294901760
    %v2250 = vsub.f32 %v2134, %v2249
    %v2251 = vand.u32 %v2250, 4294901760
    %v2252 = vsub.f32 %v2250, %v2251
    %v2253 = vand.u32 %v2252, 4294901760
    %2254 = vmatpush1.msra.mxu0 %v2253
    %2255 = vmatprep.subr.mxu0 0.0
    %v2256 = vand.u32 %v2135, 4294901760
    %v2257 = vsub.f32 %v2135, %v2256
    %v2258 = vand.u32 %v2257, 4294901760
    %v2259 = vsub.f32 %v2257, %v2258
    %v2260 = vand.u32 %v2259, 4294901760
    %2261 = vmatpush1.msra.mxu0 %v2260
    %2262 = vmatprep.subr.mxu0 0.0
    %v2263 = vand.u32 %v2136, 4294901760
    %v2264 = vsub.f32 %v2136, %v2263
    %v2265 = vand.u32 %v2264, 4294901760
    %v2266 = vsub.f32 %v2264, %v2265
    %v2267 = vand.u32 %v2266, 4294901760
    %2268 = vmatpush1.msra.mxu0 %v2267
    %2269 = vmatprep.subr.mxu0 0.0
    %v2270 = vand.u32 %v2137, 4294901760
    %v2271 = vsub.f32 %v2137, %v2270
    %v2272 = vand.u32 %v2271, 4294901760
    %v2273 = vsub.f32 %v2271, %v2272
    %v2274 = vand.u32 %v2273, 4294901760
    %2275 = vmatpush1.msra.mxu0 %v2274
    %2276 = vmatprep.subr.mxu0 0.0
    %v2277 = vand.u32 %v2138, 4294901760
    %v2278 = vsub.f32 %v2138, %v2277
    %v2279 = vand.u32 %v2278, 4294901760
    %v2280 = vsub.f32 %v2278, %v2279
    %v2281 = vand.u32 %v2280, 4294901760
    %2282 = vmatpush1.msra.mxu0 %v2281
    %2283 = vmatprep.subr.mxu0 0.0
    %v2284 = vand.u32 %v2139, 4294901760
    %v2285 = vsub.f32 %v2139, %v2284
    %v2286 = vand.u32 %v2285, 4294901760
    %v2287 = vsub.f32 %v2285, %v2286
    %v2288 = vand.u32 %v2287, 4294901760
    %2289 = vmatpush1.msra.mxu0 %v2288
    %2290 = vmatprep.subr.mxu0 0.0
    %v2291 = vand.u32 %v2140, 4294901760
    %v2292 = vsub.f32 %v2140, %v2291
    %v2293 = vand.u32 %v2292, 4294901760
    %v2294 = vsub.f32 %v2292, %v2293
    %v2295 = vand.u32 %v2294, 4294901760
    %2296 = vmatpush1.msra.mxu0 %v2295
    %2297 = vmatprep.subr.mxu0 0.0
    %v2298 = vand.u32 %v2141, 4294901760
    %v2299 = vsub.f32 %v2141, %v2298
    %v2300 = vand.u32 %v2299, 4294901760
    %v2301 = vsub.f32 %v2299, %v2300
    %v2302 = vand.u32 %v2301, 4294901760
    %2303 = vmatpush1.msra.mxu0 %v2302
    %2304 = vmatprep.subr.mxu0 0.0
    %v2305 = vand.u32 %v2142, 4294901760
    %v2306 = vsub.f32 %v2142, %v2305
    %v2307 = vand.u32 %v2306, 4294901760
    %v2308 = vsub.f32 %v2306, %v2307
    %v2309 = vand.u32 %v2308, 4294901760
    %2310 = vmatpush1.msra.mxu0 %v2309
    %2311 = vmatprep.subr.mxu0 0.0
    %v2312 = vand.u32 %v2143, 4294901760
    %v2313 = vsub.f32 %v2143, %v2312
    %v2314 = vand.u32 %v2313, 4294901760
    %v2315 = vsub.f32 %v2313, %v2314
    %v2316 = vand.u32 %v2315, 4294901760
    %2317 = vmatpush1.msra.mxu0 %v2316
    %2318 = vmatprep.subr.mxu0 0.0
    %v2319 = vand.u32 %v2144, 4294901760
    %v2320 = vsub.f32 %v2144, %v2319
    %v2321 = vand.u32 %v2320, 4294901760
    %v2322 = vsub.f32 %v2320, %v2321
    %v2323 = vand.u32 %v2322, 4294901760
    %2324 = vmatpush1.msra.mxu0 %v2323
    %2325 = vmatprep.subr.mxu0 0.0
    %v2326 = vand.u32 %v2145, 4294901760
    %v2327 = vsub.f32 %v2145, %v2326
    %v2328 = vand.u32 %v2327, 4294901760
    %v2329 = vsub.f32 %v2327, %v2328
    %v2330 = vand.u32 %v2329, 4294901760
    %2331 = vmatpush1.msra.mxu0 %v2330
    %2332 = vmatprep.subr.mxu0 0.0
    %v2333 = vand.u32 %v2146, 4294901760
    %v2334 = vsub.f32 %v2146, %v2333
    %v2335 = vand.u32 %v2334, 4294901760
    %v2336 = vsub.f32 %v2334, %v2335
    %v2337 = vand.u32 %v2336, 4294901760
    %2338 = vmatpush1.msra.mxu0 %v2337
    %2339 = vmatprep.subr.mxu0 0.0
    %v2340 = vand.u32 %v2147, 4294901760
    %v2341 = vsub.f32 %v2147, %v2340
    %v2342 = vand.u32 %v2341, 4294901760
    %v2343 = vsub.f32 %v2341, %v2342
    %v2344 = vand.u32 %v2343, 4294901760
    %2345 = vmatpush1.msra.mxu0 %v2344
    %2346 = vmatprep.subr.mxu0 0.0
    %v2347 = vand.u32 %v2148, 4294901760
    %v2348 = vsub.f32 %v2148, %v2347
    %v2349 = vand.u32 %v2348, 4294901760
    %v2350 = vsub.f32 %v2348, %v2349
    %v2351 = vand.u32 %v2350, 4294901760
    %2352 = vmatpush1.msra.mxu0 %v2351
    %2353 = vmatprep.subr.mxu0 0.0
    %v2354 = vand.u32 %v2149, 4294901760
    %v2355 = vsub.f32 %v2149, %v2354
    %v2356 = vand.u32 %v2355, 4294901760
    %v2357 = vsub.f32 %v2355, %v2356
    %v2358 = vand.u32 %v2357, 4294901760
    %2359 = vmatpush1.msra.mxu0 %v2358
    %2360 = vmatprep.subr.mxu0 0.0
    %2361 = vmatpush1.msra.mxu0 0.0
    %2362 = vmatprep.subr.mxu0 0.0
    %2363 = vmatpush1.msra.mxu0 0.0
    %2364 = vmatprep.subr.mxu0 0.0
    %2365 = vmatpush1.msra.mxu0 0.0
    %2366 = vmatprep.subr.mxu0 0.0
    %2367 = vmatpush1.msra.mxu0 0.0
    %2368 = vmatprep.subr.mxu0 0.0
    %2369 = vmatpush1.msra.mxu0 0.0
    %2370 = vmatprep.subr.mxu0 0.0
    %2371 = vmatpush1.msra.mxu0 0.0
    %2372 = vmatprep.subr.mxu0 0.0
    %2373 = vmatpush1.msra.mxu0 0.0
    %2374 = vmatprep.subr.mxu0 0.0
    %2375 = vmatpush1.msra.mxu0 0.0
    %2376 = vmatprep.subr.mxu0 0.0
    %2377 = vmatpush1.msra.mxu0 0.0
    %2378 = vmatprep.subr.mxu0 0.0
    %2379 = vmatpush1.msra.mxu0 0.0
    %2380 = vmatprep.subr.mxu0 0.0
    %2381 = vmatpush1.msra.mxu0 0.0
    %2382 = vmatprep.subr.mxu0 0.0
    %2383 = vmatpush1.msra.mxu0 0.0
    %2384 = vmatprep.subr.mxu0 0.0
    %2385 = vmatpush1.msra.mxu0 0.0
    %2386 = vmatprep.subr.mxu0 0.0
    %2387 = vmatpush1.msra.mxu0 0.0
    %2388 = vmatprep.subr.mxu0 0.0
    %2389 = vmatpush1.msra.mxu0 0.0
    %2390 = vmatprep.subr.mxu0 0.0
    %2391 = vmatpush1.msra.mxu0 0.0
    %2392 = vmatprep.mubr.f32.mxu0 0.0
    %v2393 = vand.u32 %v2133, 4294901760
    %2394 = vmatmul.mubr.f32.gmra.mrb[0].mxu0 %v2393
    %v2395 = vpop.f32.mrb[0].mxu0
    %v2396 = vadd.f32 %v2245, %v2395
    %v2397 = vpop.f32.mrb[0].mxu0
    %2398 = vdwg.mxu0
    %2399 = vmatprep.subr.mxu0 0.0
    %v2400 = vand.u32 %v2134, 4294901760
    %v2401 = vsub.f32 %v2134, %v2400
    %2402 = vmatpush1.msra.mxu0 %v2401
    %2403 = vmatprep.subr.mxu0 0.0
    %v2404 = vand.u32 %v2135, 4294901760
    %v2405 = vsub.f32 %v2135, %v2404
    %2406 = vmatpush1.msra.mxu0 %v2405
    %2407 = vmatprep.subr.mxu0 0.0
    %v2408 = vand.u32 %v2136, 4294901760
    %v2409 = vsub.f32 %v2136, %v2408
    %2410 = vmatpush1.msra.mxu0 %v2409
    %2411 = vmatprep.subr.mxu0 0.0
    %v2412 = vand.u32 %v2137, 4294901760
    %v2413 = vsub.f32 %v2137, %v2412
    %2414 = vmatpush1.msra.mxu0 %v2413
    %2415 = vmatprep.subr.mxu0 0.0
    %v2416 = vand.u32 %v2138, 4294901760
    %v2417 = vsub.f32 %v2138, %v2416
    %2418 = vmatpush1.msra.mxu0 %v2417
    %2419 = vmatprep.subr.mxu0 0.0
    %v2420 = vand.u32 %v2139, 4294901760
    %v2421 = vsub.f32 %v2139, %v2420
    %2422 = vmatpush1.msra.mxu0 %v2421
    %2423 = vmatprep.subr.mxu0 0.0
    %v2424 = vand.u32 %v2140, 4294901760
    %v2425 = vsub.f32 %v2140, %v2424
    %2426 = vmatpush1.msra.mxu0 %v2425
    %2427 = vmatprep.subr.mxu0 0.0
    %v2428 = vand.u32 %v2141, 4294901760
    %v2429 = vsub.f32 %v2141, %v2428
    %2430 = vmatpush1.msra.mxu0 %v2429
    %2431 = vmatprep.subr.mxu0 0.0
    %v2432 = vand.u32 %v2142, 4294901760
    %v2433 = vsub.f32 %v2142, %v2432
    %2434 = vmatpush1.msra.mxu0 %v2433
    %2435 = vmatprep.subr.mxu0 0.0
    %v2436 = vand.u32 %v2143, 4294901760
    %v2437 = vsub.f32 %v2143, %v2436
    %2438 = vmatpush1.msra.mxu0 %v2437
    %2439 = vmatprep.subr.mxu0 0.0
    %v2440 = vand.u32 %v2144, 4294901760
    %v2441 = vsub.f32 %v2144, %v2440
    %2442 = vmatpush1.msra.mxu0 %v2441
    %2443 = vmatprep.subr.mxu0 0.0
    %v2444 = vand.u32 %v2145, 4294901760
    %v2445 = vsub.f32 %v2145, %v2444
    %2446 = vmatpush1.msra.mxu0 %v2445
    %2447 = vmatprep.subr.mxu0 0.0
    %v2448 = vand.u32 %v2146, 4294901760
    %v2449 = vsub.f32 %v2146, %v2448
    %2450 = vmatpush1.msra.mxu0 %v2449
    %2451 = vmatprep.subr.mxu0 0.0
    %v2452 = vand.u32 %v2147, 4294901760
    %v2453 = vsub.f32 %v2147, %v2452
    %2454 = vmatpush1.msra.mxu0 %v2453
    %2455 = vmatprep.subr.mxu0 0.0
    %v2456 = vand.u32 %v2148, 4294901760
    %v2457 = vsub.f32 %v2148, %v2456
    %2458 = vmatpush1.msra.mxu0 %v2457
    %2459 = vmatprep.subr.mxu0 0.0
    %v2460 = vand.u32 %v2149, 4294901760
    %v2461 = vsub.f32 %v2149, %v2460
    %2462 = vmatpush1.msra.mxu0 %v2461
    %2463 = vmatprep.subr.mxu0 0.0
    %2464 = vmatpush1.msra.mxu0 0.0
    %2465 = vmatprep.subr.mxu0 0.0
    %2466 = vmatpush1.msra.mxu0 0.0
    %2467 = vmatprep.subr.mxu0 0.0
    %2468 = vmatpush1.msra.mxu0 0.0
    %2469 = vmatprep.subr.mxu0 0.0
    %2470 = vmatpush1.msra.mxu0 0.0
    %2471 = vmatprep.subr.mxu0 0.0
    %2472 = vmatpush1.msra.mxu0 0.0
    %2473 = vmatprep.subr.mxu0 0.0
    %2474 = vmatpush1.msra.mxu0 0.0
    %2475 = vmatprep.subr.mxu0 0.0
    %2476 = vmatpush1.msra.mxu0 0.0
    %2477 = vmatprep.subr.mxu0 0.0
    %2478 = vmatpush1.msra.mxu0 0.0
    %2479 = vmatprep.subr.mxu0 0.0
    %2480 = vmatpush1.msra.mxu0 0.0
    %2481 = vmatprep.subr.mxu0 0.0
    %2482 = vmatpush1.msra.mxu0 0.0
    %2483 = vmatprep.subr.mxu0 0.0
    %2484 = vmatpush1.msra.mxu0 0.0
    %2485 = vmatprep.subr.mxu0 0.0
    %2486 = vmatpush1.msra.mxu0 0.0
    %2487 = vmatprep.subr.mxu0 0.0
    %2488 = vmatpush1.msra.mxu0 0.0
    %2489 = vmatprep.subr.mxu0 0.0
    %2490 = vmatpush1.msra.mxu0 0.0
    %2491 = vmatprep.subr.mxu0 0.0
    %2492 = vmatpush1.msra.mxu0 0.0
    %2493 = vmatprep.subr.mxu0 0.0
    %2494 = vmatpush1.msra.mxu0 0.0
    %2495 = vmatprep.mubr.f32.mxu0 0.0
    %v2496 = vand.u32 %v2133, 4294901760
    %v2497 = vsub.f32 %v2133, %v2496
    %2498 = vmatmul.mubr.f32.gmra.mrb[0].mxu0 %v2497
    %v2499 = vpop.f32.mrb[0].mxu0
    %v2500 = vadd.f32 %v2396, %v2499
    %v2501 = vpop.f32.mrb[0].mxu0
    %2502 = vdwg.mxu0
    %2503 = vmatprep.subr.mxu0 0.0
    %v2504 = vand.u32 %v2134, 4294901760
    %2505 = vmatpush1.msra.mxu0 %v2504
    %2506 = vmatprep.subr.mxu0 0.0
    %v2507 = vand.u32 %v2135, 4294901760
    %2508 = vmatpush1.msra.mxu0 %v2507
    %2509 = vmatprep.subr.mxu0 0.0
    %v2510 = vand.u32 %v2136, 4294901760
    %2511 = vmatpush1.msra.mxu0 %v2510
    %2512 = vmatprep.subr.mxu0 0.0
    %v2513 = vand.u32 %v2137, 4294901760
    %2514 = vmatpush1.msra.mxu0 %v2513
    %2515 = vmatprep.subr.mxu0 0.0
    %v2516 = vand.u32 %v2138, 4294901760
    %2517 = vmatpush1.msra.mxu0 %v2516
    %2518 = vmatprep.subr.mxu0 0.0
    %v2519 = vand.u32 %v2139, 4294901760
    %2520 = vmatpush1.msra.mxu0 %v2519
    %2521 = vmatprep.subr.mxu0 0.0
    %v2522 = vand.u32 %v2140, 4294901760
    %2523 = vmatpush1.msra.mxu0 %v2522
    %2524 = vmatprep.subr.mxu0 0.0
    %v2525 = vand.u32 %v2141, 4294901760
    %2526 = vmatpush1.msra.mxu0 %v2525
    %2527 = vmatprep.subr.mxu0 0.0
    %v2528 = vand.u32 %v2142, 4294901760
    %2529 = vmatpush1.msra.mxu0 %v2528
    %2530 = vmatprep.subr.mxu0 0.0
    %v2531 = vand.u32 %v2143, 4294901760
    %2532 = vmatpush1.msra.mxu0 %v2531
    %2533 = vmatprep.subr.mxu0 0.0
    %v2534 = vand.u32 %v2144, 4294901760
    %2535 = vmatpush1.msra.mxu0 %v2534
    %2536 = vmatprep.subr.mxu0 0.0
    %v2537 = vand.u32 %v2145, 4294901760
    %2538 = vmatpush1.msra.mxu0 %v2537
    %2539 = vmatprep.subr.mxu0 0.0
    %v2540 = vand.u32 %v2146, 4294901760
    %2541 = vmatpush1.msra.mxu0 %v2540
    %2542 = vmatprep.subr.mxu0 0.0
    %v2543 = vand.u32 %v2147, 4294901760
    %2544 = vmatpush1.msra.mxu0 %v2543
    %2545 = vmatprep.subr.mxu0 0.0
    %v2546 = vand.u32 %v2148, 4294901760
    %2547 = vmatpush1.msra.mxu0 %v2546
    %2548 = vmatprep.subr.mxu0 0.0
    %v2549 = vand.u32 %v2149, 4294901760
    %2550 = vmatpush1.msra.mxu0 %v2549
    %2551 = vmatprep.subr.mxu0 0.0
    %2552 = vmatpush1.msra.mxu0 0.0
    %2553 = vmatprep.subr.mxu0 0.0
    %2554 = vmatpush1.msra.mxu0 0.0
    %2555 = vmatprep.subr.mxu0 0.0
    %2556 = vmatpush1.msra.mxu0 0.0
    %2557 = vmatprep.subr.mxu0 0.0
    %2558 = vmatpush1.msra.mxu0 0.0
    %2559 = vmatprep.subr.mxu0 0.0
    %2560 = vmatpush1.msra.mxu0 0.0
    %2561 = vmatprep.subr.mxu0 0.0
    %2562 = vmatpush1.msra.mxu0 0.0
    %2563 = vmatprep.subr.mxu0 0.0
    %2564 = vmatpush1.msra.mxu0 0.0
    %2565 = vmatprep.subr.mxu0 0.0
    %2566 = vmatpush1.msra.mxu0 0.0
    %2567 = vmatprep.subr.mxu0 0.0
    %2568 = vmatpush1.msra.mxu0 0.0
    %2569 = vmatprep.subr.mxu0 0.0
    %2570 = vmatpush1.msra.mxu0 0.0
    %2571 = vmatprep.subr.mxu0 0.0
    %2572 = vmatpush1.msra.mxu0 0.0
    %2573 = vmatprep.subr.mxu0 0.0
    %2574 = vmatpush1.msra.mxu0 0.0
    %2575 = vmatprep.subr.mxu0 0.0
    %2576 = vmatpush1.msra.mxu0 0.0
    %2577 = vmatprep.subr.mxu0 0.0
    %2578 = vmatpush1.msra.mxu0 0.0
    %2579 = vmatprep.subr.mxu0 0.0
    %2580 = vmatpush1.msra.mxu0 0.0
    %2581 = vmatprep.subr.mxu0 0.0
    %2582 = vmatpush1.msra.mxu0 0.0
    %2583 = vmatprep.mubr.f32.mxu0 0.0
    %v2584 = vand.u32 %v2133, 4294901760
    %v2585 = vsub.f32 %v2133, %v2584
    %v2586 = vand.u32 %v2585, 4294901760
    %2587 = vmatmul.mubr.f32.gmra.mrb[0].mxu0 %v2586
    %v2588 = vpop.f32.mrb[0].mxu0
    %v2589 = vadd.f32 %v2500, %v2588
    %v2590 = vpop.f32.mrb[0].mxu0
    %2591 = vdwg.mxu0
    %2592 = vmatprep.subr.mxu0 0.0
    %v2593 = vand.u32 %v2134, 4294901760
    %v2594 = vsub.f32 %v2134, %v2593
    %v2595 = vand.u32 %v2594, 4294901760
    %2596 = vmatpush1.msra.mxu0 %v2595
    %2597 = vmatprep.subr.mxu0 0.0
    %v2598 = vand.u32 %v2135, 4294901760
    %v2599 = vsub.f32 %v2135, %v2598
    %v2600 = vand.u32 %v2599, 4294901760
    %2601 = vmatpush1.msra.mxu0 %v2600
    %2602 = vmatprep.subr.mxu0 0.0
    %v2603 = vand.u32 %v2136, 4294901760
    %v2604 = vsub.f32 %v2136, %v2603
    %v2605 = vand.u32 %v2604, 4294901760
    %2606 = vmatpush1.msra.mxu0 %v2605
    %2607 = vmatprep.subr.mxu0 0.0
    %v2608 = vand.u32 %v2137, 4294901760
    %v2609 = vsub.f32 %v2137, %v2608
    %v2610 = vand.u32 %v2609, 4294901760
    %2611 = vmatpush1.msra.mxu0 %v2610
    %2612 = vmatprep.subr.mxu0 0.0
    %v2613 = vand.u32 %v2138, 4294901760
    %v2614 = vsub.f32 %v2138, %v2613
    %v2615 = vand.u32 %v2614, 4294901760
    %2616 = vmatpush1.msra.mxu0 %v2615
    %2617 = vmatprep.subr.mxu0 0.0
    %v2618 = vand.u32 %v2139, 4294901760
    %v2619 = vsub.f32 %v2139, %v2618
    %v2620 = vand.u32 %v2619, 4294901760
    %2621 = vmatpush1.msra.mxu0 %v2620
    %2622 = vmatprep.subr.mxu0 0.0
    %v2623 = vand.u32 %v2140, 4294901760
    %v2624 = vsub.f32 %v2140, %v2623
    %v2625 = vand.u32 %v2624, 4294901760
    %2626 = vmatpush1.msra.mxu0 %v2625
    %2627 = vmatprep.subr.mxu0 0.0
    %v2628 = vand.u32 %v2141, 4294901760
    %v2629 = vsub.f32 %v2141, %v2628
    %v2630 = vand.u32 %v2629, 4294901760
    %2631 = vmatpush1.msra.mxu0 %v2630
    %2632 = vmatprep.subr.mxu0 0.0
    %v2633 = vand.u32 %v2142, 4294901760
    %v2634 = vsub.f32 %v2142, %v2633
    %v2635 = vand.u32 %v2634, 4294901760
    %2636 = vmatpush1.msra.mxu0 %v2635
    %2637 = vmatprep.subr.mxu0 0.0
    %v2638 = vand.u32 %v2143, 4294901760
    %v2639 = vsub.f32 %v2143, %v2638
    %v2640 = vand.u32 %v2639, 4294901760
    %2641 = vmatpush1.msra.mxu0 %v2640
    %2642 = vmatprep.subr.mxu0 0.0
    %v2643 = vand.u32 %v2144, 4294901760
    %v2644 = vsub.f32 %v2144, %v2643
    %v2645 = vand.u32 %v2644, 4294901760
    %2646 = vmatpush1.msra.mxu0 %v2645
    %2647 = vmatprep.subr.mxu0 0.0
    %v2648 = vand.u32 %v2145, 4294901760
    %v2649 = vsub.f32 %v2145, %v2648
    %v2650 = vand.u32 %v2649, 4294901760
    %2651 = vmatpush1.msra.mxu0 %v2650
    %2652 = vmatprep.subr.mxu0 0.0
    %v2653 = vand.u32 %v2146, 4294901760
    %v2654 = vsub.f32 %v2146, %v2653
    %v2655 = vand.u32 %v2654, 4294901760
    %2656 = vmatpush1.msra.mxu0 %v2655
    %2657 = vmatprep.subr.mxu0 0.0
    %v2658 = vand.u32 %v2147, 4294901760
    %v2659 = vsub.f32 %v2147, %v2658
    %v2660 = vand.u32 %v2659, 4294901760
    %2661 = vmatpush1.msra.mxu0 %v2660
    %2662 = vmatprep.subr.mxu0 0.0
    %v2663 = vand.u32 %v2148, 4294901760
    %v2664 = vsub.f32 %v2148, %v2663
    %v2665 = vand.u32 %v2664, 4294901760
    %2666 = vmatpush1.msra.mxu0 %v2665
    %2667 = vmatprep.subr.mxu0 0.0
    %v2668 = vand.u32 %v2149, 4294901760
    %v2669 = vsub.f32 %v2149, %v2668
    %v2670 = vand.u32 %v2669, 4294901760
    %2671 = vmatpush1.msra.mxu0 %v2670
    %2672 = vmatprep.subr.mxu0 0.0
    %2673 = vmatpush1.msra.mxu0 0.0
    %2674 = vmatprep.subr.mxu0 0.0
    %2675 = vmatpush1.msra.mxu0 0.0
    %2676 = vmatprep.subr.mxu0 0.0
    %2677 = vmatpush1.msra.mxu0 0.0
    %2678 = vmatprep.subr.mxu0 0.0
    %2679 = vmatpush1.msra.mxu0 0.0
    %2680 = vmatprep.subr.mxu0 0.0
    %2681 = vmatpush1.msra.mxu0 0.0
    %2682 = vmatprep.subr.mxu0 0.0
    %2683 = vmatpush1.msra.mxu0 0.0
    %2684 = vmatprep.subr.mxu0 0.0
    %2685 = vmatpush1.msra.mxu0 0.0
    %2686 = vmatprep.subr.mxu0 0.0
    %2687 = vmatpush1.msra.mxu0 0.0
    %2688 = vmatprep.subr.mxu0 0.0
    %2689 = vmatpush1.msra.mxu0 0.0
    %2690 = vmatprep.subr.mxu0 0.0
    %2691 = vmatpush1.msra.mxu0 0.0
    %2692 = vmatprep.subr.mxu0 0.0
    %2693 = vmatpush1.msra.mxu0 0.0
    %2694 = vmatprep.subr.mxu0 0.0
    %2695 = vmatpush1.msra.mxu0 0.0
    %2696 = vmatprep.subr.mxu0 0.0
    %2697 = vmatpush1.msra.mxu0 0.0
    %2698 = vmatprep.subr.mxu0 0.0
    %2699 = vmatpush1.msra.mxu0 0.0
    %2700 = vmatprep.subr.mxu0 0.0
    %2701 = vmatpush1.msra.mxu0 0.0
    %2702 = vmatprep.subr.mxu0 0.0
    %2703 = vmatpush1.msra.mxu0 0.0
    %2704 = vmatprep.mubr.f32.mxu0 0.0
    %v2705 = vand.u32 %v2133, 4294901760
    %2706 = vmatmul.mubr.f32.gmra.mrb[0].mxu0 %v2705
    %v2707 = vpop.f32.mrb[0].mxu0
    %v2708 = vadd.f32 %v2589, %v2707
    %v2709 = vpop.f32.mrb[0].mxu0
    %2710 = vdwg.mxu0
    %2711 = vmatprep.subr.mxu0 0.0
    %v2712 = vand.u32 %v2134, 4294901760
    %2713 = vmatpush1.msra.mxu0 %v2712
    %2714 = vmatprep.subr.mxu0 0.0
    %v2715 = vand.u32 %v2135, 4294901760
    %2716 = vmatpush1.msra.mxu0 %v2715
    %2717 = vmatprep.subr.mxu0 0.0
    %v2718 = vand.u32 %v2136, 4294901760
    %2719 = vmatpush1.msra.mxu0 %v2718
    %2720 = vmatprep.subr.mxu0 0.0
    %v2721 = vand.u32 %v2137, 4294901760
    %2722 = vmatpush1.msra.mxu0 %v2721
    %2723 = vmatprep.subr.mxu0 0.0
    %v2724 = vand.u32 %v2138, 4294901760
    %2725 = vmatpush1.msra.mxu0 %v2724
    %2726 = vmatprep.subr.mxu0 0.0
    %v2727 = vand.u32 %v2139, 4294901760
    %2728 = vmatpush1.msra.mxu0 %v2727
    %2729 = vmatprep.subr.mxu0 0.0
    %v2730 = vand.u32 %v2140, 4294901760
    %2731 = vmatpush1.msra.mxu0 %v2730
    %2732 = vmatprep.subr.mxu0 0.0
    %v2733 = vand.u32 %v2141, 4294901760
    %2734 = vmatpush1.msra.mxu0 %v2733
    %2735 = vmatprep.subr.mxu0 0.0
    %v2736 = vand.u32 %v2142, 4294901760
    %2737 = vmatpush1.msra.mxu0 %v2736
    %2738 = vmatprep.subr.mxu0 0.0
    %v2739 = vand.u32 %v2143, 4294901760
    %2740 = vmatpush1.msra.mxu0 %v2739
    %2741 = vmatprep.subr.mxu0 0.0
    %v2742 = vand.u32 %v2144, 4294901760
    %2743 = vmatpush1.msra.mxu0 %v2742
    %2744 = vmatprep.subr.mxu0 0.0
    %v2745 = vand.u32 %v2145, 4294901760
    %2746 = vmatpush1.msra.mxu0 %v2745
    %2747 = vmatprep.subr.mxu0 0.0
    %v2748 = vand.u32 %v2146, 4294901760
    %2749 = vmatpush1.msra.mxu0 %v2748
    %2750 = vmatprep.subr.mxu0 0.0
    %v2751 = vand.u32 %v2147, 4294901760
    %2752 = vmatpush1.msra.mxu0 %v2751
    %2753 = vmatprep.subr.mxu0 0.0
    %v2754 = vand.u32 %v2148, 4294901760
    %2755 = vmatpush1.msra.mxu0 %v2754
    %2756 = vmatprep.subr.mxu0 0.0
    %v2757 = vand.u32 %v2149, 4294901760
    %2758 = vmatpush1.msra.mxu0 %v2757
    %2759 = vmatprep.subr.mxu0 0.0
    %2760 = vmatpush1.msra.mxu0 0.0
    %2761 = vmatprep.subr.mxu0 0.0
    %2762 = vmatpush1.msra.mxu0 0.0
    %2763 = vmatprep.subr.mxu0 0.0
    %2764 = vmatpush1.msra.mxu0 0.0
    %2765 = vmatprep.subr.mxu0 0.0
    %2766 = vmatpush1.msra.mxu0 0.0
    %2767 = vmatprep.subr.mxu0 0.0
    %2768 = vmatpush1.msra.mxu0 0.0
    %2769 = vmatprep.subr.mxu0 0.0
    %2770 = vmatpush1.msra.mxu0 0.0
    %2771 = vmatprep.subr.mxu0 0.0
    %2772 = vmatpush1.msra.mxu0 0.0
    %2773 = vmatprep.subr.mxu0 0.0
    %2774 = vmatpush1.msra.mxu0 0.0
    %2775 = vmatprep.subr.mxu0 0.0
    %2776 = vmatpush1.msra.mxu0 0.0
    %2777 = vmatprep.subr.mxu0 0.0
    %2778 = vmatpush1.msra.mxu0 0.0
    %2779 = vmatprep.subr.mxu0 0.0
    %2780 = vmatpush1.msra.mxu0 0.0
    %2781 = vmatprep.subr.mxu0 0.0
    %2782 = vmatpush1.msra.mxu0 0.0
    %2783 = vmatprep.subr.mxu0 0.0
    %2784 = vmatpush1.msra.mxu0 0.0
    %2785 = vmatprep.subr.mxu0 0.0
    %2786 = vmatpush1.msra.mxu0 0.0
    %2787 = vmatprep.subr.mxu0 0.0
    %2788 = vmatpush1.msra.mxu0 0.0
    %2789 = vmatprep.subr.mxu0 0.0
    %2790 = vmatpush1.msra.mxu0 0.0
    %2791 = vmatprep.mubr.f32.mxu0 0.0
    %v2792 = vand.u32 %v2133, 4294901760
    %2793 = vmatmul.mubr.f32.gmra.mrb[0].mxu0 %v2792
    %v2794 = vpop.f32.mrb[0].mxu0
    %v2795 = vadd.f32 %v2708, %v2794
    %v2796 = vpop.f32.mrb[0].mxu0
    %2797 = vdwg.mxu0
    %v2798 = vmax.f32 %v2795, 0.0
    %v2799 = vld [vmem:[#allocation11] sm:$0xff]
    %v2800 = vld [vmem:[#allocation11 + $0x8] sm:$0xff]
    %v2801 = vld [vmem:[#allocation11 + $0x10] sm:$0xff]
    %v2802 = vld [vmem:[#allocation11 + $0x18] sm:$0xff]
    %v2803 = vld [vmem:[#allocation11 + $0x20] sm:$0xff]
    %v2804 = vld [vmem:[#allocation11 + $0x28] sm:$0xff]
    %v2805 = vld [vmem:[#allocation11 + $0x30] sm:$0xff]
    %v2806 = vld [vmem:[#allocation11 + $0x38] sm:$0xff]
    %v2807 = vld [vmem:[#allocation11 + $0x40] sm:$0xff]
    %v2808 = vld [vmem:[#allocation11 + $0x48] sm:$0xff]
    %v2809 = vld [vmem:[#allocation11 + $0x50] sm:$0xff]
    %v2810 = vld [vmem:[#allocation11 + $0x58] sm:$0xff]
    %v2811 = vld [vmem:[#allocation11 + $0x60] sm:$0xff]
    %v2812 = vld [vmem:[#allocation11 + $0x68] sm:$0xff]
    %v2813 = vld [vmem:[#allocation11 + $0x70] sm:$0xff]
    %v2814 = vld [vmem:[#allocation11 + $0x78] sm:$0xff]
    %v2815 = vld [vmem:[%s10] sm:$0x1]
    %v2817 = vlaneseq
    %v2818 = vshrl.u32 %v2817, 7
    %v2819 = vsub.s32 0, %v2818
    %v2820 = vrot.slane %v2815, %v2819
    %2822 = vmatprep.subr.mxu0 0.0
    %v2823 = vand.u32 %v2799, 4294901760
    %2824 = vmatpush1.msra.mxu0 %v2823
    %2825 = vmatprep.subr.mxu0 0.0
    %v2826 = vand.u32 %v2800, 4294901760
    %2827 = vmatpush1.msra.mxu0 %v2826
    %2828 = vmatprep.subr.mxu0 0.0
    %v2829 = vand.u32 %v2801, 4294901760
    %2830 = vmatpush1.msra.mxu0 %v2829
    %2831 = vmatprep.subr.mxu0 0.0
    %v2832 = vand.u32 %v2802, 4294901760
    %2833 = vmatpush1.msra.mxu0 %v2832
    %2834 = vmatprep.subr.mxu0 0.0
    %v2835 = vand.u32 %v2803, 4294901760
    %2836 = vmatpush1.msra.mxu0 %v2835
    %2837 = vmatprep.subr.mxu0 0.0
    %v2838 = vand.u32 %v2804, 4294901760
    %2839 = vmatpush1.msra.mxu0 %v2838
    %2840 = vmatprep.subr.mxu0 0.0
    %v2841 = vand.u32 %v2805, 4294901760
    %2842 = vmatpush1.msra.mxu0 %v2841
    %2843 = vmatprep.subr.mxu0 0.0
    %v2844 = vand.u32 %v2806, 4294901760
    %2845 = vmatpush1.msra.mxu0 %v2844
    %2846 = vmatprep.subr.mxu0 0.0
    %v2847 = vand.u32 %v2807, 4294901760
    %2848 = vmatpush1.msra.mxu0 %v2847
    %2849 = vmatprep.subr.mxu0 0.0
    %v2850 = vand.u32 %v2808, 4294901760
    %2851 = vmatpush1.msra.mxu0 %v2850
    %2852 = vmatprep.subr.mxu0 0.0
    %v2853 = vand.u32 %v2809, 4294901760
    %2854 = vmatpush1.msra.mxu0 %v2853
    %2855 = vmatprep.subr.mxu0 0.0
    %v2856 = vand.u32 %v2810, 4294901760
    %2857 = vmatpush1.msra.mxu0 %v2856
    %2858 = vmatprep.subr.mxu0 0.0
    %v2859 = vand.u32 %v2811, 4294901760
    %2860 = vmatpush1.msra.mxu0 %v2859
    %2861 = vmatprep.subr.mxu0 0.0
    %v2862 = vand.u32 %v2812, 4294901760
    %2863 = vmatpush1.msra.mxu0 %v2862
    %2864 = vmatprep.subr.mxu0 0.0
    %v2865 = vand.u32 %v2813, 4294901760
    %2866 = vmatpush1.msra.mxu0 %v2865
    %2867 = vmatprep.subr.mxu0 0.0
    %v2868 = vand.u32 %v2814, 4294901760
    %2869 = vmatpush1.msra.mxu0 %v2868
    %2870 = vmatprep.subr.mxu0 0.0
    %2871 = vmatpush1.msra.mxu0 0.0
    %2872 = vmatprep.subr.mxu0 0.0
    %2873 = vmatpush1.msra.mxu0 0.0
    %2874 = vmatprep.subr.mxu0 0.0
    %2875 = vmatpush1.msra.mxu0 0.0
    %2876 = vmatprep.subr.mxu0 0.0
    %2877 = vmatpush1.msra.mxu0 0.0
    %2878 = vmatprep.subr.mxu0 0.0
    %2879 = vmatpush1.msra.mxu0 0.0
    %2880 = vmatprep.subr.mxu0 0.0
    %2881 = vmatpush1.msra.mxu0 0.0
    %2882 = vmatprep.subr.mxu0 0.0
    %2883 = vmatpush1.msra.mxu0 0.0
    %2884 = vmatprep.subr.mxu0 0.0
    %2885 = vmatpush1.msra.mxu0 0.0
    %2886 = vmatprep.subr.mxu0 0.0
    %2887 = vmatpush1.msra.mxu0 0.0
    %2888 = vmatprep.subr.mxu0 0.0
    %2889 = vmatpush1.msra.mxu0 0.0
    %2890 = vmatprep.subr.mxu0 0.0
    %2891 = vmatpush1.msra.mxu0 0.0
    %2892 = vmatprep.subr.mxu0 0.0
    %2893 = vmatpush1.msra.mxu0 0.0
    %2894 = vmatprep.subr.mxu0 0.0
    %2895 = vmatpush1.msra.mxu0 0.0
    %2896 = vmatprep.subr.mxu0 0.0
    %2897 = vmatpush1.msra.mxu0 0.0
    %2898 = vmatprep.subr.mxu0 0.0
    %2899 = vmatpush1.msra.mxu0 0.0
    %2900 = vmatprep.subr.mxu0 0.0
    %2901 = vmatpush1.msra.mxu0 0.0
    %2902 = vmatprep.mubr.f32.mxu0 0.0
    %v2903 = vand.u32 %v2798, 4294901760
    %v2904 = vsub.f32 %v2798, %v2903
    %v2905 = vand.u32 %v2904, 4294901760
    %v2906 = vsub.f32 %v2904, %v2905
    %v2907 = vand.u32 %v2906, 4294901760
    %2908 = vmatmul.mubr.f32.gmra.mrb[0].mxu0 %v2907
    %v2909 = vpop.f32.mrb[0].mxu0
    %v2910 = vadd.f32 %v2820, %v2909
    %v2911 = vpop.f32.mrb[0].mxu0
    %2912 = vdwg.mxu0
    %2913 = vmatprep.subr.mxu0 0.0
    %v2914 = vand.u32 %v2799, 4294901760
    %v2915 = vsub.f32 %v2799, %v2914
    %v2916 = vand.u32 %v2915, 4294901760
    %v2917 = vsub.f32 %v2915, %v2916
    %v2918 = vand.u32 %v2917, 4294901760
    %2919 = vmatpush1.msra.mxu0 %v2918
    %2920 = vmatprep.subr.mxu0 0.0
    %v2921 = vand.u32 %v2800, 4294901760
    %v2922 = vsub.f32 %v2800, %v2921
    %v2923 = vand.u32 %v2922, 4294901760
    %v2924 = vsub.f32 %v2922, %v2923
    %v2925 = vand.u32 %v2924, 4294901760
    %2926 = vmatpush1.msra.mxu0 %v2925
    %2927 = vmatprep.subr.mxu0 0.0
    %v2928 = vand.u32 %v2801, 4294901760
    %v2929 = vsub.f32 %v2801, %v2928
    %v2930 = vand.u32 %v2929, 4294901760
    %v2931 = vsub.f32 %v2929, %v2930
    %v2932 = vand.u32 %v2931, 4294901760
    %2933 = vmatpush1.msra.mxu0 %v2932
    %2934 = vmatprep.subr.mxu0 0.0
    %v2935 = vand.u32 %v2802, 4294901760
    %v2936 = vsub.f32 %v2802, %v2935
    %v2937 = vand.u32 %v2936, 4294901760
    %v2938 = vsub.f32 %v2936, %v2937
    %v2939 = vand.u32 %v2938, 4294901760
    %2940 = vmatpush1.msra.mxu0 %v2939
    %2941 = vmatprep.subr.mxu0 0.0
    %v2942 = vand.u32 %v2803, 4294901760
    %v2943 = vsub.f32 %v2803, %v2942
    %v2944 = vand.u32 %v2943, 4294901760
    %v2945 = vsub.f32 %v2943, %v2944
    %v2946 = vand.u32 %v2945, 4294901760
    %2947 = vmatpush1.msra.mxu0 %v2946
    %2948 = vmatprep.subr.mxu0 0.0
    %v2949 = vand.u32 %v2804, 4294901760
    %v2950 = vsub.f32 %v2804, %v2949
    %v2951 = vand.u32 %v2950, 4294901760
    %v2952 = vsub.f32 %v2950, %v2951
    %v2953 = vand.u32 %v2952, 4294901760
    %2954 = vmatpush1.msra.mxu0 %v2953
    %2955 = vmatprep.subr.mxu0 0.0
    %v2956 = vand.u32 %v2805, 4294901760
    %v2957 = vsub.f32 %v2805, %v2956
    %v2958 = vand.u32 %v2957, 4294901760
    %v2959 = vsub.f32 %v2957, %v2958
    %v2960 = vand.u32 %v2959, 4294901760
    %2961 = vmatpush1.msra.mxu0 %v2960
    %2962 = vmatprep.subr.mxu0 0.0
    %v2963 = vand.u32 %v2806, 4294901760
    %v2964 = vsub.f32 %v2806, %v2963
    %v2965 = vand.u32 %v2964, 4294901760
    %v2966 = vsub.f32 %v2964, %v2965
    %v2967 = vand.u32 %v2966, 4294901760
    %2968 = vmatpush1.msra.mxu0 %v2967
    %2969 = vmatprep.subr.mxu0 0.0
    %v2970 = vand.u32 %v2807, 4294901760
    %v2971 = vsub.f32 %v2807, %v2970
    %v2972 = vand.u32 %v2971, 4294901760
    %v2973 = vsub.f32 %v2971, %v2972
    %v2974 = vand.u32 %v2973, 4294901760
    %2975 = vmatpush1.msra.mxu0 %v2974
    %2976 = vmatprep.subr.mxu0 0.0
    %v2977 = vand.u32 %v2808, 4294901760
    %v2978 = vsub.f32 %v2808, %v2977
    %v2979 = vand.u32 %v2978, 4294901760
    %v2980 = vsub.f32 %v2978, %v2979
    %v2981 = vand.u32 %v2980, 4294901760
    %2982 = vmatpush1.msra.mxu0 %v2981
    %2983 = vmatprep.subr.mxu0 0.0
    %v2984 = vand.u32 %v2809, 4294901760
    %v2985 = vsub.f32 %v2809, %v2984
    %v2986 = vand.u32 %v2985, 4294901760
    %v2987 = vsub.f32 %v2985, %v2986
    %v2988 = vand.u32 %v2987, 4294901760
    %2989 = vmatpush1.msra.mxu0 %v2988
    %2990 = vmatprep.subr.mxu0 0.0
    %v2991 = vand.u32 %v2810, 4294901760
    %v2992 = vsub.f32 %v2810, %v2991
    %v2993 = vand.u32 %v2992, 4294901760
    %v2994 = vsub.f32 %v2992, %v2993
    %v2995 = vand.u32 %v2994, 4294901760
    %2996 = vmatpush1.msra.mxu0 %v2995
    %2997 = vmatprep.subr.mxu0 0.0
    %v2998 = vand.u32 %v2811, 4294901760
    %v2999 = vsub.f32 %v2811, %v2998
    %v3000 = vand.u32 %v2999, 4294901760
    %v3001 = vsub.f32 %v2999, %v3000
    %v3002 = vand.u32 %v3001, 4294901760
    %3003 = vmatpush1.msra.mxu0 %v3002
    %3004 = vmatprep.subr.mxu0 0.0
    %v3005 = vand.u32 %v2812, 4294901760
    %v3006 = vsub.f32 %v2812, %v3005
    %v3007 = vand.u32 %v3006, 4294901760
    %v3008 = vsub.f32 %v3006, %v3007
    %v3009 = vand.u32 %v3008, 4294901760
    %3010 = vmatpush1.msra.mxu0 %v3009
    %3011 = vmatprep.subr.mxu0 0.0
    %v3012 = vand.u32 %v2813, 4294901760
    %v3013 = vsub.f32 %v2813, %v3012
    %v3014 = vand.u32 %v3013, 4294901760
    %v3015 = vsub.f32 %v3013, %v3014
    %v3016 = vand.u32 %v3015, 4294901760
    %3017 = vmatpush1.msra.mxu0 %v3016
    %3018 = vmatprep.subr.mxu0 0.0
    %v3019 = vand.u32 %v2814, 4294901760
    %v3020 = vsub.f32 %v2814, %v3019
    %v3021 = vand.u32 %v3020, 4294901760
    %v3022 = vsub.f32 %v3020, %v3021
    %v3023 = vand.u32 %v3022, 4294901760
    %3024 = vmatpush1.msra.mxu0 %v3023
    %3025 = vmatprep.subr.mxu0 0.0
    %3026 = vmatpush1.msra.mxu0 0.0
    %3027 = vmatprep.subr.mxu0 0.0
    %3028 = vmatpush1.msra.mxu0 0.0
    %3029 = vmatprep.subr.mxu0 0.0
    %3030 = vmatpush1.msra.mxu0 0.0
    %3031 = vmatprep.subr.mxu0 0.0
    %3032 = vmatpush1.msra.mxu0 0.0
    %3033 = vmatprep.subr.mxu0 0.0
    %3034 = vmatpush1.msra.mxu0 0.0
    %3035 = vmatprep.subr.mxu0 0.0
    %3036 = vmatpush1.msra.mxu0 0.0
    %3037 = vmatprep.subr.mxu0 0.0
    %3038 = vmatpush1.msra.mxu0 0.0
    %3039 = vmatprep.subr.mxu0 0.0
    %3040 = vmatpush1.msra.mxu0 0.0
    %3041 = vmatprep.subr.mxu0 0.0
    %3042 = vmatpush1.msra.mxu0 0.0
    %3043 = vmatprep.subr.mxu0 0.0
    %3044 = vmatpush1.msra.mxu0 0.0
    %3045 = vmatprep.subr.mxu0 0.0
    %3046 = vmatpush1.msra.mxu0 0.0
    %3047 = vmatprep.subr.mxu0 0.0
    %3048 = vmatpush1.msra.mxu0 0.0
    %3049 = vmatprep.subr.mxu0 0.0
    %3050 = vmatpush1.msra.mxu0 0.0
    %3051 = vmatprep.subr.mxu0 0.0
    %3052 = vmatpush1.msra.mxu0 0.0
    %3053 = vmatprep.subr.mxu0 0.0
    %3054 = vmatpush1.msra.mxu0 0.0
    %3055 = vmatprep.subr.mxu0 0.0
    %3056 = vmatpush1.msra.mxu0 0.0
    %3057 = vmatprep.mubr.f32.mxu0 0.0
    %v3058 = vand.u32 %v2798, 4294901760
    %3059 = vmatmul.mubr.f32.gmra.mrb[0].mxu0 %v3058
    %v3060 = vpop.f32.mrb[0].mxu0
    %v3061 = vadd.f32 %v2910, %v3060
    %v3062 = vpop.f32.mrb[0].mxu0
    %3063 = vdwg.mxu0
    %3064 = vmatprep.subr.mxu0 0.0
    %v3065 = vand.u32 %v2799, 4294901760
    %v3066 = vsub.f32 %v2799, %v3065
    %3067 = vmatpush1.msra.mxu0 %v3066
    %3068 = vmatprep.subr.mxu0 0.0
    %v3069 = vand.u32 %v2800, 4294901760
    %v3070 = vsub.f32 %v2800, %v3069
    %3071 = vmatpush1.msra.mxu0 %v3070
    %3072 = vmatprep.subr.mxu0 0.0
    %v3073 = vand.u32 %v2801, 4294901760
    %v3074 = vsub.f32 %v2801, %v3073
    %3075 = vmatpush1.msra.mxu0 %v3074
    %3076 = vmatprep.subr.mxu0 0.0
    %v3077 = vand.u32 %v2802, 4294901760
    %v3078 = vsub.f32 %v2802, %v3077
    %3079 = vmatpush1.msra.mxu0 %v3078
    %3080 = vmatprep.subr.mxu0 0.0
    %v3081 = vand.u32 %v2803, 4294901760
    %v3082 = vsub.f32 %v2803, %v3081
    %3083 = vmatpush1.msra.mxu0 %v3082
    %3084 = vmatprep.subr.mxu0 0.0
    %v3085 = vand.u32 %v2804, 4294901760
    %v3086 = vsub.f32 %v2804, %v3085
    %3087 = vmatpush1.msra.mxu0 %v3086
    %3088 = vmatprep.subr.mxu0 0.0
    %v3089 = vand.u32 %v2805, 4294901760
    %v3090 = vsub.f32 %v2805, %v3089
    %3091 = vmatpush1.msra.mxu0 %v3090
    %3092 = vmatprep.subr.mxu0 0.0
    %v3093 = vand.u32 %v2806, 4294901760
    %v3094 = vsub.f32 %v2806, %v3093
    %3095 = vmatpush1.msra.mxu0 %v3094
    %3096 = vmatprep.subr.mxu0 0.0
    %v3097 = vand.u32 %v2807, 4294901760
    %v3098 = vsub.f32 %v2807, %v3097
    %3099 = vmatpush1.msra.mxu0 %v3098
    %3100 = vmatprep.subr.mxu0 0.0
    %v3101 = vand.u32 %v2808, 4294901760
    %v3102 = vsub.f32 %v2808, %v3101
    %3103 = vmatpush1.msra.mxu0 %v3102
    %3104 = vmatprep.subr.mxu0 0.0
    %v3105 = vand.u32 %v2809, 4294901760
    %v3106 = vsub.f32 %v2809, %v3105
    %3107 = vmatpush1.msra.mxu0 %v3106
    %3108 = vmatprep.subr.mxu0 0.0
    %v3109 = vand.u32 %v2810, 4294901760
    %v3110 = vsub.f32 %v2810, %v3109
    %3111 = vmatpush1.msra.mxu0 %v3110
    %3112 = vmatprep.subr.mxu0 0.0
    %v3113 = vand.u32 %v2811, 4294901760
    %v3114 = vsub.f32 %v2811, %v3113
    %3115 = vmatpush1.msra.mxu0 %v3114
    %3116 = vmatprep.subr.mxu0 0.0
    %v3117 = vand.u32 %v2812, 4294901760
    %v3118 = vsub.f32 %v2812, %v3117
    %3119 = vmatpush1.msra.mxu0 %v3118
    %3120 = vmatprep.subr.mxu0 0.0
    %v3121 = vand.u32 %v2813, 4294901760
    %v3122 = vsub.f32 %v2813, %v3121
    %3123 = vmatpush1.msra.mxu0 %v3122
    %3124 = vmatprep.subr.mxu0 0.0
    %v3125 = vand.u32 %v2814, 4294901760
    %v3126 = vsub.f32 %v2814, %v3125
    %3127 = vmatpush1.msra.mxu0 %v3126
    %3128 = vmatprep.subr.mxu0 0.0
    %3129 = vmatpush1.msra.mxu0 0.0
    %3130 = vmatprep.subr.mxu0 0.0
    %3131 = vmatpush1.msra.mxu0 0.0
    %3132 = vmatprep.subr.mxu0 0.0
    %3133 = vmatpush1.msra.mxu0 0.0
    %3134 = vmatprep.subr.mxu0 0.0
    %3135 = vmatpush1.msra.mxu0 0.0
    %3136 = vmatprep.subr.mxu0 0.0
    %3137 = vmatpush1.msra.mxu0 0.0
    %3138 = vmatprep.subr.mxu0 0.0
    %3139 = vmatpush1.msra.mxu0 0.0
    %3140 = vmatprep.subr.mxu0 0.0
    %3141 = vmatpush1.msra.mxu0 0.0
    %3142 = vmatprep.subr.mxu0 0.0
    %3143 = vmatpush1.msra.mxu0 0.0
    %3144 = vmatprep.subr.mxu0 0.0
    %3145 = vmatpush1.msra.mxu0 0.0
    %3146 = vmatprep.subr.mxu0 0.0
    %3147 = vmatpush1.msra.mxu0 0.0
    %3148 = vmatprep.subr.mxu0 0.0
    %3149 = vmatpush1.msra.mxu0 0.0
    %3150 = vmatprep.subr.mxu0 0.0
    %3151 = vmatpush1.msra.mxu0 0.0
    %3152 = vmatprep.subr.mxu0 0.0
    %3153 = vmatpush1.msra.mxu0 0.0
    %3154 = vmatprep.subr.mxu0 0.0
    %3155 = vmatpush1.msra.mxu0 0.0
    %3156 = vmatprep.subr.mxu0 0.0
    %3157 = vmatpush1.msra.mxu0 0.0
    %3158 = vmatprep.subr.mxu0 0.0
    %3159 = vmatpush1.msra.mxu0 0.0
    %3160 = vmatprep.mubr.f32.mxu0 0.0
    %v3161 = vand.u32 %v2798, 4294901760
    %v3162 = vsub.f32 %v2798, %v3161
    %3163 = vmatmul.mubr.f32.gmra.mrb[0].mxu0 %v3162
    %v3164 = vpop.f32.mrb[0].mxu0
    %v3165 = vadd.f32 %v3061, %v3164
    %v3166 = vpop.f32.mrb[0].mxu0
    %3167 = vdwg.mxu0
    %3168 = vmatprep.subr.mxu0 0.0
    %v3169 = vand.u32 %v2799, 4294901760
    %3170 = vmatpush1.msra.mxu0 %v3169
    %3171 = vmatprep.subr.mxu0 0.0
    %v3172 = vand.u32 %v2800, 4294901760
    %3173 = vmatpush1.msra.mxu0 %v3172
    %3174 = vmatprep.subr.mxu0 0.0
    %v3175 = vand.u32 %v2801, 4294901760
    %3176 = vmatpush1.msra.mxu0 %v3175
    %3177 = vmatprep.subr.mxu0 0.0
    %v3178 = vand.u32 %v2802, 4294901760
    %3179 = vmatpush1.msra.mxu0 %v3178
    %3180 = vmatprep.subr.mxu0 0.0
    %v3181 = vand.u32 %v2803, 4294901760
    %3182 = vmatpush1.msra.mxu0 %v3181
    %3183 = vmatprep.subr.mxu0 0.0
    %v3184 = vand.u32 %v2804, 4294901760
    %3185 = vmatpush1.msra.mxu0 %v3184
    %3186 = vmatprep.subr.mxu0 0.0
    %v3187 = vand.u32 %v2805, 4294901760
    %3188 = vmatpush1.msra.mxu0 %v3187
    %3189 = vmatprep.subr.mxu0 0.0
    %v3190 = vand.u32 %v2806, 4294901760
    %3191 = vmatpush1.msra.mxu0 %v3190
    %3192 = vmatprep.subr.mxu0 0.0
    %v3193 = vand.u32 %v2807, 4294901760
    %3194 = vmatpush1.msra.mxu0 %v3193
    %3195 = vmatprep.subr.mxu0 0.0
    %v3196 = vand.u32 %v2808, 4294901760
    %3197 = vmatpush1.msra.mxu0 %v3196
    %3198 = vmatprep.subr.mxu0 0.0
    %v3199 = vand.u32 %v2809, 4294901760
    %3200 = vmatpush1.msra.mxu0 %v3199
    %3201 = vmatprep.subr.mxu0 0.0
    %v3202 = vand.u32 %v2810, 4294901760
    %3203 = vmatpush1.msra.mxu0 %v3202
    %3204 = vmatprep.subr.mxu0 0.0
    %v3205 = vand.u32 %v2811, 4294901760
    %3206 = vmatpush1.msra.mxu0 %v3205
    %3207 = vmatprep.subr.mxu0 0.0
    %v3208 = vand.u32 %v2812, 4294901760
    %3209 = vmatpush1.msra.mxu0 %v3208
    %3210 = vmatprep.subr.mxu0 0.0
    %v3211 = vand.u32 %v2813, 4294901760
    %3212 = vmatpush1.msra.mxu0 %v3211
    %3213 = vmatprep.subr.mxu0 0.0
    %v3214 = vand.u32 %v2814, 4294901760
    %3215 = vmatpush1.msra.mxu0 %v3214
    %3216 = vmatprep.subr.mxu0 0.0
    %3217 = vmatpush1.msra.mxu0 0.0
    %3218 = vmatprep.subr.mxu0 0.0
    %3219 = vmatpush1.msra.mxu0 0.0
    %3220 = vmatprep.subr.mxu0 0.0
    %3221 = vmatpush1.msra.mxu0 0.0
    %3222 = vmatprep.subr.mxu0 0.0
    %3223 = vmatpush1.msra.mxu0 0.0
    %3224 = vmatprep.subr.mxu0 0.0
    %3225 = vmatpush1.msra.mxu0 0.0
    %3226 = vmatprep.subr.mxu0 0.0
    %3227 = vmatpush1.msra.mxu0 0.0
    %3228 = vmatprep.subr.mxu0 0.0
    %3229 = vmatpush1.msra.mxu0 0.0
    %3230 = vmatprep.subr.mxu0 0.0
    %3231 = vmatpush1.msra.mxu0 0.0
    %3232 = vmatprep.subr.mxu0 0.0
    %3233 = vmatpush1.msra.mxu0 0.0
    %3234 = vmatprep.subr.mxu0 0.0
    %3235 = vmatpush1.msra.mxu0 0.0
    %3236 = vmatprep.subr.mxu0 0.0
    %3237 = vmatpush1.msra.mxu0 0.0
    %3238 = vmatprep.subr.mxu0 0.0
    %3239 = vmatpush1.msra.mxu0 0.0
    %3240 = vmatprep.subr.mxu0 0.0
    %3241 = vmatpush1.msra.mxu0 0.0
    %3242 = vmatprep.subr.mxu0 0.0
    %3243 = vmatpush1.msra.mxu0 0.0
    %3244 = vmatprep.subr.mxu0 0.0
    %3245 = vmatpush1.msra.mxu0 0.0
    %3246 = vmatprep.subr.mxu0 0.0
    %3247 = vmatpush1.msra.mxu0 0.0
    %3248 = vmatprep.mubr.f32.mxu0 0.0
    %v3249 = vand.u32 %v2798, 4294901760
    %v3250 = vsub.f32 %v2798, %v3249
    %v3251 = vand.u32 %v3250, 4294901760
    %3252 = vmatmul.mubr.f32.gmra.mrb[0].mxu0 %v3251
    %v3253 = vpop.f32.mrb[0].mxu0
    %v3254 = vadd.f32 %v3165, %v3253
    %v3255 = vpop.f32.mrb[0].mxu0
    %3256 = vdwg.mxu0
    %3257 = vmatprep.subr.mxu0 0.0
    %v3258 = vand.u32 %v2799, 4294901760
    %v3259 = vsub.f32 %v2799, %v3258
    %v3260 = vand.u32 %v3259, 4294901760
    %3261 = vmatpush1.msra.mxu0 %v3260
    %3262 = vmatprep.subr.mxu0 0.0
    %v3263 = vand.u32 %v2800, 4294901760
    %v3264 = vsub.f32 %v2800, %v3263
    %v3265 = vand.u32 %v3264, 4294901760
    %3266 = vmatpush1.msra.mxu0 %v3265
    %3267 = vmatprep.subr.mxu0 0.0
    %v3268 = vand.u32 %v2801, 4294901760
    %v3269 = vsub.f32 %v2801, %v3268
    %v3270 = vand.u32 %v3269, 4294901760
    %3271 = vmatpush1.msra.mxu0 %v3270
    %3272 = vmatprep.subr.mxu0 0.0
    %v3273 = vand.u32 %v2802, 4294901760
    %v3274 = vsub.f32 %v2802, %v3273
    %v3275 = vand.u32 %v3274, 4294901760
    %3276 = vmatpush1.msra.mxu0 %v3275
    %3277 = vmatprep.subr.mxu0 0.0
    %v3278 = vand.u32 %v2803, 4294901760
    %v3279 = vsub.f32 %v2803, %v3278
    %v3280 = vand.u32 %v3279, 4294901760
    %3281 = vmatpush1.msra.mxu0 %v3280
    %3282 = vmatprep.subr.mxu0 0.0
    %v3283 = vand.u32 %v2804, 4294901760
    %v3284 = vsub.f32 %v2804, %v3283
    %v3285 = vand.u32 %v3284, 4294901760
    %3286 = vmatpush1.msra.mxu0 %v3285
    %3287 = vmatprep.subr.mxu0 0.0
    %v3288 = vand.u32 %v2805, 4294901760
    %v3289 = vsub.f32 %v2805, %v3288
    %v3290 = vand.u32 %v3289, 4294901760
    %3291 = vmatpush1.msra.mxu0 %v3290
    %3292 = vmatprep.subr.mxu0 0.0
    %v3293 = vand.u32 %v2806, 4294901760
    %v3294 = vsub.f32 %v2806, %v3293
    %v3295 = vand.u32 %v3294, 4294901760
    %3296 = vmatpush1.msra.mxu0 %v3295
    %3297 = vmatprep.subr.mxu0 0.0
    %v3298 = vand.u32 %v2807, 4294901760
    %v3299 = vsub.f32 %v2807, %v3298
    %v3300 = vand.u32 %v3299, 4294901760
    %3301 = vmatpush1.msra.mxu0 %v3300
    %3302 = vmatprep.subr.mxu0 0.0
    %v3303 = vand.u32 %v2808, 4294901760
    %v3304 = vsub.f32 %v2808, %v3303
    %v3305 = vand.u32 %v3304, 4294901760
    %3306 = vmatpush1.msra.mxu0 %v3305
    %3307 = vmatprep.subr.mxu0 0.0
    %v3308 = vand.u32 %v2809, 4294901760
    %v3309 = vsub.f32 %v2809, %v3308
    %v3310 = vand.u32 %v3309, 4294901760
    %3311 = vmatpush1.msra.mxu0 %v3310
    %3312 = vmatprep.subr.mxu0 0.0
    %v3313 = vand.u32 %v2810, 4294901760
    %v3314 = vsub.f32 %v2810, %v3313
    %v3315 = vand.u32 %v3314, 4294901760
    %3316 = vmatpush1.msra.mxu0 %v3315
    %3317 = vmatprep.subr.mxu0 0.0
    %v3318 = vand.u32 %v2811, 4294901760
    %v3319 = vsub.f32 %v2811, %v3318
    %v3320 = vand.u32 %v3319, 4294901760
    %3321 = vmatpush1.msra.mxu0 %v3320
    %3322 = vmatprep.subr.mxu0 0.0
    %v3323 = vand.u32 %v2812, 4294901760
    %v3324 = vsub.f32 %v2812, %v3323
    %v3325 = vand.u32 %v3324, 4294901760
    %3326 = vmatpush1.msra.mxu0 %v3325
    %3327 = vmatprep.subr.mxu0 0.0
    %v3328 = vand.u32 %v2813, 4294901760
    %v3329 = vsub.f32 %v2813, %v3328
    %v3330 = vand.u32 %v3329, 4294901760
    %3331 = vmatpush1.msra.mxu0 %v3330
    %3332 = vmatprep.subr.mxu0 0.0
    %v3333 = vand.u32 %v2814, 4294901760
    %v3334 = vsub.f32 %v2814, %v3333
    %v3335 = vand.u32 %v3334, 4294901760
    %3336 = vmatpush1.msra.mxu0 %v3335
    %3337 = vmatprep.subr.mxu0 0.0
    %3338 = vmatpush1.msra.mxu0 0.0
    %3339 = vmatprep.subr.mxu0 0.0
    %3340 = vmatpush1.msra.mxu0 0.0
    %3341 = vmatprep.subr.mxu0 0.0
    %3342 = vmatpush1.msra.mxu0 0.0
    %3343 = vmatprep.subr.mxu0 0.0
    %3344 = vmatpush1.msra.mxu0 0.0
    %3345 = vmatprep.subr.mxu0 0.0
    %3346 = vmatpush1.msra.mxu0 0.0
    %3347 = vmatprep.subr.mxu0 0.0
    %3348 = vmatpush1.msra.mxu0 0.0
    %3349 = vmatprep.subr.mxu0 0.0
    %3350 = vmatpush1.msra.mxu0 0.0
    %3351 = vmatprep.subr.mxu0 0.0
    %3352 = vmatpush1.msra.mxu0 0.0
    %3353 = vmatprep.subr.mxu0 0.0
    %3354 = vmatpush1.msra.mxu0 0.0
    %3355 = vmatprep.subr.mxu0 0.0
    %3356 = vmatpush1.msra.mxu0 0.0
    %3357 = vmatprep.subr.mxu0 0.0
    %3358 = vmatpush1.msra.mxu0 0.0
    %3359 = vmatprep.subr.mxu0 0.0
    %3360 = vmatpush1.msra.mxu0 0.0
    %3361 = vmatprep.subr.mxu0 0.0
    %3362 = vmatpush1.msra.mxu0 0.0
    %3363 = vmatprep.subr.mxu0 0.0
    %3364 = vmatpush1.msra.mxu0 0.0
    %3365 = vmatprep.subr.mxu0 0.0
    %3366 = vmatpush1.msra.mxu0 0.0
    %3367 = vmatprep.subr.mxu0 0.0
    %3368 = vmatpush1.msra.mxu0 0.0
    %3369 = vmatprep.mubr.f32.mxu0 0.0
    %v3370 = vand.u32 %v2798, 4294901760
    %3371 = vmatmul.mubr.f32.gmra.mrb[0].mxu0 %v3370
    %v3372 = vpop.f32.mrb[0].mxu0
    %v3373 = vadd.f32 %v3254, %v3372
    %v3374 = vpop.f32.mrb[0].mxu0
    %3375 = vdwg.mxu0
    %3376 = vmatprep.subr.mxu0 0.0
    %v3377 = vand.u32 %v2799, 4294901760
    %3378 = vmatpush1.msra.mxu0 %v3377
    %3379 = vmatprep.subr.mxu0 0.0
    %v3380 = vand.u32 %v2800, 4294901760
    %3381 = vmatpush1.msra.mxu0 %v3380
    %3382 = vmatprep.subr.mxu0 0.0
    %v3383 = vand.u32 %v2801, 4294901760
    %3384 = vmatpush1.msra.mxu0 %v3383
    %3385 = vmatprep.subr.mxu0 0.0
    %v3386 = vand.u32 %v2802, 4294901760
    %3387 = vmatpush1.msra.mxu0 %v3386
    %3388 = vmatprep.subr.mxu0 0.0
    %v3389 = vand.u32 %v2803, 4294901760
    %3390 = vmatpush1.msra.mxu0 %v3389
    %3391 = vmatprep.subr.mxu0 0.0
    %v3392 = vand.u32 %v2804, 4294901760
    %3393 = vmatpush1.msra.mxu0 %v3392
    %3394 = vmatprep.subr.mxu0 0.0
    %v3395 = vand.u32 %v2805, 4294901760
    %3396 = vmatpush1.msra.mxu0 %v3395
    %3397 = vmatprep.subr.mxu0 0.0
    %v3398 = vand.u32 %v2806, 4294901760
    %3399 = vmatpush1.msra.mxu0 %v3398
    %3400 = vmatprep.subr.mxu0 0.0
    %v3401 = vand.u32 %v2807, 4294901760
    %3402 = vmatpush1.msra.mxu0 %v3401
    %3403 = vmatprep.subr.mxu0 0.0
    %v3404 = vand.u32 %v2808, 4294901760
    %3405 = vmatpush1.msra.mxu0 %v3404
    %3406 = vmatprep.subr.mxu0 0.0
    %v3407 = vand.u32 %v2809, 4294901760
    %3408 = vmatpush1.msra.mxu0 %v3407
    %3409 = vmatprep.subr.mxu0 0.0
    %v3410 = vand.u32 %v2810, 4294901760
    %3411 = vmatpush1.msra.mxu0 %v3410
    %3412 = vmatprep.subr.mxu0 0.0
    %v3413 = vand.u32 %v2811, 4294901760
    %3414 = vmatpush1.msra.mxu0 %v3413
    %3415 = vmatprep.subr.mxu0 0.0
    %v3416 = vand.u32 %v2812, 4294901760
    %3417 = vmatpush1.msra.mxu0 %v3416
    %3418 = vmatprep.subr.mxu0 0.0
    %v3419 = vand.u32 %v2813, 4294901760
    %3420 = vmatpush1.msra.mxu0 %v3419
    %3421 = vmatprep.subr.mxu0 0.0
    %v3422 = vand.u32 %v2814, 4294901760
    %3423 = vmatpush1.msra.mxu0 %v3422
    %3424 = vmatprep.subr.mxu0 0.0
    %3425 = vmatpush1.msra.mxu0 0.0
    %3426 = vmatprep.subr.mxu0 0.0
    %3427 = vmatpush1.msra.mxu0 0.0
    %3428 = vmatprep.subr.mxu0 0.0
    %3429 = vmatpush1.msra.mxu0 0.0
    %3430 = vmatprep.subr.mxu0 0.0
    %3431 = vmatpush1.msra.mxu0 0.0
    %3432 = vmatprep.subr.mxu0 0.0
    %3433 = vmatpush1.msra.mxu0 0.0
    %3434 = vmatprep.subr.mxu0 0.0
    %3435 = vmatpush1.msra.mxu0 0.0
    %3436 = vmatprep.subr.mxu0 0.0
    %3437 = vmatpush1.msra.mxu0 0.0
    %3438 = vmatprep.subr.mxu0 0.0
    %3439 = vmatpush1.msra.mxu0 0.0
    %3440 = vmatprep.subr.mxu0 0.0
    %3441 = vmatpush1.msra.mxu0 0.0
    %3442 = vmatprep.subr.mxu0 0.0
    %3443 = vmatpush1.msra.mxu0 0.0
    %3444 = vmatprep.subr.mxu0 0.0
    %3445 = vmatpush1.msra.mxu0 0.0
    %3446 = vmatprep.subr.mxu0 0.0
    %3447 = vmatpush1.msra.mxu0 0.0
    %3448 = vmatprep.subr.mxu0 0.0
    %3449 = vmatpush1.msra.mxu0 0.0
    %3450 = vmatprep.subr.mxu0 0.0
    %3451 = vmatpush1.msra.mxu0 0.0
    %3452 = vmatprep.subr.mxu0 0.0
    %3453 = vmatpush1.msra.mxu0 0.0
    %3454 = vmatprep.subr.mxu0 0.0
    %3455 = vmatpush1.msra.mxu0 0.0
    %3456 = vmatprep.mubr.f32.mxu0 0.0
    %v3457 = vand.u32 %v2798, 4294901760
    %3458 = vmatmul.mubr.f32.gmra.mrb[0].mxu0 %v3457
    %v3459 = vpop.f32.mrb[0].mxu0
    %v3460 = vadd.f32 %v3373, %v3459
    %v3461 = vpop.f32.mrb[0].mxu0
    %3462 = vdwg.mxu0
    %v3463 = vmax.f32 %v3460, 0.0
    %v3464 = vld [vmem:[#allocation13] sm:$0xff]
    %v3465 = vld [vmem:[#allocation13 + $0x8] sm:$0xff]
    %v3466 = vld [vmem:[#allocation13 + $0x10] sm:$0xff]
    %v3467 = vld [vmem:[#allocation13 + $0x18] sm:$0xff]
    %v3468 = vld [vmem:[#allocation13 + $0x20] sm:$0xff]
    %v3469 = vld [vmem:[#allocation13 + $0x28] sm:$0xff]
    %v3470 = vld [vmem:[#allocation13 + $0x30] sm:$0xff]
    %v3471 = vld [vmem:[#allocation13 + $0x38] sm:$0xff]
    %v3472 = vld [vmem:[#allocation13 + $0x40] sm:$0xff]
    %v3473 = vld [vmem:[#allocation13 + $0x48] sm:$0xff]
    %v3474 = vld [vmem:[#allocation13 + $0x50] sm:$0xff]
    %v3475 = vld [vmem:[#allocation13 + $0x58] sm:$0xff]
    %v3476 = vld [vmem:[#allocation13 + $0x60] sm:$0xff]
    %v3477 = vld [vmem:[#allocation13 + $0x68] sm:$0xff]
    %v3478 = vld [vmem:[#allocation13 + $0x70] sm:$0xff]
    %v3479 = vld [vmem:[#allocation13 + $0x78] sm:$0xff]
    %v3480 = vld [vmem:[%s12] sm:$0x1]
    %v3482 = vlaneseq
    %v3483 = vshrl.u32 %v3482, 7
    %v3484 = vsub.s32 0, %v3483
    %v3485 = vrot.slane %v3480, %v3484
    %3487 = vmatprep.subr.mxu0 0.0
    %v3488 = vand.u32 %v3464, 4294901760
    %3489 = vmatpush1.msra.mxu0 %v3488
    %3490 = vmatprep.subr.mxu0 0.0
    %v3491 = vand.u32 %v3465, 4294901760
    %3492 = vmatpush1.msra.mxu0 %v3491
    %3493 = vmatprep.subr.mxu0 0.0
    %v3494 = vand.u32 %v3466, 4294901760
    %3495 = vmatpush1.msra.mxu0 %v3494
    %3496 = vmatprep.subr.mxu0 0.0
    %v3497 = vand.u32 %v3467, 4294901760
    %3498 = vmatpush1.msra.mxu0 %v3497
    %3499 = vmatprep.subr.mxu0 0.0
    %v3500 = vand.u32 %v3468, 4294901760
    %3501 = vmatpush1.msra.mxu0 %v3500
    %3502 = vmatprep.subr.mxu0 0.0
    %v3503 = vand.u32 %v3469, 4294901760
    %3504 = vmatpush1.msra.mxu0 %v3503
    %3505 = vmatprep.subr.mxu0 0.0
    %v3506 = vand.u32 %v3470, 4294901760
    %3507 = vmatpush1.msra.mxu0 %v3506
    %3508 = vmatprep.subr.mxu0 0.0
    %v3509 = vand.u32 %v3471, 4294901760
    %3510 = vmatpush1.msra.mxu0 %v3509
    %3511 = vmatprep.subr.mxu0 0.0
    %v3512 = vand.u32 %v3472, 4294901760
    %3513 = vmatpush1.msra.mxu0 %v3512
    %3514 = vmatprep.subr.mxu0 0.0
    %v3515 = vand.u32 %v3473, 4294901760
    %3516 = vmatpush1.msra.mxu0 %v3515
    %3517 = vmatprep.subr.mxu0 0.0
    %v3518 = vand.u32 %v3474, 4294901760
    %3519 = vmatpush1.msra.mxu0 %v3518
    %3520 = vmatprep.subr.mxu0 0.0
    %v3521 = vand.u32 %v3475, 4294901760
    %3522 = vmatpush1.msra.mxu0 %v3521
    %3523 = vmatprep.subr.mxu0 0.0
    %v3524 = vand.u32 %v3476, 4294901760
    %3525 = vmatpush1.msra.mxu0 %v3524
    %3526 = vmatprep.subr.mxu0 0.0
    %v3527 = vand.u32 %v3477, 4294901760
    %3528 = vmatpush1.msra.mxu0 %v3527
    %3529 = vmatprep.subr.mxu0 0.0
    %v3530 = vand.u32 %v3478, 4294901760
    %3531 = vmatpush1.msra.mxu0 %v3530
    %3532 = vmatprep.subr.mxu0 0.0
    %v3533 = vand.u32 %v3479, 4294901760
    %3534 = vmatpush1.msra.mxu0 %v3533
    %3535 = vmatprep.subr.mxu0 0.0
    %3536 = vmatpush1.msra.mxu0 0.0
    %3537 = vmatprep.subr.mxu0 0.0
    %3538 = vmatpush1.msra.mxu0 0.0
    %3539 = vmatprep.subr.mxu0 0.0
    %3540 = vmatpush1.msra.mxu0 0.0
    %3541 = vmatprep.subr.mxu0 0.0
    %3542 = vmatpush1.msra.mxu0 0.0
    %3543 = vmatprep.subr.mxu0 0.0
    %3544 = vmatpush1.msra.mxu0 0.0
    %3545 = vmatprep.subr.mxu0 0.0
    %3546 = vmatpush1.msra.mxu0 0.0
    %3547 = vmatprep.subr.mxu0 0.0
    %3548 = vmatpush1.msra.mxu0 0.0
    %3549 = vmatprep.subr.mxu0 0.0
    %3550 = vmatpush1.msra.mxu0 0.0
    %3551 = vmatprep.subr.mxu0 0.0
    %3552 = vmatpush1.msra.mxu0 0.0
    %3553 = vmatprep.subr.mxu0 0.0
    %3554 = vmatpush1.msra.mxu0 0.0
    %3555 = vmatprep.subr.mxu0 0.0
    %3556 = vmatpush1.msra.mxu0 0.0
    %3557 = vmatprep.subr.mxu0 0.0
    %3558 = vmatpush1.msra.mxu0 0.0
    %3559 = vmatprep.subr.mxu0 0.0
    %3560 = vmatpush1.msra.mxu0 0.0
    %3561 = vmatprep.subr.mxu0 0.0
    %3562 = vmatpush1.msra.mxu0 0.0
    %3563 = vmatprep.subr.mxu0 0.0
    %3564 = vmatpush1.msra.mxu0 0.0
    %3565 = vmatprep.subr.mxu0 0.0
    %3566 = vmatpush1.msra.mxu0 0.0
    %3567 = vmatprep.mubr.f32.mxu0 0.0
    %v3568 = vand.u32 %v3463, 4294901760
    %v3569 = vsub.f32 %v3463, %v3568
    %v3570 = vand.u32 %v3569, 4294901760
    %v3571 = vsub.f32 %v3569, %v3570
    %v3572 = vand.u32 %v3571, 4294901760
    %3573 = vmatmul.mubr.f32.gmra.mrb[0].mxu0 %v3572
    %v3574 = vpop.f32.mrb[0].mxu0
    %v3575 = vadd.f32 %v3485, %v3574
    %v3576 = vpop.f32.mrb[0].mxu0
    %3577 = vdwg.mxu0
    %3578 = vmatprep.subr.mxu0 0.0
    %v3579 = vand.u32 %v3464, 4294901760
    %v3580 = vsub.f32 %v3464, %v3579
    %v3581 = vand.u32 %v3580, 4294901760
    %v3582 = vsub.f32 %v3580, %v3581
    %v3583 = vand.u32 %v3582, 4294901760
    %3584 = vmatpush1.msra.mxu0 %v3583
    %3585 = vmatprep.subr.mxu0 0.0
    %v3586 = vand.u32 %v3465, 4294901760
    %v3587 = vsub.f32 %v3465, %v3586
    %v3588 = vand.u32 %v3587, 4294901760
    %v3589 = vsub.f32 %v3587, %v3588
    %v3590 = vand.u32 %v3589, 4294901760
    %3591 = vmatpush1.msra.mxu0 %v3590
    %3592 = vmatprep.subr.mxu0 0.0
    %v3593 = vand.u32 %v3466, 4294901760
    %v3594 = vsub.f32 %v3466, %v3593
    %v3595 = vand.u32 %v3594, 4294901760
    %v3596 = vsub.f32 %v3594, %v3595
    %v3597 = vand.u32 %v3596, 4294901760
    %3598 = vmatpush1.msra.mxu0 %v3597
    %3599 = vmatprep.subr.mxu0 0.0
    %v3600 = vand.u32 %v3467, 4294901760
    %v3601 = vsub.f32 %v3467, %v3600
    %v3602 = vand.u32 %v3601, 4294901760
    %v3603 = vsub.f32 %v3601, %v3602
    %v3604 = vand.u32 %v3603, 4294901760
    %3605 = vmatpush1.msra.mxu0 %v3604
    %3606 = vmatprep.subr.mxu0 0.0
    %v3607 = vand.u32 %v3468, 4294901760
    %v3608 = vsub.f32 %v3468, %v3607
    %v3609 = vand.u32 %v3608, 4294901760
    %v3610 = vsub.f32 %v3608, %v3609
    %v3611 = vand.u32 %v3610, 4294901760
    %3612 = vmatpush1.msra.mxu0 %v3611
    %3613 = vmatprep.subr.mxu0 0.0
    %v3614 = vand.u32 %v3469, 4294901760
    %v3615 = vsub.f32 %v3469, %v3614
    %v3616 = vand.u32 %v3615, 4294901760
    %v3617 = vsub.f32 %v3615, %v3616
    %v3618 = vand.u32 %v3617, 4294901760
    %3619 = vmatpush1.msra.mxu0 %v3618
    %3620 = vmatprep.subr.mxu0 0.0
    %v3621 = vand.u32 %v3470, 4294901760
    %v3622 = vsub.f32 %v3470, %v3621
    %v3623 = vand.u32 %v3622, 4294901760
    %v3624 = vsub.f32 %v3622, %v3623
    %v3625 = vand.u32 %v3624, 4294901760
    %3626 = vmatpush1.msra.mxu0 %v3625
    %3627 = vmatprep.subr.mxu0 0.0
    %v3628 = vand.u32 %v3471, 4294901760
    %v3629 = vsub.f32 %v3471, %v3628
    %v3630 = vand.u32 %v3629, 4294901760
    %v3631 = vsub.f32 %v3629, %v3630
    %v3632 = vand.u32 %v3631, 4294901760
    %3633 = vmatpush1.msra.mxu0 %v3632
    %3634 = vmatprep.subr.mxu0 0.0
    %v3635 = vand.u32 %v3472, 4294901760
    %v3636 = vsub.f32 %v3472, %v3635
    %v3637 = vand.u32 %v3636, 4294901760
    %v3638 = vsub.f32 %v3636, %v3637
    %v3639 = vand.u32 %v3638, 4294901760
    %3640 = vmatpush1.msra.mxu0 %v3639
    %3641 = vmatprep.subr.mxu0 0.0
    %v3642 = vand.u32 %v3473, 4294901760
    %v3643 = vsub.f32 %v3473, %v3642
    %v3644 = vand.u32 %v3643, 4294901760
    %v3645 = vsub.f32 %v3643, %v3644
    %v3646 = vand.u32 %v3645, 4294901760
    %3647 = vmatpush1.msra.mxu0 %v3646
    %3648 = vmatprep.subr.mxu0 0.0
    %v3649 = vand.u32 %v3474, 4294901760
    %v3650 = vsub.f32 %v3474, %v3649
    %v3651 = vand.u32 %v3650, 4294901760
    %v3652 = vsub.f32 %v3650, %v3651
    %v3653 = vand.u32 %v3652, 4294901760
    %3654 = vmatpush1.msra.mxu0 %v3653
    %3655 = vmatprep.subr.mxu0 0.0
    %v3656 = vand.u32 %v3475, 4294901760
    %v3657 = vsub.f32 %v3475, %v3656
    %v3658 = vand.u32 %v3657, 4294901760
    %v3659 = vsub.f32 %v3657, %v3658
    %v3660 = vand.u32 %v3659, 4294901760
    %3661 = vmatpush1.msra.mxu0 %v3660
    %3662 = vmatprep.subr.mxu0 0.0
    %v3663 = vand.u32 %v3476, 4294901760
    %v3664 = vsub.f32 %v3476, %v3663
    %v3665 = vand.u32 %v3664, 4294901760
    %v3666 = vsub.f32 %v3664, %v3665
    %v3667 = vand.u32 %v3666, 4294901760
    %3668 = vmatpush1.msra.mxu0 %v3667
    %3669 = vmatprep.subr.mxu0 0.0
    %v3670 = vand.u32 %v3477, 4294901760
    %v3671 = vsub.f32 %v3477, %v3670
    %v3672 = vand.u32 %v3671, 4294901760
    %v3673 = vsub.f32 %v3671, %v3672
    %v3674 = vand.u32 %v3673, 4294901760
    %3675 = vmatpush1.msra.mxu0 %v3674
    %3676 = vmatprep.subr.mxu0 0.0
    %v3677 = vand.u32 %v3478, 4294901760
    %v3678 = vsub.f32 %v3478, %v3677
    %v3679 = vand.u32 %v3678, 4294901760
    %v3680 = vsub.f32 %v3678, %v3679
    %v3681 = vand.u32 %v3680, 4294901760
    %3682 = vmatpush1.msra.mxu0 %v3681
    %3683 = vmatprep.subr.mxu0 0.0
    %v3684 = vand.u32 %v3479, 4294901760
    %v3685 = vsub.f32 %v3479, %v3684
    %v3686 = vand.u32 %v3685, 4294901760
    %v3687 = vsub.f32 %v3685, %v3686
    %v3688 = vand.u32 %v3687, 4294901760
    %3689 = vmatpush1.msra.mxu0 %v3688
    %3690 = vmatprep.subr.mxu0 0.0
    %3691 = vmatpush1.msra.mxu0 0.0
    %3692 = vmatprep.subr.mxu0 0.0
    %3693 = vmatpush1.msra.mxu0 0.0
    %3694 = vmatprep.subr.mxu0 0.0
    %3695 = vmatpush1.msra.mxu0 0.0
    %3696 = vmatprep.subr.mxu0 0.0
    %3697 = vmatpush1.msra.mxu0 0.0
    %3698 = vmatprep.subr.mxu0 0.0
    %3699 = vmatpush1.msra.mxu0 0.0
    %3700 = vmatprep.subr.mxu0 0.0
    %3701 = vmatpush1.msra.mxu0 0.0
    %3702 = vmatprep.subr.mxu0 0.0
    %3703 = vmatpush1.msra.mxu0 0.0
    %3704 = vmatprep.subr.mxu0 0.0
    %3705 = vmatpush1.msra.mxu0 0.0
    %3706 = vmatprep.subr.mxu0 0.0
    %3707 = vmatpush1.msra.mxu0 0.0
    %3708 = vmatprep.subr.mxu0 0.0
    %3709 = vmatpush1.msra.mxu0 0.0
    %3710 = vmatprep.subr.mxu0 0.0
    %3711 = vmatpush1.msra.mxu0 0.0
    %3712 = vmatprep.subr.mxu0 0.0
    %3713 = vmatpush1.msra.mxu0 0.0
    %3714 = vmatprep.subr.mxu0 0.0
    %3715 = vmatpush1.msra.mxu0 0.0
    %3716 = vmatprep.subr.mxu0 0.0
    %3717 = vmatpush1.msra.mxu0 0.0
    %3718 = vmatprep.subr.mxu0 0.0
    %3719 = vmatpush1.msra.mxu0 0.0
    %3720 = vmatprep.subr.mxu0 0.0
    %3721 = vmatpush1.msra.mxu0 0.0
    %3722 = vmatprep.mubr.f32.mxu0 0.0
    %v3723 = vand.u32 %v3463, 4294901760
    %3724 = vmatmul.mubr.f32.gmra.mrb[0].mxu0 %v3723
    %v3725 = vpop.f32.mrb[0].mxu0
    %v3726 = vadd.f32 %v3575, %v3725
    %v3727 = vpop.f32.mrb[0].mxu0
    %3728 = vdwg.mxu0
    %3729 = vmatprep.subr.mxu0 0.0
    %v3730 = vand.u32 %v3464, 4294901760
    %v3731 = vsub.f32 %v3464, %v3730
    %3732 = vmatpush1.msra.mxu0 %v3731
    %3733 = vmatprep.subr.mxu0 0.0
    %v3734 = vand.u32 %v3465, 4294901760
    %v3735 = vsub.f32 %v3465, %v3734
    %3736 = vmatpush1.msra.mxu0 %v3735
    %3737 = vmatprep.subr.mxu0 0.0
    %v3738 = vand.u32 %v3466, 4294901760
    %v3739 = vsub.f32 %v3466, %v3738
    %3740 = vmatpush1.msra.mxu0 %v3739
    %3741 = vmatprep.subr.mxu0 0.0
    %v3742 = vand.u32 %v3467, 4294901760
    %v3743 = vsub.f32 %v3467, %v3742
    %3744 = vmatpush1.msra.mxu0 %v3743
    %3745 = vmatprep.subr.mxu0 0.0
    %v3746 = vand.u32 %v3468, 4294901760
    %v3747 = vsub.f32 %v3468, %v3746
    %3748 = vmatpush1.msra.mxu0 %v3747
    %3749 = vmatprep.subr.mxu0 0.0
    %v3750 = vand.u32 %v3469, 4294901760
    %v3751 = vsub.f32 %v3469, %v3750
    %3752 = vmatpush1.msra.mxu0 %v3751
    %3753 = vmatprep.subr.mxu0 0.0
    %v3754 = vand.u32 %v3470, 4294901760
    %v3755 = vsub.f32 %v3470, %v3754
    %3756 = vmatpush1.msra.mxu0 %v3755
    %3757 = vmatprep.subr.mxu0 0.0
    %v3758 = vand.u32 %v3471, 4294901760
    %v3759 = vsub.f32 %v3471, %v3758
    %3760 = vmatpush1.msra.mxu0 %v3759
    %3761 = vmatprep.subr.mxu0 0.0
    %v3762 = vand.u32 %v3472, 4294901760
    %v3763 = vsub.f32 %v3472, %v3762
    %3764 = vmatpush1.msra.mxu0 %v3763
    %3765 = vmatprep.subr.mxu0 0.0
    %v3766 = vand.u32 %v3473, 4294901760
    %v3767 = vsub.f32 %v3473, %v3766
    %3768 = vmatpush1.msra.mxu0 %v3767
    %3769 = vmatprep.subr.mxu0 0.0
    %v3770 = vand.u32 %v3474, 4294901760
    %v3771 = vsub.f32 %v3474, %v3770
    %3772 = vmatpush1.msra.mxu0 %v3771
    %3773 = vmatprep.subr.mxu0 0.0
    %v3774 = vand.u32 %v3475, 4294901760
    %v3775 = vsub.f32 %v3475, %v3774
    %3776 = vmatpush1.msra.mxu0 %v3775
    %3777 = vmatprep.subr.mxu0 0.0
    %v3778 = vand.u32 %v3476, 4294901760
    %v3779 = vsub.f32 %v3476, %v3778
    %3780 = vmatpush1.msra.mxu0 %v3779
    %3781 = vmatprep.subr.mxu0 0.0
    %v3782 = vand.u32 %v3477, 4294901760
    %v3783 = vsub.f32 %v3477, %v3782
    %3784 = vmatpush1.msra.mxu0 %v3783
    %3785 = vmatprep.subr.mxu0 0.0
    %v3786 = vand.u32 %v3478, 4294901760
    %v3787 = vsub.f32 %v3478, %v3786
    %3788 = vmatpush1.msra.mxu0 %v3787
    %3789 = vmatprep.subr.mxu0 0.0
    %v3790 = vand.u32 %v3479, 4294901760
    %v3791 = vsub.f32 %v3479, %v3790
    %3792 = vmatpush1.msra.mxu0 %v3791
    %3793 = vmatprep.subr.mxu0 0.0
    %3794 = vmatpush1.msra.mxu0 0.0
    %3795 = vmatprep.subr.mxu0 0.0
    %3796 = vmatpush1.msra.mxu0 0.0
    %3797 = vmatprep.subr.mxu0 0.0
    %3798 = vmatpush1.msra.mxu0 0.0
    %3799 = vmatprep.subr.mxu0 0.0
    %3800 = vmatpush1.msra.mxu0 0.0
    %3801 = vmatprep.subr.mxu0 0.0
    %3802 = vmatpush1.msra.mxu0 0.0
    %3803 = vmatprep.subr.mxu0 0.0
    %3804 = vmatpush1.msra.mxu0 0.0
    %3805 = vmatprep.subr.mxu0 0.0
    %3806 = vmatpush1.msra.mxu0 0.0
    %3807 = vmatprep.subr.mxu0 0.0
    %3808 = vmatpush1.msra.mxu0 0.0
    %3809 = vmatprep.subr.mxu0 0.0
    %3810 = vmatpush1.msra.mxu0 0.0
    %3811 = vmatprep.subr.mxu0 0.0
    %3812 = vmatpush1.msra.mxu0 0.0
    %3813 = vmatprep.subr.mxu0 0.0
    %3814 = vmatpush1.msra.mxu0 0.0
    %3815 = vmatprep.subr.mxu0 0.0
    %3816 = vmatpush1.msra.mxu0 0.0
    %3817 = vmatprep.subr.mxu0 0.0
    %3818 = vmatpush1.msra.mxu0 0.0
    %3819 = vmatprep.subr.mxu0 0.0
    %3820 = vmatpush1.msra.mxu0 0.0
    %3821 = vmatprep.subr.mxu0 0.0
    %3822 = vmatpush1.msra.mxu0 0.0
    %3823 = vmatprep.subr.mxu0 0.0
    %3824 = vmatpush1.msra.mxu0 0.0
    %3825 = vmatprep.mubr.f32.mxu0 0.0
    %v3826 = vand.u32 %v3463, 4294901760
    %v3827 = vsub.f32 %v3463, %v3826
    %3828 = vmatmul.mubr.f32.gmra.mrb[0].mxu0 %v3827
    %v3829 = vpop.f32.mrb[0].mxu0
    %v3830 = vadd.f32 %v3726, %v3829
    %v3831 = vpop.f32.mrb[0].mxu0
    %3832 = vdwg.mxu0
    %3833 = vmatprep.subr.mxu0 0.0
    %v3834 = vand.u32 %v3464, 4294901760
    %3835 = vmatpush1.msra.mxu0 %v3834
    %3836 = vmatprep.subr.mxu0 0.0
    %v3837 = vand.u32 %v3465, 4294901760
    %3838 = vmatpush1.msra.mxu0 %v3837
    %3839 = vmatprep.subr.mxu0 0.0
    %v3840 = vand.u32 %v3466, 4294901760
    %3841 = vmatpush1.msra.mxu0 %v3840
    %3842 = vmatprep.subr.mxu0 0.0
    %v3843 = vand.u32 %v3467, 4294901760
    %3844 = vmatpush1.msra.mxu0 %v3843
    %3845 = vmatprep.subr.mxu0 0.0
    %v3846 = vand.u32 %v3468, 4294901760
    %3847 = vmatpush1.msra.mxu0 %v3846
    %3848 = vmatprep.subr.mxu0 0.0
    %v3849 = vand.u32 %v3469, 4294901760
    %3850 = vmatpush1.msra.mxu0 %v3849
    %3851 = vmatprep.subr.mxu0 0.0
    %v3852 = vand.u32 %v3470, 4294901760
    %3853 = vmatpush1.msra.mxu0 %v3852
    %3854 = vmatprep.subr.mxu0 0.0
    %v3855 = vand.u32 %v3471, 4294901760
    %3856 = vmatpush1.msra.mxu0 %v3855
    %3857 = vmatprep.subr.mxu0 0.0
    %v3858 = vand.u32 %v3472, 4294901760
    %3859 = vmatpush1.msra.mxu0 %v3858
    %3860 = vmatprep.subr.mxu0 0.0
    %v3861 = vand.u32 %v3473, 4294901760
    %3862 = vmatpush1.msra.mxu0 %v3861
    %3863 = vmatprep.subr.mxu0 0.0
    %v3864 = vand.u32 %v3474, 4294901760
    %3865 = vmatpush1.msra.mxu0 %v3864
    %3866 = vmatprep.subr.mxu0 0.0
    %v3867 = vand.u32 %v3475, 4294901760
    %3868 = vmatpush1.msra.mxu0 %v3867
    %3869 = vmatprep.subr.mxu0 0.0
    %v3870 = vand.u32 %v3476, 4294901760
    %3871 = vmatpush1.msra.mxu0 %v3870
    %3872 = vmatprep.subr.mxu0 0.0
    %v3873 = vand.u32 %v3477, 4294901760
    %3874 = vmatpush1.msra.mxu0 %v3873
    %3875 = vmatprep.subr.mxu0 0.0
    %v3876 = vand.u32 %v3478, 4294901760
    %3877 = vmatpush1.msra.mxu0 %v3876
    %3878 = vmatprep.subr.mxu0 0.0
    %v3879 = vand.u32 %v3479, 4294901760
    %3880 = vmatpush1.msra.mxu0 %v3879
    %3881 = vmatprep.subr.mxu0 0.0
    %3882 = vmatpush1.msra.mxu0 0.0
    %3883 = vmatprep.subr.mxu0 0.0
    %3884 = vmatpush1.msra.mxu0 0.0
    %3885 = vmatprep.subr.mxu0 0.0
    %3886 = vmatpush1.msra.mxu0 0.0
    %3887 = vmatprep.subr.mxu0 0.0
    %3888 = vmatpush1.msra.mxu0 0.0
    %3889 = vmatprep.subr.mxu0 0.0
    %3890 = vmatpush1.msra.mxu0 0.0
    %3891 = vmatprep.subr.mxu0 0.0
    %3892 = vmatpush1.msra.mxu0 0.0
    %3893 = vmatprep.subr.mxu0 0.0
    %3894 = vmatpush1.msra.mxu0 0.0
    %3895 = vmatprep.subr.mxu0 0.0
    %3896 = vmatpush1.msra.mxu0 0.0
    %3897 = vmatprep.subr.mxu0 0.0
    %3898 = vmatpush1.msra.mxu0 0.0
    %3899 = vmatprep.subr.mxu0 0.0
    %3900 = vmatpush1.msra.mxu0 0.0
    %3901 = vmatprep.subr.mxu0 0.0
    %3902 = vmatpush1.msra.mxu0 0.0
    %3903 = vmatprep.subr.mxu0 0.0
    %3904 = vmatpush1.msra.mxu0 0.0
    %3905 = vmatprep.subr.mxu0 0.0
    %3906 = vmatpush1.msra.mxu0 0.0
    %3907 = vmatprep.subr.mxu0 0.0
    %3908 = vmatpush1.msra.mxu0 0.0
    %3909 = vmatprep.subr.mxu0 0.0
    %3910 = vmatpush1.msra.mxu0 0.0
    %3911 = vmatprep.subr.mxu0 0.0
    %3912 = vmatpush1.msra.mxu0 0.0
    %3913 = vmatprep.mubr.f32.mxu0 0.0
    %v3914 = vand.u32 %v3463, 4294901760
    %v3915 = vsub.f32 %v3463, %v3914
    %v3916 = vand.u32 %v3915, 4294901760
    %3917 = vmatmul.mubr.f32.gmra.mrb[0].mxu0 %v3916
    %v3918 = vpop.f32.mrb[0].mxu0
    %v3919 = vadd.f32 %v3830, %v3918
    %v3920 = vpop.f32.mrb[0].mxu0
    %3921 = vdwg.mxu0
    %3922 = vmatprep.subr.mxu0 0.0
    %v3923 = vand.u32 %v3464, 4294901760
    %v3924 = vsub.f32 %v3464, %v3923
    %v3925 = vand.u32 %v3924, 4294901760
    %3926 = vmatpush1.msra.mxu0 %v3925
    %3927 = vmatprep.subr.mxu0 0.0
    %v3928 = vand.u32 %v3465, 4294901760
    %v3929 = vsub.f32 %v3465, %v3928
    %v3930 = vand.u32 %v3929, 4294901760
    %3931 = vmatpush1.msra.mxu0 %v3930
    %3932 = vmatprep.subr.mxu0 0.0
    %v3933 = vand.u32 %v3466, 4294901760
    %v3934 = vsub.f32 %v3466, %v3933
    %v3935 = vand.u32 %v3934, 4294901760
    %3936 = vmatpush1.msra.mxu0 %v3935
    %3937 = vmatprep.subr.mxu0 0.0
    %v3938 = vand.u32 %v3467, 4294901760
    %v3939 = vsub.f32 %v3467, %v3938
    %v3940 = vand.u32 %v3939, 4294901760
    %3941 = vmatpush1.msra.mxu0 %v3940
    %3942 = vmatprep.subr.mxu0 0.0
    %v3943 = vand.u32 %v3468, 4294901760
    %v3944 = vsub.f32 %v3468, %v3943
    %v3945 = vand.u32 %v3944, 4294901760
    %3946 = vmatpush1.msra.mxu0 %v3945
    %3947 = vmatprep.subr.mxu0 0.0
    %v3948 = vand.u32 %v3469, 4294901760
    %v3949 = vsub.f32 %v3469, %v3948
    %v3950 = vand.u32 %v3949, 4294901760
    %3951 = vmatpush1.msra.mxu0 %v3950
    %3952 = vmatprep.subr.mxu0 0.0
    %v3953 = vand.u32 %v3470, 4294901760
    %v3954 = vsub.f32 %v3470, %v3953
    %v3955 = vand.u32 %v3954, 4294901760
    %3956 = vmatpush1.msra.mxu0 %v3955
    %3957 = vmatprep.subr.mxu0 0.0
    %v3958 = vand.u32 %v3471, 4294901760
    %v3959 = vsub.f32 %v3471, %v3958
    %v3960 = vand.u32 %v3959, 4294901760
    %3961 = vmatpush1.msra.mxu0 %v3960
    %3962 = vmatprep.subr.mxu0 0.0
    %v3963 = vand.u32 %v3472, 4294901760
    %v3964 = vsub.f32 %v3472, %v3963
    %v3965 = vand.u32 %v3964, 4294901760
    %3966 = vmatpush1.msra.mxu0 %v3965
    %3967 = vmatprep.subr.mxu0 0.0
    %v3968 = vand.u32 %v3473, 4294901760
    %v3969 = vsub.f32 %v3473, %v3968
    %v3970 = vand.u32 %v3969, 4294901760
    %3971 = vmatpush1.msra.mxu0 %v3970
    %3972 = vmatprep.subr.mxu0 0.0
    %v3973 = vand.u32 %v3474, 4294901760
    %v3974 = vsub.f32 %v3474, %v3973
    %v3975 = vand.u32 %v3974, 4294901760
    %3976 = vmatpush1.msra.mxu0 %v3975
    %3977 = vmatprep.subr.mxu0 0.0
    %v3978 = vand.u32 %v3475, 4294901760
    %v3979 = vsub.f32 %v3475, %v3978
    %v3980 = vand.u32 %v3979, 4294901760
    %3981 = vmatpush1.msra.mxu0 %v3980
    %3982 = vmatprep.subr.mxu0 0.0
    %v3983 = vand.u32 %v3476, 4294901760
    %v3984 = vsub.f32 %v3476, %v3983
    %v3985 = vand.u32 %v3984, 4294901760
    %3986 = vmatpush1.msra.mxu0 %v3985
    %3987 = vmatprep.subr.mxu0 0.0
    %v3988 = vand.u32 %v3477, 4294901760
    %v3989 = vsub.f32 %v3477, %v3988
    %v3990 = vand.u32 %v3989, 4294901760
    %3991 = vmatpush1.msra.mxu0 %v3990
    %3992 = vmatprep.subr.mxu0 0.0
    %v3993 = vand.u32 %v3478, 4294901760
    %v3994 = vsub.f32 %v3478, %v3993
    %v3995 = vand.u32 %v3994, 4294901760
    %3996 = vmatpush1.msra.mxu0 %v3995
    %3997 = vmatprep.subr.mxu0 0.0
    %v3998 = vand.u32 %v3479, 4294901760
    %v3999 = vsub.f32 %v3479, %v3998
    %v4000 = vand.u32 %v3999, 4294901760
    %4001 = vmatpush1.msra.mxu0 %v4000
    %4002 = vmatprep.subr.mxu0 0.0
    %4003 = vmatpush1.msra.mxu0 0.0
    %4004 = vmatprep.subr.mxu0 0.0
    %4005 = vmatpush1.msra.mxu0 0.0
    %4006 = vmatprep.subr.mxu0 0.0
    %4007 = vmatpush1.msra.mxu0 0.0
    %4008 = vmatprep.subr.mxu0 0.0
    %4009 = vmatpush1.msra.mxu0 0.0
    %4010 = vmatprep.subr.mxu0 0.0
    %4011 = vmatpush1.msra.mxu0 0.0
    %4012 = vmatprep.subr.mxu0 0.0
    %4013 = vmatpush1.msra.mxu0 0.0
    %4014 = vmatprep.subr.mxu0 0.0
    %4015 = vmatpush1.msra.mxu0 0.0
    %4016 = vmatprep.subr.mxu0 0.0
    %4017 = vmatpush1.msra.mxu0 0.0
    %4018 = vmatprep.subr.mxu0 0.0
    %4019 = vmatpush1.msra.mxu0 0.0
    %4020 = vmatprep.subr.mxu0 0.0
    %4021 = vmatpush1.msra.mxu0 0.0
    %4022 = vmatprep.subr.mxu0 0.0
    %4023 = vmatpush1.msra.mxu0 0.0
    %4024 = vmatprep.subr.mxu0 0.0
    %4025 = vmatpush1.msra.mxu0 0.0
    %4026 = vmatprep.subr.mxu0 0.0
    %4027 = vmatpush1.msra.mxu0 0.0
    %4028 = vmatprep.subr.mxu0 0.0
    %4029 = vmatpush1.msra.mxu0 0.0
    %4030 = vmatprep.subr.mxu0 0.0
    %4031 = vmatpush1.msra.mxu0 0.0
    %4032 = vmatprep.subr.mxu0 0.0
    %4033 = vmatpush1.msra.mxu0 0.0
    %4034 = vmatprep.mubr.f32.mxu0 0.0
    %v4035 = vand.u32 %v3463, 4294901760
    %4036 = vmatmul.mubr.f32.gmra.mrb[0].mxu0 %v4035
    %v4037 = vpop.f32.mrb[0].mxu0
    %v4038 = vadd.f32 %v3919, %v4037
    %v4039 = vpop.f32.mrb[0].mxu0
    %4040 = vdwg.mxu0
    %4041 = vmatprep.subr.mxu0 0.0
    %v4042 = vand.u32 %v3464, 4294901760
    %4043 = vmatpush1.msra.mxu0 %v4042
    %4044 = vmatprep.subr.mxu0 0.0
    %v4045 = vand.u32 %v3465, 4294901760
    %4046 = vmatpush1.msra.mxu0 %v4045
    %4047 = vmatprep.subr.mxu0 0.0
    %v4048 = vand.u32 %v3466, 4294901760
    %4049 = vmatpush1.msra.mxu0 %v4048
    %4050 = vmatprep.subr.mxu0 0.0
    %v4051 = vand.u32 %v3467, 4294901760
    %4052 = vmatpush1.msra.mxu0 %v4051
    %4053 = vmatprep.subr.mxu0 0.0
    %v4054 = vand.u32 %v3468, 4294901760
    %4055 = vmatpush1.msra.mxu0 %v4054
    %4056 = vmatprep.subr.mxu0 0.0
    %v4057 = vand.u32 %v3469, 4294901760
    %4058 = vmatpush1.msra.mxu0 %v4057
    %4059 = vmatprep.subr.mxu0 0.0
    %v4060 = vand.u32 %v3470, 4294901760
    %4061 = vmatpush1.msra.mxu0 %v4060
    %4062 = vmatprep.subr.mxu0 0.0
    %v4063 = vand.u32 %v3471, 4294901760
    %4064 = vmatpush1.msra.mxu0 %v4063
    %4065 = vmatprep.subr.mxu0 0.0
    %v4066 = vand.u32 %v3472, 4294901760
    %4067 = vmatpush1.msra.mxu0 %v4066
    %4068 = vmatprep.subr.mxu0 0.0
    %v4069 = vand.u32 %v3473, 4294901760
    %4070 = vmatpush1.msra.mxu0 %v4069
    %4071 = vmatprep.subr.mxu0 0.0
    %v4072 = vand.u32 %v3474, 4294901760
    %4073 = vmatpush1.msra.mxu0 %v4072
    %4074 = vmatprep.subr.mxu0 0.0
    %v4075 = vand.u32 %v3475, 4294901760
    %4076 = vmatpush1.msra.mxu0 %v4075
    %4077 = vmatprep.subr.mxu0 0.0
    %v4078 = vand.u32 %v3476, 4294901760
    %4079 = vmatpush1.msra.mxu0 %v4078
    %4080 = vmatprep.subr.mxu0 0.0
    %v4081 = vand.u32 %v3477, 4294901760
    %4082 = vmatpush1.msra.mxu0 %v4081
    %4083 = vmatprep.subr.mxu0 0.0
    %v4084 = vand.u32 %v3478, 4294901760
    %4085 = vmatpush1.msra.mxu0 %v4084
    %4086 = vmatprep.subr.mxu0 0.0
    %v4087 = vand.u32 %v3479, 4294901760
    %4088 = vmatpush1.msra.mxu0 %v4087
    %4089 = vmatprep.subr.mxu0 0.0
    %4090 = vmatpush1.msra.mxu0 0.0
    %4091 = vmatprep.subr.mxu0 0.0
    %4092 = vmatpush1.msra.mxu0 0.0
    %4093 = vmatprep.subr.mxu0 0.0
    %4094 = vmatpush1.msra.mxu0 0.0
    %4095 = vmatprep.subr.mxu0 0.0
    %4096 = vmatpush1.msra.mxu0 0.0
    %4097 = vmatprep.subr.mxu0 0.0
    %4098 = vmatpush1.msra.mxu0 0.0
    %4099 = vmatprep.subr.mxu0 0.0
    %4100 = vmatpush1.msra.mxu0 0.0
    %4101 = vmatprep.subr.mxu0 0.0
    %4102 = vmatpush1.msra.mxu0 0.0
    %4103 = vmatprep.subr.mxu0 0.0
    %4104 = vmatpush1.msra.mxu0 0.0
    %4105 = vmatprep.subr.mxu0 0.0
    %4106 = vmatpush1.msra.mxu0 0.0
    %4107 = vmatprep.subr.mxu0 0.0
    %4108 = vmatpush1.msra.mxu0 0.0
    %4109 = vmatprep.subr.mxu0 0.0
    %4110 = vmatpush1.msra.mxu0 0.0
    %4111 = vmatprep.subr.mxu0 0.0
    %4112 = vmatpush1.msra.mxu0 0.0
    %4113 = vmatprep.subr.mxu0 0.0
    %4114 = vmatpush1.msra.mxu0 0.0
    %4115 = vmatprep.subr.mxu0 0.0
    %4116 = vmatpush1.msra.mxu0 0.0
    %4117 = vmatprep.subr.mxu0 0.0
    %4118 = vmatpush1.msra.mxu0 0.0
    %4119 = vmatprep.subr.mxu0 0.0
    %4120 = vmatpush1.msra.mxu0 0.0
    %4121 = vmatprep.mubr.f32.mxu0 0.0
    %v4122 = vand.u32 %v3463, 4294901760
    %4123 = vmatmul.mubr.f32.gmra.mrb[0].mxu0 %v4122
    %v4124 = vpop.f32.mrb[0].mxu0
    %v4125 = vadd.f32 %v4038, %v4124
    %v4126 = vpop.f32.mrb[0].mxu0
    %4127 = vdwg.mxu0
    %v4128 = vmax.f32 %v4125, 0.0
    %4129 = vst [vmem:[#allocation14] sm:$0xff] %v4128
    // Predicated region
    $region82: #{tpu_custom_call.1} parent=1 // pred_check
      _
    $region83: #{tpu_custom_call.1} parent=1 // pred_check_branch
      %4131 = sbr.rel (0) target = $region85
    $region84: #{tpu_custom_call.1} parent=1 // pred_region
      %s4133 = ssub.s32 128, 128
      %4134 = vsyncadd [#allocation4], %s4133
      %s4136 = sshll.u32 [#allocation14], 4
      %s4137 = int_to_ptr.vmem [resolvable:$true] %s4136
      %4139 = dma.vmem_to_hbm [thread:$0]  %s4137, 128, %s13, [#allocation4]
    $region85: #{tpu_custom_call.1} parent=1 // pred_fallthru
      _
    // Predicated region
    $region86: #{tpu_custom_call.1} parent=1 // pred_check
      _
    $region87: #{tpu_custom_call.1} parent=1 // pred_check_branch
      %4141 = sbr.rel (0) target = $region89
    $region88: #{tpu_custom_call.1} parent=1 // pred_region
      %4142 = dma.done [#allocation4], 128
    $region89: #{tpu_custom_call.1} parent=1 // pred_fallthru
      _
    %4143 = vsyncpa [#allocation3], 1
    %4144 = vsyncpa [#allocation6], 1
    %4145 = vsyncpa [#allocation9], 1
    %4146 = vsyncpa [#allocation12], 1
    %4147 = vsyncpa [#allocation4], 1

</llo_original>
